<compile_context>
chip_gen: v7x
topology: tpu7x:2x2x1
jax: 0.10.0
libtpu: 0.0.40
codegen_flags: <defaults>
</compile_context>

<pallas_src>
import math
from functools import partial

import numpy as np
import jax
import jax.numpy as jnp
from jax.experimental import pallas as pl
from jax.experimental.pallas import tpu as pltpu


def conv_output_shape(x, kernel_size=1, stride=1, pad=0, dilation=1):
    return math.floor((x + 2 * pad - dilation * (kernel_size - 1) - 1) / stride + 1)


# ----------------------------------------------------------------------------
# Fused whole-model Pallas kernel
# ----------------------------------------------------------------------------

def _model_kernel(n_layers, x_ref, *refs):
    """All conv blocks + avg-pool + Linear + softmax for one batch element.

    refs = [R_0, A_0, bb_0, ..., R_{L-1}, A_{L-1}, bb_{L-1},
            head_w, head_b, out]
    """
    head_w_ref = refs[3 * n_layers]
    head_b_ref = refs[3 * n_layers + 1]
    out_ref = refs[3 * n_layers + 2]

    # Activation layout: (H, W*C), channels innermost on the lane dim.
    act = x_ref[0].astype(jnp.float32)                         # (H0, W0), Cin = 1

    for li in range(n_layers):
        r_ref = refs[3 * li]          # (3, Ho, H)
        a_ref = refs[3 * li + 1]      # (3, W*Cin, Wo*Cout)
        bb_ref = refs[3 * li + 2]     # (2, Wo*Cout): [gamma'*bias, beta']
        z = None
        for ky in range(3):
            rows = jnp.dot(r_ref[ky], act,
                           preferred_element_type=jnp.float32)     # (Ho, W*Cin)
            term = jnp.dot(rows, a_ref[ky],
                           preferred_element_type=jnp.float32)     # (Ho, Wo*Cout)
            z = term if z is None else z + term
        bb = bb_ref[...]
        z = z + bb[0:1, :]                       # gamma' * (conv + skip + bias)
        # BN(LeakyReLU(y)) with gamma' > 0  ==  LeakyReLU(gamma'*y) + beta'
        act = jnp.where(z >= 0.0, z, 0.01 * z) + bb[1:2, :]

    # adaptive_avg_pool2d((1,1)) + Linear: the 1/(H*W) factor and the (C, A)
    # weight are folded into head_w (W*C, A); only the sum over H remains here.
    pooled = jnp.sum(act, axis=0, keepdims=True)                # (1, W_last*C)
    logits = jnp.dot(pooled, head_w_ref[...],
                     preferred_element_type=jnp.float32) + head_b_ref[...]
    m = jnp.max(logits, axis=-1, keepdims=True)
    e = jnp.exp(logits - m)
    out_ref[0] = (e / jnp.sum(e, axis=-1, keepdims=True)).astype(out_ref.dtype)


def fused_forward(x, layer_mats, head_w, head_b, action_dim):
    """x: (N, H, W) float32 -> (N, action_dim) softmax probabilities."""
    N, H0, W0 = x.shape
    n_layers = len(layer_mats)

    in_specs = [pl.BlockSpec((1, H0, W0), lambda n: (n, 0, 0))]
    args = [x]
    for (R, A, bb) in layer_mats:
        in_specs.append(pl.BlockSpec(R.shape, lambda n: (0, 0, 0)))
        in_specs.append(pl.BlockSpec(A.shape, lambda n: (0, 0, 0)))
        in_specs.append(pl.BlockSpec(bb.shape, lambda n: (0, 0)))
        args += [R, A, bb]
    in_specs.append(pl.BlockSpec(head_w.shape, lambda n: (0, 0)))
    in_specs.append(pl.BlockSpec(head_b.shape, lambda n: (0, 0)))
    args += [head_w, head_b]

    out = pl.pallas_call(
        partial(_model_kernel, n_layers),
        out_shape=jax.ShapeDtypeStruct((N, 1, action_dim), jnp.float32),
        grid=(N,),
        in_specs=in_specs,
        out_specs=pl.BlockSpec((1, 1, action_dim), lambda n: (n, 0, 0)),
        compiler_params=pltpu.CompilerParams(
            dimension_semantics=("parallel",),
            vmem_limit_bytes=32 * 1024 * 1024,
        ),
    )(*args)
    return out.reshape(N, action_dim)


# ----------------------------------------------------------------------------
# Init-time folding of a conv block into constant (R, A, bias/beta) matrices
# ----------------------------------------------------------------------------

def _fold_conv_block(w, b, gamma_p, beta_p, cin, cout, H, W, stride, skip):
    """Fold {SkipLayer(conv)|conv} + LeakyReLU + BatchNorm into (R, A, bb)."""
    Ho = conv_output_shape(H, 3, stride, 1)
    Wo = conv_output_shape(W, 3, stride, 1)

    # Row-tap selection (replicate padding == index clipping).
    R = np.zeros((3, Ho, H), np.float32)
    for ky in range(3):
        for i in range(Ho):
            R[ky, i, int(np.clip(stride * i + ky - 1, 0, H - 1))] = 1.0

    # Column taps x channels (replicate padding via clipping, += at edges).
    w = np.asarray(w, np.float32)                      # (3, 3, cin, cout)
    A = np.zeros((3, W * cin, Wo * cout), np.float32)
    for ky in range(3):
        for kx in range(3):
            for j in range(Wo):
                wi = int(np.clip(stride * j + kx - 1, 0, W - 1))
                A[ky, wi * cin:(wi + 1) * cin, j * cout:(j + 1) * cout] += w[ky, kx]

    if skip:   # SkipLayer: out += x ; stride == 1 so R[1] is the identity row map
        for j in range(W):
            if cin == cout:
                A[1, j * cin:(j + 1) * cin, j * cout:(j + 1) * cout] += \
                    np.eye(cin, dtype=np.float32)
            else:  # cin == 1: PyTorch broadcasts the single channel over cout
                A[1, j * cin, j * cout:(j + 1) * cout] += 1.0

    # Fold the BatchNorm scale (gamma' > 0) into A and the conv bias.
    gamma_p = np.broadcast_to(np.asarray(gamma_p, np.float32), (cout,))
    beta_p = np.broadcast_to(np.asarray(beta_p, np.float32), (cout,))
    A = A * np.tile(gamma_p, Wo)[None, None, :]
    bias_row = np.tile(np.asarray(b, np.float32) * gamma_p, Wo)[None, :]
    beta_row = np.tile(beta_p, Wo)[None, :]
    bb = np.concatenate([bias_row, beta_row], axis=0)          # (2, Wo*cout)
    return (jnp.asarray(R), jnp.asarray(A), jnp.asarray(bb)), (Ho, Wo)


# ----------------------------------------------------------------------------
# Model (deterministic synthetic parameters matching BaseModel.__init__ shapes)
# ----------------------------------------------------------------------------

class BaseModelPallas:
    def __init__(self, state_dim, action_dim, hidden_dim, numlayers, key):
        self.state_dim = tuple(state_dim)
        self.action_dim = action_dim
        self.hidden_dim = hidden_dim
        H, W = self.state_dim
        cur_dim = min(H, W)
        assert cur_dim >= 3, "State dimensions must be at least 3x3"

        bn_eps = 1e-5
        gamma_p = 1.0 / math.sqrt(1.0 + bn_eps)   # eval-mode BN, default stats
        beta_p = 0.0

        # Architecture (mirrors the PyTorch __init__).
        specs = []                                 # (cin, cout, stride, skip)
        channels = 1
        for _ in range(numlayers):
            specs.append((channels, hidden_dim, 1, True))
            channels = hidden_dim
        while cur_dim >= 2:
            specs.append((channels, channels, 2, False))
            cur_dim = conv_output_shape(cur_dim, kernel_size=3, stride=2, pad=1)

        keys = iter(jax.random.split(key, 2 * len(specs) + 2))

        def conv_params(cin, cout):
            fan_out = cout * 9
            gain = math.sqrt(2.0 / (1.0 + 0.01 ** 2))   # kaiming, leaky_relu(0.01)
            bw = gain * math.sqrt(3.0 / fan_out)
            wv = jax.random.uniform(next(keys), (3, 3, cin, cout), jnp.float32, -bw, bw)
            bb = 1.0 / math.sqrt(cin * 9)
            bv = jax.random.uniform(next(keys), (cout,), jnp.float32, -bb, bb)
            return wv, bv

        self.raw_blocks = []      # kept for the pure-JAX reference check
        self.layer_mats = []
        curH, curW = H, W
        for (cin, cout, stride, skip) in specs:
            wv, bv = conv_params(cin, cout)
            self.raw_blocks.append(dict(w=wv, b=bv, stride=stride, skip=skip,
                                        gamma=gamma_p, beta=beta_p))
            mats, (curH, curW) = _fold_conv_block(
                np.asarray(wv), np.asarray(bv), gamma_p, beta_p,
                cin, cout, curH, curW, stride, skip)
            self.layer_mats.append(mats)
        self.out_spatial = (curH, curW)

        # Output Linear (kaiming fan_out, 'linear') with avg-pool folded in.
        bw = math.sqrt(3.0 / action_dim)
        w_out = jax.random.uniform(next(keys), (hidden_dim, action_dim),
                                   jnp.float32, -bw, bw)
        bb = 1.0 / math.sqrt(hidden_dim)
        b_out = jax.random.uniform(next(keys), (action_dim,), jnp.float32, -bb, bb)
        self.w_out, self.b_out = w_out, b_out
        head = np.tile(np.asarray(w_out, np.float32), (curW, 1)) / float(curH * curW)
        self.head_w = jnp.asarray(head)                          # (curW*hidden, A)
        self.head_b = jnp.asarray(np.asarray(b_out, np.float32)[None, :])

    def _prep(self, state):
        state = jnp.asarray(state, jnp.float32)
        if state.ndim == 2:
            state = state[None]
        if state.ndim == 4:                      # (B, 1, H, W) like the reference
            state = state.reshape(state.shape[0], state.shape[-2], state.shape[-1])
        assert state.shape[1:] == self.state_dim
        return state

    def __call__(self, state):
        x = self._prep(state)
        return fused_forward(x, self.layer_mats, self.head_w, self.head_b,
                             self.action_dim)

    def reference(self, state):
        """Pure-JAX (XLA) reference of the same forward pass, for validation."""
        x = self._prep(state)
        a = x[:, :, :, None]                                    # NHWC, C = 1
        for blk in self.raw_blocks:
            ap = jnp.pad(a, ((0, 0), (1, 1), (1, 1), (0, 0)), mode="edge")
            y = jax.lax.conv_general_dilated(
                ap, blk["w"], window_strides=(blk["stride"], blk["stride"]),
                padding="VALID",
                dimension_numbers=("NHWC", "HWIO", "NHWC")) + blk["b"]
            if blk["skip"]:
                y = y + a
            y = jnp.where(y >= 0.0, y, 0.01 * y)
            a = blk["gamma"] * y + blk["beta"]
        feat = jnp.mean(a, axis=(1, 2))
        logits = feat @ self.w_out + self.b_out
        return jax.nn.softmax(logits, axis=-1)


# ----------------------------------------------------------------------------

if __name__ == "__main__":
    key = jax.random.PRNGKey(0)
    k_param, k_x = jax.random.split(key)

    state_dim = (16, 16)
    action_dim = 4
    hidden_dim = 32
    numlayers = 2
    batch = 2

    model = BaseModelPallas(state_dim, action_dim, hidden_dim, numlayers, k_param)
    state = jax.random.normal(k_x, (batch, state_dim[0], state_dim[1]), jnp.float32)

    out = jax.block_until_ready(model(state))
    assert out.shape == (batch, action_dim)
    assert bool(jnp.all(jnp.isfinite(out)))
    assert bool(jnp.all(jnp.abs(jnp.sum(out, axis=-1) - 1.0) < 1e-3))

    ref = jax.block_until_ready(model.reference(state))
    np.testing.assert_allclose(np.asarray(out), np.asarray(ref), atol=3e-2, rtol=0.0)

    print("KERNEL_OK")
</pallas_src>

<mosaic_0001>
module attributes {stable_mosaic.version = 11 : i64} {
  func.func @_model_kernel(%arg0: i32, %arg1: memref<1x16x16xf32, #tpu.memory_space<vmem>>, %arg2: memref<3x16x16xf32, #tpu.memory_space<vmem>>, %arg3: memref<3x16x512xf32, #tpu.memory_space<vmem>>, %arg4: memref<2x512xf32, #tpu.memory_space<vmem>>, %arg5: memref<3x16x16xf32, #tpu.memory_space<vmem>>, %arg6: memref<3x512x512xf32, #tpu.memory_space<vmem>>, %arg7: memref<2x512xf32, #tpu.memory_space<vmem>>, %arg8: memref<3x8x16xf32, #tpu.memory_space<vmem>>, %arg9: memref<3x512x256xf32, #tpu.memory_space<vmem>>, %arg10: memref<2x256xf32, #tpu.memory_space<vmem>>, %arg11: memref<3x4x8xf32, #tpu.memory_space<vmem>>, %arg12: memref<3x256x128xf32, #tpu.memory_space<vmem>>, %arg13: memref<2x128xf32, #tpu.memory_space<vmem>>, %arg14: memref<3x2x4xf32, #tpu.memory_space<vmem>>, %arg15: memref<3x128x64xf32, #tpu.memory_space<vmem>>, %arg16: memref<2x64xf32, #tpu.memory_space<vmem>>, %arg17: memref<3x1x2xf32, #tpu.memory_space<vmem>>, %arg18: memref<3x64x32xf32, #tpu.memory_space<vmem>>, %arg19: memref<2x32xf32, #tpu.memory_space<vmem>>, %arg20: memref<32x4xf32, #tpu.memory_space<vmem>>, %arg21: memref<1x4xf32, #tpu.memory_space<vmem>>, %arg22: memref<1x1x4xf32, #tpu.memory_space<vmem>>) attributes {dimension_semantics = [#tpu.dimension_semantics<parallel>], iteration_bounds = array<i64: 2>, scalar_prefetch = 0 : i64, scratch_operands = 0 : i64, tpu.core_type = #tpu.core_type<tc>, window_params = [{transform_indices = @transform_0, window_bounds = array<i64: 1, 16, 16>}, {pipeline_mode = #tpu.pipeline_mode<synchronous>, transform_indices = @transform_1, window_bounds = array<i64: 3, 16, 16>}, {pipeline_mode = #tpu.pipeline_mode<synchronous>, transform_indices = @transform_2, window_bounds = array<i64: 3, 16, 512>}, {pipeline_mode = #tpu.pipeline_mode<synchronous>, transform_indices = @transform_3, window_bounds = array<i64: 2, 512>}, {pipeline_mode = #tpu.pipeline_mode<synchronous>, transform_indices = @transform_4, window_bounds = array<i64: 3, 16, 16>}, {pipeline_mode = #tpu.pipeline_mode<synchronous>, transform_indices = @transform_5, window_bounds = array<i64: 3, 512, 512>}, {pipeline_mode = #tpu.pipeline_mode<synchronous>, transform_indices = @transform_6, window_bounds = array<i64: 2, 512>}, {pipeline_mode = #tpu.pipeline_mode<synchronous>, transform_indices = @transform_7, window_bounds = array<i64: 3, 8, 16>}, {pipeline_mode = #tpu.pipeline_mode<synchronous>, transform_indices = @transform_8, window_bounds = array<i64: 3, 512, 256>}, {pipeline_mode = #tpu.pipeline_mode<synchronous>, transform_indices = @transform_9, window_bounds = array<i64: 2, 256>}, {pipeline_mode = #tpu.pipeline_mode<synchronous>, transform_indices = @transform_10, window_bounds = array<i64: 3, 4, 8>}, {pipeline_mode = #tpu.pipeline_mode<synchronous>, transform_indices = @transform_11, window_bounds = array<i64: 3, 256, 128>}, {pipeline_mode = #tpu.pipeline_mode<synchronous>, transform_indices = @transform_12, window_bounds = array<i64: 2, 128>}, {pipeline_mode = #tpu.pipeline_mode<synchronous>, transform_indices = @transform_13, window_bounds = array<i64: 3, 2, 4>}, {pipeline_mode = #tpu.pipeline_mode<synchronous>, transform_indices = @transform_14, window_bounds = array<i64: 3, 128, 64>}, {pipeline_mode = #tpu.pipeline_mode<synchronous>, transform_indices = @transform_15, window_bounds = array<i64: 2, 64>}, {pipeline_mode = #tpu.pipeline_mode<synchronous>, transform_indices = @transform_16, window_bounds = array<i64: 3, 1, 2>}, {pipeline_mode = #tpu.pipeline_mode<synchronous>, transform_indices = @transform_17, window_bounds = array<i64: 3, 64, 32>}, {pipeline_mode = #tpu.pipeline_mode<synchronous>, transform_indices = @transform_18, window_bounds = array<i64: 2, 32>}, {pipeline_mode = #tpu.pipeline_mode<synchronous>, transform_indices = @transform_19, window_bounds = array<i64: 32, 4>}, {pipeline_mode = #tpu.pipeline_mode<synchronous>, transform_indices = @transform_20, window_bounds = array<i64: 1, 4>}, {transform_indices = @transform_21, window_bounds = array<i64: 1, 1, 4>}]} {
    %c0 = arith.constant 0 : index
    %c0_0 = arith.constant 0 : index
    %c0_1 = arith.constant 0 : index
    %0 = vector.load %arg1[%c0, %c0_0, %c0_1] : memref<1x16x16xf32, #tpu.memory_space<vmem>>, vector<1x16x16xf32>
    %1 = vector.shape_cast %0 : vector<1x16x16xf32> to vector<16x16xf32>
    %c0_2 = arith.constant 0 : index
    %c0_3 = arith.constant 0 : index
    %c0_4 = arith.constant 0 : index
    %2 = vector.load %arg2[%c0_2, %c0_3, %c0_4] : memref<3x16x16xf32, #tpu.memory_space<vmem>>, vector<1x16x16xf32>
    %3 = vector.shape_cast %2 : vector<1x16x16xf32> to vector<16x16xf32>
    %cst = arith.constant dense<0.000000e+00> : vector<16x16xf32>
    %4 = tpu.matmul %3, %1, %cst {dimension_numbers = #tpu.dot_dimension_numbers<[1], [0], [0], [1], [0, 0, 1, 1], [], []>} : vector<16x16xf32>, vector<16x16xf32>, vector<16x16xf32> -> vector<16x16xf32>
    %c0_5 = arith.constant 0 : index
    %c0_6 = arith.constant 0 : index
    %c0_7 = arith.constant 0 : index
    %5 = vector.load %arg3[%c0_5, %c0_6, %c0_7] : memref<3x16x512xf32, #tpu.memory_space<vmem>>, vector<1x16x512xf32>
    %6 = vector.shape_cast %5 : vector<1x16x512xf32> to vector<16x512xf32>
    %cst_8 = arith.constant dense<0.000000e+00> : vector<16x512xf32>
    %7 = tpu.matmul %4, %6, %cst_8 {dimension_numbers = #tpu.dot_dimension_numbers<[1], [0], [0], [1], [0, 0, 1, 1], [], []>} : vector<16x16xf32>, vector<16x512xf32>, vector<16x512xf32> -> vector<16x512xf32>
    %c1 = arith.constant 1 : index
    %c0_9 = arith.constant 0 : index
    %c0_10 = arith.constant 0 : index
    %8 = vector.load %arg2[%c1, %c0_9, %c0_10] : memref<3x16x16xf32, #tpu.memory_space<vmem>>, vector<1x16x16xf32>
    %9 = vector.shape_cast %8 : vector<1x16x16xf32> to vector<16x16xf32>
    %cst_11 = arith.constant dense<0.000000e+00> : vector<16x16xf32>
    %10 = tpu.matmul %9, %1, %cst_11 {dimension_numbers = #tpu.dot_dimension_numbers<[1], [0], [0], [1], [0, 0, 1, 1], [], []>} : vector<16x16xf32>, vector<16x16xf32>, vector<16x16xf32> -> vector<16x16xf32>
    %c1_12 = arith.constant 1 : index
    %c0_13 = arith.constant 0 : index
    %c0_14 = arith.constant 0 : index
    %11 = vector.load %arg3[%c1_12, %c0_13, %c0_14] : memref<3x16x512xf32, #tpu.memory_space<vmem>>, vector<1x16x512xf32>
    %12 = vector.shape_cast %11 : vector<1x16x512xf32> to vector<16x512xf32>
    %cst_15 = arith.constant dense<0.000000e+00> : vector<16x512xf32>
    %13 = tpu.matmul %10, %12, %cst_15 {dimension_numbers = #tpu.dot_dimension_numbers<[1], [0], [0], [1], [0, 0, 1, 1], [], []>} : vector<16x16xf32>, vector<16x512xf32>, vector<16x512xf32> -> vector<16x512xf32>
    %14 = arith.addf %7, %13 : vector<16x512xf32>
    %c2 = arith.constant 2 : index
    %c0_16 = arith.constant 0 : index
    %c0_17 = arith.constant 0 : index
    %15 = vector.load %arg2[%c2, %c0_16, %c0_17] : memref<3x16x16xf32, #tpu.memory_space<vmem>>, vector<1x16x16xf32>
    %16 = vector.shape_cast %15 : vector<1x16x16xf32> to vector<16x16xf32>
    %cst_18 = arith.constant dense<0.000000e+00> : vector<16x16xf32>
    %17 = tpu.matmul %16, %1, %cst_18 {dimension_numbers = #tpu.dot_dimension_numbers<[1], [0], [0], [1], [0, 0, 1, 1], [], []>} : vector<16x16xf32>, vector<16x16xf32>, vector<16x16xf32> -> vector<16x16xf32>
    %c2_19 = arith.constant 2 : index
    %c0_20 = arith.constant 0 : index
    %c0_21 = arith.constant 0 : index
    %18 = vector.load %arg3[%c2_19, %c0_20, %c0_21] : memref<3x16x512xf32, #tpu.memory_space<vmem>>, vector<1x16x512xf32>
    %19 = vector.shape_cast %18 : vector<1x16x512xf32> to vector<16x512xf32>
    %cst_22 = arith.constant dense<0.000000e+00> : vector<16x512xf32>
    %20 = tpu.matmul %17, %19, %cst_22 {dimension_numbers = #tpu.dot_dimension_numbers<[1], [0], [0], [1], [0, 0, 1, 1], [], []>} : vector<16x16xf32>, vector<16x512xf32>, vector<16x512xf32> -> vector<16x512xf32>
    %21 = arith.addf %14, %20 : vector<16x512xf32>
    %c0_23 = arith.constant 0 : index
    %c0_24 = arith.constant 0 : index
    %22 = vector.load %arg4[%c0_23, %c0_24] : memref<2x512xf32, #tpu.memory_space<vmem>>, vector<2x512xf32>
    %23 = vector.extract_strided_slice %22 {offsets = [0, 0], sizes = [1, 512], strides = [1, 1]} : vector<2x512xf32> to vector<1x512xf32>
    %24 = vector.broadcast %23 : vector<1x512xf32> to vector<16x512xf32>
    %25 = arith.addf %21, %24 : vector<16x512xf32>
    %cst_25 = arith.constant 0.000000e+00 : f32
    %26 = vector.broadcast %cst_25 : f32 to vector<16x512xf32>
    %27 = arith.cmpf oge, %25, %26 : vector<16x512xf32>
    %cst_26 = arith.constant 0.00999999977 : f32
    %28 = vector.broadcast %cst_26 : f32 to vector<16x512xf32>
    %29 = arith.mulf %28, %25 : vector<16x512xf32>
    %30 = arith.select %27, %25, %29 : vector<16x512xi1>, vector<16x512xf32>
    %31 = vector.extract_strided_slice %22 {offsets = [1, 0], sizes = [1, 512], strides = [1, 1]} : vector<2x512xf32> to vector<1x512xf32>
    %32 = vector.broadcast %31 : vector<1x512xf32> to vector<16x512xf32>
    %33 = arith.addf %30, %32 : vector<16x512xf32>
    %c0_27 = arith.constant 0 : index
    %c0_28 = arith.constant 0 : index
    %c0_29 = arith.constant 0 : index
    %34 = vector.load %arg5[%c0_27, %c0_28, %c0_29] : memref<3x16x16xf32, #tpu.memory_space<vmem>>, vector<1x16x16xf32>
    %35 = vector.shape_cast %34 : vector<1x16x16xf32> to vector<16x16xf32>
    %cst_30 = arith.constant dense<0.000000e+00> : vector<16x512xf32>
    %36 = tpu.matmul %35, %33, %cst_30 {dimension_numbers = #tpu.dot_dimension_numbers<[1], [0], [0], [1], [0, 0, 1, 1], [], []>} : vector<16x16xf32>, vector<16x512xf32>, vector<16x512xf32> -> vector<16x512xf32>
    %c0_31 = arith.constant 0 : index
    %c0_32 = arith.constant 0 : index
    %c0_33 = arith.constant 0 : index
    %37 = vector.load %arg6[%c0_31, %c0_32, %c0_33] : memref<3x512x512xf32, #tpu.memory_space<vmem>>, vector<1x512x512xf32>
    %38 = vector.shape_cast %37 : vector<1x512x512xf32> to vector<512x512xf32>
    %cst_34 = arith.constant dense<0.000000e+00> : vector<16x512xf32>
    %39 = tpu.matmul %36, %38, %cst_34 {dimension_numbers = #tpu.dot_dimension_numbers<[1], [0], [0], [1], [0, 0, 1, 1], [], []>} : vector<16x512xf32>, vector<512x512xf32>, vector<16x512xf32> -> vector<16x512xf32>
    %c1_35 = arith.constant 1 : index
    %c0_36 = arith.constant 0 : index
    %c0_37 = arith.constant 0 : index
    %40 = vector.load %arg5[%c1_35, %c0_36, %c0_37] : memref<3x16x16xf32, #tpu.memory_space<vmem>>, vector<1x16x16xf32>
    %41 = vector.shape_cast %40 : vector<1x16x16xf32> to vector<16x16xf32>
    %cst_38 = arith.constant dense<0.000000e+00> : vector<16x512xf32>
    %42 = tpu.matmul %41, %33, %cst_38 {dimension_numbers = #tpu.dot_dimension_numbers<[1], [0], [0], [1], [0, 0, 1, 1], [], []>} : vector<16x16xf32>, vector<16x512xf32>, vector<16x512xf32> -> vector<16x512xf32>
    %c1_39 = arith.constant 1 : index
    %c0_40 = arith.constant 0 : index
    %c0_41 = arith.constant 0 : index
    %43 = vector.load %arg6[%c1_39, %c0_40, %c0_41] : memref<3x512x512xf32, #tpu.memory_space<vmem>>, vector<1x512x512xf32>
    %44 = vector.shape_cast %43 : vector<1x512x512xf32> to vector<512x512xf32>
    %cst_42 = arith.constant dense<0.000000e+00> : vector<16x512xf32>
    %45 = tpu.matmul %42, %44, %cst_42 {dimension_numbers = #tpu.dot_dimension_numbers<[1], [0], [0], [1], [0, 0, 1, 1], [], []>} : vector<16x512xf32>, vector<512x512xf32>, vector<16x512xf32> -> vector<16x512xf32>
    %46 = arith.addf %39, %45 : vector<16x512xf32>
    %c2_43 = arith.constant 2 : index
    %c0_44 = arith.constant 0 : index
    %c0_45 = arith.constant 0 : index
    %47 = vector.load %arg5[%c2_43, %c0_44, %c0_45] : memref<3x16x16xf32, #tpu.memory_space<vmem>>, vector<1x16x16xf32>
    %48 = vector.shape_cast %47 : vector<1x16x16xf32> to vector<16x16xf32>
    %cst_46 = arith.constant dense<0.000000e+00> : vector<16x512xf32>
    %49 = tpu.matmul %48, %33, %cst_46 {dimension_numbers = #tpu.dot_dimension_numbers<[1], [0], [0], [1], [0, 0, 1, 1], [], []>} : vector<16x16xf32>, vector<16x512xf32>, vector<16x512xf32> -> vector<16x512xf32>
    %c2_47 = arith.constant 2 : index
    %c0_48 = arith.constant 0 : index
    %c0_49 = arith.constant 0 : index
    %50 = vector.load %arg6[%c2_47, %c0_48, %c0_49] : memref<3x512x512xf32, #tpu.memory_space<vmem>>, vector<1x512x512xf32>
    %51 = vector.shape_cast %50 : vector<1x512x512xf32> to vector<512x512xf32>
    %cst_50 = arith.constant dense<0.000000e+00> : vector<16x512xf32>
    %52 = tpu.matmul %49, %51, %cst_50 {dimension_numbers = #tpu.dot_dimension_numbers<[1], [0], [0], [1], [0, 0, 1, 1], [], []>} : vector<16x512xf32>, vector<512x512xf32>, vector<16x512xf32> -> vector<16x512xf32>
    %53 = arith.addf %46, %52 : vector<16x512xf32>
    %c0_51 = arith.constant 0 : index
    %c0_52 = arith.constant 0 : index
    %54 = vector.load %arg7[%c0_51, %c0_52] : memref<2x512xf32, #tpu.memory_space<vmem>>, vector<2x512xf32>
    %55 = vector.extract_strided_slice %54 {offsets = [0, 0], sizes = [1, 512], strides = [1, 1]} : vector<2x512xf32> to vector<1x512xf32>
    %56 = vector.broadcast %55 : vector<1x512xf32> to vector<16x512xf32>
    %57 = arith.addf %53, %56 : vector<16x512xf32>
    %cst_53 = arith.constant 0.000000e+00 : f32
    %58 = vector.broadcast %cst_53 : f32 to vector<16x512xf32>
    %59 = arith.cmpf oge, %57, %58 : vector<16x512xf32>
    %cst_54 = arith.constant 0.00999999977 : f32
    %60 = vector.broadcast %cst_54 : f32 to vector<16x512xf32>
    %61 = arith.mulf %60, %57 : vector<16x512xf32>
    %62 = arith.select %59, %57, %61 : vector<16x512xi1>, vector<16x512xf32>
    %63 = vector.extract_strided_slice %54 {offsets = [1, 0], sizes = [1, 512], strides = [1, 1]} : vector<2x512xf32> to vector<1x512xf32>
    %64 = vector.broadcast %63 : vector<1x512xf32> to vector<16x512xf32>
    %65 = arith.addf %62, %64 : vector<16x512xf32>
    %c0_55 = arith.constant 0 : index
    %c0_56 = arith.constant 0 : index
    %c0_57 = arith.constant 0 : index
    %66 = vector.load %arg8[%c0_55, %c0_56, %c0_57] : memref<3x8x16xf32, #tpu.memory_space<vmem>>, vector<1x8x16xf32>
    %67 = vector.shape_cast %66 : vector<1x8x16xf32> to vector<8x16xf32>
    %cst_58 = arith.constant dense<0.000000e+00> : vector<8x512xf32>
    %68 = tpu.matmul %67, %65, %cst_58 {dimension_numbers = #tpu.dot_dimension_numbers<[1], [0], [0], [1], [0, 0, 1, 1], [], []>} : vector<8x16xf32>, vector<16x512xf32>, vector<8x512xf32> -> vector<8x512xf32>
    %c0_59 = arith.constant 0 : index
    %c0_60 = arith.constant 0 : index
    %c0_61 = arith.constant 0 : index
    %69 = vector.load %arg9[%c0_59, %c0_60, %c0_61] : memref<3x512x256xf32, #tpu.memory_space<vmem>>, vector<1x512x256xf32>
    %70 = vector.shape_cast %69 : vector<1x512x256xf32> to vector<512x256xf32>
    %cst_62 = arith.constant dense<0.000000e+00> : vector<8x256xf32>
    %71 = tpu.matmul %68, %70, %cst_62 {dimension_numbers = #tpu.dot_dimension_numbers<[1], [0], [0], [1], [0, 0, 1, 1], [], []>} : vector<8x512xf32>, vector<512x256xf32>, vector<8x256xf32> -> vector<8x256xf32>
    %c1_63 = arith.constant 1 : index
    %c0_64 = arith.constant 0 : index
    %c0_65 = arith.constant 0 : index
    %72 = vector.load %arg8[%c1_63, %c0_64, %c0_65] : memref<3x8x16xf32, #tpu.memory_space<vmem>>, vector<1x8x16xf32>
    %73 = vector.shape_cast %72 : vector<1x8x16xf32> to vector<8x16xf32>
    %cst_66 = arith.constant dense<0.000000e+00> : vector<8x512xf32>
    %74 = tpu.matmul %73, %65, %cst_66 {dimension_numbers = #tpu.dot_dimension_numbers<[1], [0], [0], [1], [0, 0, 1, 1], [], []>} : vector<8x16xf32>, vector<16x512xf32>, vector<8x512xf32> -> vector<8x512xf32>
    %c1_67 = arith.constant 1 : index
    %c0_68 = arith.constant 0 : index
    %c0_69 = arith.constant 0 : index
    %75 = vector.load %arg9[%c1_67, %c0_68, %c0_69] : memref<3x512x256xf32, #tpu.memory_space<vmem>>, vector<1x512x256xf32>
    %76 = vector.shape_cast %75 : vector<1x512x256xf32> to vector<512x256xf32>
    %cst_70 = arith.constant dense<0.000000e+00> : vector<8x256xf32>
    %77 = tpu.matmul %74, %76, %cst_70 {dimension_numbers = #tpu.dot_dimension_numbers<[1], [0], [0], [1], [0, 0, 1, 1], [], []>} : vector<8x512xf32>, vector<512x256xf32>, vector<8x256xf32> -> vector<8x256xf32>
    %78 = arith.addf %71, %77 : vector<8x256xf32>
    %c2_71 = arith.constant 2 : index
    %c0_72 = arith.constant 0 : index
    %c0_73 = arith.constant 0 : index
    %79 = vector.load %arg8[%c2_71, %c0_72, %c0_73] : memref<3x8x16xf32, #tpu.memory_space<vmem>>, vector<1x8x16xf32>
    %80 = vector.shape_cast %79 : vector<1x8x16xf32> to vector<8x16xf32>
    %cst_74 = arith.constant dense<0.000000e+00> : vector<8x512xf32>
    %81 = tpu.matmul %80, %65, %cst_74 {dimension_numbers = #tpu.dot_dimension_numbers<[1], [0], [0], [1], [0, 0, 1, 1], [], []>} : vector<8x16xf32>, vector<16x512xf32>, vector<8x512xf32> -> vector<8x512xf32>
    %c2_75 = arith.constant 2 : index
    %c0_76 = arith.constant 0 : index
    %c0_77 = arith.constant 0 : index
    %82 = vector.load %arg9[%c2_75, %c0_76, %c0_77] : memref<3x512x256xf32, #tpu.memory_space<vmem>>, vector<1x512x256xf32>
    %83 = vector.shape_cast %82 : vector<1x512x256xf32> to vector<512x256xf32>
    %cst_78 = arith.constant dense<0.000000e+00> : vector<8x256xf32>
    %84 = tpu.matmul %81, %83, %cst_78 {dimension_numbers = #tpu.dot_dimension_numbers<[1], [0], [0], [1], [0, 0, 1, 1], [], []>} : vector<8x512xf32>, vector<512x256xf32>, vector<8x256xf32> -> vector<8x256xf32>
    %85 = arith.addf %78, %84 : vector<8x256xf32>
    %c0_79 = arith.constant 0 : index
    %c0_80 = arith.constant 0 : index
    %86 = vector.load %arg10[%c0_79, %c0_80] : memref<2x256xf32, #tpu.memory_space<vmem>>, vector<2x256xf32>
    %87 = vector.extract_strided_slice %86 {offsets = [0, 0], sizes = [1, 256], strides = [1, 1]} : vector<2x256xf32> to vector<1x256xf32>
    %88 = vector.broadcast %87 : vector<1x256xf32> to vector<8x256xf32>
    %89 = arith.addf %85, %88 : vector<8x256xf32>
    %cst_81 = arith.constant 0.000000e+00 : f32
    %90 = vector.broadcast %cst_81 : f32 to vector<8x256xf32>
    %91 = arith.cmpf oge, %89, %90 : vector<8x256xf32>
    %cst_82 = arith.constant 0.00999999977 : f32
    %92 = vector.broadcast %cst_82 : f32 to vector<8x256xf32>
    %93 = arith.mulf %92, %89 : vector<8x256xf32>
    %94 = arith.select %91, %89, %93 : vector<8x256xi1>, vector<8x256xf32>
    %95 = vector.extract_strided_slice %86 {offsets = [1, 0], sizes = [1, 256], strides = [1, 1]} : vector<2x256xf32> to vector<1x256xf32>
    %96 = vector.broadcast %95 : vector<1x256xf32> to vector<8x256xf32>
    %97 = arith.addf %94, %96 : vector<8x256xf32>
    %c0_83 = arith.constant 0 : index
    %c0_84 = arith.constant 0 : index
    %c0_85 = arith.constant 0 : index
    %98 = vector.load %arg11[%c0_83, %c0_84, %c0_85] : memref<3x4x8xf32, #tpu.memory_space<vmem>>, vector<1x4x8xf32>
    %99 = vector.shape_cast %98 : vector<1x4x8xf32> to vector<4x8xf32>
    %cst_86 = arith.constant dense<0.000000e+00> : vector<4x256xf32>
    %100 = tpu.matmul %99, %97, %cst_86 {dimension_numbers = #tpu.dot_dimension_numbers<[1], [0], [0], [1], [0, 0, 1, 1], [], []>} : vector<4x8xf32>, vector<8x256xf32>, vector<4x256xf32> -> vector<4x256xf32>
    %c0_87 = arith.constant 0 : index
    %c0_88 = arith.constant 0 : index
    %c0_89 = arith.constant 0 : index
    %101 = vector.load %arg12[%c0_87, %c0_88, %c0_89] : memref<3x256x128xf32, #tpu.memory_space<vmem>>, vector<1x256x128xf32>
    %102 = vector.shape_cast %101 : vector<1x256x128xf32> to vector<256x128xf32>
    %cst_90 = arith.constant dense<0.000000e+00> : vector<4x128xf32>
    %103 = tpu.matmul %100, %102, %cst_90 {dimension_numbers = #tpu.dot_dimension_numbers<[1], [0], [0], [1], [0, 0, 1, 1], [], []>} : vector<4x256xf32>, vector<256x128xf32>, vector<4x128xf32> -> vector<4x128xf32>
    %c1_91 = arith.constant 1 : index
    %c0_92 = arith.constant 0 : index
    %c0_93 = arith.constant 0 : index
    %104 = vector.load %arg11[%c1_91, %c0_92, %c0_93] : memref<3x4x8xf32, #tpu.memory_space<vmem>>, vector<1x4x8xf32>
    %105 = vector.shape_cast %104 : vector<1x4x8xf32> to vector<4x8xf32>
    %cst_94 = arith.constant dense<0.000000e+00> : vector<4x256xf32>
    %106 = tpu.matmul %105, %97, %cst_94 {dimension_numbers = #tpu.dot_dimension_numbers<[1], [0], [0], [1], [0, 0, 1, 1], [], []>} : vector<4x8xf32>, vector<8x256xf32>, vector<4x256xf32> -> vector<4x256xf32>
    %c1_95 = arith.constant 1 : index
    %c0_96 = arith.constant 0 : index
    %c0_97 = arith.constant 0 : index
    %107 = vector.load %arg12[%c1_95, %c0_96, %c0_97] : memref<3x256x128xf32, #tpu.memory_space<vmem>>, vector<1x256x128xf32>
    %108 = vector.shape_cast %107 : vector<1x256x128xf32> to vector<256x128xf32>
    %cst_98 = arith.constant dense<0.000000e+00> : vector<4x128xf32>
    %109 = tpu.matmul %106, %108, %cst_98 {dimension_numbers = #tpu.dot_dimension_numbers<[1], [0], [0], [1], [0, 0, 1, 1], [], []>} : vector<4x256xf32>, vector<256x128xf32>, vector<4x128xf32> -> vector<4x128xf32>
    %110 = arith.addf %103, %109 : vector<4x128xf32>
    %c2_99 = arith.constant 2 : index
    %c0_100 = arith.constant 0 : index
    %c0_101 = arith.constant 0 : index
    %111 = vector.load %arg11[%c2_99, %c0_100, %c0_101] : memref<3x4x8xf32, #tpu.memory_space<vmem>>, vector<1x4x8xf32>
    %112 = vector.shape_cast %111 : vector<1x4x8xf32> to vector<4x8xf32>
    %cst_102 = arith.constant dense<0.000000e+00> : vector<4x256xf32>
    %113 = tpu.matmul %112, %97, %cst_102 {dimension_numbers = #tpu.dot_dimension_numbers<[1], [0], [0], [1], [0, 0, 1, 1], [], []>} : vector<4x8xf32>, vector<8x256xf32>, vector<4x256xf32> -> vector<4x256xf32>
    %c2_103 = arith.constant 2 : index
    %c0_104 = arith.constant 0 : index
    %c0_105 = arith.constant 0 : index
    %114 = vector.load %arg12[%c2_103, %c0_104, %c0_105] : memref<3x256x128xf32, #tpu.memory_space<vmem>>, vector<1x256x128xf32>
    %115 = vector.shape_cast %114 : vector<1x256x128xf32> to vector<256x128xf32>
    %cst_106 = arith.constant dense<0.000000e+00> : vector<4x128xf32>
    %116 = tpu.matmul %113, %115, %cst_106 {dimension_numbers = #tpu.dot_dimension_numbers<[1], [0], [0], [1], [0, 0, 1, 1], [], []>} : vector<4x256xf32>, vector<256x128xf32>, vector<4x128xf32> -> vector<4x128xf32>
    %117 = arith.addf %110, %116 : vector<4x128xf32>
    %c0_107 = arith.constant 0 : index
    %c0_108 = arith.constant 0 : index
    %118 = vector.load %arg13[%c0_107, %c0_108] : memref<2x128xf32, #tpu.memory_space<vmem>>, vector<2x128xf32>
    %119 = vector.extract_strided_slice %118 {offsets = [0, 0], sizes = [1, 128], strides = [1, 1]} : vector<2x128xf32> to vector<1x128xf32>
    %120 = vector.broadcast %119 : vector<1x128xf32> to vector<4x128xf32>
    %121 = arith.addf %117, %120 : vector<4x128xf32>
    %cst_109 = arith.constant 0.000000e+00 : f32
    %122 = vector.broadcast %cst_109 : f32 to vector<4x128xf32>
    %123 = arith.cmpf oge, %121, %122 : vector<4x128xf32>
    %cst_110 = arith.constant 0.00999999977 : f32
    %124 = vector.broadcast %cst_110 : f32 to vector<4x128xf32>
    %125 = arith.mulf %124, %121 : vector<4x128xf32>
    %126 = arith.select %123, %121, %125 : vector<4x128xi1>, vector<4x128xf32>
    %127 = vector.extract_strided_slice %118 {offsets = [1, 0], sizes = [1, 128], strides = [1, 1]} : vector<2x128xf32> to vector<1x128xf32>
    %128 = vector.broadcast %127 : vector<1x128xf32> to vector<4x128xf32>
    %129 = arith.addf %126, %128 : vector<4x128xf32>
    %c0_111 = arith.constant 0 : index
    %c0_112 = arith.constant 0 : index
    %c0_113 = arith.constant 0 : index
    %130 = vector.load %arg14[%c0_111, %c0_112, %c0_113] : memref<3x2x4xf32, #tpu.memory_space<vmem>>, vector<1x2x4xf32>
    %131 = vector.shape_cast %130 : vector<1x2x4xf32> to vector<2x4xf32>
    %cst_114 = arith.constant dense<0.000000e+00> : vector<2x128xf32>
    %132 = tpu.matmul %131, %129, %cst_114 {dimension_numbers = #tpu.dot_dimension_numbers<[1], [0], [0], [1], [0, 0, 1, 1], [], []>} : vector<2x4xf32>, vector<4x128xf32>, vector<2x128xf32> -> vector<2x128xf32>
    %c0_115 = arith.constant 0 : index
    %c0_116 = arith.constant 0 : index
    %c0_117 = arith.constant 0 : index
    %133 = vector.load %arg15[%c0_115, %c0_116, %c0_117] : memref<3x128x64xf32, #tpu.memory_space<vmem>>, vector<1x128x64xf32>
    %134 = vector.shape_cast %133 : vector<1x128x64xf32> to vector<128x64xf32>
    %cst_118 = arith.constant dense<0.000000e+00> : vector<2x64xf32>
    %135 = tpu.matmul %132, %134, %cst_118 {dimension_numbers = #tpu.dot_dimension_numbers<[1], [0], [0], [1], [0, 0, 1, 1], [], []>} : vector<2x128xf32>, vector<128x64xf32>, vector<2x64xf32> -> vector<2x64xf32>
    %c1_119 = arith.constant 1 : index
    %c0_120 = arith.constant 0 : index
    %c0_121 = arith.constant 0 : index
    %136 = vector.load %arg14[%c1_119, %c0_120, %c0_121] : memref<3x2x4xf32, #tpu.memory_space<vmem>>, vector<1x2x4xf32>
    %137 = vector.shape_cast %136 : vector<1x2x4xf32> to vector<2x4xf32>
    %cst_122 = arith.constant dense<0.000000e+00> : vector<2x128xf32>
    %138 = tpu.matmul %137, %129, %cst_122 {dimension_numbers = #tpu.dot_dimension_numbers<[1], [0], [0], [1], [0, 0, 1, 1], [], []>} : vector<2x4xf32>, vector<4x128xf32>, vector<2x128xf32> -> vector<2x128xf32>
    %c1_123 = arith.constant 1 : index
    %c0_124 = arith.constant 0 : index
    %c0_125 = arith.constant 0 : index
    %139 = vector.load %arg15[%c1_123, %c0_124, %c0_125] : memref<3x128x64xf32, #tpu.memory_space<vmem>>, vector<1x128x64xf32>
    %140 = vector.shape_cast %139 : vector<1x128x64xf32> to vector<128x64xf32>
    %cst_126 = arith.constant dense<0.000000e+00> : vector<2x64xf32>
    %141 = tpu.matmul %138, %140, %cst_126 {dimension_numbers = #tpu.dot_dimension_numbers<[1], [0], [0], [1], [0, 0, 1, 1], [], []>} : vector<2x128xf32>, vector<128x64xf32>, vector<2x64xf32> -> vector<2x64xf32>
    %142 = arith.addf %135, %141 : vector<2x64xf32>
    %c2_127 = arith.constant 2 : index
    %c0_128 = arith.constant 0 : index
    %c0_129 = arith.constant 0 : index
    %143 = vector.load %arg14[%c2_127, %c0_128, %c0_129] : memref<3x2x4xf32, #tpu.memory_space<vmem>>, vector<1x2x4xf32>
    %144 = vector.shape_cast %143 : vector<1x2x4xf32> to vector<2x4xf32>
    %cst_130 = arith.constant dense<0.000000e+00> : vector<2x128xf32>
    %145 = tpu.matmul %144, %129, %cst_130 {dimension_numbers = #tpu.dot_dimension_numbers<[1], [0], [0], [1], [0, 0, 1, 1], [], []>} : vector<2x4xf32>, vector<4x128xf32>, vector<2x128xf32> -> vector<2x128xf32>
    %c2_131 = arith.constant 2 : index
    %c0_132 = arith.constant 0 : index
    %c0_133 = arith.constant 0 : index
    %146 = vector.load %arg15[%c2_131, %c0_132, %c0_133] : memref<3x128x64xf32, #tpu.memory_space<vmem>>, vector<1x128x64xf32>
    %147 = vector.shape_cast %146 : vector<1x128x64xf32> to vector<128x64xf32>
    %cst_134 = arith.constant dense<0.000000e+00> : vector<2x64xf32>
    %148 = tpu.matmul %145, %147, %cst_134 {dimension_numbers = #tpu.dot_dimension_numbers<[1], [0], [0], [1], [0, 0, 1, 1], [], []>} : vector<2x128xf32>, vector<128x64xf32>, vector<2x64xf32> -> vector<2x64xf32>
    %149 = arith.addf %142, %148 : vector<2x64xf32>
    %c0_135 = arith.constant 0 : index
    %c0_136 = arith.constant 0 : index
    %150 = vector.load %arg16[%c0_135, %c0_136] : memref<2x64xf32, #tpu.memory_space<vmem>>, vector<2x64xf32>
    %151 = vector.extract_strided_slice %150 {offsets = [0, 0], sizes = [1, 64], strides = [1, 1]} : vector<2x64xf32> to vector<1x64xf32>
    %152 = vector.broadcast %151 : vector<1x64xf32> to vector<2x64xf32>
    %153 = arith.addf %149, %152 : vector<2x64xf32>
    %cst_137 = arith.constant 0.000000e+00 : f32
    %154 = vector.broadcast %cst_137 : f32 to vector<2x64xf32>
    %155 = arith.cmpf oge, %153, %154 : vector<2x64xf32>
    %cst_138 = arith.constant 0.00999999977 : f32
    %156 = vector.broadcast %cst_138 : f32 to vector<2x64xf32>
    %157 = arith.mulf %156, %153 : vector<2x64xf32>
    %158 = arith.select %155, %153, %157 : vector<2x64xi1>, vector<2x64xf32>
    %159 = vector.extract_strided_slice %150 {offsets = [1, 0], sizes = [1, 64], strides = [1, 1]} : vector<2x64xf32> to vector<1x64xf32>
    %160 = vector.broadcast %159 : vector<1x64xf32> to vector<2x64xf32>
    %161 = arith.addf %158, %160 : vector<2x64xf32>
    %c0_139 = arith.constant 0 : index
    %c0_140 = arith.constant 0 : index
    %c0_141 = arith.constant 0 : index
    %162 = vector.load %arg17[%c0_139, %c0_140, %c0_141] : memref<3x1x2xf32, #tpu.memory_space<vmem>>, vector<1x1x2xf32>
    %163 = vector.shape_cast %162 : vector<1x1x2xf32> to vector<1x2xf32>
    %cst_142 = arith.constant dense<0.000000e+00> : vector<1x64xf32>
    %164 = tpu.matmul %163, %161, %cst_142 {dimension_numbers = #tpu.dot_dimension_numbers<[1], [0], [0], [1], [0, 0, 1, 1], [], []>} : vector<1x2xf32>, vector<2x64xf32>, vector<1x64xf32> -> vector<1x64xf32>
    %c0_143 = arith.constant 0 : index
    %c0_144 = arith.constant 0 : index
    %c0_145 = arith.constant 0 : index
    %165 = vector.load %arg18[%c0_143, %c0_144, %c0_145] : memref<3x64x32xf32, #tpu.memory_space<vmem>>, vector<1x64x32xf32>
    %166 = vector.shape_cast %165 : vector<1x64x32xf32> to vector<64x32xf32>
    %cst_146 = arith.constant dense<0.000000e+00> : vector<1x32xf32>
    %167 = tpu.matmul %164, %166, %cst_146 {dimension_numbers = #tpu.dot_dimension_numbers<[1], [0], [0], [1], [0, 0, 1, 1], [], []>} : vector<1x64xf32>, vector<64x32xf32>, vector<1x32xf32> -> vector<1x32xf32>
    %c1_147 = arith.constant 1 : index
    %c0_148 = arith.constant 0 : index
    %c0_149 = arith.constant 0 : index
    %168 = vector.load %arg17[%c1_147, %c0_148, %c0_149] : memref<3x1x2xf32, #tpu.memory_space<vmem>>, vector<1x1x2xf32>
    %169 = vector.shape_cast %168 : vector<1x1x2xf32> to vector<1x2xf32>
    %cst_150 = arith.constant dense<0.000000e+00> : vector<1x64xf32>
    %170 = tpu.matmul %169, %161, %cst_150 {dimension_numbers = #tpu.dot_dimension_numbers<[1], [0], [0], [1], [0, 0, 1, 1], [], []>} : vector<1x2xf32>, vector<2x64xf32>, vector<1x64xf32> -> vector<1x64xf32>
    %c1_151 = arith.constant 1 : index
    %c0_152 = arith.constant 0 : index
    %c0_153 = arith.constant 0 : index
    %171 = vector.load %arg18[%c1_151, %c0_152, %c0_153] : memref<3x64x32xf32, #tpu.memory_space<vmem>>, vector<1x64x32xf32>
    %172 = vector.shape_cast %171 : vector<1x64x32xf32> to vector<64x32xf32>
    %cst_154 = arith.constant dense<0.000000e+00> : vector<1x32xf32>
    %173 = tpu.matmul %170, %172, %cst_154 {dimension_numbers = #tpu.dot_dimension_numbers<[1], [0], [0], [1], [0, 0, 1, 1], [], []>} : vector<1x64xf32>, vector<64x32xf32>, vector<1x32xf32> -> vector<1x32xf32>
    %174 = arith.addf %167, %173 : vector<1x32xf32>
    %c2_155 = arith.constant 2 : index
    %c0_156 = arith.constant 0 : index
    %c0_157 = arith.constant 0 : index
    %175 = vector.load %arg17[%c2_155, %c0_156, %c0_157] : memref<3x1x2xf32, #tpu.memory_space<vmem>>, vector<1x1x2xf32>
    %176 = vector.shape_cast %175 : vector<1x1x2xf32> to vector<1x2xf32>
    %cst_158 = arith.constant dense<0.000000e+00> : vector<1x64xf32>
    %177 = tpu.matmul %176, %161, %cst_158 {dimension_numbers = #tpu.dot_dimension_numbers<[1], [0], [0], [1], [0, 0, 1, 1], [], []>} : vector<1x2xf32>, vector<2x64xf32>, vector<1x64xf32> -> vector<1x64xf32>
    %c2_159 = arith.constant 2 : index
    %c0_160 = arith.constant 0 : index
    %c0_161 = arith.constant 0 : index
    %178 = vector.load %arg18[%c2_159, %c0_160, %c0_161] : memref<3x64x32xf32, #tpu.memory_space<vmem>>, vector<1x64x32xf32>
    %179 = vector.shape_cast %178 : vector<1x64x32xf32> to vector<64x32xf32>
    %cst_162 = arith.constant dense<0.000000e+00> : vector<1x32xf32>
    %180 = tpu.matmul %177, %179, %cst_162 {dimension_numbers = #tpu.dot_dimension_numbers<[1], [0], [0], [1], [0, 0, 1, 1], [], []>} : vector<1x64xf32>, vector<64x32xf32>, vector<1x32xf32> -> vector<1x32xf32>
    %181 = arith.addf %174, %180 : vector<1x32xf32>
    %c0_163 = arith.constant 0 : index
    %c0_164 = arith.constant 0 : index
    %182 = vector.load %arg19[%c0_163, %c0_164] : memref<2x32xf32, #tpu.memory_space<vmem>>, vector<2x32xf32>
    %183 = vector.extract_strided_slice %182 {offsets = [0, 0], sizes = [1, 32], strides = [1, 1]} : vector<2x32xf32> to vector<1x32xf32>
    %184 = arith.addf %181, %183 : vector<1x32xf32>
    %cst_165 = arith.constant 0.000000e+00 : f32
    %185 = vector.broadcast %cst_165 : f32 to vector<1x32xf32>
    %186 = arith.cmpf oge, %184, %185 : vector<1x32xf32>
    %cst_166 = arith.constant 0.00999999977 : f32
    %187 = vector.broadcast %cst_166 : f32 to vector<1x32xf32>
    %188 = arith.mulf %187, %184 : vector<1x32xf32>
    %189 = arith.select %186, %184, %188 : vector<1x32xi1>, vector<1x32xf32>
    %190 = vector.extract_strided_slice %182 {offsets = [1, 0], sizes = [1, 32], strides = [1, 1]} : vector<2x32xf32> to vector<1x32xf32>
    %191 = arith.addf %189, %190 : vector<1x32xf32>
    %cst_167 = arith.constant dense<0.000000e+00> : vector<32xf32>
    %192 = vector.multi_reduction <add>, %191, %cst_167 [0] : vector<1x32xf32> to vector<32xf32>
    %193 = vector.shape_cast %192 : vector<32xf32> to vector<1x32xf32>
    %c0_168 = arith.constant 0 : index
    %c0_169 = arith.constant 0 : index
    %194 = vector.load %arg20[%c0_168, %c0_169] : memref<32x4xf32, #tpu.memory_space<vmem>>, vector<32x4xf32>
    %cst_170 = arith.constant dense<0.000000e+00> : vector<1x4xf32>
    %195 = tpu.matmul %193, %194, %cst_170 {dimension_numbers = #tpu.dot_dimension_numbers<[1], [0], [0], [1], [0, 0, 1, 1], [], []>} : vector<1x32xf32>, vector<32x4xf32>, vector<1x4xf32> -> vector<1x4xf32>
    %c0_171 = arith.constant 0 : index
    %c0_172 = arith.constant 0 : index
    %196 = vector.load %arg21[%c0_171, %c0_172] : memref<1x4xf32, #tpu.memory_space<vmem>>, vector<1x4xf32>
    %197 = arith.addf %195, %196 : vector<1x4xf32>
    %cst_173 = arith.constant dense<0xFF800000> : vector<1xf32>
    %198 = vector.multi_reduction <maximumf>, %197, %cst_173 [1] : vector<1x4xf32> to vector<1xf32>
    %199 = vector.shape_cast %198 : vector<1xf32> to vector<1x1xf32>
    %200 = vector.broadcast %199 : vector<1x1xf32> to vector<1x4xf32>
    %201 = arith.subf %197, %200 : vector<1x4xf32>
    %202 = math.exp %201 : vector<1x4xf32>
    %cst_174 = arith.constant dense<0.000000e+00> : vector<1xf32>
    %203 = vector.multi_reduction <add>, %202, %cst_174 [1] : vector<1x4xf32> to vector<1xf32>
    %204 = vector.shape_cast %203 : vector<1xf32> to vector<1x1xf32>
    %205 = vector.broadcast %204 : vector<1x1xf32> to vector<1x4xf32>
    %206 = arith.divf %202, %205 : vector<1x4xf32>
    %c0_175 = arith.constant 0 : index
    %c0_176 = arith.constant 0 : index
    %c0_177 = arith.constant 0 : index
    %207 = vector.load %arg22[%c0_175, %c0_176, %c0_177] : memref<1x1x4xf32, #tpu.memory_space<vmem>>, vector<1x1x4xf32>
    %208 = vector.shape_cast %207 : vector<1x1x4xf32> to vector<1x4xf32>
    %209 = vector.shape_cast %206 : vector<1x4xf32> to vector<1x1x4xf32>
    tpu.vector_store %arg22[%c0_175, %c0_176, %c0_177], %209 {strides = array<i32>} : memref<1x1x4xf32, #tpu.memory_space<vmem>>, vector<1x1x4xf32>,
    return
  }
  func.func @transform_0(%arg0: i32) -> (i32, i32, i32) {
    %c0_i32 = arith.constant 0 : i32
    %c0_i32_0 = arith.constant 0 : i32
    %c0_i32_1 = arith.constant 0 : i32
    return %arg0, %c0_i32, %c0_i32_0 : i32, i32, i32
  }
  func.func @transform_1(%arg0: i32) -> (i32, i32, i32) {
    %c0_i32 = arith.constant 0 : i32
    %c0_i32_0 = arith.constant 0 : i32
    %c0_i32_1 = arith.constant 0 : i32
    %c0_i32_2 = arith.constant 0 : i32
    return %c0_i32, %c0_i32_0, %c0_i32_1 : i32, i32, i32
  }
  func.func @transform_2(%arg0: i32) -> (i32, i32, i32) {
    %c0_i32 = arith.constant 0 : i32
    %c0_i32_0 = arith.constant 0 : i32
    %c0_i32_1 = arith.constant 0 : i32
    %c0_i32_2 = arith.constant 0 : i32
    return %c0_i32, %c0_i32_0, %c0_i32_1 : i32, i32, i32
  }
  func.func @transform_3(%arg0: i32) -> (i32, i32) {
    %c0_i32 = arith.constant 0 : i32
    %c0_i32_0 = arith.constant 0 : i32
    %c0_i32_1 = arith.constant 0 : i32
    return %c0_i32, %c0_i32_0 : i32, i32
  }
  func.func @transform_4(%arg0: i32) -> (i32, i32, i32) {
    %c0_i32 = arith.constant 0 : i32
    %c0_i32_0 = arith.constant 0 : i32
    %c0_i32_1 = arith.constant 0 : i32
    %c0_i32_2 = arith.constant 0 : i32
    return %c0_i32, %c0_i32_0, %c0_i32_1 : i32, i32, i32
  }
  func.func @transform_5(%arg0: i32) -> (i32, i32, i32) {
    %c0_i32 = arith.constant 0 : i32
    %c0_i32_0 = arith.constant 0 : i32
    %c0_i32_1 = arith.constant 0 : i32
    %c0_i32_2 = arith.constant 0 : i32
    return %c0_i32, %c0_i32_0, %c0_i32_1 : i32, i32, i32
  }
  func.func @transform_6(%arg0: i32) -> (i32, i32) {
    %c0_i32 = arith.constant 0 : i32
    %c0_i32_0 = arith.constant 0 : i32
    %c0_i32_1 = arith.constant 0 : i32
    return %c0_i32, %c0_i32_0 : i32, i32
  }
  func.func @transform_7(%arg0: i32) -> (i32, i32, i32) {
    %c0_i32 = arith.constant 0 : i32
    %c0_i32_0 = arith.constant 0 : i32
    %c0_i32_1 = arith.constant 0 : i32
    %c0_i32_2 = arith.constant 0 : i32
    return %c0_i32, %c0_i32_0, %c0_i32_1 : i32, i32, i32
  }
  func.func @transform_8(%arg0: i32) -> (i32, i32, i32) {
    %c0_i32 = arith.constant 0 : i32
    %c0_i32_0 = arith.constant 0 : i32
    %c0_i32_1 = arith.constant 0 : i32
    %c0_i32_2 = arith.constant 0 : i32
    return %c0_i32, %c0_i32_0, %c0_i32_1 : i32, i32, i32
  }
  func.func @transform_9(%arg0: i32) -> (i32, i32) {
    %c0_i32 = arith.constant 0 : i32
    %c0_i32_0 = arith.constant 0 : i32
    %c0_i32_1 = arith.constant 0 : i32
    return %c0_i32, %c0_i32_0 : i32, i32
  }
  func.func @transform_10(%arg0: i32) -> (i32, i32, i32) {
    %c0_i32 = arith.constant 0 : i32
    %c0_i32_0 = arith.constant 0 : i32
    %c0_i32_1 = arith.constant 0 : i32
    %c0_i32_2 = arith.constant 0 : i32
    return %c0_i32, %c0_i32_0, %c0_i32_1 : i32, i32, i32
  }
  func.func @transform_11(%arg0: i32) -> (i32, i32, i32) {
    %c0_i32 = arith.constant 0 : i32
    %c0_i32_0 = arith.constant 0 : i32
    %c0_i32_1 = arith.constant 0 : i32
    %c0_i32_2 = arith.constant 0 : i32
    return %c0_i32, %c0_i32_0, %c0_i32_1 : i32, i32, i32
  }
  func.func @transform_12(%arg0: i32) -> (i32, i32) {
    %c0_i32 = arith.constant 0 : i32
    %c0_i32_0 = arith.constant 0 : i32
    %c0_i32_1 = arith.constant 0 : i32
    return %c0_i32, %c0_i32_0 : i32, i32
  }
  func.func @transform_13(%arg0: i32) -> (i32, i32, i32) {
    %c0_i32 = arith.constant 0 : i32
    %c0_i32_0 = arith.constant 0 : i32
    %c0_i32_1 = arith.constant 0 : i32
    %c0_i32_2 = arith.constant 0 : i32
    return %c0_i32, %c0_i32_0, %c0_i32_1 : i32, i32, i32
  }
  func.func @transform_14(%arg0: i32) -> (i32, i32, i32) {
    %c0_i32 = arith.constant 0 : i32
    %c0_i32_0 = arith.constant 0 : i32
    %c0_i32_1 = arith.constant 0 : i32
    %c0_i32_2 = arith.constant 0 : i32
    return %c0_i32, %c0_i32_0, %c0_i32_1 : i32, i32, i32
  }
  func.func @transform_15(%arg0: i32) -> (i32, i32) {
    %c0_i32 = arith.constant 0 : i32
    %c0_i32_0 = arith.constant 0 : i32
    %c0_i32_1 = arith.constant 0 : i32
    return %c0_i32, %c0_i32_0 : i32, i32
  }
  func.func @transform_16(%arg0: i32) -> (i32, i32, i32) {
    %c0_i32 = arith.constant 0 : i32
    %c0_i32_0 = arith.constant 0 : i32
    %c0_i32_1 = arith.constant 0 : i32
    %c0_i32_2 = arith.constant 0 : i32
    return %c0_i32, %c0_i32_0, %c0_i32_1 : i32, i32, i32
  }
  func.func @transform_17(%arg0: i32) -> (i32, i32, i32) {
    %c0_i32 = arith.constant 0 : i32
    %c0_i32_0 = arith.constant 0 : i32
    %c0_i32_1 = arith.constant 0 : i32
    %c0_i32_2 = arith.constant 0 : i32
    return %c0_i32, %c0_i32_0, %c0_i32_1 : i32, i32, i32
  }
  func.func @transform_18(%arg0: i32) -> (i32, i32) {
    %c0_i32 = arith.constant 0 : i32
    %c0_i32_0 = arith.constant 0 : i32
    %c0_i32_1 = arith.constant 0 : i32
    return %c0_i32, %c0_i32_0 : i32, i32
  }
  func.func @transform_19(%arg0: i32) -> (i32, i32) {
    %c0_i32 = arith.constant 0 : i32
    %c0_i32_0 = arith.constant 0 : i32
    %c0_i32_1 = arith.constant 0 : i32
    return %c0_i32, %c0_i32_0 : i32, i32
  }
  func.func @transform_20(%arg0: i32) -> (i32, i32) {
    %c0_i32 = arith.constant 0 : i32
    %c0_i32_0 = arith.constant 0 : i32
    %c0_i32_1 = arith.constant 0 : i32
    return %c0_i32, %c0_i32_0 : i32, i32
  }
  func.func @transform_21(%arg0: i32) -> (i32, i32, i32) {
    %c0_i32 = arith.constant 0 : i32
    %c0_i32_0 = arith.constant 0 : i32
    %c0_i32_1 = arith.constant 0 : i32
    return %arg0, %c0_i32, %c0_i32_0 : i32, i32, i32
  }
}

</mosaic_0001>

<llo_original>
// kernel: tpu_custom_call.1
$region0: #{tpu_custom_call.1}
  #allocation0 [shape = 'u32[]', space=smem, size = 0x4, offset = 0x4, fixed_abs, tag = 'smem constant byte address 0x4 - core index']
  #allocation1 [shape = 'u32[144,128]{1,0:T(1,128)}', space=vmem, size = 0x12000, scoped, tag = 'internal scratch']
  %s0 = inlined_call_operand.hbm [shape: f32[2,16,16], index: 0, kind: input, shape index: {}]
  %s1 = inlined_call_operand.hbm [shape: f32[3,16,16], index: 1, kind: input, shape index: {}]
  %s2 = inlined_call_operand.hbm [shape: f32[3,16,512], index: 2, kind: input, shape index: {}]
  %s3 = inlined_call_operand.hbm [shape: f32[2,512], index: 3, kind: input, shape index: {}]
  %s4 = inlined_call_operand.hbm [shape: f32[3,16,16], index: 4, kind: input, shape index: {}]
  %s5 = inlined_call_operand.hbm [shape: f32[3,512,512], index: 5, kind: input, shape index: {}]
  %s6 = inlined_call_operand.hbm [shape: f32[2,512], index: 6, kind: input, shape index: {}]
  %s7 = inlined_call_operand.hbm [shape: f32[3,8,16], index: 7, kind: input, shape index: {}]
  %s8 = inlined_call_operand.hbm [shape: f32[3,512,256], index: 8, kind: input, shape index: {}]
  %s9 = inlined_call_operand.hbm [shape: f32[2,256], index: 9, kind: input, shape index: {}]
  %s10 = inlined_call_operand.hbm [shape: f32[3,4,8], index: 10, kind: input, shape index: {}]
  %s11 = inlined_call_operand.hbm [shape: f32[3,256,128], index: 11, kind: input, shape index: {}]
  %s12 = inlined_call_operand.hbm [shape: f32[2,128], index: 12, kind: input, shape index: {}]
  %s13 = inlined_call_operand.hbm [shape: f32[3,2,4], index: 13, kind: input, shape index: {}]
  %s14 = inlined_call_operand.vmem [shape: f32[3,128,64], index: 14, kind: input, shape index: {}]
  %s15 = inlined_call_operand.hbm [shape: f32[2,64], index: 15, kind: input, shape index: {}]
  %s16 = inlined_call_operand.vmem [shape: f32[3,1,2], index: 16, kind: input, shape index: {}]
  %s17 = inlined_call_operand.vmem [shape: f32[3,64,32], index: 17, kind: input, shape index: {}]
  %s18 = inlined_call_operand.hbm [shape: f32[2,32], index: 18, kind: input, shape index: {}]
  %s19 = inlined_call_operand.vmem [shape: f32[32,4], index: 19, kind: input, shape index: {}]
  %s20 = inlined_call_operand.hbm [shape: f32[1,4], index: 20, kind: input, shape index: {}]
  %s21 = inlined_call_operand.hbm [shape: f32[2,1,4], index: 21, kind: output, shape index: {}]
  %s22 = sld [smem:[#allocation0]]
  $region185: #{tpu_custom_call.1} parent=0
    _
  %s24 = ssub.s32 1, %s22
  %s25 = scalar_select 0, %s24, %s22
  $region1: #{tpu_custom_call.1} parent=0
    #allocation2 [shape = 'u8[16384]{0}', space=vmem, size = 0x4000, scoped, tag = 'input window, operand 0']
    #allocation3 [shape = 's32[2]{0}', space=sflag, size = 0x8, scoped, tag = 'scoped memory for tpu_custom_call.1']
    #allocation4 [shape = 's32[2]{0}', space=sflag, size = 0x8, scoped, tag = 'scoped memory for tpu_custom_call.1']
    #allocation5 [shape = 'u8[24576]{0}', space=vmem, size = 0x6000, scoped, tag = 'input window, operand 1, single buffered']
    #allocation6 [shape = 's32[1]{0}', space=sflag, size = 0x4, scoped, tag = 'scoped memory for tpu_custom_call.1']
    #allocation7 [shape = 'u8[98304]{0}', space=vmem, size = 0x18000, scoped, tag = 'input window, operand 2, single buffered']
    #allocation8 [shape = 'u8[4096]{0}', space=vmem, size = 0x1000, scoped, tag = 'input window, operand 3, single buffered']
    #allocation9 [shape = 's32[1]{0}', space=sflag, size = 0x4, scoped, tag = 'scoped memory for tpu_custom_call.1']
    #allocation10 [shape = 'u8[24576]{0}', space=vmem, size = 0x6000, scoped, tag = 'input window, operand 4, single buffered']
    #allocation11 [shape = 'u8[3145728]{0}', space=vmem, size = 0x300000, scoped, tag = 'input window, operand 5, single buffered']
    #allocation12 [shape = 's32[1]{0}', space=sflag, size = 0x4, scoped, tag = 'scoped memory for tpu_custom_call.1']
    #allocation13 [shape = 'u8[4096]{0}', space=vmem, size = 0x1000, scoped, tag = 'input window, operand 6, single buffered']
    #allocation14 [shape = 'u8[12288]{0}', space=vmem, size = 0x3000, scoped, tag = 'input window, operand 7, single buffered']
    #allocation15 [shape = 's32[1]{0}', space=sflag, size = 0x4, scoped, tag = 'scoped memory for tpu_custom_call.1']
    #allocation16 [shape = 'u8[1572864]{0}', space=vmem, size = 0x180000, scoped, tag = 'input window, operand 8, single buffered']
    #allocation17 [shape = 'u8[2048]{0}', space=vmem, size = 0x800, scoped, tag = 'input window, operand 9, single buffered']
    #allocation18 [shape = 's32[1]{0}', space=sflag, size = 0x4, scoped, tag = 'scoped memory for tpu_custom_call.1']
    #allocation19 [shape = 'u8[6144]{0}', space=vmem, size = 0x1800, scoped, tag = 'input window, operand 10, single buffered']
    #allocation20 [shape = 'u8[393216]{0}', space=vmem, size = 0x60000, scoped, tag = 'input window, operand 11, single buffered']
    #allocation21 [shape = 's32[1]{0}', space=sflag, size = 0x4, scoped, tag = 'scoped memory for tpu_custom_call.1']
    #allocation22 [shape = 'u8[1024]{0}', space=vmem, size = 0x400, scoped, tag = 'input window, operand 12, single buffered']
    #allocation23 [shape = 'u8[3072]{0}', space=vmem, size = 0xc00, scoped, tag = 'input window, operand 13, single buffered']
    #allocation24 [shape = 's32[1]{0}', space=sflag, size = 0x4, scoped, tag = 'scoped memory for tpu_custom_call.1']
    #allocation25 [shape = 'u8[1024]{0}', space=vmem, size = 0x400, scoped, tag = 'input window, operand 15, single buffered']
    #allocation26 [shape = 'u8[1024]{0}', space=vmem, size = 0x400, scoped, tag = 'input window, operand 18, single buffered']
    #allocation27 [shape = 's32[1]{0}', space=sflag, size = 0x4, scoped, tag = 'scoped memory for tpu_custom_call.1']
    #allocation28 [shape = 'u8[512]{0}', space=vmem, size = 0x400, scoped, tag = 'input window, operand 20, single buffered']
    #allocation29 [shape = 'u8[1024]{0}', space=vmem, size = 0x400, scoped, tag = 'output window, operand 0']
    %26 = vsyncpa [#allocation3], 0
    %s27 = scalar_lea.sflag [#allocation3], 1
    %28 = vsyncpa %s27, 0
    %29 = vsyncpa [#allocation6], 0
    %30 = vsyncpa [#allocation9], 0
    %31 = vsyncpa [#allocation12], 0
    %32 = vsyncpa [#allocation15], 0
    %33 = vsyncpa [#allocation18], 0
    %34 = vsyncpa [#allocation21], 0
    %35 = vsyncpa [#allocation24], 0
    %36 = vsyncpa [#allocation27], 0
    %37 = vsyncpa [#allocation4], 0
    %s38 = scalar_lea.sflag [#allocation4], 1
    %39 = vsyncpa %s38, 0
    loop: start=0, step=1, limit=4
    $region2: #{tpu_custom_call.1} parent=1 // loop_pre_header
      _
    $region3: #{tpu_custom_call.1} parent=1 // loop_header
      %s41 = sphi 0, %s45
      %p42 = scmp.ge.s32.totalorder %s41, 4
      %s51 = sphi 0, %s53
      %s54 = sphi 0, %s51
      %s55 = sphi 0, %s54
      %s71 = sphi 0, %s55
      %s75 = sphi 0, %s75
      %s77 = sphi 0, %s75
      %s78 = sphi 0, %s77
      %s92 = sphi 0, %s78
      %s96 = sphi 0, %s96
      %s98 = sphi 0, %s96
      %s99 = sphi 0, %s98
      %s113 = sphi 0, %s99
      %s117 = sphi 0, %s117
      %s119 = sphi 0, %s117
      %s120 = sphi 0, %s119
      %s134 = sphi 0, %s120
      %s138 = sphi 0, %s138
      %s140 = sphi 0, %s138
      %s141 = sphi 0, %s140
      %s155 = sphi 0, %s141
      %s159 = sphi 0, %s159
      %s161 = sphi 0, %s159
      %s162 = sphi 0, %s161
      %s176 = sphi 0, %s162
      %s180 = sphi 0, %s180
      %s182 = sphi 0, %s180
      %s183 = sphi 0, %s182
      %s197 = sphi 0, %s183
      %s201 = sphi 0, %s201
      %s203 = sphi 0, %s201
      %s204 = sphi 0, %s203
      %s218 = sphi 0, %s204
      %s222 = sphi 0, %s222
      %s224 = sphi 0, %s222
      %s225 = sphi 0, %s224
      %s239 = sphi 0, %s225
      %s243 = sphi 0, %s243
      %s245 = sphi 0, %s243
      %s246 = sphi 0, %s245
      %s260 = sphi 0, %s246
      %s264 = sphi 0, %s264
      %s266 = sphi 0, %s264
      %s267 = sphi 0, %s266
      %s281 = sphi 0, %s267
      %s285 = sphi 0, %s285
      %s287 = sphi 0, %s285
      %s288 = sphi 0, %s287
      %s302 = sphi 0, %s288
      %s306 = sphi 0, %s306
      %s308 = sphi 0, %s306
      %s309 = sphi 0, %s308
      %s323 = sphi 0, %s309
      %s327 = sphi 0, %s327
      %s329 = sphi 0, %s327
      %s330 = sphi 0, %s329
      %s344 = sphi 0, %s330
      %s348 = sphi 0, %s348
      %s350 = sphi 0, %s348
      %s351 = sphi 0, %s350
      %s365 = sphi 0, %s351
      %s369 = sphi 0, %s369
      %s371 = sphi 0, %s369
      %s372 = sphi 0, %s371
      %s386 = sphi 0, %s372
      %s390 = sphi 0, %s390
      %s392 = sphi 0, %s390
      %s393 = sphi 0, %s392
      %s407 = sphi 0, %s393
      %s411 = sphi 0, %s411
      %s413 = sphi 0, %s411
      %s414 = sphi 0, %s413
      %s428 = sphi 0, %s414
      %s432 = sphi 0, %s432
      %s434 = sphi 0, %s432
      %s435 = sphi 0, %s434
      %s449 = sphi 0, %s435
      %s453 = sphi 0, %s453
      %s455 = sphi 0, %s453
      %s456 = sphi 0, %s455
      %s470 = sphi 0, %s456
      %s474 = sphi 0, %s474
      %s476 = sphi 0, %s474
      %s477 = sphi 0, %s476
      %s491 = sphi 0, %s477
      %s497 = sphi 0, %s499
      %s500 = sphi 0, %s497
      %s501 = sphi 0, %s500
      %s517 = sphi 0, %s501
    $region4: #{tpu_custom_call.1} parent=1 // loop_header_branch
      %44 = sbr.rel (%p42) target = $region8
    $region5: #{tpu_custom_call.1} parent=1 // loop_body
      %s46 = ssub.s32 %s41, 1
      %s47 = ssub.s32 %s41, 2
      %s48 = sadd.s32 %s41, 1
      %s49 = ssub.s32 %s41, %s48
      %p50 = scmp.eq.s32.totalorder %s49, 0
      %s52 = sadd.s32 %s51, 1
      %s53 = scalar_select %p50, %s51, %s52
      %p56 = pneg %p50
      %p57 = scmp.eq.s32.totalorder %s41, 1
      %p58 = por %p56, %p57
      %p59 = scmp.ne.s32.totalorder %s51, %s54
      %p60 = scmp.eq.s32.totalorder %s41, 0
      %p61 = por %p59, %p60
      %p62 = scmp.ne.s32.totalorder %s51, %s54
      %p63 = scmp.eq.s32.totalorder %s46, 1
      %p64 = por %p62, %p63
      %p65 = scmp.ne.s32.totalorder %s54, %s55
      %p66 = scmp.eq.s32.totalorder %s46, 0
      %p67 = por %p65, %p66
      %p68 = scmp.ne.s32.totalorder %s54, %s55
      %p69 = scmp.eq.s32.totalorder %s47, 1
      %p70 = por %p68, %p69
      %p72 = scmp.ne.s32.totalorder %s55, %s71
      %p73 = scmp.eq.s32.totalorder %s47, 0
      %p74 = por %p72, %p73
      %s76 = sadd.s32 %s75, 1
      %p79 = scmp.eq.s32.totalorder %s41, 1
      %p80 = scmp.ne.s32.totalorder %s75, %s77
      %p81 = scmp.eq.s32.totalorder %s41, 0
      %p82 = por %p80, %p81
      %p83 = scmp.ne.s32.totalorder %s75, %s77
      %p84 = scmp.eq.s32.totalorder %s46, 1
      %p85 = por %p83, %p84
      %p86 = scmp.ne.s32.totalorder %s77, %s78
      %p87 = scmp.eq.s32.totalorder %s46, 0
      %p88 = por %p86, %p87
      %p89 = scmp.ne.s32.totalorder %s77, %s78
      %p90 = scmp.eq.s32.totalorder %s47, 1
      %p91 = por %p89, %p90
      %p93 = scmp.ne.s32.totalorder %s78, %s92
      %p94 = scmp.eq.s32.totalorder %s47, 0
      %p95 = por %p93, %p94
      %s97 = sadd.s32 %s96, 1
      %p100 = scmp.eq.s32.totalorder %s41, 1
      %p101 = scmp.ne.s32.totalorder %s96, %s98
      %p102 = scmp.eq.s32.totalorder %s41, 0
      %p103 = por %p101, %p102
      %p104 = scmp.ne.s32.totalorder %s96, %s98
      %p105 = scmp.eq.s32.totalorder %s46, 1
      %p106 = por %p104, %p105
      %p107 = scmp.ne.s32.totalorder %s98, %s99
      %p108 = scmp.eq.s32.totalorder %s46, 0
      %p109 = por %p107, %p108
      %p110 = scmp.ne.s32.totalorder %s98, %s99
      %p111 = scmp.eq.s32.totalorder %s47, 1
      %p112 = por %p110, %p111
      %p114 = scmp.ne.s32.totalorder %s99, %s113
      %p115 = scmp.eq.s32.totalorder %s47, 0
      %p116 = por %p114, %p115
      %s118 = sadd.s32 %s117, 1
      %p121 = scmp.eq.s32.totalorder %s41, 1
      %p122 = scmp.ne.s32.totalorder %s117, %s119
      %p123 = scmp.eq.s32.totalorder %s41, 0
      %p124 = por %p122, %p123
      %p125 = scmp.ne.s32.totalorder %s117, %s119
      %p126 = scmp.eq.s32.totalorder %s46, 1
      %p127 = por %p125, %p126
      %p128 = scmp.ne.s32.totalorder %s119, %s120
      %p129 = scmp.eq.s32.totalorder %s46, 0
      %p130 = por %p128, %p129
      %p131 = scmp.ne.s32.totalorder %s119, %s120
      %p132 = scmp.eq.s32.totalorder %s47, 1
      %p133 = por %p131, %p132
      %p135 = scmp.ne.s32.totalorder %s120, %s134
      %p136 = scmp.eq.s32.totalorder %s47, 0
      %p137 = por %p135, %p136
      %s139 = sadd.s32 %s138, 1
      %p142 = scmp.eq.s32.totalorder %s41, 1
      %p143 = scmp.ne.s32.totalorder %s138, %s140
      %p144 = scmp.eq.s32.totalorder %s41, 0
      %p145 = por %p143, %p144
      %p146 = scmp.ne.s32.totalorder %s138, %s140
      %p147 = scmp.eq.s32.totalorder %s46, 1
      %p148 = por %p146, %p147
      %p149 = scmp.ne.s32.totalorder %s140, %s141
      %p150 = scmp.eq.s32.totalorder %s46, 0
      %p151 = por %p149, %p150
      %p152 = scmp.ne.s32.totalorder %s140, %s141
      %p153 = scmp.eq.s32.totalorder %s47, 1
      %p154 = por %p152, %p153
      %p156 = scmp.ne.s32.totalorder %s141, %s155
      %p157 = scmp.eq.s32.totalorder %s47, 0
      %p158 = por %p156, %p157
      %s160 = sadd.s32 %s159, 1
      %p163 = scmp.eq.s32.totalorder %s41, 1
      %p164 = scmp.ne.s32.totalorder %s159, %s161
      %p165 = scmp.eq.s32.totalorder %s41, 0
      %p166 = por %p164, %p165
      %p167 = scmp.ne.s32.totalorder %s159, %s161
      %p168 = scmp.eq.s32.totalorder %s46, 1
      %p169 = por %p167, %p168
      %p170 = scmp.ne.s32.totalorder %s161, %s162
      %p171 = scmp.eq.s32.totalorder %s46, 0
      %p172 = por %p170, %p171
      %p173 = scmp.ne.s32.totalorder %s161, %s162
      %p174 = scmp.eq.s32.totalorder %s47, 1
      %p175 = por %p173, %p174
      %p177 = scmp.ne.s32.totalorder %s162, %s176
      %p178 = scmp.eq.s32.totalorder %s47, 0
      %p179 = por %p177, %p178
      %s181 = sadd.s32 %s180, 1
      %p184 = scmp.eq.s32.totalorder %s41, 1
      %p185 = scmp.ne.s32.totalorder %s180, %s182
      %p186 = scmp.eq.s32.totalorder %s41, 0
      %p187 = por %p185, %p186
      %p188 = scmp.ne.s32.totalorder %s180, %s182
      %p189 = scmp.eq.s32.totalorder %s46, 1
      %p190 = por %p188, %p189
      %p191 = scmp.ne.s32.totalorder %s182, %s183
      %p192 = scmp.eq.s32.totalorder %s46, 0
      %p193 = por %p191, %p192
      %p194 = scmp.ne.s32.totalorder %s182, %s183
      %p195 = scmp.eq.s32.totalorder %s47, 1
      %p196 = por %p194, %p195
      %p198 = scmp.ne.s32.totalorder %s183, %s197
      %p199 = scmp.eq.s32.totalorder %s47, 0
      %p200 = por %p198, %p199
      %s202 = sadd.s32 %s201, 1
      %p205 = scmp.eq.s32.totalorder %s41, 1
      %p206 = scmp.ne.s32.totalorder %s201, %s203
      %p207 = scmp.eq.s32.totalorder %s41, 0
      %p208 = por %p206, %p207
      %p209 = scmp.ne.s32.totalorder %s201, %s203
      %p210 = scmp.eq.s32.totalorder %s46, 1
      %p211 = por %p209, %p210
      %p212 = scmp.ne.s32.totalorder %s203, %s204
      %p213 = scmp.eq.s32.totalorder %s46, 0
      %p214 = por %p212, %p213
      %p215 = scmp.ne.s32.totalorder %s203, %s204
      %p216 = scmp.eq.s32.totalorder %s47, 1
      %p217 = por %p215, %p216
      %p219 = scmp.ne.s32.totalorder %s204, %s218
      %p220 = scmp.eq.s32.totalorder %s47, 0
      %p221 = por %p219, %p220
      %s223 = sadd.s32 %s222, 1
      %p226 = scmp.eq.s32.totalorder %s41, 1
      %p227 = scmp.ne.s32.totalorder %s222, %s224
      %p228 = scmp.eq.s32.totalorder %s41, 0
      %p229 = por %p227, %p228
      %p230 = scmp.ne.s32.totalorder %s222, %s224
      %p231 = scmp.eq.s32.totalorder %s46, 1
      %p232 = por %p230, %p231
      %p233 = scmp.ne.s32.totalorder %s224, %s225
      %p234 = scmp.eq.s32.totalorder %s46, 0
      %p235 = por %p233, %p234
      %p236 = scmp.ne.s32.totalorder %s224, %s225
      %p237 = scmp.eq.s32.totalorder %s47, 1
      %p238 = por %p236, %p237
      %p240 = scmp.ne.s32.totalorder %s225, %s239
      %p241 = scmp.eq.s32.totalorder %s47, 0
      %p242 = por %p240, %p241
      %s244 = sadd.s32 %s243, 1
      %p247 = scmp.eq.s32.totalorder %s41, 1
      %p248 = scmp.ne.s32.totalorder %s243, %s245
      %p249 = scmp.eq.s32.totalorder %s41, 0
      %p250 = por %p248, %p249
      %p251 = scmp.ne.s32.totalorder %s243, %s245
      %p252 = scmp.eq.s32.totalorder %s46, 1
      %p253 = por %p251, %p252
      %p254 = scmp.ne.s32.totalorder %s245, %s246
      %p255 = scmp.eq.s32.totalorder %s46, 0
      %p256 = por %p254, %p255
      %p257 = scmp.ne.s32.totalorder %s245, %s246
      %p258 = scmp.eq.s32.totalorder %s47, 1
      %p259 = por %p257, %p258
      %p261 = scmp.ne.s32.totalorder %s246, %s260
      %p262 = scmp.eq.s32.totalorder %s47, 0
      %p263 = por %p261, %p262
      %s265 = sadd.s32 %s264, 1
      %p268 = scmp.eq.s32.totalorder %s41, 1
      %p269 = scmp.ne.s32.totalorder %s264, %s266
      %p270 = scmp.eq.s32.totalorder %s41, 0
      %p271 = por %p269, %p270
      %p272 = scmp.ne.s32.totalorder %s264, %s266
      %p273 = scmp.eq.s32.totalorder %s46, 1
      %p274 = por %p272, %p273
      %p275 = scmp.ne.s32.totalorder %s266, %s267
      %p276 = scmp.eq.s32.totalorder %s46, 0
      %p277 = por %p275, %p276
      %p278 = scmp.ne.s32.totalorder %s266, %s267
      %p279 = scmp.eq.s32.totalorder %s47, 1
      %p280 = por %p278, %p279
      %p282 = scmp.ne.s32.totalorder %s267, %s281
      %p283 = scmp.eq.s32.totalorder %s47, 0
      %p284 = por %p282, %p283
      %s286 = sadd.s32 %s285, 1
      %p289 = scmp.eq.s32.totalorder %s41, 1
      %p290 = scmp.ne.s32.totalorder %s285, %s287
      %p291 = scmp.eq.s32.totalorder %s41, 0
      %p292 = por %p290, %p291
      %p293 = scmp.ne.s32.totalorder %s285, %s287
      %p294 = scmp.eq.s32.totalorder %s46, 1
      %p295 = por %p293, %p294
      %p296 = scmp.ne.s32.totalorder %s287, %s288
      %p297 = scmp.eq.s32.totalorder %s46, 0
      %p298 = por %p296, %p297
      %p299 = scmp.ne.s32.totalorder %s287, %s288
      %p300 = scmp.eq.s32.totalorder %s47, 1
      %p301 = por %p299, %p300
      %p303 = scmp.ne.s32.totalorder %s288, %s302
      %p304 = scmp.eq.s32.totalorder %s47, 0
      %p305 = por %p303, %p304
      %s307 = sadd.s32 %s306, 1
      %p310 = scmp.eq.s32.totalorder %s41, 1
      %p311 = scmp.ne.s32.totalorder %s306, %s308
      %p312 = scmp.eq.s32.totalorder %s41, 0
      %p313 = por %p311, %p312
      %p314 = scmp.ne.s32.totalorder %s306, %s308
      %p315 = scmp.eq.s32.totalorder %s46, 1
      %p316 = por %p314, %p315
      %p317 = scmp.ne.s32.totalorder %s308, %s309
      %p318 = scmp.eq.s32.totalorder %s46, 0
      %p319 = por %p317, %p318
      %p320 = scmp.ne.s32.totalorder %s308, %s309
      %p321 = scmp.eq.s32.totalorder %s47, 1
      %p322 = por %p320, %p321
      %p324 = scmp.ne.s32.totalorder %s309, %s323
      %p325 = scmp.eq.s32.totalorder %s47, 0
      %p326 = por %p324, %p325
      %s328 = sadd.s32 %s327, 1
      %p331 = scmp.eq.s32.totalorder %s41, 1
      %p332 = scmp.ne.s32.totalorder %s327, %s329
      %p333 = scmp.eq.s32.totalorder %s41, 0
      %p334 = por %p332, %p333
      %p335 = scmp.ne.s32.totalorder %s327, %s329
      %p336 = scmp.eq.s32.totalorder %s46, 1
      %p337 = por %p335, %p336
      %p338 = scmp.ne.s32.totalorder %s329, %s330
      %p339 = scmp.eq.s32.totalorder %s46, 0
      %p340 = por %p338, %p339
      %p341 = scmp.ne.s32.totalorder %s329, %s330
      %p342 = scmp.eq.s32.totalorder %s47, 1
      %p343 = por %p341, %p342
      %p345 = scmp.ne.s32.totalorder %s330, %s344
      %p346 = scmp.eq.s32.totalorder %s47, 0
      %p347 = por %p345, %p346
      %s349 = sadd.s32 %s348, 1
      %p352 = scmp.eq.s32.totalorder %s41, 1
      %p353 = scmp.ne.s32.totalorder %s348, %s350
      %p354 = scmp.eq.s32.totalorder %s41, 0
      %p355 = por %p353, %p354
      %p356 = scmp.ne.s32.totalorder %s348, %s350
      %p357 = scmp.eq.s32.totalorder %s46, 1
      %p358 = por %p356, %p357
      %p359 = scmp.ne.s32.totalorder %s350, %s351
      %p360 = scmp.eq.s32.totalorder %s46, 0
      %p361 = por %p359, %p360
      %p362 = scmp.ne.s32.totalorder %s350, %s351
      %p363 = scmp.eq.s32.totalorder %s47, 1
      %p364 = por %p362, %p363
      %p366 = scmp.ne.s32.totalorder %s351, %s365
      %p367 = scmp.eq.s32.totalorder %s47, 0
      %p368 = por %p366, %p367
      %s370 = sadd.s32 %s369, 1
      %p373 = scmp.eq.s32.totalorder %s41, 1
      %p374 = scmp.ne.s32.totalorder %s369, %s371
      %p375 = scmp.eq.s32.totalorder %s41, 0
      %p376 = por %p374, %p375
      %p377 = scmp.ne.s32.totalorder %s369, %s371
      %p378 = scmp.eq.s32.totalorder %s46, 1
      %p379 = por %p377, %p378
      %p380 = scmp.ne.s32.totalorder %s371, %s372
      %p381 = scmp.eq.s32.totalorder %s46, 0
      %p382 = por %p380, %p381
      %p383 = scmp.ne.s32.totalorder %s371, %s372
      %p384 = scmp.eq.s32.totalorder %s47, 1
      %p385 = por %p383, %p384
      %p387 = scmp.ne.s32.totalorder %s372, %s386
      %p388 = scmp.eq.s32.totalorder %s47, 0
      %p389 = por %p387, %p388
      %s391 = sadd.s32 %s390, 1
      %p394 = scmp.eq.s32.totalorder %s41, 1
      %p395 = scmp.ne.s32.totalorder %s390, %s392
      %p396 = scmp.eq.s32.totalorder %s41, 0
      %p397 = por %p395, %p396
      %p398 = scmp.ne.s32.totalorder %s390, %s392
      %p399 = scmp.eq.s32.totalorder %s46, 1
      %p400 = por %p398, %p399
      %p401 = scmp.ne.s32.totalorder %s392, %s393
      %p402 = scmp.eq.s32.totalorder %s46, 0
      %p403 = por %p401, %p402
      %p404 = scmp.ne.s32.totalorder %s392, %s393
      %p405 = scmp.eq.s32.totalorder %s47, 1
      %p406 = por %p404, %p405
      %p408 = scmp.ne.s32.totalorder %s393, %s407
      %p409 = scmp.eq.s32.totalorder %s47, 0
      %p410 = por %p408, %p409
      %s412 = sadd.s32 %s411, 1
      %p415 = scmp.eq.s32.totalorder %s41, 1
      %p416 = scmp.ne.s32.totalorder %s411, %s413
      %p417 = scmp.eq.s32.totalorder %s41, 0
      %p418 = por %p416, %p417
      %p419 = scmp.ne.s32.totalorder %s411, %s413
      %p420 = scmp.eq.s32.totalorder %s46, 1
      %p421 = por %p419, %p420
      %p422 = scmp.ne.s32.totalorder %s413, %s414
      %p423 = scmp.eq.s32.totalorder %s46, 0
      %p424 = por %p422, %p423
      %p425 = scmp.ne.s32.totalorder %s413, %s414
      %p426 = scmp.eq.s32.totalorder %s47, 1
      %p427 = por %p425, %p426
      %p429 = scmp.ne.s32.totalorder %s414, %s428
      %p430 = scmp.eq.s32.totalorder %s47, 0
      %p431 = por %p429, %p430
      %s433 = sadd.s32 %s432, 1
      %p436 = scmp.eq.s32.totalorder %s41, 1
      %p437 = scmp.ne.s32.totalorder %s432, %s434
      %p438 = scmp.eq.s32.totalorder %s41, 0
      %p439 = por %p437, %p438
      %p440 = scmp.ne.s32.totalorder %s432, %s434
      %p441 = scmp.eq.s32.totalorder %s46, 1
      %p442 = por %p440, %p441
      %p443 = scmp.ne.s32.totalorder %s434, %s435
      %p444 = scmp.eq.s32.totalorder %s46, 0
      %p445 = por %p443, %p444
      %p446 = scmp.ne.s32.totalorder %s434, %s435
      %p447 = scmp.eq.s32.totalorder %s47, 1
      %p448 = por %p446, %p447
      %p450 = scmp.ne.s32.totalorder %s435, %s449
      %p451 = scmp.eq.s32.totalorder %s47, 0
      %p452 = por %p450, %p451
      %s454 = sadd.s32 %s453, 1
      %p457 = scmp.eq.s32.totalorder %s41, 1
      %p458 = scmp.ne.s32.totalorder %s453, %s455
      %p459 = scmp.eq.s32.totalorder %s41, 0
      %p460 = por %p458, %p459
      %p461 = scmp.ne.s32.totalorder %s453, %s455
      %p462 = scmp.eq.s32.totalorder %s46, 1
      %p463 = por %p461, %p462
      %p464 = scmp.ne.s32.totalorder %s455, %s456
      %p465 = scmp.eq.s32.totalorder %s46, 0
      %p466 = por %p464, %p465
      %p467 = scmp.ne.s32.totalorder %s455, %s456
      %p468 = scmp.eq.s32.totalorder %s47, 1
      %p469 = por %p467, %p468
      %p471 = scmp.ne.s32.totalorder %s456, %s470
      %p472 = scmp.eq.s32.totalorder %s47, 0
      %p473 = por %p471, %p472
      %s475 = sadd.s32 %s474, 1
      %p478 = scmp.eq.s32.totalorder %s41, 1
      %p479 = scmp.ne.s32.totalorder %s474, %s476
      %p480 = scmp.eq.s32.totalorder %s41, 0
      %p481 = por %p479, %p480
      %p482 = scmp.ne.s32.totalorder %s474, %s476
      %p483 = scmp.eq.s32.totalorder %s46, 1
      %p484 = por %p482, %p483
      %p485 = scmp.ne.s32.totalorder %s476, %s477
      %p486 = scmp.eq.s32.totalorder %s46, 0
      %p487 = por %p485, %p486
      %p488 = scmp.ne.s32.totalorder %s476, %s477
      %p489 = scmp.eq.s32.totalorder %s47, 1
      %p490 = por %p488, %p489
      %p492 = scmp.ne.s32.totalorder %s477, %s491
      %p493 = scmp.eq.s32.totalorder %s47, 0
      %p494 = por %p492, %p493
      %s495 = ssub.s32 %s41, %s48
      %p496 = scmp.eq.s32.totalorder %s495, 0
      %s498 = sadd.s32 %s497, 1
      %s499 = scalar_select %p496, %s497, %s498
      %p502 = pneg %p496
      %p503 = scmp.eq.s32.totalorder %s41, 1
      %p504 = por %p502, %p503
      %p505 = scmp.ne.s32.totalorder %s497, %s500
      %p506 = scmp.eq.s32.totalorder %s41, 0
      %p507 = por %p505, %p506
      %p508 = scmp.ne.s32.totalorder %s497, %s500
      %p509 = scmp.eq.s32.totalorder %s46, 1
      %p510 = por %p508, %p509
      %p511 = scmp.ne.s32.totalorder %s500, %s501
      %p512 = scmp.eq.s32.totalorder %s46, 0
      %p513 = por %p511, %p512
      %p514 = scmp.ne.s32.totalorder %s500, %s501
      %p515 = scmp.eq.s32.totalorder %s47, 1
      %p516 = por %p514, %p515
      %p518 = scmp.ne.s32.totalorder %s501, %s517
      %p519 = scmp.eq.s32.totalorder %s47, 0
      %p520 = por %p518, %p519
      %p521 = scmp.le.s32.totalorder 1, %s41
      %p522 = scmp.lt.s32.totalorder %s41, 3
      %p523 = pnand %p521, %p522
      %p524 = pneg %p523
      // Predicated region
      $region9: #{tpu_custom_call.1} parent=5 // pred_check
        _
      $region10: #{tpu_custom_call.1} parent=5 // pred_check_branch
        %526 = sbr.rel (%p523) target = $region12
      $region11: #{tpu_custom_call.1} parent=5 // pred_region
        %s527 = ssub.s32 %s41, 1
        // Predicated region
        $region13: #{tpu_custom_call.1} parent=11 // pred_check
          %p528 = pneg %p88
        $region14: #{tpu_custom_call.1} parent=11 // pred_check_branch
          %530 = sbr.rel (%p528) target = $region16
        $region15: #{tpu_custom_call.1} parent=11 // pred_region
          %s532 = ssub.s32 768, 768
          %533 = vsyncadd [#allocation6], %s532
          %s534 = sshll.u32 [#allocation5], 4
          %s535 = int_to_ptr.vmem [resolvable:$true] %s534
          %540 = dma.hbm_to_vmem [thread:$0]  %s1, 768, %s535, [#allocation6], 128, 128, 8
        $region16: #{tpu_custom_call.1} parent=11 // pred_fallthru
          _
        // Predicated region
        $region17: #{tpu_custom_call.1} parent=11 // pred_check
          %p541 = pneg %p109
        $region18: #{tpu_custom_call.1} parent=11 // pred_check_branch
          %543 = sbr.rel (%p541) target = $region20
        $region19: #{tpu_custom_call.1} parent=11 // pred_region
          %s545 = ssub.s32 3072, 3072
          %546 = vsyncadd [#allocation6], %s545
          %s547 = sshll.u32 [#allocation7], 4
          %s548 = int_to_ptr.vmem [resolvable:$true] %s547
          %553 = dma.hbm_to_vmem [thread:$0]  %s2, 3072, %s548, [#allocation6], 512, 512, 32
        $region20: #{tpu_custom_call.1} parent=11 // pred_fallthru
          _
        // Predicated region
        $region21: #{tpu_custom_call.1} parent=11 // pred_check
          %p554 = pneg %p130
        $region22: #{tpu_custom_call.1} parent=11 // pred_check_branch
          %556 = sbr.rel (%p554) target = $region24
        $region23: #{tpu_custom_call.1} parent=11 // pred_region
          %s558 = ssub.s32 128, 128
          %559 = vsyncadd [#allocation9], %s558
          %s561 = sshll.u32 [#allocation8], 4
          %s562 = int_to_ptr.vmem [resolvable:$true] %s561
          %564 = dma.hbm_to_vmem [thread:$0]  %s3, 128, %s562, [#allocation9]
        $region24: #{tpu_custom_call.1} parent=11 // pred_fallthru
          _
        // Predicated region
        $region25: #{tpu_custom_call.1} parent=11 // pred_check
          %p565 = pneg %p151
        $region26: #{tpu_custom_call.1} parent=11 // pred_check_branch
          %567 = sbr.rel (%p565) target = $region28
        $region27: #{tpu_custom_call.1} parent=11 // pred_region
          %s569 = ssub.s32 768, 768
          %570 = vsyncadd [#allocation9], %s569
          %s571 = sshll.u32 [#allocation10], 4
          %s572 = int_to_ptr.vmem [resolvable:$true] %s571
          %577 = dma.hbm_to_vmem [thread:$0]  %s4, 768, %s572, [#allocation9], 128, 128, 8
        $region28: #{tpu_custom_call.1} parent=11 // pred_fallthru
          _
        // Predicated region
        $region29: #{tpu_custom_call.1} parent=11 // pred_check
          %p578 = pneg %p172
        $region30: #{tpu_custom_call.1} parent=11 // pred_check_branch
          %580 = sbr.rel (%p578) target = $region32
        $region31: #{tpu_custom_call.1} parent=11 // pred_region
          %s582 = ssub.s32 98304, 98304
          %583 = vsyncadd [#allocation12], %s582
          %s584 = sshll.u32 [#allocation11], 4
          %s585 = int_to_ptr.vmem [resolvable:$true] %s584
          %590 = dma.hbm_to_vmem [thread:$0]  %s5, 98304, %s585, [#allocation12], 512, 512, 32
        $region32: #{tpu_custom_call.1} parent=11 // pred_fallthru
          _
        // Predicated region
        $region33: #{tpu_custom_call.1} parent=11 // pred_check
          %p591 = pneg %p193
        $region34: #{tpu_custom_call.1} parent=11 // pred_check_branch
          %593 = sbr.rel (%p591) target = $region36
        $region35: #{tpu_custom_call.1} parent=11 // pred_region
          %s595 = ssub.s32 128, 128
          %596 = vsyncadd [#allocation12], %s595
          %s598 = sshll.u32 [#allocation13], 4
          %s599 = int_to_ptr.vmem [resolvable:$true] %s598
          %601 = dma.hbm_to_vmem [thread:$0]  %s6, 128, %s599, [#allocation12]
        $region36: #{tpu_custom_call.1} parent=11 // pred_fallthru
          _
        // Predicated region
        $region37: #{tpu_custom_call.1} parent=11 // pred_check
          %p602 = pneg %p214
        $region38: #{tpu_custom_call.1} parent=11 // pred_check_branch
          %604 = sbr.rel (%p602) target = $region40
        $region39: #{tpu_custom_call.1} parent=11 // pred_region
          %s606 = ssub.s32 384, 384
          %607 = vsyncadd [#allocation15], %s606
          %s608 = sshll.u32 [#allocation14], 4
          %s609 = int_to_ptr.vmem [resolvable:$true] %s608
          %614 = dma.hbm_to_vmem [thread:$0]  %s7, 384, %s609, [#allocation15], 128, 128, 8
        $region40: #{tpu_custom_call.1} parent=11 // pred_fallthru
          _
        // Predicated region
        $region41: #{tpu_custom_call.1} parent=11 // pred_check
          %p615 = pneg %p235
        $region42: #{tpu_custom_call.1} parent=11 // pred_check_branch
          %617 = sbr.rel (%p615) target = $region44
        $region43: #{tpu_custom_call.1} parent=11 // pred_region
          %s619 = ssub.s32 49152, 49152
          %620 = vsyncadd [#allocation15], %s619
          %s621 = sshll.u32 [#allocation16], 4
          %s622 = int_to_ptr.vmem [resolvable:$true] %s621
          %627 = dma.hbm_to_vmem [thread:$0]  %s8, 49152, %s622, [#allocation15], 256, 256, 16
        $region44: #{tpu_custom_call.1} parent=11 // pred_fallthru
          _
        // Predicated region
        $region45: #{tpu_custom_call.1} parent=11 // pred_check
          %p628 = pneg %p256
        $region46: #{tpu_custom_call.1} parent=11 // pred_check_branch
          %630 = sbr.rel (%p628) target = $region48
        $region47: #{tpu_custom_call.1} parent=11 // pred_region
          %s632 = ssub.s32 64, 64
          %633 = vsyncadd [#allocation18], %s632
          %s635 = sshll.u32 [#allocation17], 4
          %s636 = int_to_ptr.vmem [resolvable:$true] %s635
          %638 = dma.hbm_to_vmem [thread:$0]  %s9, 64, %s636, [#allocation18]
        $region48: #{tpu_custom_call.1} parent=11 // pred_fallthru
          _
        // Predicated region
        $region49: #{tpu_custom_call.1} parent=11 // pred_check
          %p639 = pneg %p277
        $region50: #{tpu_custom_call.1} parent=11 // pred_check_branch
          %641 = sbr.rel (%p639) target = $region52
        $region51: #{tpu_custom_call.1} parent=11 // pred_region
          %s643 = ssub.s32 192, 192
          %644 = vsyncadd [#allocation18], %s643
          %s645 = sshll.u32 [#allocation19], 4
          %s646 = int_to_ptr.vmem [resolvable:$true] %s645
          %651 = dma.hbm_to_vmem [thread:$0]  %s10, 192, %s646, [#allocation18], 64, 64, 4
        $region52: #{tpu_custom_call.1} parent=11 // pred_fallthru
          _
        // Predicated region
        $region53: #{tpu_custom_call.1} parent=11 // pred_check
          %p652 = pneg %p298
        $region54: #{tpu_custom_call.1} parent=11 // pred_check_branch
          %654 = sbr.rel (%p652) target = $region56
        $region55: #{tpu_custom_call.1} parent=11 // pred_region
          %s656 = ssub.s32 12288, 12288
          %657 = vsyncadd [#allocation21], %s656
          %s658 = sshll.u32 [#allocation20], 4
          %s659 = int_to_ptr.vmem [resolvable:$true] %s658
          %664 = dma.hbm_to_vmem [thread:$0]  %s11, 12288, %s659, [#allocation21], 128, 128, 8
        $region56: #{tpu_custom_call.1} parent=11 // pred_fallthru
          _
        // Predicated region
        $region57: #{tpu_custom_call.1} parent=11 // pred_check
          %p665 = pneg %p319
        $region58: #{tpu_custom_call.1} parent=11 // pred_check_branch
          %667 = sbr.rel (%p665) target = $region60
        $region59: #{tpu_custom_call.1} parent=11 // pred_region
          %s669 = ssub.s32 32, 32
          %670 = vsyncadd [#allocation21], %s669
          %s672 = sshll.u32 [#allocation22], 4
          %s673 = int_to_ptr.vmem [resolvable:$true] %s672
          %675 = dma.hbm_to_vmem [thread:$0]  %s12, 32, %s673, [#allocation21]
        $region60: #{tpu_custom_call.1} parent=11 // pred_fallthru
          _
        // Predicated region
        $region61: #{tpu_custom_call.1} parent=11 // pred_check
          %p676 = pneg %p340
        $region62: #{tpu_custom_call.1} parent=11 // pred_check_branch
          %678 = sbr.rel (%p676) target = $region64
        $region63: #{tpu_custom_call.1} parent=11 // pred_region
          %s680 = ssub.s32 96, 96
          %681 = vsyncadd [#allocation24], %s680
          %s682 = sshll.u32 [#allocation23], 4
          %s683 = int_to_ptr.vmem [resolvable:$true] %s682
          %688 = dma.hbm_to_vmem [thread:$0]  %s13, 96, %s683, [#allocation24], 32, 32, 2
        $region64: #{tpu_custom_call.1} parent=11 // pred_fallthru
          _
        // Predicated region
        $region65: #{tpu_custom_call.1} parent=11 // pred_check
          %p689 = pneg %p361
        $region66: #{tpu_custom_call.1} parent=11 // pred_check_branch
          %691 = sbr.rel (%p689) target = $region68
        $region67: #{tpu_custom_call.1} parent=11 // pred_region
          _
        $region68: #{tpu_custom_call.1} parent=11 // pred_fallthru
          _
        // Predicated region
        $region69: #{tpu_custom_call.1} parent=11 // pred_check
          %p692 = pneg %p382
        $region70: #{tpu_custom_call.1} parent=11 // pred_check_branch
          %694 = sbr.rel (%p692) target = $region72
        $region71: #{tpu_custom_call.1} parent=11 // pred_region
          %s696 = ssub.s32 32, 32
          %697 = vsyncadd [#allocation24], %s696
          %s699 = sshll.u32 [#allocation25], 4
          %s700 = int_to_ptr.vmem [resolvable:$true] %s699
          %702 = dma.hbm_to_vmem [thread:$0]  %s15, 32, %s700, [#allocation24]
        $region72: #{tpu_custom_call.1} parent=11 // pred_fallthru
          _
        // Predicated region
        $region73: #{tpu_custom_call.1} parent=11 // pred_check
          %p703 = pneg %p403
        $region74: #{tpu_custom_call.1} parent=11 // pred_check_branch
          %705 = sbr.rel (%p703) target = $region76
        $region75: #{tpu_custom_call.1} parent=11 // pred_region
          _
        $region76: #{tpu_custom_call.1} parent=11 // pred_fallthru
          _
        // Predicated region
        $region77: #{tpu_custom_call.1} parent=11 // pred_check
          %p706 = pneg %p424
        $region78: #{tpu_custom_call.1} parent=11 // pred_check_branch
          %708 = sbr.rel (%p706) target = $region80
        $region79: #{tpu_custom_call.1} parent=11 // pred_region
          _
        $region80: #{tpu_custom_call.1} parent=11 // pred_fallthru
          _
        // Predicated region
        $region81: #{tpu_custom_call.1} parent=11 // pred_check
          %p709 = pneg %p445
        $region82: #{tpu_custom_call.1} parent=11 // pred_check_branch
          %711 = sbr.rel (%p709) target = $region84
        $region83: #{tpu_custom_call.1} parent=11 // pred_region
          %s713 = ssub.s32 32, 32
          %714 = vsyncadd [#allocation27], %s713
          %s716 = sshll.u32 [#allocation26], 4
          %s717 = int_to_ptr.vmem [resolvable:$true] %s716
          %719 = dma.hbm_to_vmem [thread:$0]  %s18, 32, %s717, [#allocation27]
        $region84: #{tpu_custom_call.1} parent=11 // pred_fallthru
          _
        // Predicated region
        $region85: #{tpu_custom_call.1} parent=11 // pred_check
          %p720 = pneg %p466
        $region86: #{tpu_custom_call.1} parent=11 // pred_check_branch
          %722 = sbr.rel (%p720) target = $region88
        $region87: #{tpu_custom_call.1} parent=11 // pred_region
          _
        $region88: #{tpu_custom_call.1} parent=11 // pred_fallthru
          _
        // Predicated region
        $region89: #{tpu_custom_call.1} parent=11 // pred_check
          %p723 = pneg %p487
        $region90: #{tpu_custom_call.1} parent=11 // pred_check_branch
          %725 = sbr.rel (%p723) target = $region92
        $region91: #{tpu_custom_call.1} parent=11 // pred_region
          %s727 = ssub.s32 16, 16
          %728 = vsyncadd [#allocation27], %s727
          %s730 = sshll.u32 [#allocation28], 4
          %s731 = int_to_ptr.vmem [resolvable:$true] %s730
          %733 = dma.hbm_to_vmem [thread:$0]  %s20, 16, %s731, [#allocation27]
        $region92: #{tpu_custom_call.1} parent=11 // pred_fallthru
          _
      $region12: #{tpu_custom_call.1} parent=5 // pred_fallthru
        _
      %p734 = scmp.lt.s32.totalorder %s41, 2
      // Predicated region
      $region93: #{tpu_custom_call.1} parent=5 // pred_check
        %p735 = pneg %p734
      $region94: #{tpu_custom_call.1} parent=5 // pred_check_branch
        %737 = sbr.rel (%p735) target = $region96
      $region95: #{tpu_custom_call.1} parent=5 // pred_region
        // Predicated region
        $region97: #{tpu_custom_call.1} parent=95 // pred_check
          %p738 = pneg %p61
        $region98: #{tpu_custom_call.1} parent=95 // pred_check_branch
          %740 = sbr.rel (%p738) target = $region100
        $region99: #{tpu_custom_call.1} parent=95 // pred_region
          %s741 = sand.u32 %s51, 1
          %s742 = scalar_lea.sflag [#allocation3], %s741
          %s743 = sand.u32 %s51, 1
          %s744 = smul.addr %s743, 16
          %s745 = scalar_lea.vmem [#allocation2], %s744
          %s747 = ssub.s32 256, 256
          %748 = vsyncadd %s742, %s747
          %s749 = smul.addr %s41, 2
          %s750 = smul.addr %s749, 128
          %s751 = scalar_lea.hbm %s0, %s750
          %s752 = sshll.u32 %s745, 4
          %s753 = int_to_ptr.vmem [resolvable:$true] %s752
          %758 = dma.hbm_to_vmem [thread:$0]  %s751, 256, %s753, %s742, 128, 128, 8
        $region100: #{tpu_custom_call.1} parent=95 // pred_fallthru
          _
      $region96: #{tpu_custom_call.1} parent=5 // pred_fallthru
        _
      %p759 = scmp.le.s32.totalorder 1, %s41
      %p760 = scmp.lt.s32.totalorder %s41, 3
      %p761 = pnand %p759, %p760
      %p762 = pneg %p761
      // Predicated region
      $region101: #{tpu_custom_call.1} parent=5 // pred_check
        _
      $region102: #{tpu_custom_call.1} parent=5 // pred_check_branch
        %764 = sbr.rel (%p761) target = $region104
      $region103: #{tpu_custom_call.1} parent=5 // pred_region
        %s765 = ssub.s32 %s41, 1
        %s766 = sand.u32 %s54, 1
        %s767 = scalar_lea.sflag [#allocation3], %s766
        %s768 = sand.u32 %s54, 1
        %s769 = smul.addr %s768, 16
        %s770 = scalar_lea.vmem [#allocation2], %s769
        // Predicated region
        $region105: #{tpu_custom_call.1} parent=103 // pred_check
          %p771 = pneg %p67
        $region106: #{tpu_custom_call.1} parent=103 // pred_check_branch
          %773 = sbr.rel (%p771) target = $region108
        $region107: #{tpu_custom_call.1} parent=103 // pred_region
          %774 = dma.done %s767, 256
        $region108: #{tpu_custom_call.1} parent=103 // pred_fallthru
          _
        // Predicated region
        $region109: #{tpu_custom_call.1} parent=103 // pred_check
          %p775 = pneg %p88
        $region110: #{tpu_custom_call.1} parent=103 // pred_check_branch
          %777 = sbr.rel (%p775) target = $region112
        $region111: #{tpu_custom_call.1} parent=103 // pred_region
          %778 = dma.done [#allocation6], 768
        $region112: #{tpu_custom_call.1} parent=103 // pred_fallthru
          _
        // Predicated region
        $region113: #{tpu_custom_call.1} parent=103 // pred_check
          %p779 = pneg %p109
        $region114: #{tpu_custom_call.1} parent=103 // pred_check_branch
          %781 = sbr.rel (%p779) target = $region116
        $region115: #{tpu_custom_call.1} parent=103 // pred_region
          %782 = dma.done [#allocation6], 3072
        $region116: #{tpu_custom_call.1} parent=103 // pred_fallthru
          _
        // Predicated region
        $region117: #{tpu_custom_call.1} parent=103 // pred_check
          %p783 = pneg %p130
        $region118: #{tpu_custom_call.1} parent=103 // pred_check_branch
          %785 = sbr.rel (%p783) target = $region120
        $region119: #{tpu_custom_call.1} parent=103 // pred_region
          %786 = dma.done [#allocation9], 128
        $region120: #{tpu_custom_call.1} parent=103 // pred_fallthru
          _
        // Predicated region
        $region121: #{tpu_custom_call.1} parent=103 // pred_check
          %p787 = pneg %p151
        $region122: #{tpu_custom_call.1} parent=103 // pred_check_branch
          %789 = sbr.rel (%p787) target = $region124
        $region123: #{tpu_custom_call.1} parent=103 // pred_region
          %790 = dma.done [#allocation9], 768
        $region124: #{tpu_custom_call.1} parent=103 // pred_fallthru
          _
        // Predicated region
        $region125: #{tpu_custom_call.1} parent=103 // pred_check
          %p791 = pneg %p172
        $region126: #{tpu_custom_call.1} parent=103 // pred_check_branch
          %793 = sbr.rel (%p791) target = $region128
        $region127: #{tpu_custom_call.1} parent=103 // pred_region
          %794 = dma.done [#allocation12], 98304
        $region128: #{tpu_custom_call.1} parent=103 // pred_fallthru
          _
        // Predicated region
        $region129: #{tpu_custom_call.1} parent=103 // pred_check
          %p795 = pneg %p193
        $region130: #{tpu_custom_call.1} parent=103 // pred_check_branch
          %797 = sbr.rel (%p795) target = $region132
        $region131: #{tpu_custom_call.1} parent=103 // pred_region
          %798 = dma.done [#allocation12], 128
        $region132: #{tpu_custom_call.1} parent=103 // pred_fallthru
          _
        // Predicated region
        $region133: #{tpu_custom_call.1} parent=103 // pred_check
          %p799 = pneg %p214
        $region134: #{tpu_custom_call.1} parent=103 // pred_check_branch
          %801 = sbr.rel (%p799) target = $region136
        $region135: #{tpu_custom_call.1} parent=103 // pred_region
          %802 = dma.done [#allocation15], 384
        $region136: #{tpu_custom_call.1} parent=103 // pred_fallthru
          _
        // Predicated region
        $region137: #{tpu_custom_call.1} parent=103 // pred_check
          %p803 = pneg %p235
        $region138: #{tpu_custom_call.1} parent=103 // pred_check_branch
          %805 = sbr.rel (%p803) target = $region140
        $region139: #{tpu_custom_call.1} parent=103 // pred_region
          %806 = dma.done [#allocation15], 49152
        $region140: #{tpu_custom_call.1} parent=103 // pred_fallthru
          _
        // Predicated region
        $region141: #{tpu_custom_call.1} parent=103 // pred_check
          %p807 = pneg %p256
        $region142: #{tpu_custom_call.1} parent=103 // pred_check_branch
          %809 = sbr.rel (%p807) target = $region144
        $region143: #{tpu_custom_call.1} parent=103 // pred_region
          %810 = dma.done [#allocation18], 64
        $region144: #{tpu_custom_call.1} parent=103 // pred_fallthru
          _
        // Predicated region
        $region145: #{tpu_custom_call.1} parent=103 // pred_check
          %p811 = pneg %p277
        $region146: #{tpu_custom_call.1} parent=103 // pred_check_branch
          %813 = sbr.rel (%p811) target = $region148
        $region147: #{tpu_custom_call.1} parent=103 // pred_region
          %814 = dma.done [#allocation18], 192
        $region148: #{tpu_custom_call.1} parent=103 // pred_fallthru
          _
        // Predicated region
        $region149: #{tpu_custom_call.1} parent=103 // pred_check
          %p815 = pneg %p298
        $region150: #{tpu_custom_call.1} parent=103 // pred_check_branch
          %817 = sbr.rel (%p815) target = $region152
        $region151: #{tpu_custom_call.1} parent=103 // pred_region
          %818 = dma.done [#allocation21], 12288
        $region152: #{tpu_custom_call.1} parent=103 // pred_fallthru
          _
        // Predicated region
        $region153: #{tpu_custom_call.1} parent=103 // pred_check
          %p819 = pneg %p319
        $region154: #{tpu_custom_call.1} parent=103 // pred_check_branch
          %821 = sbr.rel (%p819) target = $region156
        $region155: #{tpu_custom_call.1} parent=103 // pred_region
          %822 = dma.done [#allocation21], 32
        $region156: #{tpu_custom_call.1} parent=103 // pred_fallthru
          _
        // Predicated region
        $region157: #{tpu_custom_call.1} parent=103 // pred_check
          %p823 = pneg %p340
        $region158: #{tpu_custom_call.1} parent=103 // pred_check_branch
          %825 = sbr.rel (%p823) target = $region160
        $region159: #{tpu_custom_call.1} parent=103 // pred_region
          %826 = dma.done [#allocation24], 96
        $region160: #{tpu_custom_call.1} parent=103 // pred_fallthru
          _
        // Predicated region
        $region161: #{tpu_custom_call.1} parent=103 // pred_check
          %p827 = pneg %p382
        $region162: #{tpu_custom_call.1} parent=103 // pred_check_branch
          %829 = sbr.rel (%p827) target = $region164
        $region163: #{tpu_custom_call.1} parent=103 // pred_region
          %830 = dma.done [#allocation24], 32
        $region164: #{tpu_custom_call.1} parent=103 // pred_fallthru
          _
        // Predicated region
        $region165: #{tpu_custom_call.1} parent=103 // pred_check
          %p831 = pneg %p445
        $region166: #{tpu_custom_call.1} parent=103 // pred_check_branch
          %833 = sbr.rel (%p831) target = $region168
        $region167: #{tpu_custom_call.1} parent=103 // pred_region
          %834 = dma.done [#allocation27], 32
        $region168: #{tpu_custom_call.1} parent=103 // pred_fallthru
          _
        // Predicated region
        $region169: #{tpu_custom_call.1} parent=103 // pred_check
          %p835 = pneg %p487
        $region170: #{tpu_custom_call.1} parent=103 // pred_check_branch
          %837 = sbr.rel (%p835) target = $region172
        $region171: #{tpu_custom_call.1} parent=103 // pred_region
          %838 = dma.done [#allocation27], 16
        $region172: #{tpu_custom_call.1} parent=103 // pred_fallthru
          _
        %s839 = sand.u32 %s54, 1
        %s840 = scalar_lea.sflag [#allocation3], %s839
        %s841 = sand.u32 %s54, 1
        %s842 = smul.addr %s841, 16
        %s843 = scalar_lea.vmem [#allocation2], %s842
        %p844 = pneg %p67
        %p845 = pneg %p64
        %p846 = pneg %p88
        %p847 = pneg %p85
        %p848 = pneg %p109
        %p849 = pneg %p106
        %p850 = pneg %p130
        %p851 = pneg %p127
        %p852 = pneg %p151
        %p853 = pneg %p148
        %p854 = pneg %p172
        %p855 = pneg %p169
        %p856 = pneg %p193
        %p857 = pneg %p190
        %p858 = pneg %p214
        %p859 = pneg %p211
        %p860 = pneg %p235
        %p861 = pneg %p232
        %p862 = pneg %p256
        %p863 = pneg %p253
        %p864 = pneg %p277
        %p865 = pneg %p274
        %p866 = pneg %p298
        %p867 = pneg %p295
        %p868 = pneg %p319
        %p869 = pneg %p316
        %p870 = pneg %p340
        %p871 = pneg %p337
        %p872 = pneg %p361
        %p873 = pneg %p358
        %p874 = pneg %p382
        %p875 = pneg %p379
        %p876 = pneg %p403
        %p877 = pneg %p400
        %p878 = pneg %p424
        %p879 = pneg %p421
        %p880 = pneg %p445
        %p881 = pneg %p442
        %p882 = pneg %p466
        %p883 = pneg %p463
        %p884 = pneg %p487
        %p885 = pneg %p484
        %p886 = pneg %p513
        %p887 = pneg %p510
        %s888 = sand.u32 %s500, 1
        %s889 = scalar_lea.sflag [#allocation4], %s888
        %s890 = sand.u32 %s500, 1
        %s891 = scalar_lea.vmem [#allocation29], %s890
        %v892 = vld [vmem:[%s770] sm:$0xff]
        %v893 = vld [vmem:[%s770 + $0x8] sm:$0xff]
        %v894 = vld [vmem:[#allocation5] sm:$0xff]
        %v895 = vld [vmem:[#allocation5 + $0x8] sm:$0xff]
        %vm896 = vcmask 130048
        %v898 = vsel %vm896, %v894, 0
        %v901 = vsel %vm896, %v895, 0
        %903 = vmatprep.subr.mxu0 0.0
        %904 = vmatpush1.msra.mxu0 %v892
        %905 = vmatprep.subr.mxu0 0.0
        %906 = vmatpush1.msra.mxu0 %v893
        %907 = vmatprep.subr.mxu0 0.0
        %908 = vmatpush1.msra.mxu0 0.0
        %909 = vmatprep.subr.mxu0 0.0
        %910 = vmatpush1.msra.mxu0 0.0
        %911 = vmatprep.subr.mxu0 0.0
        %912 = vmatpush1.msra.mxu0 0.0
        %913 = vmatprep.subr.mxu0 0.0
        %914 = vmatpush1.msra.mxu0 0.0
        %915 = vmatprep.subr.mxu0 0.0
        %916 = vmatpush1.msra.mxu0 0.0
        %917 = vmatprep.subr.mxu0 0.0
        %918 = vmatpush1.msra.mxu0 0.0
        %919 = vmatprep.subr.mxu0 0.0
        %920 = vmatpush1.msra.mxu0 0.0
        %921 = vmatprep.subr.mxu0 0.0
        %922 = vmatpush1.msra.mxu0 0.0
        %923 = vmatprep.subr.mxu0 0.0
        %924 = vmatpush1.msra.mxu0 0.0
        %925 = vmatprep.subr.mxu0 0.0
        %926 = vmatpush1.msra.mxu0 0.0
        %927 = vmatprep.subr.mxu0 0.0
        %928 = vmatpush1.msra.mxu0 0.0
        %929 = vmatprep.subr.mxu0 0.0
        %930 = vmatpush1.msra.mxu0 0.0
        %931 = vmatprep.subr.mxu0 0.0
        %932 = vmatpush1.msra.mxu0 0.0
        %933 = vmatprep.subr.mxu0 0.0
        %934 = vmatpush1.msra.mxu0 0.0
        %935 = vmatprep.subr.mxu0 0.0
        %936 = vmatpush1.msra.mxu0 0.0
        %937 = vmatprep.subr.mxu0 0.0
        %938 = vmatpush1.msra.mxu0 0.0
        %939 = vmatprep.subr.mxu0 0.0
        %940 = vmatpush1.msra.mxu0 0.0
        %941 = vmatprep.subr.mxu0 0.0
        %942 = vmatpush1.msra.mxu0 0.0
        %943 = vmatprep.subr.mxu0 0.0
        %944 = vmatpush1.msra.mxu0 0.0
        %945 = vmatprep.subr.mxu0 0.0
        %946 = vmatpush1.msra.mxu0 0.0
        %947 = vmatprep.subr.mxu0 0.0
        %948 = vmatpush1.msra.mxu0 0.0
        %949 = vmatprep.subr.mxu0 0.0
        %950 = vmatpush1.msra.mxu0 0.0
        %951 = vmatprep.subr.mxu0 0.0
        %952 = vmatpush1.msra.mxu0 0.0
        %953 = vmatprep.subr.mxu0 0.0
        %954 = vmatpush1.msra.mxu0 0.0
        %955 = vmatprep.subr.mxu0 0.0
        %956 = vmatpush1.msra.mxu0 0.0
        %957 = vmatprep.subr.mxu0 0.0
        %958 = vmatpush1.msra.mxu0 0.0
        %959 = vmatprep.subr.mxu0 0.0
        %960 = vmatpush1.msra.mxu0 0.0
        %961 = vmatprep.subr.mxu0 0.0
        %962 = vmatpush1.msra.mxu0 0.0
        %963 = vmatprep.subr.mxu0 0.0
        %964 = vmatpush1.msra.mxu0 0.0
        %965 = vmatprep.subr.mxu0 0.0
        %966 = vmatpush1.msra.mxu0 0.0
        %967 = vmatprep.mubr.f32.mxu0 0.0
        %968 = vmatmul.mubr.f32.gmra.mrb[0].mxu0 %v898
        %v969 = vpop.f32.mrb[0].mxu0
        %v970 = vadd.f32 0.0, %v969
        %v971 = vpop.f32.mrb[0].mxu0
        %972 = vmatprep.mubr.f32.mxu0 0.0
        %973 = vmatmul.mubr.f32.gmra.mrb[0].mxu0 %v901
        %v974 = vpop.f32.mrb[0].mxu0
        %v975 = vadd.f32 0.0, %v974
        %v976 = vpop.f32.mrb[0].mxu0
        %977 = vdwg.mxu0
        %v978 = vld [vmem:[#allocation7] sm:$0xff]
        %v979 = vld [vmem:[#allocation7 + $0x8] sm:$0xff]
        %v980 = vld [vmem:[#allocation7 + $0x10] sm:$0xff]
        %v981 = vld [vmem:[#allocation7 + $0x18] sm:$0xff]
        %v982 = vld [vmem:[#allocation7 + $0x20] sm:$0xff]
        %v983 = vld [vmem:[#allocation7 + $0x28] sm:$0xff]
        %v984 = vld [vmem:[#allocation7 + $0x30] sm:$0xff]
        %v985 = vld [vmem:[#allocation7 + $0x38] sm:$0xff]
        %s986 = scalar_lea.vmem [#allocation5], 16
        %v987 = vld [vmem:[%s986] sm:$0xff]
        %v988 = vld [vmem:[%s986 + $0x8] sm:$0xff]
        %v990 = vsel %vm896, %v987, 0
        %v993 = vsel %vm896, %v988, 0
        %995 = vmatprep.subr.mxu0 0.0
        %996 = vmatpush1.msra.mxu0 %v892
        %997 = vmatprep.subr.mxu0 0.0
        %998 = vmatpush1.msra.mxu0 %v893
        %999 = vmatprep.subr.mxu0 0.0
        %1000 = vmatpush1.msra.mxu0 0.0
        %1001 = vmatprep.subr.mxu0 0.0
        %1002 = vmatpush1.msra.mxu0 0.0
        %1003 = vmatprep.subr.mxu0 0.0
        %1004 = vmatpush1.msra.mxu0 0.0
        %1005 = vmatprep.subr.mxu0 0.0
        %1006 = vmatpush1.msra.mxu0 0.0
        %1007 = vmatprep.subr.mxu0 0.0
        %1008 = vmatpush1.msra.mxu0 0.0
        %1009 = vmatprep.subr.mxu0 0.0
        %1010 = vmatpush1.msra.mxu0 0.0
        %1011 = vmatprep.subr.mxu0 0.0
        %1012 = vmatpush1.msra.mxu0 0.0
        %1013 = vmatprep.subr.mxu0 0.0
        %1014 = vmatpush1.msra.mxu0 0.0
        %1015 = vmatprep.subr.mxu0 0.0
        %1016 = vmatpush1.msra.mxu0 0.0
        %1017 = vmatprep.subr.mxu0 0.0
        %1018 = vmatpush1.msra.mxu0 0.0
        %1019 = vmatprep.subr.mxu0 0.0
        %1020 = vmatpush1.msra.mxu0 0.0
        %1021 = vmatprep.subr.mxu0 0.0
        %1022 = vmatpush1.msra.mxu0 0.0
        %1023 = vmatprep.subr.mxu0 0.0
        %1024 = vmatpush1.msra.mxu0 0.0
        %1025 = vmatprep.subr.mxu0 0.0
        %1026 = vmatpush1.msra.mxu0 0.0
        %1027 = vmatprep.subr.mxu0 0.0
        %1028 = vmatpush1.msra.mxu0 0.0
        %1029 = vmatprep.subr.mxu0 0.0
        %1030 = vmatpush1.msra.mxu0 0.0
        %1031 = vmatprep.subr.mxu0 0.0
        %1032 = vmatpush1.msra.mxu0 0.0
        %1033 = vmatprep.subr.mxu0 0.0
        %1034 = vmatpush1.msra.mxu0 0.0
        %1035 = vmatprep.subr.mxu0 0.0
        %1036 = vmatpush1.msra.mxu0 0.0
        %1037 = vmatprep.subr.mxu0 0.0
        %1038 = vmatpush1.msra.mxu0 0.0
        %1039 = vmatprep.subr.mxu0 0.0
        %1040 = vmatpush1.msra.mxu0 0.0
        %1041 = vmatprep.subr.mxu0 0.0
        %1042 = vmatpush1.msra.mxu0 0.0
        %1043 = vmatprep.subr.mxu0 0.0
        %1044 = vmatpush1.msra.mxu0 0.0
        %1045 = vmatprep.subr.mxu0 0.0
        %1046 = vmatpush1.msra.mxu0 0.0
        %1047 = vmatprep.subr.mxu0 0.0
        %1048 = vmatpush1.msra.mxu0 0.0
        %1049 = vmatprep.subr.mxu0 0.0
        %1050 = vmatpush1.msra.mxu0 0.0
        %1051 = vmatprep.subr.mxu0 0.0
        %1052 = vmatpush1.msra.mxu0 0.0
        %1053 = vmatprep.subr.mxu0 0.0
        %1054 = vmatpush1.msra.mxu0 0.0
        %1055 = vmatprep.subr.mxu0 0.0
        %1056 = vmatpush1.msra.mxu0 0.0
        %1057 = vmatprep.subr.mxu0 0.0
        %1058 = vmatpush1.msra.mxu0 0.0
        %1059 = vmatprep.mubr.f32.mxu0 0.0
        %1060 = vmatmul.mubr.f32.gmra.mrb[0].mxu0 %v990
        %v1061 = vpop.f32.mrb[0].mxu0
        %v1062 = vadd.f32 0.0, %v1061
        %v1063 = vpop.f32.mrb[0].mxu0
        %1064 = vmatprep.mubr.f32.mxu0 0.0
        %1065 = vmatmul.mubr.f32.gmra.mrb[0].mxu0 %v993
        %v1066 = vpop.f32.mrb[0].mxu0
        %v1067 = vadd.f32 0.0, %v1066
        %v1068 = vpop.f32.mrb[0].mxu0
        %1069 = vdwg.mxu0
        %s1070 = scalar_lea.vmem [#allocation7], 64
        %v1071 = vld [vmem:[%s1070] sm:$0xff]
        %v1072 = vld [vmem:[%s1070 + $0x8] sm:$0xff]
        %v1073 = vld [vmem:[%s1070 + $0x10] sm:$0xff]
        %v1074 = vld [vmem:[%s1070 + $0x18] sm:$0xff]
        %v1075 = vld [vmem:[%s1070 + $0x20] sm:$0xff]
        %v1076 = vld [vmem:[%s1070 + $0x28] sm:$0xff]
        %v1077 = vld [vmem:[%s1070 + $0x30] sm:$0xff]
        %v1078 = vld [vmem:[%s1070 + $0x38] sm:$0xff]
        %v1080 = vsel %vm896, %v1062, 0
        %v1083 = vsel %vm896, %v1067, 0
        %1085 = vmatprep.subr.mxu0 %v1072
        %1086 = vmatpush1.msra.mxu0 %v1071
        %1087 = vmatprep.subr.mxu0 %v1076
        %1088 = vmatpush1.msra.mxu0 %v1075
        %1089 = vmatprep.subr.mxu0 0.0
        %1090 = vmatpush1.msra.mxu0 0.0
        %1091 = vmatprep.subr.mxu0 0.0
        %1092 = vmatpush1.msra.mxu0 0.0
        %1093 = vmatprep.subr.mxu0 0.0
        %1094 = vmatpush1.msra.mxu0 0.0
        %1095 = vmatprep.subr.mxu0 0.0
        %1096 = vmatpush1.msra.mxu0 0.0
        %1097 = vmatprep.subr.mxu0 0.0
        %1098 = vmatpush1.msra.mxu0 0.0
        %1099 = vmatprep.subr.mxu0 0.0
        %1100 = vmatpush1.msra.mxu0 0.0
        %1101 = vmatprep.subr.mxu0 0.0
        %1102 = vmatpush1.msra.mxu0 0.0
        %1103 = vmatprep.subr.mxu0 0.0
        %1104 = vmatpush1.msra.mxu0 0.0
        %1105 = vmatprep.subr.mxu0 0.0
        %1106 = vmatpush1.msra.mxu0 0.0
        %1107 = vmatprep.subr.mxu0 0.0
        %1108 = vmatpush1.msra.mxu0 0.0
        %1109 = vmatprep.subr.mxu0 0.0
        %1110 = vmatpush1.msra.mxu0 0.0
        %1111 = vmatprep.subr.mxu0 0.0
        %1112 = vmatpush1.msra.mxu0 0.0
        %1113 = vmatprep.subr.mxu0 0.0
        %1114 = vmatpush1.msra.mxu0 0.0
        %1115 = vmatprep.subr.mxu0 0.0
        %1116 = vmatpush1.msra.mxu0 0.0
        %1117 = vmatprep.subr.mxu0 0.0
        %1118 = vmatpush1.msra.mxu0 0.0
        %1119 = vmatprep.subr.mxu0 0.0
        %1120 = vmatpush1.msra.mxu0 0.0
        %1121 = vmatprep.subr.mxu0 0.0
        %1122 = vmatpush1.msra.mxu0 0.0
        %1123 = vmatprep.subr.mxu0 0.0
        %1124 = vmatpush1.msra.mxu0 0.0
        %1125 = vmatprep.subr.mxu0 0.0
        %1126 = vmatpush1.msra.mxu0 0.0
        %1127 = vmatprep.subr.mxu0 0.0
        %1128 = vmatpush1.msra.mxu0 0.0
        %1129 = vmatprep.subr.mxu0 0.0
        %1130 = vmatpush1.msra.mxu0 0.0
        %1131 = vmatprep.subr.mxu0 0.0
        %1132 = vmatpush1.msra.mxu0 0.0
        %1133 = vmatprep.subr.mxu0 0.0
        %1134 = vmatpush1.msra.mxu0 0.0
        %1135 = vmatprep.subr.mxu0 0.0
        %1136 = vmatpush1.msra.mxu0 0.0
        %1137 = vmatprep.subr.mxu0 0.0
        %1138 = vmatpush1.msra.mxu0 0.0
        %1139 = vmatprep.subr.mxu0 0.0
        %1140 = vmatpush1.msra.mxu0 0.0
        %1141 = vmatprep.subr.mxu0 0.0
        %1142 = vmatpush1.msra.mxu0 0.0
        %1143 = vmatprep.subr.mxu0 0.0
        %1144 = vmatpush1.msra.mxu0 0.0
        %1145 = vmatprep.subr.mxu0 0.0
        %1146 = vmatpush1.msra.mxu0 0.0
        %1147 = vmatprep.subr.mxu0 0.0
        %1148 = vmatpush1.msra.mxu0 0.0
        %1149 = vmatprep.mubr.f32.mxu0 0.0
        %1150 = vmatmul.mubr.f32.gmra.mrb[0].mxu0 %v1080
        %v1151 = vpop.f32.mrb[0].mxu0
        %v1152 = vadd.f32 0.0, %v1151
        %v1153 = vpop.f32.mrb[0].mxu0
        %v1154 = vadd.f32 0.0, %v1153
        %1155 = vmatprep.mubr.f32.mxu0 0.0
        %1156 = vmatmul.mubr.f32.gmra.mrb[0].mxu0 %v1083
        %v1157 = vpop.f32.mrb[0].mxu0
        %v1158 = vadd.f32 0.0, %v1157
        %v1159 = vpop.f32.mrb[0].mxu0
        %v1160 = vadd.f32 0.0, %v1159
        %1161 = vdwg.mxu0
        %1162 = vmatprep.subr.mxu0 %v1074
        %1163 = vmatpush1.msra.mxu0 %v1073
        %1164 = vmatprep.subr.mxu0 %v1078
        %1165 = vmatpush1.msra.mxu0 %v1077
        %1166 = vmatprep.subr.mxu0 0.0
        %1167 = vmatpush1.msra.mxu0 0.0
        %1168 = vmatprep.subr.mxu0 0.0
        %1169 = vmatpush1.msra.mxu0 0.0
        %1170 = vmatprep.subr.mxu0 0.0
        %1171 = vmatpush1.msra.mxu0 0.0
        %1172 = vmatprep.subr.mxu0 0.0
        %1173 = vmatpush1.msra.mxu0 0.0
        %1174 = vmatprep.subr.mxu0 0.0
        %1175 = vmatpush1.msra.mxu0 0.0
        %1176 = vmatprep.subr.mxu0 0.0
        %1177 = vmatpush1.msra.mxu0 0.0
        %1178 = vmatprep.subr.mxu0 0.0
        %1179 = vmatpush1.msra.mxu0 0.0
        %1180 = vmatprep.subr.mxu0 0.0
        %1181 = vmatpush1.msra.mxu0 0.0
        %1182 = vmatprep.subr.mxu0 0.0
        %1183 = vmatpush1.msra.mxu0 0.0
        %1184 = vmatprep.subr.mxu0 0.0
        %1185 = vmatpush1.msra.mxu0 0.0
        %1186 = vmatprep.subr.mxu0 0.0
        %1187 = vmatpush1.msra.mxu0 0.0
        %1188 = vmatprep.subr.mxu0 0.0
        %1189 = vmatpush1.msra.mxu0 0.0
        %1190 = vmatprep.subr.mxu0 0.0
        %1191 = vmatpush1.msra.mxu0 0.0
        %1192 = vmatprep.subr.mxu0 0.0
        %1193 = vmatpush1.msra.mxu0 0.0
        %1194 = vmatprep.subr.mxu0 0.0
        %1195 = vmatpush1.msra.mxu0 0.0
        %1196 = vmatprep.subr.mxu0 0.0
        %1197 = vmatpush1.msra.mxu0 0.0
        %1198 = vmatprep.subr.mxu0 0.0
        %1199 = vmatpush1.msra.mxu0 0.0
        %1200 = vmatprep.subr.mxu0 0.0
        %1201 = vmatpush1.msra.mxu0 0.0
        %1202 = vmatprep.subr.mxu0 0.0
        %1203 = vmatpush1.msra.mxu0 0.0
        %1204 = vmatprep.subr.mxu0 0.0
        %1205 = vmatpush1.msra.mxu0 0.0
        %1206 = vmatprep.subr.mxu0 0.0
        %1207 = vmatpush1.msra.mxu0 0.0
        %1208 = vmatprep.subr.mxu0 0.0
        %1209 = vmatpush1.msra.mxu0 0.0
        %1210 = vmatprep.subr.mxu0 0.0
        %1211 = vmatpush1.msra.mxu0 0.0
        %1212 = vmatprep.subr.mxu0 0.0
        %1213 = vmatpush1.msra.mxu0 0.0
        %1214 = vmatprep.subr.mxu0 0.0
        %1215 = vmatpush1.msra.mxu0 0.0
        %1216 = vmatprep.subr.mxu0 0.0
        %1217 = vmatpush1.msra.mxu0 0.0
        %1218 = vmatprep.subr.mxu0 0.0
        %1219 = vmatpush1.msra.mxu0 0.0
        %1220 = vmatprep.subr.mxu0 0.0
        %1221 = vmatpush1.msra.mxu0 0.0
        %1222 = vmatprep.subr.mxu0 0.0
        %1223 = vmatpush1.msra.mxu0 0.0
        %1224 = vmatprep.subr.mxu0 0.0
        %1225 = vmatpush1.msra.mxu0 0.0
        %1226 = vmatprep.mubr.f32.mxu0 0.0
        %1227 = vmatmul.mubr.f32.gmra.mrb[0].mxu0 %v1080
        %v1228 = vpop.f32.mrb[0].mxu0
        %v1229 = vadd.f32 0.0, %v1228
        %v1230 = vpop.f32.mrb[0].mxu0
        %v1231 = vadd.f32 0.0, %v1230
        %1232 = vmatprep.mubr.f32.mxu0 0.0
        %1233 = vmatmul.mubr.f32.gmra.mrb[0].mxu0 %v1083
        %v1234 = vpop.f32.mrb[0].mxu0
        %v1235 = vadd.f32 0.0, %v1234
        %v1236 = vpop.f32.mrb[0].mxu0
        %v1237 = vadd.f32 0.0, %v1236
        %1238 = vdwg.mxu0
        %v1240 = vsel %vm896, %v970, 0
        %v1243 = vsel %vm896, %v975, 0
        %1245 = vmatprep.subr.mxu0 %v979
        %1246 = vmatpush1.msra.mxu0 %v978
        %1247 = vmatprep.subr.mxu0 %v983
        %1248 = vmatpush1.msra.mxu0 %v982
        %1249 = vmatprep.subr.mxu0 0.0
        %1250 = vmatpush1.msra.mxu0 0.0
        %1251 = vmatprep.subr.mxu0 0.0
        %1252 = vmatpush1.msra.mxu0 0.0
        %1253 = vmatprep.subr.mxu0 0.0
        %1254 = vmatpush1.msra.mxu0 0.0
        %1255 = vmatprep.subr.mxu0 0.0
        %1256 = vmatpush1.msra.mxu0 0.0
        %1257 = vmatprep.subr.mxu0 0.0
        %1258 = vmatpush1.msra.mxu0 0.0
        %1259 = vmatprep.subr.mxu0 0.0
        %1260 = vmatpush1.msra.mxu0 0.0
        %1261 = vmatprep.subr.mxu0 0.0
        %1262 = vmatpush1.msra.mxu0 0.0
        %1263 = vmatprep.subr.mxu0 0.0
        %1264 = vmatpush1.msra.mxu0 0.0
        %1265 = vmatprep.subr.mxu0 0.0
        %1266 = vmatpush1.msra.mxu0 0.0
        %1267 = vmatprep.subr.mxu0 0.0
        %1268 = vmatpush1.msra.mxu0 0.0
        %1269 = vmatprep.subr.mxu0 0.0
        %1270 = vmatpush1.msra.mxu0 0.0
        %1271 = vmatprep.subr.mxu0 0.0
        %1272 = vmatpush1.msra.mxu0 0.0
        %1273 = vmatprep.subr.mxu0 0.0
        %1274 = vmatpush1.msra.mxu0 0.0
        %1275 = vmatprep.subr.mxu0 0.0
        %1276 = vmatpush1.msra.mxu0 0.0
        %1277 = vmatprep.subr.mxu0 0.0
        %1278 = vmatpush1.msra.mxu0 0.0
        %1279 = vmatprep.subr.mxu0 0.0
        %1280 = vmatpush1.msra.mxu0 0.0
        %1281 = vmatprep.subr.mxu0 0.0
        %1282 = vmatpush1.msra.mxu0 0.0
        %1283 = vmatprep.subr.mxu0 0.0
        %1284 = vmatpush1.msra.mxu0 0.0
        %1285 = vmatprep.subr.mxu0 0.0
        %1286 = vmatpush1.msra.mxu0 0.0
        %1287 = vmatprep.subr.mxu0 0.0
        %1288 = vmatpush1.msra.mxu0 0.0
        %1289 = vmatprep.subr.mxu0 0.0
        %1290 = vmatpush1.msra.mxu0 0.0
        %1291 = vmatprep.subr.mxu0 0.0
        %1292 = vmatpush1.msra.mxu0 0.0
        %1293 = vmatprep.subr.mxu0 0.0
        %1294 = vmatpush1.msra.mxu0 0.0
        %1295 = vmatprep.subr.mxu0 0.0
        %1296 = vmatpush1.msra.mxu0 0.0
        %1297 = vmatprep.subr.mxu0 0.0
        %1298 = vmatpush1.msra.mxu0 0.0
        %1299 = vmatprep.subr.mxu0 0.0
        %1300 = vmatpush1.msra.mxu0 0.0
        %1301 = vmatprep.subr.mxu0 0.0
        %1302 = vmatpush1.msra.mxu0 0.0
        %1303 = vmatprep.subr.mxu0 0.0
        %1304 = vmatpush1.msra.mxu0 0.0
        %1305 = vmatprep.subr.mxu0 0.0
        %1306 = vmatpush1.msra.mxu0 0.0
        %1307 = vmatprep.subr.mxu0 0.0
        %1308 = vmatpush1.msra.mxu0 0.0
        %1309 = vmatprep.mubr.f32.mxu0 0.0
        %1310 = vmatmul.mubr.f32.gmra.mrb[0].mxu0 %v1240
        %v1311 = vpop.f32.mrb[0].mxu0
        %v1312 = vadd.f32 %v1152, %v1311
        %v1313 = vpop.f32.mrb[0].mxu0
        %v1314 = vadd.f32 %v1154, %v1313
        %1315 = vmatprep.mubr.f32.mxu0 0.0
        %1316 = vmatmul.mubr.f32.gmra.mrb[0].mxu0 %v1243
        %v1317 = vpop.f32.mrb[0].mxu0
        %v1318 = vadd.f32 %v1158, %v1317
        %v1319 = vpop.f32.mrb[0].mxu0
        %v1320 = vadd.f32 %v1160, %v1319
        %1321 = vdwg.mxu0
        %1322 = vmatprep.subr.mxu0 %v981
        %1323 = vmatpush1.msra.mxu0 %v980
        %1324 = vmatprep.subr.mxu0 %v985
        %1325 = vmatpush1.msra.mxu0 %v984
        %1326 = vmatprep.subr.mxu0 0.0
        %1327 = vmatpush1.msra.mxu0 0.0
        %1328 = vmatprep.subr.mxu0 0.0
        %1329 = vmatpush1.msra.mxu0 0.0
        %1330 = vmatprep.subr.mxu0 0.0
        %1331 = vmatpush1.msra.mxu0 0.0
        %1332 = vmatprep.subr.mxu0 0.0
        %1333 = vmatpush1.msra.mxu0 0.0
        %1334 = vmatprep.subr.mxu0 0.0
        %1335 = vmatpush1.msra.mxu0 0.0
        %1336 = vmatprep.subr.mxu0 0.0
        %1337 = vmatpush1.msra.mxu0 0.0
        %1338 = vmatprep.subr.mxu0 0.0
        %1339 = vmatpush1.msra.mxu0 0.0
        %1340 = vmatprep.subr.mxu0 0.0
        %1341 = vmatpush1.msra.mxu0 0.0
        %1342 = vmatprep.subr.mxu0 0.0
        %1343 = vmatpush1.msra.mxu0 0.0
        %1344 = vmatprep.subr.mxu0 0.0
        %1345 = vmatpush1.msra.mxu0 0.0
        %1346 = vmatprep.subr.mxu0 0.0
        %1347 = vmatpush1.msra.mxu0 0.0
        %1348 = vmatprep.subr.mxu0 0.0
        %1349 = vmatpush1.msra.mxu0 0.0
        %1350 = vmatprep.subr.mxu0 0.0
        %1351 = vmatpush1.msra.mxu0 0.0
        %1352 = vmatprep.subr.mxu0 0.0
        %1353 = vmatpush1.msra.mxu0 0.0
        %1354 = vmatprep.subr.mxu0 0.0
        %1355 = vmatpush1.msra.mxu0 0.0
        %1356 = vmatprep.subr.mxu0 0.0
        %1357 = vmatpush1.msra.mxu0 0.0
        %1358 = vmatprep.subr.mxu0 0.0
        %1359 = vmatpush1.msra.mxu0 0.0
        %1360 = vmatprep.subr.mxu0 0.0
        %1361 = vmatpush1.msra.mxu0 0.0
        %1362 = vmatprep.subr.mxu0 0.0
        %1363 = vmatpush1.msra.mxu0 0.0
        %1364 = vmatprep.subr.mxu0 0.0
        %1365 = vmatpush1.msra.mxu0 0.0
        %1366 = vmatprep.subr.mxu0 0.0
        %1367 = vmatpush1.msra.mxu0 0.0
        %1368 = vmatprep.subr.mxu0 0.0
        %1369 = vmatpush1.msra.mxu0 0.0
        %1370 = vmatprep.subr.mxu0 0.0
        %1371 = vmatpush1.msra.mxu0 0.0
        %1372 = vmatprep.subr.mxu0 0.0
        %1373 = vmatpush1.msra.mxu0 0.0
        %1374 = vmatprep.subr.mxu0 0.0
        %1375 = vmatpush1.msra.mxu0 0.0
        %1376 = vmatprep.subr.mxu0 0.0
        %1377 = vmatpush1.msra.mxu0 0.0
        %1378 = vmatprep.subr.mxu0 0.0
        %1379 = vmatpush1.msra.mxu0 0.0
        %1380 = vmatprep.subr.mxu0 0.0
        %1381 = vmatpush1.msra.mxu0 0.0
        %1382 = vmatprep.subr.mxu0 0.0
        %1383 = vmatpush1.msra.mxu0 0.0
        %1384 = vmatprep.subr.mxu0 0.0
        %1385 = vmatpush1.msra.mxu0 0.0
        %1386 = vmatprep.mubr.f32.mxu0 0.0
        %1387 = vmatmul.mubr.f32.gmra.mrb[0].mxu0 %v1240
        %v1388 = vpop.f32.mrb[0].mxu0
        %v1389 = vadd.f32 %v1229, %v1388
        %v1390 = vpop.f32.mrb[0].mxu0
        %v1391 = vadd.f32 %v1231, %v1390
        %1392 = vmatprep.mubr.f32.mxu0 0.0
        %1393 = vmatmul.mubr.f32.gmra.mrb[0].mxu0 %v1243
        %v1394 = vpop.f32.mrb[0].mxu0
        %v1395 = vadd.f32 %v1235, %v1394
        %v1396 = vpop.f32.mrb[0].mxu0
        %v1397 = vadd.f32 %v1237, %v1396
        %1398 = vdwg.mxu0
        %s1399 = scalar_lea.vmem [#allocation5], 32
        %v1400 = vld [vmem:[%s1399] sm:$0xff]
        %v1401 = vld [vmem:[%s1399 + $0x8] sm:$0xff]
        %v1403 = vsel %vm896, %v1400, 0
        %v1406 = vsel %vm896, %v1401, 0
        %1408 = vmatprep.subr.mxu0 0.0
        %1409 = vmatpush1.msra.mxu0 %v892
        %1410 = vmatprep.subr.mxu0 0.0
        %1411 = vmatpush1.msra.mxu0 %v893
        %1412 = vmatprep.subr.mxu0 0.0
        %1413 = vmatpush1.msra.mxu0 0.0
        %1414 = vmatprep.subr.mxu0 0.0
        %1415 = vmatpush1.msra.mxu0 0.0
        %1416 = vmatprep.subr.mxu0 0.0
        %1417 = vmatpush1.msra.mxu0 0.0
        %1418 = vmatprep.subr.mxu0 0.0
        %1419 = vmatpush1.msra.mxu0 0.0
        %1420 = vmatprep.subr.mxu0 0.0
        %1421 = vmatpush1.msra.mxu0 0.0
        %1422 = vmatprep.subr.mxu0 0.0
        %1423 = vmatpush1.msra.mxu0 0.0
        %1424 = vmatprep.subr.mxu0 0.0
        %1425 = vmatpush1.msra.mxu0 0.0
        %1426 = vmatprep.subr.mxu0 0.0
        %1427 = vmatpush1.msra.mxu0 0.0
        %1428 = vmatprep.subr.mxu0 0.0
        %1429 = vmatpush1.msra.mxu0 0.0
        %1430 = vmatprep.subr.mxu0 0.0
        %1431 = vmatpush1.msra.mxu0 0.0
        %1432 = vmatprep.subr.mxu0 0.0
        %1433 = vmatpush1.msra.mxu0 0.0
        %1434 = vmatprep.subr.mxu0 0.0
        %1435 = vmatpush1.msra.mxu0 0.0
        %1436 = vmatprep.subr.mxu0 0.0
        %1437 = vmatpush1.msra.mxu0 0.0
        %1438 = vmatprep.subr.mxu0 0.0
        %1439 = vmatpush1.msra.mxu0 0.0
        %1440 = vmatprep.subr.mxu0 0.0
        %1441 = vmatpush1.msra.mxu0 0.0
        %1442 = vmatprep.subr.mxu0 0.0
        %1443 = vmatpush1.msra.mxu0 0.0
        %1444 = vmatprep.subr.mxu0 0.0
        %1445 = vmatpush1.msra.mxu0 0.0
        %1446 = vmatprep.subr.mxu0 0.0
        %1447 = vmatpush1.msra.mxu0 0.0
        %1448 = vmatprep.subr.mxu0 0.0
        %1449 = vmatpush1.msra.mxu0 0.0
        %1450 = vmatprep.subr.mxu0 0.0
        %1451 = vmatpush1.msra.mxu0 0.0
        %1452 = vmatprep.subr.mxu0 0.0
        %1453 = vmatpush1.msra.mxu0 0.0
        %1454 = vmatprep.subr.mxu0 0.0
        %1455 = vmatpush1.msra.mxu0 0.0
        %1456 = vmatprep.subr.mxu0 0.0
        %1457 = vmatpush1.msra.mxu0 0.0
        %1458 = vmatprep.subr.mxu0 0.0
        %1459 = vmatpush1.msra.mxu0 0.0
        %1460 = vmatprep.subr.mxu0 0.0
        %1461 = vmatpush1.msra.mxu0 0.0
        %1462 = vmatprep.subr.mxu0 0.0
        %1463 = vmatpush1.msra.mxu0 0.0
        %1464 = vmatprep.subr.mxu0 0.0
        %1465 = vmatpush1.msra.mxu0 0.0
        %1466 = vmatprep.subr.mxu0 0.0
        %1467 = vmatpush1.msra.mxu0 0.0
        %1468 = vmatprep.subr.mxu0 0.0
        %1469 = vmatpush1.msra.mxu0 0.0
        %1470 = vmatprep.subr.mxu0 0.0
        %1471 = vmatpush1.msra.mxu0 0.0
        %1472 = vmatprep.mubr.f32.mxu0 0.0
        %1473 = vmatmul.mubr.f32.gmra.mrb[0].mxu0 %v1403
        %v1474 = vpop.f32.mrb[0].mxu0
        %v1475 = vadd.f32 0.0, %v1474
        %v1476 = vpop.f32.mrb[0].mxu0
        %1477 = vmatprep.mubr.f32.mxu0 0.0
        %1478 = vmatmul.mubr.f32.gmra.mrb[0].mxu0 %v1406
        %v1479 = vpop.f32.mrb[0].mxu0
        %v1480 = vadd.f32 0.0, %v1479
        %v1481 = vpop.f32.mrb[0].mxu0
        %1482 = vdwg.mxu0
        %s1483 = scalar_lea.vmem [#allocation7], 128
        %v1484 = vld [vmem:[%s1483] sm:$0xff]
        %v1485 = vld [vmem:[%s1483 + $0x8] sm:$0xff]
        %v1486 = vld [vmem:[%s1483 + $0x10] sm:$0xff]
        %v1487 = vld [vmem:[%s1483 + $0x18] sm:$0xff]
        %v1488 = vld [vmem:[%s1483 + $0x20] sm:$0xff]
        %v1489 = vld [vmem:[%s1483 + $0x28] sm:$0xff]
        %v1490 = vld [vmem:[%s1483 + $0x30] sm:$0xff]
        %v1491 = vld [vmem:[%s1483 + $0x38] sm:$0xff]
        %v1493 = vsel %vm896, %v1475, 0
        %v1496 = vsel %vm896, %v1480, 0
        %1498 = vmatprep.subr.mxu0 %v1485
        %1499 = vmatpush1.msra.mxu0 %v1484
        %1500 = vmatprep.subr.mxu0 %v1489
        %1501 = vmatpush1.msra.mxu0 %v1488
        %1502 = vmatprep.subr.mxu0 0.0
        %1503 = vmatpush1.msra.mxu0 0.0
        %1504 = vmatprep.subr.mxu0 0.0
        %1505 = vmatpush1.msra.mxu0 0.0
        %1506 = vmatprep.subr.mxu0 0.0
        %1507 = vmatpush1.msra.mxu0 0.0
        %1508 = vmatprep.subr.mxu0 0.0
        %1509 = vmatpush1.msra.mxu0 0.0
        %1510 = vmatprep.subr.mxu0 0.0
        %1511 = vmatpush1.msra.mxu0 0.0
        %1512 = vmatprep.subr.mxu0 0.0
        %1513 = vmatpush1.msra.mxu0 0.0
        %1514 = vmatprep.subr.mxu0 0.0
        %1515 = vmatpush1.msra.mxu0 0.0
        %1516 = vmatprep.subr.mxu0 0.0
        %1517 = vmatpush1.msra.mxu0 0.0
        %1518 = vmatprep.subr.mxu0 0.0
        %1519 = vmatpush1.msra.mxu0 0.0
        %1520 = vmatprep.subr.mxu0 0.0
        %1521 = vmatpush1.msra.mxu0 0.0
        %1522 = vmatprep.subr.mxu0 0.0
        %1523 = vmatpush1.msra.mxu0 0.0
        %1524 = vmatprep.subr.mxu0 0.0
        %1525 = vmatpush1.msra.mxu0 0.0
        %1526 = vmatprep.subr.mxu0 0.0
        %1527 = vmatpush1.msra.mxu0 0.0
        %1528 = vmatprep.subr.mxu0 0.0
        %1529 = vmatpush1.msra.mxu0 0.0
        %1530 = vmatprep.subr.mxu0 0.0
        %1531 = vmatpush1.msra.mxu0 0.0
        %1532 = vmatprep.subr.mxu0 0.0
        %1533 = vmatpush1.msra.mxu0 0.0
        %1534 = vmatprep.subr.mxu0 0.0
        %1535 = vmatpush1.msra.mxu0 0.0
        %1536 = vmatprep.subr.mxu0 0.0
        %1537 = vmatpush1.msra.mxu0 0.0
        %1538 = vmatprep.subr.mxu0 0.0
        %1539 = vmatpush1.msra.mxu0 0.0
        %1540 = vmatprep.subr.mxu0 0.0
        %1541 = vmatpush1.msra.mxu0 0.0
        %1542 = vmatprep.subr.mxu0 0.0
        %1543 = vmatpush1.msra.mxu0 0.0
        %1544 = vmatprep.subr.mxu0 0.0
        %1545 = vmatpush1.msra.mxu0 0.0
        %1546 = vmatprep.subr.mxu0 0.0
        %1547 = vmatpush1.msra.mxu0 0.0
        %1548 = vmatprep.subr.mxu0 0.0
        %1549 = vmatpush1.msra.mxu0 0.0
        %1550 = vmatprep.subr.mxu0 0.0
        %1551 = vmatpush1.msra.mxu0 0.0
        %1552 = vmatprep.subr.mxu0 0.0
        %1553 = vmatpush1.msra.mxu0 0.0
        %1554 = vmatprep.subr.mxu0 0.0
        %1555 = vmatpush1.msra.mxu0 0.0
        %1556 = vmatprep.subr.mxu0 0.0
        %1557 = vmatpush1.msra.mxu0 0.0
        %1558 = vmatprep.subr.mxu0 0.0
        %1559 = vmatpush1.msra.mxu0 0.0
        %1560 = vmatprep.subr.mxu0 0.0
        %1561 = vmatpush1.msra.mxu0 0.0
        %1562 = vmatprep.mubr.f32.mxu0 0.0
        %1563 = vmatmul.mubr.f32.gmra.mrb[0].mxu0 %v1493
        %v1564 = vpop.f32.mrb[0].mxu0
        %v1565 = vadd.f32 0.0, %v1564
        %v1566 = vpop.f32.mrb[0].mxu0
        %v1567 = vadd.f32 0.0, %v1566
        %1568 = vmatprep.mubr.f32.mxu0 0.0
        %1569 = vmatmul.mubr.f32.gmra.mrb[0].mxu0 %v1496
        %v1570 = vpop.f32.mrb[0].mxu0
        %v1571 = vadd.f32 0.0, %v1570
        %v1572 = vpop.f32.mrb[0].mxu0
        %v1573 = vadd.f32 0.0, %v1572
        %1574 = vdwg.mxu0
        %1575 = vmatprep.subr.mxu0 %v1487
        %1576 = vmatpush1.msra.mxu0 %v1486
        %1577 = vmatprep.subr.mxu0 %v1491
        %1578 = vmatpush1.msra.mxu0 %v1490
        %1579 = vmatprep.subr.mxu0 0.0
        %1580 = vmatpush1.msra.mxu0 0.0
        %1581 = vmatprep.subr.mxu0 0.0
        %1582 = vmatpush1.msra.mxu0 0.0
        %1583 = vmatprep.subr.mxu0 0.0
        %1584 = vmatpush1.msra.mxu0 0.0
        %1585 = vmatprep.subr.mxu0 0.0
        %1586 = vmatpush1.msra.mxu0 0.0
        %1587 = vmatprep.subr.mxu0 0.0
        %1588 = vmatpush1.msra.mxu0 0.0
        %1589 = vmatprep.subr.mxu0 0.0
        %1590 = vmatpush1.msra.mxu0 0.0
        %1591 = vmatprep.subr.mxu0 0.0
        %1592 = vmatpush1.msra.mxu0 0.0
        %1593 = vmatprep.subr.mxu0 0.0
        %1594 = vmatpush1.msra.mxu0 0.0
        %1595 = vmatprep.subr.mxu0 0.0
        %1596 = vmatpush1.msra.mxu0 0.0
        %1597 = vmatprep.subr.mxu0 0.0
        %1598 = vmatpush1.msra.mxu0 0.0
        %1599 = vmatprep.subr.mxu0 0.0
        %1600 = vmatpush1.msra.mxu0 0.0
        %1601 = vmatprep.subr.mxu0 0.0
        %1602 = vmatpush1.msra.mxu0 0.0
        %1603 = vmatprep.subr.mxu0 0.0
        %1604 = vmatpush1.msra.mxu0 0.0
        %1605 = vmatprep.subr.mxu0 0.0
        %1606 = vmatpush1.msra.mxu0 0.0
        %1607 = vmatprep.subr.mxu0 0.0
        %1608 = vmatpush1.msra.mxu0 0.0
        %1609 = vmatprep.subr.mxu0 0.0
        %1610 = vmatpush1.msra.mxu0 0.0
        %1611 = vmatprep.subr.mxu0 0.0
        %1612 = vmatpush1.msra.mxu0 0.0
        %1613 = vmatprep.subr.mxu0 0.0
        %1614 = vmatpush1.msra.mxu0 0.0
        %1615 = vmatprep.subr.mxu0 0.0
        %1616 = vmatpush1.msra.mxu0 0.0
        %1617 = vmatprep.subr.mxu0 0.0
        %1618 = vmatpush1.msra.mxu0 0.0
        %1619 = vmatprep.subr.mxu0 0.0
        %1620 = vmatpush1.msra.mxu0 0.0
        %1621 = vmatprep.subr.mxu0 0.0
        %1622 = vmatpush1.msra.mxu0 0.0
        %1623 = vmatprep.subr.mxu0 0.0
        %1624 = vmatpush1.msra.mxu0 0.0
        %1625 = vmatprep.subr.mxu0 0.0
        %1626 = vmatpush1.msra.mxu0 0.0
        %1627 = vmatprep.subr.mxu0 0.0
        %1628 = vmatpush1.msra.mxu0 0.0
        %1629 = vmatprep.subr.mxu0 0.0
        %1630 = vmatpush1.msra.mxu0 0.0
        %1631 = vmatprep.subr.mxu0 0.0
        %1632 = vmatpush1.msra.mxu0 0.0
        %1633 = vmatprep.subr.mxu0 0.0
        %1634 = vmatpush1.msra.mxu0 0.0
        %1635 = vmatprep.subr.mxu0 0.0
        %1636 = vmatpush1.msra.mxu0 0.0
        %1637 = vmatprep.subr.mxu0 0.0
        %1638 = vmatpush1.msra.mxu0 0.0
        %1639 = vmatprep.mubr.f32.mxu0 0.0
        %1640 = vmatmul.mubr.f32.gmra.mrb[0].mxu0 %v1493
        %v1641 = vpop.f32.mrb[0].mxu0
        %v1642 = vadd.f32 0.0, %v1641
        %v1643 = vpop.f32.mrb[0].mxu0
        %v1644 = vadd.f32 0.0, %v1643
        %1645 = vmatprep.mubr.f32.mxu0 0.0
        %1646 = vmatmul.mubr.f32.gmra.mrb[0].mxu0 %v1496
        %v1647 = vpop.f32.mrb[0].mxu0
        %v1648 = vadd.f32 0.0, %v1647
        %v1649 = vpop.f32.mrb[0].mxu0
        %v1650 = vadd.f32 0.0, %v1649
        %1651 = vdwg.mxu0
        %v1652 = vadd.f32 %v1312, %v1565
        %v1653 = vadd.f32 %v1314, %v1567
        %v1654 = vadd.f32 %v1389, %v1642
        %v1655 = vadd.f32 %v1391, %v1644
        %v1656 = vadd.f32 %v1318, %v1571
        %v1657 = vadd.f32 %v1320, %v1573
        %v1658 = vadd.f32 %v1395, %v1648
        %v1659 = vadd.f32 %v1397, %v1650
        %v1660 = vld [vmem:[#allocation8] sm:$0xff]
        %v1662 = vlaneseq
        %v1663 = vshrl.u32 %v1662, 7
        %v1664 = vsub.s32 0, %v1663
        %v1665 = vrot.slane %v1660, %v1664
        %v1666 = vlaneseq
        %v1667 = vshrl.u32 %v1666, 7
        %v1668 = vsub.s32 2, %v1667
        %v1669 = vrot.slane %v1660, %v1668
        %v1670 = vlaneseq
        %v1671 = vshrl.u32 %v1670, 7
        %v1672 = vsub.s32 4, %v1671
        %v1673 = vrot.slane %v1660, %v1672
        %v1674 = vlaneseq
        %v1675 = vshrl.u32 %v1674, 7
        %v1676 = vsub.s32 6, %v1675
        %v1677 = vrot.slane %v1660, %v1676
        %v1682 = vlaneseq
        %v1683 = vshrl.u32 %v1682, 7
        %v1684 = vsub.s32 0, %v1683
        %v1685 = vrot.slane %v1665, %v1684
        %v1686 = vlaneseq
        %v1687 = vshrl.u32 %v1686, 7
        %v1688 = vsub.s32 0, %v1687
        %v1689 = vrot.slane %v1669, %v1688
        %v1690 = vlaneseq
        %v1691 = vshrl.u32 %v1690, 7
        %v1692 = vsub.s32 0, %v1691
        %v1693 = vrot.slane %v1673, %v1692
        %v1694 = vlaneseq
        %v1695 = vshrl.u32 %v1694, 7
        %v1696 = vsub.s32 0, %v1695
        %v1697 = vrot.slane %v1677, %v1696
        %v1698 = vadd.f32 %v1652, %v1685
        %v1699 = vadd.f32 %v1653, %v1689
        %v1700 = vadd.f32 %v1654, %v1693
        %v1701 = vadd.f32 %v1655, %v1697
        %v1702 = vadd.f32 %v1656, %v1685
        %v1703 = vadd.f32 %v1657, %v1689
        %v1704 = vadd.f32 %v1658, %v1693
        %v1705 = vadd.f32 %v1659, %v1697
        %vm1706 = vcmp.ge.f32.partialorder %v1698, 0.0
        %vm1707 = vcmp.ge.f32.partialorder %v1699, 0.0
        %vm1708 = vcmp.ge.f32.partialorder %v1700, 0.0
        %vm1709 = vcmp.ge.f32.partialorder %v1701, 0.0
        %vm1710 = vcmp.ge.f32.partialorder %v1702, 0.0
        %vm1711 = vcmp.ge.f32.partialorder %v1703, 0.0
        %vm1712 = vcmp.ge.f32.partialorder %v1704, 0.0
        %vm1713 = vcmp.ge.f32.partialorder %v1705, 0.0
        %v1714 = vmul.f32 %v1698, 0.01
        %v1715 = vmul.f32 %v1699, 0.01
        %v1716 = vmul.f32 %v1700, 0.01
        %v1717 = vmul.f32 %v1701, 0.01
        %v1718 = vmul.f32 %v1702, 0.01
        %v1719 = vmul.f32 %v1703, 0.01
        %v1720 = vmul.f32 %v1704, 0.01
        %v1721 = vmul.f32 %v1705, 0.01
        %v1722 = vsel %vm1706, %v1698, %v1714
        %v1723 = vsel %vm1707, %v1699, %v1715
        %v1724 = vsel %vm1708, %v1700, %v1716
        %v1725 = vsel %vm1709, %v1701, %v1717
        %v1726 = vsel %vm1710, %v1702, %v1718
        %v1727 = vsel %vm1711, %v1703, %v1719
        %v1728 = vsel %vm1712, %v1704, %v1720
        %v1729 = vsel %vm1713, %v1705, %v1721
        %v1730 = vlaneseq
        %v1731 = vshrl.u32 %v1730, 7
        %v1732 = vsub.s32 1, %v1731
        %v1733 = vrot.slane %v1660, %v1732
        %v1734 = vlaneseq
        %v1735 = vshrl.u32 %v1734, 7
        %v1736 = vsub.s32 3, %v1735
        %v1737 = vrot.slane %v1660, %v1736
        %v1738 = vlaneseq
        %v1739 = vshrl.u32 %v1738, 7
        %v1740 = vsub.s32 5, %v1739
        %v1741 = vrot.slane %v1660, %v1740
        %v1742 = vlaneseq
        %v1743 = vshrl.u32 %v1742, 7
        %v1744 = vsub.s32 7, %v1743
        %v1745 = vrot.slane %v1660, %v1744
        %v1750 = vlaneseq
        %v1751 = vshrl.u32 %v1750, 7
        %v1752 = vsub.s32 1, %v1751
        %v1753 = vrot.slane %v1733, %v1752
        %v1754 = vlaneseq
        %v1755 = vshrl.u32 %v1754, 7
        %v1756 = vsub.s32 1, %v1755
        %v1757 = vrot.slane %v1737, %v1756
        %v1758 = vlaneseq
        %v1759 = vshrl.u32 %v1758, 7
        %v1760 = vsub.s32 1, %v1759
        %v1761 = vrot.slane %v1741, %v1760
        %v1762 = vlaneseq
        %v1763 = vshrl.u32 %v1762, 7
        %v1764 = vsub.s32 1, %v1763
        %v1765 = vrot.slane %v1745, %v1764
        %v1766 = vadd.f32 %v1722, %v1753
        %v1767 = vadd.f32 %v1723, %v1757
        %v1768 = vadd.f32 %v1724, %v1761
        %v1769 = vadd.f32 %v1725, %v1765
        %v1770 = vadd.f32 %v1726, %v1753
        %v1771 = vadd.f32 %v1727, %v1757
        %v1772 = vadd.f32 %v1728, %v1761
        %v1773 = vadd.f32 %v1729, %v1765
        %v1774 = vld [vmem:[#allocation10] sm:$0xff]
        %v1775 = vld [vmem:[#allocation10 + $0x8] sm:$0xff]
        %v1777 = vsel %vm896, %v1774, 0
        %v1780 = vsel %vm896, %v1775, 0
        %1782 = vmatprep.subr.mxu0 %v1767
        %1783 = vmatpush1.msra.mxu0 %v1766
        %1784 = vmatprep.subr.mxu0 %v1771
        %1785 = vmatpush1.msra.mxu0 %v1770
        %1786 = vmatprep.subr.mxu0 0.0
        %1787 = vmatpush1.msra.mxu0 0.0
        %1788 = vmatprep.subr.mxu0 0.0
        %1789 = vmatpush1.msra.mxu0 0.0
        %1790 = vmatprep.subr.mxu0 0.0
        %1791 = vmatpush1.msra.mxu0 0.0
        %1792 = vmatprep.subr.mxu0 0.0
        %1793 = vmatpush1.msra.mxu0 0.0
        %1794 = vmatprep.subr.mxu0 0.0
        %1795 = vmatpush1.msra.mxu0 0.0
        %1796 = vmatprep.subr.mxu0 0.0
        %1797 = vmatpush1.msra.mxu0 0.0
        %1798 = vmatprep.subr.mxu0 0.0
        %1799 = vmatpush1.msra.mxu0 0.0
        %1800 = vmatprep.subr.mxu0 0.0
        %1801 = vmatpush1.msra.mxu0 0.0
        %1802 = vmatprep.subr.mxu0 0.0
        %1803 = vmatpush1.msra.mxu0 0.0
        %1804 = vmatprep.subr.mxu0 0.0
        %1805 = vmatpush1.msra.mxu0 0.0
        %1806 = vmatprep.subr.mxu0 0.0
        %1807 = vmatpush1.msra.mxu0 0.0
        %1808 = vmatprep.subr.mxu0 0.0
        %1809 = vmatpush1.msra.mxu0 0.0
        %1810 = vmatprep.subr.mxu0 0.0
        %1811 = vmatpush1.msra.mxu0 0.0
        %1812 = vmatprep.subr.mxu0 0.0
        %1813 = vmatpush1.msra.mxu0 0.0
        %1814 = vmatprep.subr.mxu0 0.0
        %1815 = vmatpush1.msra.mxu0 0.0
        %1816 = vmatprep.subr.mxu0 0.0
        %1817 = vmatpush1.msra.mxu0 0.0
        %1818 = vmatprep.subr.mxu0 0.0
        %1819 = vmatpush1.msra.mxu0 0.0
        %1820 = vmatprep.subr.mxu0 0.0
        %1821 = vmatpush1.msra.mxu0 0.0
        %1822 = vmatprep.subr.mxu0 0.0
        %1823 = vmatpush1.msra.mxu0 0.0
        %1824 = vmatprep.subr.mxu0 0.0
        %1825 = vmatpush1.msra.mxu0 0.0
        %1826 = vmatprep.subr.mxu0 0.0
        %1827 = vmatpush1.msra.mxu0 0.0
        %1828 = vmatprep.subr.mxu0 0.0
        %1829 = vmatpush1.msra.mxu0 0.0
        %1830 = vmatprep.subr.mxu0 0.0
        %1831 = vmatpush1.msra.mxu0 0.0
        %1832 = vmatprep.subr.mxu0 0.0
        %1833 = vmatpush1.msra.mxu0 0.0
        %1834 = vmatprep.subr.mxu0 0.0
        %1835 = vmatpush1.msra.mxu0 0.0
        %1836 = vmatprep.subr.mxu0 0.0
        %1837 = vmatpush1.msra.mxu0 0.0
        %1838 = vmatprep.subr.mxu0 0.0
        %1839 = vmatpush1.msra.mxu0 0.0
        %1840 = vmatprep.subr.mxu0 0.0
        %1841 = vmatpush1.msra.mxu0 0.0
        %1842 = vmatprep.subr.mxu0 0.0
        %1843 = vmatpush1.msra.mxu0 0.0
        %1844 = vmatprep.subr.mxu0 0.0
        %1845 = vmatpush1.msra.mxu0 0.0
        %1846 = vmatprep.mubr.f32.mxu0 0.0
        %1847 = vmatmul.mubr.f32.gmra.mrb[0].mxu0 %v1777
        %v1848 = vpop.f32.mrb[0].mxu0
        %v1849 = vadd.f32 0.0, %v1848
        %v1850 = vpop.f32.mrb[0].mxu0
        %v1851 = vadd.f32 0.0, %v1850
        %1852 = vmatprep.mubr.f32.mxu0 0.0
        %1853 = vmatmul.mubr.f32.gmra.mrb[0].mxu0 %v1780
        %v1854 = vpop.f32.mrb[0].mxu0
        %v1855 = vadd.f32 0.0, %v1854
        %v1856 = vpop.f32.mrb[0].mxu0
        %v1857 = vadd.f32 0.0, %v1856
        %1858 = vdwg.mxu0
        %1859 = vmatprep.subr.mxu0 %v1769
        %1860 = vmatpush1.msra.mxu0 %v1768
        %1861 = vmatprep.subr.mxu0 %v1773
        %1862 = vmatpush1.msra.mxu0 %v1772
        %1863 = vmatprep.subr.mxu0 0.0
        %1864 = vmatpush1.msra.mxu0 0.0
        %1865 = vmatprep.subr.mxu0 0.0
        %1866 = vmatpush1.msra.mxu0 0.0
        %1867 = vmatprep.subr.mxu0 0.0
        %1868 = vmatpush1.msra.mxu0 0.0
        %1869 = vmatprep.subr.mxu0 0.0
        %1870 = vmatpush1.msra.mxu0 0.0
        %1871 = vmatprep.subr.mxu0 0.0
        %1872 = vmatpush1.msra.mxu0 0.0
        %1873 = vmatprep.subr.mxu0 0.0
        %1874 = vmatpush1.msra.mxu0 0.0
        %1875 = vmatprep.subr.mxu0 0.0
        %1876 = vmatpush1.msra.mxu0 0.0
        %1877 = vmatprep.subr.mxu0 0.0
        %1878 = vmatpush1.msra.mxu0 0.0
        %1879 = vmatprep.subr.mxu0 0.0
        %1880 = vmatpush1.msra.mxu0 0.0
        %1881 = vmatprep.subr.mxu0 0.0
        %1882 = vmatpush1.msra.mxu0 0.0
        %1883 = vmatprep.subr.mxu0 0.0
        %1884 = vmatpush1.msra.mxu0 0.0
        %1885 = vmatprep.subr.mxu0 0.0
        %1886 = vmatpush1.msra.mxu0 0.0
        %1887 = vmatprep.subr.mxu0 0.0
        %1888 = vmatpush1.msra.mxu0 0.0
        %1889 = vmatprep.subr.mxu0 0.0
        %1890 = vmatpush1.msra.mxu0 0.0
        %1891 = vmatprep.subr.mxu0 0.0
        %1892 = vmatpush1.msra.mxu0 0.0
        %1893 = vmatprep.subr.mxu0 0.0
        %1894 = vmatpush1.msra.mxu0 0.0
        %1895 = vmatprep.subr.mxu0 0.0
        %1896 = vmatpush1.msra.mxu0 0.0
        %1897 = vmatprep.subr.mxu0 0.0
        %1898 = vmatpush1.msra.mxu0 0.0
        %1899 = vmatprep.subr.mxu0 0.0
        %1900 = vmatpush1.msra.mxu0 0.0
        %1901 = vmatprep.subr.mxu0 0.0
        %1902 = vmatpush1.msra.mxu0 0.0
        %1903 = vmatprep.subr.mxu0 0.0
        %1904 = vmatpush1.msra.mxu0 0.0
        %1905 = vmatprep.subr.mxu0 0.0
        %1906 = vmatpush1.msra.mxu0 0.0
        %1907 = vmatprep.subr.mxu0 0.0
        %1908 = vmatpush1.msra.mxu0 0.0
        %1909 = vmatprep.subr.mxu0 0.0
        %1910 = vmatpush1.msra.mxu0 0.0
        %1911 = vmatprep.subr.mxu0 0.0
        %1912 = vmatpush1.msra.mxu0 0.0
        %1913 = vmatprep.subr.mxu0 0.0
        %1914 = vmatpush1.msra.mxu0 0.0
        %1915 = vmatprep.subr.mxu0 0.0
        %1916 = vmatpush1.msra.mxu0 0.0
        %1917 = vmatprep.subr.mxu0 0.0
        %1918 = vmatpush1.msra.mxu0 0.0
        %1919 = vmatprep.subr.mxu0 0.0
        %1920 = vmatpush1.msra.mxu0 0.0
        %1921 = vmatprep.subr.mxu0 0.0
        %1922 = vmatpush1.msra.mxu0 0.0
        %1923 = vmatprep.mubr.f32.mxu0 0.0
        %1924 = vmatmul.mubr.f32.gmra.mrb[0].mxu0 %v1777
        %v1925 = vpop.f32.mrb[0].mxu0
        %v1926 = vadd.f32 0.0, %v1925
        %v1927 = vpop.f32.mrb[0].mxu0
        %v1928 = vadd.f32 0.0, %v1927
        %1929 = vmatprep.mubr.f32.mxu0 0.0
        %1930 = vmatmul.mubr.f32.gmra.mrb[0].mxu0 %v1780
        %v1931 = vpop.f32.mrb[0].mxu0
        %v1932 = vadd.f32 0.0, %v1931
        %v1933 = vpop.f32.mrb[0].mxu0
        %v1934 = vadd.f32 0.0, %v1933
        %1935 = vdwg.mxu0
        %v1936 = vld [vmem:[#allocation11] sm:$0xff]
        %v1937 = vld [vmem:[#allocation11 + $0x8] sm:$0xff]
        %v1938 = vld [vmem:[#allocation11 + $0x10] sm:$0xff]
        %v1939 = vld [vmem:[#allocation11 + $0x18] sm:$0xff]
        %v1940 = vld [vmem:[#allocation11 + $0x20] sm:$0xff]
        %v1941 = vld [vmem:[#allocation11 + $0x28] sm:$0xff]
        %v1942 = vld [vmem:[#allocation11 + $0x30] sm:$0xff]
        %v1943 = vld [vmem:[#allocation11 + $0x38] sm:$0xff]
        %v1944 = vld [vmem:[#allocation11 + $0x40] sm:$0xff]
        %v1945 = vld [vmem:[#allocation11 + $0x48] sm:$0xff]
        %v1946 = vld [vmem:[#allocation11 + $0x50] sm:$0xff]
        %v1947 = vld [vmem:[#allocation11 + $0x58] sm:$0xff]
        %v1948 = vld [vmem:[#allocation11 + $0x60] sm:$0xff]
        %v1949 = vld [vmem:[#allocation11 + $0x68] sm:$0xff]
        %v1950 = vld [vmem:[#allocation11 + $0x70] sm:$0xff]
        %v1951 = vld [vmem:[#allocation11 + $0x78] sm:$0xff]
        %v1952 = vld [vmem:[#allocation11 + $0x80] sm:$0xff]
        %v1953 = vld [vmem:[#allocation11 + $0x88] sm:$0xff]
        %v1954 = vld [vmem:[#allocation11 + $0x90] sm:$0xff]
        %v1955 = vld [vmem:[#allocation11 + $0x98] sm:$0xff]
        %v1956 = vld [vmem:[#allocation11 + $0xa0] sm:$0xff]
        %v1957 = vld [vmem:[#allocation11 + $0xa8] sm:$0xff]
        %v1958 = vld [vmem:[#allocation11 + $0xb0] sm:$0xff]
        %v1959 = vld [vmem:[#allocation11 + $0xb8] sm:$0xff]
        %v1960 = vld [vmem:[#allocation11 + $0xc0] sm:$0xff]
        %v1961 = vld [vmem:[#allocation11 + $0xc8] sm:$0xff]
        %v1962 = vld [vmem:[#allocation11 + $0xd0] sm:$0xff]
        %v1963 = vld [vmem:[#allocation11 + $0xd8] sm:$0xff]
        %v1964 = vld [vmem:[#allocation11 + $0xe0] sm:$0xff]
        %v1965 = vld [vmem:[#allocation11 + $0xe8] sm:$0xff]
        %v1966 = vld [vmem:[#allocation11 + $0xf0] sm:$0xff]
        %v1967 = vld [vmem:[#allocation11 + $0xf8] sm:$0xff]
        %v1968 = vld [vmem:[#allocation11 + $0x100] sm:$0xff]
        %v1969 = vld [vmem:[#allocation11 + $0x108] sm:$0xff]
        %v1970 = vld [vmem:[#allocation11 + $0x110] sm:$0xff]
        %v1971 = vld [vmem:[#allocation11 + $0x118] sm:$0xff]
        %v1972 = vld [vmem:[#allocation11 + $0x120] sm:$0xff]
        %v1973 = vld [vmem:[#allocation11 + $0x128] sm:$0xff]
        %v1974 = vld [vmem:[#allocation11 + $0x130] sm:$0xff]
        %v1975 = vld [vmem:[#allocation11 + $0x138] sm:$0xff]
        %v1976 = vld [vmem:[#allocation11 + $0x140] sm:$0xff]
        %v1977 = vld [vmem:[#allocation11 + $0x148] sm:$0xff]
        %v1978 = vld [vmem:[#allocation11 + $0x150] sm:$0xff]
        %v1979 = vld [vmem:[#allocation11 + $0x158] sm:$0xff]
        %v1980 = vld [vmem:[#allocation11 + $0x160] sm:$0xff]
        %v1981 = vld [vmem:[#allocation11 + $0x168] sm:$0xff]
        %v1982 = vld [vmem:[#allocation11 + $0x170] sm:$0xff]
        %v1983 = vld [vmem:[#allocation11 + $0x178] sm:$0xff]
        %v1984 = vld [vmem:[#allocation11 + $0x180] sm:$0xff]
        %v1985 = vld [vmem:[#allocation11 + $0x188] sm:$0xff]
        %v1986 = vld [vmem:[#allocation11 + $0x190] sm:$0xff]
        %v1987 = vld [vmem:[#allocation11 + $0x198] sm:$0xff]
        %v1988 = vld [vmem:[#allocation11 + $0x1a0] sm:$0xff]
        %v1989 = vld [vmem:[#allocation11 + $0x1a8] sm:$0xff]
        %v1990 = vld [vmem:[#allocation11 + $0x1b0] sm:$0xff]
        %v1991 = vld [vmem:[#allocation11 + $0x1b8] sm:$0xff]
        %v1992 = vld [vmem:[#allocation11 + $0x1c0] sm:$0xff]
        %v1993 = vld [vmem:[#allocation11 + $0x1c8] sm:$0xff]
        %v1994 = vld [vmem:[#allocation11 + $0x1d0] sm:$0xff]
        %v1995 = vld [vmem:[#allocation11 + $0x1d8] sm:$0xff]
        %v1996 = vld [vmem:[#allocation11 + $0x1e0] sm:$0xff]
        %v1997 = vld [vmem:[#allocation11 + $0x1e8] sm:$0xff]
        %v1998 = vld [vmem:[#allocation11 + $0x1f0] sm:$0xff]
        %v1999 = vld [vmem:[#allocation11 + $0x1f8] sm:$0xff]
        %v2000 = vld [vmem:[#allocation11 + $0x200] sm:$0xff]
        %v2001 = vld [vmem:[#allocation11 + $0x208] sm:$0xff]
        %v2002 = vld [vmem:[#allocation11 + $0x210] sm:$0xff]
        %v2003 = vld [vmem:[#allocation11 + $0x218] sm:$0xff]
        %v2004 = vld [vmem:[#allocation11 + $0x220] sm:$0xff]
        %v2005 = vld [vmem:[#allocation11 + $0x228] sm:$0xff]
        %v2006 = vld [vmem:[#allocation11 + $0x230] sm:$0xff]
        %v2007 = vld [vmem:[#allocation11 + $0x238] sm:$0xff]
        %v2008 = vld [vmem:[#allocation11 + $0x240] sm:$0xff]
        %v2009 = vld [vmem:[#allocation11 + $0x248] sm:$0xff]
        %v2010 = vld [vmem:[#allocation11 + $0x250] sm:$0xff]
        %v2011 = vld [vmem:[#allocation11 + $0x258] sm:$0xff]
        %v2012 = vld [vmem:[#allocation11 + $0x260] sm:$0xff]
        %v2013 = vld [vmem:[#allocation11 + $0x268] sm:$0xff]
        %v2014 = vld [vmem:[#allocation11 + $0x270] sm:$0xff]
        %v2015 = vld [vmem:[#allocation11 + $0x278] sm:$0xff]
        %v2016 = vld [vmem:[#allocation11 + $0x280] sm:$0xff]
        %v2017 = vld [vmem:[#allocation11 + $0x288] sm:$0xff]
        %v2018 = vld [vmem:[#allocation11 + $0x290] sm:$0xff]
        %v2019 = vld [vmem:[#allocation11 + $0x298] sm:$0xff]
        %v2020 = vld [vmem:[#allocation11 + $0x2a0] sm:$0xff]
        %v2021 = vld [vmem:[#allocation11 + $0x2a8] sm:$0xff]
        %v2022 = vld [vmem:[#allocation11 + $0x2b0] sm:$0xff]
        %v2023 = vld [vmem:[#allocation11 + $0x2b8] sm:$0xff]
        %v2024 = vld [vmem:[#allocation11 + $0x2c0] sm:$0xff]
        %v2025 = vld [vmem:[#allocation11 + $0x2c8] sm:$0xff]
        %v2026 = vld [vmem:[#allocation11 + $0x2d0] sm:$0xff]
        %v2027 = vld [vmem:[#allocation11 + $0x2d8] sm:$0xff]
        %v2028 = vld [vmem:[#allocation11 + $0x2e0] sm:$0xff]
        %v2029 = vld [vmem:[#allocation11 + $0x2e8] sm:$0xff]
        %v2030 = vld [vmem:[#allocation11 + $0x2f0] sm:$0xff]
        %v2031 = vld [vmem:[#allocation11 + $0x2f8] sm:$0xff]
        %v2032 = vld [vmem:[#allocation11 + $0x300] sm:$0xff]
        %v2033 = vld [vmem:[#allocation11 + $0x308] sm:$0xff]
        %v2034 = vld [vmem:[#allocation11 + $0x310] sm:$0xff]
        %v2035 = vld [vmem:[#allocation11 + $0x318] sm:$0xff]
        %v2036 = vld [vmem:[#allocation11 + $0x320] sm:$0xff]
        %v2037 = vld [vmem:[#allocation11 + $0x328] sm:$0xff]
        %v2038 = vld [vmem:[#allocation11 + $0x330] sm:$0xff]
        %v2039 = vld [vmem:[#allocation11 + $0x338] sm:$0xff]
        %v2040 = vld [vmem:[#allocation11 + $0x340] sm:$0xff]
        %v2041 = vld [vmem:[#allocation11 + $0x348] sm:$0xff]
        %v2042 = vld [vmem:[#allocation11 + $0x350] sm:$0xff]
        %v2043 = vld [vmem:[#allocation11 + $0x358] sm:$0xff]
        %v2044 = vld [vmem:[#allocation11 + $0x360] sm:$0xff]
        %v2045 = vld [vmem:[#allocation11 + $0x368] sm:$0xff]
        %v2046 = vld [vmem:[#allocation11 + $0x370] sm:$0xff]
        %v2047 = vld [vmem:[#allocation11 + $0x378] sm:$0xff]
        %v2048 = vld [vmem:[#allocation11 + $0x380] sm:$0xff]
        %v2049 = vld [vmem:[#allocation11 + $0x388] sm:$0xff]
        %v2050 = vld [vmem:[#allocation11 + $0x390] sm:$0xff]
        %v2051 = vld [vmem:[#allocation11 + $0x398] sm:$0xff]
        %v2052 = vld [vmem:[#allocation11 + $0x3a0] sm:$0xff]
        %v2053 = vld [vmem:[#allocation11 + $0x3a8] sm:$0xff]
        %v2054 = vld [vmem:[#allocation11 + $0x3b0] sm:$0xff]
        %v2055 = vld [vmem:[#allocation11 + $0x3b8] sm:$0xff]
        %v2056 = vld [vmem:[#allocation11 + $0x3c0] sm:$0xff]
        %v2057 = vld [vmem:[#allocation11 + $0x3c8] sm:$0xff]
        %v2058 = vld [vmem:[#allocation11 + $0x3d0] sm:$0xff]
        %v2059 = vld [vmem:[#allocation11 + $0x3d8] sm:$0xff]
        %v2060 = vld [vmem:[#allocation11 + $0x3e0] sm:$0xff]
        %v2061 = vld [vmem:[#allocation11 + $0x3e8] sm:$0xff]
        %v2062 = vld [vmem:[#allocation11 + $0x3f0] sm:$0xff]
        %v2063 = vld [vmem:[#allocation11 + $0x3f8] sm:$0xff]
        %v2064 = vld [vmem:[#allocation11 + $0x400] sm:$0xff]
        %v2065 = vld [vmem:[#allocation11 + $0x408] sm:$0xff]
        %v2066 = vld [vmem:[#allocation11 + $0x410] sm:$0xff]
        %v2067 = vld [vmem:[#allocation11 + $0x418] sm:$0xff]
        %v2068 = vld [vmem:[#allocation11 + $0x420] sm:$0xff]
        %v2069 = vld [vmem:[#allocation11 + $0x428] sm:$0xff]
        %v2070 = vld [vmem:[#allocation11 + $0x430] sm:$0xff]
        %v2071 = vld [vmem:[#allocation11 + $0x438] sm:$0xff]
        %v2072 = vld [vmem:[#allocation11 + $0x440] sm:$0xff]
        %v2073 = vld [vmem:[#allocation11 + $0x448] sm:$0xff]
        %v2074 = vld [vmem:[#allocation11 + $0x450] sm:$0xff]
        %v2075 = vld [vmem:[#allocation11 + $0x458] sm:$0xff]
        %v2076 = vld [vmem:[#allocation11 + $0x460] sm:$0xff]
        %v2077 = vld [vmem:[#allocation11 + $0x468] sm:$0xff]
        %v2078 = vld [vmem:[#allocation11 + $0x470] sm:$0xff]
        %v2079 = vld [vmem:[#allocation11 + $0x478] sm:$0xff]
        %v2080 = vld [vmem:[#allocation11 + $0x480] sm:$0xff]
        %v2081 = vld [vmem:[#allocation11 + $0x488] sm:$0xff]
        %v2082 = vld [vmem:[#allocation11 + $0x490] sm:$0xff]
        %v2083 = vld [vmem:[#allocation11 + $0x498] sm:$0xff]
        %v2084 = vld [vmem:[#allocation11 + $0x4a0] sm:$0xff]
        %v2085 = vld [vmem:[#allocation11 + $0x4a8] sm:$0xff]
        %v2086 = vld [vmem:[#allocation11 + $0x4b0] sm:$0xff]
        %v2087 = vld [vmem:[#allocation11 + $0x4b8] sm:$0xff]
        %v2088 = vld [vmem:[#allocation11 + $0x4c0] sm:$0xff]
        %v2089 = vld [vmem:[#allocation11 + $0x4c8] sm:$0xff]
        %v2090 = vld [vmem:[#allocation11 + $0x4d0] sm:$0xff]
        %v2091 = vld [vmem:[#allocation11 + $0x4d8] sm:$0xff]
        %v2092 = vld [vmem:[#allocation11 + $0x4e0] sm:$0xff]
        %v2093 = vld [vmem:[#allocation11 + $0x4e8] sm:$0xff]
        %v2094 = vld [vmem:[#allocation11 + $0x4f0] sm:$0xff]
        %v2095 = vld [vmem:[#allocation11 + $0x4f8] sm:$0xff]
        %v2096 = vld [vmem:[#allocation11 + $0x500] sm:$0xff]
        %v2097 = vld [vmem:[#allocation11 + $0x508] sm:$0xff]
        %v2098 = vld [vmem:[#allocation11 + $0x510] sm:$0xff]
        %v2099 = vld [vmem:[#allocation11 + $0x518] sm:$0xff]
        %v2100 = vld [vmem:[#allocation11 + $0x520] sm:$0xff]
        %v2101 = vld [vmem:[#allocation11 + $0x528] sm:$0xff]
        %v2102 = vld [vmem:[#allocation11 + $0x530] sm:$0xff]
        %v2103 = vld [vmem:[#allocation11 + $0x538] sm:$0xff]
        %v2104 = vld [vmem:[#allocation11 + $0x540] sm:$0xff]
        %v2105 = vld [vmem:[#allocation11 + $0x548] sm:$0xff]
        %v2106 = vld [vmem:[#allocation11 + $0x550] sm:$0xff]
        %v2107 = vld [vmem:[#allocation11 + $0x558] sm:$0xff]
        %v2108 = vld [vmem:[#allocation11 + $0x560] sm:$0xff]
        %v2109 = vld [vmem:[#allocation11 + $0x568] sm:$0xff]
        %v2110 = vld [vmem:[#allocation11 + $0x570] sm:$0xff]
        %v2111 = vld [vmem:[#allocation11 + $0x578] sm:$0xff]
        %v2112 = vld [vmem:[#allocation11 + $0x580] sm:$0xff]
        %v2113 = vld [vmem:[#allocation11 + $0x588] sm:$0xff]
        %v2114 = vld [vmem:[#allocation11 + $0x590] sm:$0xff]
        %v2115 = vld [vmem:[#allocation11 + $0x598] sm:$0xff]
        %v2116 = vld [vmem:[#allocation11 + $0x5a0] sm:$0xff]
        %v2117 = vld [vmem:[#allocation11 + $0x5a8] sm:$0xff]
        %v2118 = vld [vmem:[#allocation11 + $0x5b0] sm:$0xff]
        %v2119 = vld [vmem:[#allocation11 + $0x5b8] sm:$0xff]
        %v2120 = vld [vmem:[#allocation11 + $0x5c0] sm:$0xff]
        %v2121 = vld [vmem:[#allocation11 + $0x5c8] sm:$0xff]
        %v2122 = vld [vmem:[#allocation11 + $0x5d0] sm:$0xff]
        %v2123 = vld [vmem:[#allocation11 + $0x5d8] sm:$0xff]
        %v2124 = vld [vmem:[#allocation11 + $0x5e0] sm:$0xff]
        %v2125 = vld [vmem:[#allocation11 + $0x5e8] sm:$0xff]
        %v2126 = vld [vmem:[#allocation11 + $0x5f0] sm:$0xff]
        %v2127 = vld [vmem:[#allocation11 + $0x5f8] sm:$0xff]
        %v2128 = vld [vmem:[#allocation11 + $0x600] sm:$0xff]
        %v2129 = vld [vmem:[#allocation11 + $0x608] sm:$0xff]
        %v2130 = vld [vmem:[#allocation11 + $0x610] sm:$0xff]
        %v2131 = vld [vmem:[#allocation11 + $0x618] sm:$0xff]
        %v2132 = vld [vmem:[#allocation11 + $0x620] sm:$0xff]
        %v2133 = vld [vmem:[#allocation11 + $0x628] sm:$0xff]
        %v2134 = vld [vmem:[#allocation11 + $0x630] sm:$0xff]
        %v2135 = vld [vmem:[#allocation11 + $0x638] sm:$0xff]
        %v2136 = vld [vmem:[#allocation11 + $0x640] sm:$0xff]
        %v2137 = vld [vmem:[#allocation11 + $0x648] sm:$0xff]
        %v2138 = vld [vmem:[#allocation11 + $0x650] sm:$0xff]
        %v2139 = vld [vmem:[#allocation11 + $0x658] sm:$0xff]
        %v2140 = vld [vmem:[#allocation11 + $0x660] sm:$0xff]
        %v2141 = vld [vmem:[#allocation11 + $0x668] sm:$0xff]
        %v2142 = vld [vmem:[#allocation11 + $0x670] sm:$0xff]
        %v2143 = vld [vmem:[#allocation11 + $0x678] sm:$0xff]
        %v2144 = vld [vmem:[#allocation11 + $0x680] sm:$0xff]
        %v2145 = vld [vmem:[#allocation11 + $0x688] sm:$0xff]
        %v2146 = vld [vmem:[#allocation11 + $0x690] sm:$0xff]
        %v2147 = vld [vmem:[#allocation11 + $0x698] sm:$0xff]
        %v2148 = vld [vmem:[#allocation11 + $0x6a0] sm:$0xff]
        %v2149 = vld [vmem:[#allocation11 + $0x6a8] sm:$0xff]
        %v2150 = vld [vmem:[#allocation11 + $0x6b0] sm:$0xff]
        %v2151 = vld [vmem:[#allocation11 + $0x6b8] sm:$0xff]
        %v2152 = vld [vmem:[#allocation11 + $0x6c0] sm:$0xff]
        %v2153 = vld [vmem:[#allocation11 + $0x6c8] sm:$0xff]
        %v2154 = vld [vmem:[#allocation11 + $0x6d0] sm:$0xff]
        %v2155 = vld [vmem:[#allocation11 + $0x6d8] sm:$0xff]
        %v2156 = vld [vmem:[#allocation11 + $0x6e0] sm:$0xff]
        %v2157 = vld [vmem:[#allocation11 + $0x6e8] sm:$0xff]
        %v2158 = vld [vmem:[#allocation11 + $0x6f0] sm:$0xff]
        %v2159 = vld [vmem:[#allocation11 + $0x6f8] sm:$0xff]
        %v2160 = vld [vmem:[#allocation11 + $0x700] sm:$0xff]
        %v2161 = vld [vmem:[#allocation11 + $0x708] sm:$0xff]
        %v2162 = vld [vmem:[#allocation11 + $0x710] sm:$0xff]
        %v2163 = vld [vmem:[#allocation11 + $0x718] sm:$0xff]
        %v2164 = vld [vmem:[#allocation11 + $0x720] sm:$0xff]
        %v2165 = vld [vmem:[#allocation11 + $0x728] sm:$0xff]
        %v2166 = vld [vmem:[#allocation11 + $0x730] sm:$0xff]
        %v2167 = vld [vmem:[#allocation11 + $0x738] sm:$0xff]
        %v2168 = vld [vmem:[#allocation11 + $0x740] sm:$0xff]
        %v2169 = vld [vmem:[#allocation11 + $0x748] sm:$0xff]
        %v2170 = vld [vmem:[#allocation11 + $0x750] sm:$0xff]
        %v2171 = vld [vmem:[#allocation11 + $0x758] sm:$0xff]
        %v2172 = vld [vmem:[#allocation11 + $0x760] sm:$0xff]
        %v2173 = vld [vmem:[#allocation11 + $0x768] sm:$0xff]
        %v2174 = vld [vmem:[#allocation11 + $0x770] sm:$0xff]
        %v2175 = vld [vmem:[#allocation11 + $0x778] sm:$0xff]
        %v2176 = vld [vmem:[#allocation11 + $0x780] sm:$0xff]
        %v2177 = vld [vmem:[#allocation11 + $0x788] sm:$0xff]
        %v2178 = vld [vmem:[#allocation11 + $0x790] sm:$0xff]
        %v2179 = vld [vmem:[#allocation11 + $0x798] sm:$0xff]
        %v2180 = vld [vmem:[#allocation11 + $0x7a0] sm:$0xff]
        %v2181 = vld [vmem:[#allocation11 + $0x7a8] sm:$0xff]
        %v2182 = vld [vmem:[#allocation11 + $0x7b0] sm:$0xff]
        %v2183 = vld [vmem:[#allocation11 + $0x7b8] sm:$0xff]
        %v2184 = vld [vmem:[#allocation11 + $0x7c0] sm:$0xff]
        %v2185 = vld [vmem:[#allocation11 + $0x7c8] sm:$0xff]
        %v2186 = vld [vmem:[#allocation11 + $0x7d0] sm:$0xff]
        %v2187 = vld [vmem:[#allocation11 + $0x7d8] sm:$0xff]
        %v2188 = vld [vmem:[#allocation11 + $0x7e0] sm:$0xff]
        %v2189 = vld [vmem:[#allocation11 + $0x7e8] sm:$0xff]
        %v2190 = vld [vmem:[#allocation11 + $0x7f0] sm:$0xff]
        %v2191 = vld [vmem:[#allocation11 + $0x7f8] sm:$0xff]
        %s2192 = scalar_lea.vmem [#allocation10], 16
        %v2193 = vld [vmem:[%s2192] sm:$0xff]
        %v2194 = vld [vmem:[%s2192 + $0x8] sm:$0xff]
        %v2196 = vsel %vm896, %v2193, 0
        %v2199 = vsel %vm896, %v2194, 0
        %2201 = vmatprep.subr.mxu0 %v1767
        %2202 = vmatpush1.msra.mxu0 %v1766
        %2203 = vmatprep.subr.mxu0 %v1771
        %2204 = vmatpush1.msra.mxu0 %v1770
        %2205 = vmatprep.subr.mxu0 0.0
        %2206 = vmatpush1.msra.mxu0 0.0
        %2207 = vmatprep.subr.mxu0 0.0
        %2208 = vmatpush1.msra.mxu0 0.0
        %2209 = vmatprep.subr.mxu0 0.0
        %2210 = vmatpush1.msra.mxu0 0.0
        %2211 = vmatprep.subr.mxu0 0.0
        %2212 = vmatpush1.msra.mxu0 0.0
        %2213 = vmatprep.subr.mxu0 0.0
        %2214 = vmatpush1.msra.mxu0 0.0
        %2215 = vmatprep.subr.mxu0 0.0
        %2216 = vmatpush1.msra.mxu0 0.0
        %2217 = vmatprep.subr.mxu0 0.0
        %2218 = vmatpush1.msra.mxu0 0.0
        %2219 = vmatprep.subr.mxu0 0.0
        %2220 = vmatpush1.msra.mxu0 0.0
        %2221 = vmatprep.subr.mxu0 0.0
        %2222 = vmatpush1.msra.mxu0 0.0
        %2223 = vmatprep.subr.mxu0 0.0
        %2224 = vmatpush1.msra.mxu0 0.0
        %2225 = vmatprep.subr.mxu0 0.0
        %2226 = vmatpush1.msra.mxu0 0.0
        %2227 = vmatprep.subr.mxu0 0.0
        %2228 = vmatpush1.msra.mxu0 0.0
        %2229 = vmatprep.subr.mxu0 0.0
        %2230 = vmatpush1.msra.mxu0 0.0
        %2231 = vmatprep.subr.mxu0 0.0
        %2232 = vmatpush1.msra.mxu0 0.0
        %2233 = vmatprep.subr.mxu0 0.0
        %2234 = vmatpush1.msra.mxu0 0.0
        %2235 = vmatprep.subr.mxu0 0.0
        %2236 = vmatpush1.msra.mxu0 0.0
        %2237 = vmatprep.subr.mxu0 0.0
        %2238 = vmatpush1.msra.mxu0 0.0
        %2239 = vmatprep.subr.mxu0 0.0
        %2240 = vmatpush1.msra.mxu0 0.0
        %2241 = vmatprep.subr.mxu0 0.0
        %2242 = vmatpush1.msra.mxu0 0.0
        %2243 = vmatprep.subr.mxu0 0.0
        %2244 = vmatpush1.msra.mxu0 0.0
        %2245 = vmatprep.subr.mxu0 0.0
        %2246 = vmatpush1.msra.mxu0 0.0
        %2247 = vmatprep.subr.mxu0 0.0
        %2248 = vmatpush1.msra.mxu0 0.0
        %2249 = vmatprep.subr.mxu0 0.0
        %2250 = vmatpush1.msra.mxu0 0.0
        %2251 = vmatprep.subr.mxu0 0.0
        %2252 = vmatpush1.msra.mxu0 0.0
        %2253 = vmatprep.subr.mxu0 0.0
        %2254 = vmatpush1.msra.mxu0 0.0
        %2255 = vmatprep.subr.mxu0 0.0
        %2256 = vmatpush1.msra.mxu0 0.0
        %2257 = vmatprep.subr.mxu0 0.0
        %2258 = vmatpush1.msra.mxu0 0.0
        %2259 = vmatprep.subr.mxu0 0.0
        %2260 = vmatpush1.msra.mxu0 0.0
        %2261 = vmatprep.subr.mxu0 0.0
        %2262 = vmatpush1.msra.mxu0 0.0
        %2263 = vmatprep.subr.mxu0 0.0
        %2264 = vmatpush1.msra.mxu0 0.0
        %2265 = vmatprep.mubr.f32.mxu0 0.0
        %2266 = vmatmul.mubr.f32.gmra.mrb[0].mxu0 %v2196
        %v2267 = vpop.f32.mrb[0].mxu0
        %v2268 = vadd.f32 0.0, %v2267
        %v2269 = vpop.f32.mrb[0].mxu0
        %v2270 = vadd.f32 0.0, %v2269
        %2271 = vmatprep.mubr.f32.mxu0 0.0
        %2272 = vmatmul.mubr.f32.gmra.mrb[0].mxu0 %v2199
        %v2273 = vpop.f32.mrb[0].mxu0
        %v2274 = vadd.f32 0.0, %v2273
        %v2275 = vpop.f32.mrb[0].mxu0
        %v2276 = vadd.f32 0.0, %v2275
        %2277 = vdwg.mxu0
        %2278 = vmatprep.subr.mxu0 %v1769
        %2279 = vmatpush1.msra.mxu0 %v1768
        %2280 = vmatprep.subr.mxu0 %v1773
        %2281 = vmatpush1.msra.mxu0 %v1772
        %2282 = vmatprep.subr.mxu0 0.0
        %2283 = vmatpush1.msra.mxu0 0.0
        %2284 = vmatprep.subr.mxu0 0.0
        %2285 = vmatpush1.msra.mxu0 0.0
        %2286 = vmatprep.subr.mxu0 0.0
        %2287 = vmatpush1.msra.mxu0 0.0
        %2288 = vmatprep.subr.mxu0 0.0
        %2289 = vmatpush1.msra.mxu0 0.0
        %2290 = vmatprep.subr.mxu0 0.0
        %2291 = vmatpush1.msra.mxu0 0.0
        %2292 = vmatprep.subr.mxu0 0.0
        %2293 = vmatpush1.msra.mxu0 0.0
        %2294 = vmatprep.subr.mxu0 0.0
        %2295 = vmatpush1.msra.mxu0 0.0
        %2296 = vmatprep.subr.mxu0 0.0
        %2297 = vmatpush1.msra.mxu0 0.0
        %2298 = vmatprep.subr.mxu0 0.0
        %2299 = vmatpush1.msra.mxu0 0.0
        %2300 = vmatprep.subr.mxu0 0.0
        %2301 = vmatpush1.msra.mxu0 0.0
        %2302 = vmatprep.subr.mxu0 0.0
        %2303 = vmatpush1.msra.mxu0 0.0
        %2304 = vmatprep.subr.mxu0 0.0
        %2305 = vmatpush1.msra.mxu0 0.0
        %2306 = vmatprep.subr.mxu0 0.0
        %2307 = vmatpush1.msra.mxu0 0.0
        %2308 = vmatprep.subr.mxu0 0.0
        %2309 = vmatpush1.msra.mxu0 0.0
        %2310 = vmatprep.subr.mxu0 0.0
        %2311 = vmatpush1.msra.mxu0 0.0
        %2312 = vmatprep.subr.mxu0 0.0
        %2313 = vmatpush1.msra.mxu0 0.0
        %2314 = vmatprep.subr.mxu0 0.0
        %2315 = vmatpush1.msra.mxu0 0.0
        %2316 = vmatprep.subr.mxu0 0.0
        %2317 = vmatpush1.msra.mxu0 0.0
        %2318 = vmatprep.subr.mxu0 0.0
        %2319 = vmatpush1.msra.mxu0 0.0
        %2320 = vmatprep.subr.mxu0 0.0
        %2321 = vmatpush1.msra.mxu0 0.0
        %2322 = vmatprep.subr.mxu0 0.0
        %2323 = vmatpush1.msra.mxu0 0.0
        %2324 = vmatprep.subr.mxu0 0.0
        %2325 = vmatpush1.msra.mxu0 0.0
        %2326 = vmatprep.subr.mxu0 0.0
        %2327 = vmatpush1.msra.mxu0 0.0
        %2328 = vmatprep.subr.mxu0 0.0
        %2329 = vmatpush1.msra.mxu0 0.0
        %2330 = vmatprep.subr.mxu0 0.0
        %2331 = vmatpush1.msra.mxu0 0.0
        %2332 = vmatprep.subr.mxu0 0.0
        %2333 = vmatpush1.msra.mxu0 0.0
        %2334 = vmatprep.subr.mxu0 0.0
        %2335 = vmatpush1.msra.mxu0 0.0
        %2336 = vmatprep.subr.mxu0 0.0
        %2337 = vmatpush1.msra.mxu0 0.0
        %2338 = vmatprep.subr.mxu0 0.0
        %2339 = vmatpush1.msra.mxu0 0.0
        %2340 = vmatprep.subr.mxu0 0.0
        %2341 = vmatpush1.msra.mxu0 0.0
        %2342 = vmatprep.mubr.f32.mxu0 0.0
        %2343 = vmatmul.mubr.f32.gmra.mrb[0].mxu0 %v2196
        %v2344 = vpop.f32.mrb[0].mxu0
        %v2345 = vadd.f32 0.0, %v2344
        %v2346 = vpop.f32.mrb[0].mxu0
        %v2347 = vadd.f32 0.0, %v2346
        %2348 = vmatprep.mubr.f32.mxu0 0.0
        %2349 = vmatmul.mubr.f32.gmra.mrb[0].mxu0 %v2199
        %v2350 = vpop.f32.mrb[0].mxu0
        %v2351 = vadd.f32 0.0, %v2350
        %v2352 = vpop.f32.mrb[0].mxu0
        %v2353 = vadd.f32 0.0, %v2352
        %2354 = vdwg.mxu0
        %s2355 = scalar_lea.vmem [#allocation11], 2048
        %v2356 = vld [vmem:[%s2355] sm:$0xff]
        %v2357 = vld [vmem:[%s2355 + $0x8] sm:$0xff]
        %v2358 = vld [vmem:[%s2355 + $0x10] sm:$0xff]
        %v2359 = vld [vmem:[%s2355 + $0x18] sm:$0xff]
        %v2360 = vld [vmem:[%s2355 + $0x20] sm:$0xff]
        %v2361 = vld [vmem:[%s2355 + $0x28] sm:$0xff]
        %v2362 = vld [vmem:[%s2355 + $0x30] sm:$0xff]
        %v2363 = vld [vmem:[%s2355 + $0x38] sm:$0xff]
        %v2364 = vld [vmem:[%s2355 + $0x40] sm:$0xff]
        %v2365 = vld [vmem:[%s2355 + $0x48] sm:$0xff]
        %v2366 = vld [vmem:[%s2355 + $0x50] sm:$0xff]
        %v2367 = vld [vmem:[%s2355 + $0x58] sm:$0xff]
        %v2368 = vld [vmem:[%s2355 + $0x60] sm:$0xff]
        %v2369 = vld [vmem:[%s2355 + $0x68] sm:$0xff]
        %v2370 = vld [vmem:[%s2355 + $0x70] sm:$0xff]
        %v2371 = vld [vmem:[%s2355 + $0x78] sm:$0xff]
        %v2372 = vld [vmem:[%s2355 + $0x80] sm:$0xff]
        %v2373 = vld [vmem:[%s2355 + $0x88] sm:$0xff]
        %v2374 = vld [vmem:[%s2355 + $0x90] sm:$0xff]
        %v2375 = vld [vmem:[%s2355 + $0x98] sm:$0xff]
        %v2376 = vld [vmem:[%s2355 + $0xa0] sm:$0xff]
        %v2377 = vld [vmem:[%s2355 + $0xa8] sm:$0xff]
        %v2378 = vld [vmem:[%s2355 + $0xb0] sm:$0xff]
        %v2379 = vld [vmem:[%s2355 + $0xb8] sm:$0xff]
        %v2380 = vld [vmem:[%s2355 + $0xc0] sm:$0xff]
        %v2381 = vld [vmem:[%s2355 + $0xc8] sm:$0xff]
        %v2382 = vld [vmem:[%s2355 + $0xd0] sm:$0xff]
        %v2383 = vld [vmem:[%s2355 + $0xd8] sm:$0xff]
        %v2384 = vld [vmem:[%s2355 + $0xe0] sm:$0xff]
        %v2385 = vld [vmem:[%s2355 + $0xe8] sm:$0xff]
        %v2386 = vld [vmem:[%s2355 + $0xf0] sm:$0xff]
        %v2387 = vld [vmem:[%s2355 + $0xf8] sm:$0xff]
        %v2388 = vld [vmem:[%s2355 + $0x100] sm:$0xff]
        %v2389 = vld [vmem:[%s2355 + $0x108] sm:$0xff]
        %v2390 = vld [vmem:[%s2355 + $0x110] sm:$0xff]
        %v2391 = vld [vmem:[%s2355 + $0x118] sm:$0xff]
        %v2392 = vld [vmem:[%s2355 + $0x120] sm:$0xff]
        %v2393 = vld [vmem:[%s2355 + $0x128] sm:$0xff]
        %v2394 = vld [vmem:[%s2355 + $0x130] sm:$0xff]
        %v2395 = vld [vmem:[%s2355 + $0x138] sm:$0xff]
        %v2396 = vld [vmem:[%s2355 + $0x140] sm:$0xff]
        %v2397 = vld [vmem:[%s2355 + $0x148] sm:$0xff]
        %v2398 = vld [vmem:[%s2355 + $0x150] sm:$0xff]
        %v2399 = vld [vmem:[%s2355 + $0x158] sm:$0xff]
        %v2400 = vld [vmem:[%s2355 + $0x160] sm:$0xff]
        %v2401 = vld [vmem:[%s2355 + $0x168] sm:$0xff]
        %v2402 = vld [vmem:[%s2355 + $0x170] sm:$0xff]
        %v2403 = vld [vmem:[%s2355 + $0x178] sm:$0xff]
        %v2404 = vld [vmem:[%s2355 + $0x180] sm:$0xff]
        %v2405 = vld [vmem:[%s2355 + $0x188] sm:$0xff]
        %v2406 = vld [vmem:[%s2355 + $0x190] sm:$0xff]
        %v2407 = vld [vmem:[%s2355 + $0x198] sm:$0xff]
        %v2408 = vld [vmem:[%s2355 + $0x1a0] sm:$0xff]
        %v2409 = vld [vmem:[%s2355 + $0x1a8] sm:$0xff]
        %v2410 = vld [vmem:[%s2355 + $0x1b0] sm:$0xff]
        %v2411 = vld [vmem:[%s2355 + $0x1b8] sm:$0xff]
        %v2412 = vld [vmem:[%s2355 + $0x1c0] sm:$0xff]
        %v2413 = vld [vmem:[%s2355 + $0x1c8] sm:$0xff]
        %v2414 = vld [vmem:[%s2355 + $0x1d0] sm:$0xff]
        %v2415 = vld [vmem:[%s2355 + $0x1d8] sm:$0xff]
        %v2416 = vld [vmem:[%s2355 + $0x1e0] sm:$0xff]
        %v2417 = vld [vmem:[%s2355 + $0x1e8] sm:$0xff]
        %v2418 = vld [vmem:[%s2355 + $0x1f0] sm:$0xff]
        %v2419 = vld [vmem:[%s2355 + $0x1f8] sm:$0xff]
        %v2420 = vld [vmem:[%s2355 + $0x200] sm:$0xff]
        %v2421 = vld [vmem:[%s2355 + $0x208] sm:$0xff]
        %v2422 = vld [vmem:[%s2355 + $0x210] sm:$0xff]
        %v2423 = vld [vmem:[%s2355 + $0x218] sm:$0xff]
        %v2424 = vld [vmem:[%s2355 + $0x220] sm:$0xff]
        %v2425 = vld [vmem:[%s2355 + $0x228] sm:$0xff]
        %v2426 = vld [vmem:[%s2355 + $0x230] sm:$0xff]
        %v2427 = vld [vmem:[%s2355 + $0x238] sm:$0xff]
        %v2428 = vld [vmem:[%s2355 + $0x240] sm:$0xff]
        %v2429 = vld [vmem:[%s2355 + $0x248] sm:$0xff]
        %v2430 = vld [vmem:[%s2355 + $0x250] sm:$0xff]
        %v2431 = vld [vmem:[%s2355 + $0x258] sm:$0xff]
        %v2432 = vld [vmem:[%s2355 + $0x260] sm:$0xff]
        %v2433 = vld [vmem:[%s2355 + $0x268] sm:$0xff]
        %v2434 = vld [vmem:[%s2355 + $0x270] sm:$0xff]
        %v2435 = vld [vmem:[%s2355 + $0x278] sm:$0xff]
        %v2436 = vld [vmem:[%s2355 + $0x280] sm:$0xff]
        %v2437 = vld [vmem:[%s2355 + $0x288] sm:$0xff]
        %v2438 = vld [vmem:[%s2355 + $0x290] sm:$0xff]
        %v2439 = vld [vmem:[%s2355 + $0x298] sm:$0xff]
        %v2440 = vld [vmem:[%s2355 + $0x2a0] sm:$0xff]
        %v2441 = vld [vmem:[%s2355 + $0x2a8] sm:$0xff]
        %v2442 = vld [vmem:[%s2355 + $0x2b0] sm:$0xff]
        %v2443 = vld [vmem:[%s2355 + $0x2b8] sm:$0xff]
        %v2444 = vld [vmem:[%s2355 + $0x2c0] sm:$0xff]
        %v2445 = vld [vmem:[%s2355 + $0x2c8] sm:$0xff]
        %v2446 = vld [vmem:[%s2355 + $0x2d0] sm:$0xff]
        %v2447 = vld [vmem:[%s2355 + $0x2d8] sm:$0xff]
        %v2448 = vld [vmem:[%s2355 + $0x2e0] sm:$0xff]
        %v2449 = vld [vmem:[%s2355 + $0x2e8] sm:$0xff]
        %v2450 = vld [vmem:[%s2355 + $0x2f0] sm:$0xff]
        %v2451 = vld [vmem:[%s2355 + $0x2f8] sm:$0xff]
        %v2452 = vld [vmem:[%s2355 + $0x300] sm:$0xff]
        %v2453 = vld [vmem:[%s2355 + $0x308] sm:$0xff]
        %v2454 = vld [vmem:[%s2355 + $0x310] sm:$0xff]
        %v2455 = vld [vmem:[%s2355 + $0x318] sm:$0xff]
        %v2456 = vld [vmem:[%s2355 + $0x320] sm:$0xff]
        %v2457 = vld [vmem:[%s2355 + $0x328] sm:$0xff]
        %v2458 = vld [vmem:[%s2355 + $0x330] sm:$0xff]
        %v2459 = vld [vmem:[%s2355 + $0x338] sm:$0xff]
        %v2460 = vld [vmem:[%s2355 + $0x340] sm:$0xff]
        %v2461 = vld [vmem:[%s2355 + $0x348] sm:$0xff]
        %v2462 = vld [vmem:[%s2355 + $0x350] sm:$0xff]
        %v2463 = vld [vmem:[%s2355 + $0x358] sm:$0xff]
        %v2464 = vld [vmem:[%s2355 + $0x360] sm:$0xff]
        %v2465 = vld [vmem:[%s2355 + $0x368] sm:$0xff]
        %v2466 = vld [vmem:[%s2355 + $0x370] sm:$0xff]
        %v2467 = vld [vmem:[%s2355 + $0x378] sm:$0xff]
        %v2468 = vld [vmem:[%s2355 + $0x380] sm:$0xff]
        %v2469 = vld [vmem:[%s2355 + $0x388] sm:$0xff]
        %v2470 = vld [vmem:[%s2355 + $0x390] sm:$0xff]
        %v2471 = vld [vmem:[%s2355 + $0x398] sm:$0xff]
        %v2472 = vld [vmem:[%s2355 + $0x3a0] sm:$0xff]
        %v2473 = vld [vmem:[%s2355 + $0x3a8] sm:$0xff]
        %v2474 = vld [vmem:[%s2355 + $0x3b0] sm:$0xff]
        %v2475 = vld [vmem:[%s2355 + $0x3b8] sm:$0xff]
        %v2476 = vld [vmem:[%s2355 + $0x3c0] sm:$0xff]
        %v2477 = vld [vmem:[%s2355 + $0x3c8] sm:$0xff]
        %v2478 = vld [vmem:[%s2355 + $0x3d0] sm:$0xff]
        %v2479 = vld [vmem:[%s2355 + $0x3d8] sm:$0xff]
        %v2480 = vld [vmem:[%s2355 + $0x3e0] sm:$0xff]
        %v2481 = vld [vmem:[%s2355 + $0x3e8] sm:$0xff]
        %v2482 = vld [vmem:[%s2355 + $0x3f0] sm:$0xff]
        %v2483 = vld [vmem:[%s2355 + $0x3f8] sm:$0xff]
        %v2484 = vld [vmem:[%s2355 + $0x400] sm:$0xff]
        %v2485 = vld [vmem:[%s2355 + $0x408] sm:$0xff]
        %v2486 = vld [vmem:[%s2355 + $0x410] sm:$0xff]
        %v2487 = vld [vmem:[%s2355 + $0x418] sm:$0xff]
        %v2488 = vld [vmem:[%s2355 + $0x420] sm:$0xff]
        %v2489 = vld [vmem:[%s2355 + $0x428] sm:$0xff]
        %v2490 = vld [vmem:[%s2355 + $0x430] sm:$0xff]
        %v2491 = vld [vmem:[%s2355 + $0x438] sm:$0xff]
        %v2492 = vld [vmem:[%s2355 + $0x440] sm:$0xff]
        %v2493 = vld [vmem:[%s2355 + $0x448] sm:$0xff]
        %v2494 = vld [vmem:[%s2355 + $0x450] sm:$0xff]
        %v2495 = vld [vmem:[%s2355 + $0x458] sm:$0xff]
        %v2496 = vld [vmem:[%s2355 + $0x460] sm:$0xff]
        %v2497 = vld [vmem:[%s2355 + $0x468] sm:$0xff]
        %v2498 = vld [vmem:[%s2355 + $0x470] sm:$0xff]
        %v2499 = vld [vmem:[%s2355 + $0x478] sm:$0xff]
        %v2500 = vld [vmem:[%s2355 + $0x480] sm:$0xff]
        %v2501 = vld [vmem:[%s2355 + $0x488] sm:$0xff]
        %v2502 = vld [vmem:[%s2355 + $0x490] sm:$0xff]
        %v2503 = vld [vmem:[%s2355 + $0x498] sm:$0xff]
        %v2504 = vld [vmem:[%s2355 + $0x4a0] sm:$0xff]
        %v2505 = vld [vmem:[%s2355 + $0x4a8] sm:$0xff]
        %v2506 = vld [vmem:[%s2355 + $0x4b0] sm:$0xff]
        %v2507 = vld [vmem:[%s2355 + $0x4b8] sm:$0xff]
        %v2508 = vld [vmem:[%s2355 + $0x4c0] sm:$0xff]
        %v2509 = vld [vmem:[%s2355 + $0x4c8] sm:$0xff]
        %v2510 = vld [vmem:[%s2355 + $0x4d0] sm:$0xff]
        %v2511 = vld [vmem:[%s2355 + $0x4d8] sm:$0xff]
        %v2512 = vld [vmem:[%s2355 + $0x4e0] sm:$0xff]
        %v2513 = vld [vmem:[%s2355 + $0x4e8] sm:$0xff]
        %v2514 = vld [vmem:[%s2355 + $0x4f0] sm:$0xff]
        %v2515 = vld [vmem:[%s2355 + $0x4f8] sm:$0xff]
        %v2516 = vld [vmem:[%s2355 + $0x500] sm:$0xff]
        %v2517 = vld [vmem:[%s2355 + $0x508] sm:$0xff]
        %v2518 = vld [vmem:[%s2355 + $0x510] sm:$0xff]
        %v2519 = vld [vmem:[%s2355 + $0x518] sm:$0xff]
        %v2520 = vld [vmem:[%s2355 + $0x520] sm:$0xff]
        %v2521 = vld [vmem:[%s2355 + $0x528] sm:$0xff]
        %v2522 = vld [vmem:[%s2355 + $0x530] sm:$0xff]
        %v2523 = vld [vmem:[%s2355 + $0x538] sm:$0xff]
        %v2524 = vld [vmem:[%s2355 + $0x540] sm:$0xff]
        %v2525 = vld [vmem:[%s2355 + $0x548] sm:$0xff]
        %v2526 = vld [vmem:[%s2355 + $0x550] sm:$0xff]
        %v2527 = vld [vmem:[%s2355 + $0x558] sm:$0xff]
        %v2528 = vld [vmem:[%s2355 + $0x560] sm:$0xff]
        %v2529 = vld [vmem:[%s2355 + $0x568] sm:$0xff]
        %v2530 = vld [vmem:[%s2355 + $0x570] sm:$0xff]
        %v2531 = vld [vmem:[%s2355 + $0x578] sm:$0xff]
        %v2532 = vld [vmem:[%s2355 + $0x580] sm:$0xff]
        %v2533 = vld [vmem:[%s2355 + $0x588] sm:$0xff]
        %v2534 = vld [vmem:[%s2355 + $0x590] sm:$0xff]
        %v2535 = vld [vmem:[%s2355 + $0x598] sm:$0xff]
        %v2536 = vld [vmem:[%s2355 + $0x5a0] sm:$0xff]
        %v2537 = vld [vmem:[%s2355 + $0x5a8] sm:$0xff]
        %v2538 = vld [vmem:[%s2355 + $0x5b0] sm:$0xff]
        %v2539 = vld [vmem:[%s2355 + $0x5b8] sm:$0xff]
        %v2540 = vld [vmem:[%s2355 + $0x5c0] sm:$0xff]
        %v2541 = vld [vmem:[%s2355 + $0x5c8] sm:$0xff]
        %v2542 = vld [vmem:[%s2355 + $0x5d0] sm:$0xff]
        %v2543 = vld [vmem:[%s2355 + $0x5d8] sm:$0xff]
        %v2544 = vld [vmem:[%s2355 + $0x5e0] sm:$0xff]
        %v2545 = vld [vmem:[%s2355 + $0x5e8] sm:$0xff]
        %v2546 = vld [vmem:[%s2355 + $0x5f0] sm:$0xff]
        %v2547 = vld [vmem:[%s2355 + $0x5f8] sm:$0xff]
        %v2548 = vld [vmem:[%s2355 + $0x600] sm:$0xff]
        %v2549 = vld [vmem:[%s2355 + $0x608] sm:$0xff]
        %v2550 = vld [vmem:[%s2355 + $0x610] sm:$0xff]
        %v2551 = vld [vmem:[%s2355 + $0x618] sm:$0xff]
        %v2552 = vld [vmem:[%s2355 + $0x620] sm:$0xff]
        %v2553 = vld [vmem:[%s2355 + $0x628] sm:$0xff]
        %v2554 = vld [vmem:[%s2355 + $0x630] sm:$0xff]
        %v2555 = vld [vmem:[%s2355 + $0x638] sm:$0xff]
        %v2556 = vld [vmem:[%s2355 + $0x640] sm:$0xff]
        %v2557 = vld [vmem:[%s2355 + $0x648] sm:$0xff]
        %v2558 = vld [vmem:[%s2355 + $0x650] sm:$0xff]
        %v2559 = vld [vmem:[%s2355 + $0x658] sm:$0xff]
        %v2560 = vld [vmem:[%s2355 + $0x660] sm:$0xff]
        %v2561 = vld [vmem:[%s2355 + $0x668] sm:$0xff]
        %v2562 = vld [vmem:[%s2355 + $0x670] sm:$0xff]
        %v2563 = vld [vmem:[%s2355 + $0x678] sm:$0xff]
        %v2564 = vld [vmem:[%s2355 + $0x680] sm:$0xff]
        %v2565 = vld [vmem:[%s2355 + $0x688] sm:$0xff]
        %v2566 = vld [vmem:[%s2355 + $0x690] sm:$0xff]
        %v2567 = vld [vmem:[%s2355 + $0x698] sm:$0xff]
        %v2568 = vld [vmem:[%s2355 + $0x6a0] sm:$0xff]
        %v2569 = vld [vmem:[%s2355 + $0x6a8] sm:$0xff]
        %v2570 = vld [vmem:[%s2355 + $0x6b0] sm:$0xff]
        %v2571 = vld [vmem:[%s2355 + $0x6b8] sm:$0xff]
        %v2572 = vld [vmem:[%s2355 + $0x6c0] sm:$0xff]
        %v2573 = vld [vmem:[%s2355 + $0x6c8] sm:$0xff]
        %v2574 = vld [vmem:[%s2355 + $0x6d0] sm:$0xff]
        %v2575 = vld [vmem:[%s2355 + $0x6d8] sm:$0xff]
        %v2576 = vld [vmem:[%s2355 + $0x6e0] sm:$0xff]
        %v2577 = vld [vmem:[%s2355 + $0x6e8] sm:$0xff]
        %v2578 = vld [vmem:[%s2355 + $0x6f0] sm:$0xff]
        %v2579 = vld [vmem:[%s2355 + $0x6f8] sm:$0xff]
        %v2580 = vld [vmem:[%s2355 + $0x700] sm:$0xff]
        %v2581 = vld [vmem:[%s2355 + $0x708] sm:$0xff]
        %v2582 = vld [vmem:[%s2355 + $0x710] sm:$0xff]
        %v2583 = vld [vmem:[%s2355 + $0x718] sm:$0xff]
        %v2584 = vld [vmem:[%s2355 + $0x720] sm:$0xff]
        %v2585 = vld [vmem:[%s2355 + $0x728] sm:$0xff]
        %v2586 = vld [vmem:[%s2355 + $0x730] sm:$0xff]
        %v2587 = vld [vmem:[%s2355 + $0x738] sm:$0xff]
        %v2588 = vld [vmem:[%s2355 + $0x740] sm:$0xff]
        %v2589 = vld [vmem:[%s2355 + $0x748] sm:$0xff]
        %v2590 = vld [vmem:[%s2355 + $0x750] sm:$0xff]
        %v2591 = vld [vmem:[%s2355 + $0x758] sm:$0xff]
        %v2592 = vld [vmem:[%s2355 + $0x760] sm:$0xff]
        %v2593 = vld [vmem:[%s2355 + $0x768] sm:$0xff]
        %v2594 = vld [vmem:[%s2355 + $0x770] sm:$0xff]
        %v2595 = vld [vmem:[%s2355 + $0x778] sm:$0xff]
        %v2596 = vld [vmem:[%s2355 + $0x780] sm:$0xff]
        %v2597 = vld [vmem:[%s2355 + $0x788] sm:$0xff]
        %v2598 = vld [vmem:[%s2355 + $0x790] sm:$0xff]
        %v2599 = vld [vmem:[%s2355 + $0x798] sm:$0xff]
        %v2600 = vld [vmem:[%s2355 + $0x7a0] sm:$0xff]
        %v2601 = vld [vmem:[%s2355 + $0x7a8] sm:$0xff]
        %v2602 = vld [vmem:[%s2355 + $0x7b0] sm:$0xff]
        %v2603 = vld [vmem:[%s2355 + $0x7b8] sm:$0xff]
        %v2604 = vld [vmem:[%s2355 + $0x7c0] sm:$0xff]
        %v2605 = vld [vmem:[%s2355 + $0x7c8] sm:$0xff]
        %v2606 = vld [vmem:[%s2355 + $0x7d0] sm:$0xff]
        %v2607 = vld [vmem:[%s2355 + $0x7d8] sm:$0xff]
        %v2608 = vld [vmem:[%s2355 + $0x7e0] sm:$0xff]
        %v2609 = vld [vmem:[%s2355 + $0x7e8] sm:$0xff]
        %v2610 = vld [vmem:[%s2355 + $0x7f0] sm:$0xff]
        %v2611 = vld [vmem:[%s2355 + $0x7f8] sm:$0xff]
        %2612 = vmatprep.subr.mxu0 %v2357
        %2613 = vmatpush1.msra.mxu0 %v2356
        %2614 = vmatprep.subr.mxu0 %v2361
        %2615 = vmatpush1.msra.mxu0 %v2360
        %2616 = vmatprep.subr.mxu0 %v2365
        %2617 = vmatpush1.msra.mxu0 %v2364
        %2618 = vmatprep.subr.mxu0 %v2369
        %2619 = vmatpush1.msra.mxu0 %v2368
        %2620 = vmatprep.subr.mxu0 %v2373
        %2621 = vmatpush1.msra.mxu0 %v2372
        %2622 = vmatprep.subr.mxu0 %v2377
        %2623 = vmatpush1.msra.mxu0 %v2376
        %2624 = vmatprep.subr.mxu0 %v2381
        %2625 = vmatpush1.msra.mxu0 %v2380
        %2626 = vmatprep.subr.mxu0 %v2385
        %2627 = vmatpush1.msra.mxu0 %v2384
        %2628 = vmatprep.subr.mxu0 %v2389
        %2629 = vmatpush1.msra.mxu0 %v2388
        %2630 = vmatprep.subr.mxu0 %v2393
        %2631 = vmatpush1.msra.mxu0 %v2392
        %2632 = vmatprep.subr.mxu0 %v2397
        %2633 = vmatpush1.msra.mxu0 %v2396
        %2634 = vmatprep.subr.mxu0 %v2401
        %2635 = vmatpush1.msra.mxu0 %v2400
        %2636 = vmatprep.subr.mxu0 %v2405
        %2637 = vmatpush1.msra.mxu0 %v2404
        %2638 = vmatprep.subr.mxu0 %v2409
        %2639 = vmatpush1.msra.mxu0 %v2408
        %2640 = vmatprep.subr.mxu0 %v2413
        %2641 = vmatpush1.msra.mxu0 %v2412
        %2642 = vmatprep.subr.mxu0 %v2417
        %2643 = vmatpush1.msra.mxu0 %v2416
        %2644 = vmatprep.subr.mxu0 %v2421
        %2645 = vmatpush1.msra.mxu0 %v2420
        %2646 = vmatprep.subr.mxu0 %v2425
        %2647 = vmatpush1.msra.mxu0 %v2424
        %2648 = vmatprep.subr.mxu0 %v2429
        %2649 = vmatpush1.msra.mxu0 %v2428
        %2650 = vmatprep.subr.mxu0 %v2433
        %2651 = vmatpush1.msra.mxu0 %v2432
        %2652 = vmatprep.subr.mxu0 %v2437
        %2653 = vmatpush1.msra.mxu0 %v2436
        %2654 = vmatprep.subr.mxu0 %v2441
        %2655 = vmatpush1.msra.mxu0 %v2440
        %2656 = vmatprep.subr.mxu0 %v2445
        %2657 = vmatpush1.msra.mxu0 %v2444
        %2658 = vmatprep.subr.mxu0 %v2449
        %2659 = vmatpush1.msra.mxu0 %v2448
        %2660 = vmatprep.subr.mxu0 %v2453
        %2661 = vmatpush1.msra.mxu0 %v2452
        %2662 = vmatprep.subr.mxu0 %v2457
        %2663 = vmatpush1.msra.mxu0 %v2456
        %2664 = vmatprep.subr.mxu0 %v2461
        %2665 = vmatpush1.msra.mxu0 %v2460
        %2666 = vmatprep.subr.mxu0 %v2465
        %2667 = vmatpush1.msra.mxu0 %v2464
        %2668 = vmatprep.subr.mxu0 %v2469
        %2669 = vmatpush1.msra.mxu0 %v2468
        %2670 = vmatprep.subr.mxu0 %v2473
        %2671 = vmatpush1.msra.mxu0 %v2472
        %2672 = vmatprep.subr.mxu0 %v2477
        %2673 = vmatpush1.msra.mxu0 %v2476
        %2674 = vmatprep.subr.mxu0 %v2481
        %2675 = vmatpush1.msra.mxu0 %v2480
        %2676 = vmatprep.mubr.f32.mxu0 %v2270
        %2677 = vmatmul.mubr.f32.gmra.mrb[0].mxu0 %v2268
        %v2678 = vpop.f32.mrb[0].mxu0
        %v2679 = vadd.f32 0.0, %v2678
        %v2680 = vpop.f32.mrb[0].mxu0
        %v2681 = vadd.f32 0.0, %v2680
        %2682 = vmatprep.mubr.f32.mxu0 %v2276
        %2683 = vmatmul.mubr.f32.gmra.mrb[0].mxu0 %v2274
        %v2684 = vpop.f32.mrb[0].mxu0
        %v2685 = vadd.f32 0.0, %v2684
        %v2686 = vpop.f32.mrb[0].mxu0
        %v2687 = vadd.f32 0.0, %v2686
        %2688 = vdwg.mxu0
        %2689 = vmatprep.subr.mxu0 %v2485
        %2690 = vmatpush1.msra.mxu0 %v2484
        %2691 = vmatprep.subr.mxu0 %v2489
        %2692 = vmatpush1.msra.mxu0 %v2488
        %2693 = vmatprep.subr.mxu0 %v2493
        %2694 = vmatpush1.msra.mxu0 %v2492
        %2695 = vmatprep.subr.mxu0 %v2497
        %2696 = vmatpush1.msra.mxu0 %v2496
        %2697 = vmatprep.subr.mxu0 %v2501
        %2698 = vmatpush1.msra.mxu0 %v2500
        %2699 = vmatprep.subr.mxu0 %v2505
        %2700 = vmatpush1.msra.mxu0 %v2504
        %2701 = vmatprep.subr.mxu0 %v2509
        %2702 = vmatpush1.msra.mxu0 %v2508
        %2703 = vmatprep.subr.mxu0 %v2513
        %2704 = vmatpush1.msra.mxu0 %v2512
        %2705 = vmatprep.subr.mxu0 %v2517
        %2706 = vmatpush1.msra.mxu0 %v2516
        %2707 = vmatprep.subr.mxu0 %v2521
        %2708 = vmatpush1.msra.mxu0 %v2520
        %2709 = vmatprep.subr.mxu0 %v2525
        %2710 = vmatpush1.msra.mxu0 %v2524
        %2711 = vmatprep.subr.mxu0 %v2529
        %2712 = vmatpush1.msra.mxu0 %v2528
        %2713 = vmatprep.subr.mxu0 %v2533
        %2714 = vmatpush1.msra.mxu0 %v2532
        %2715 = vmatprep.subr.mxu0 %v2537
        %2716 = vmatpush1.msra.mxu0 %v2536
        %2717 = vmatprep.subr.mxu0 %v2541
        %2718 = vmatpush1.msra.mxu0 %v2540
        %2719 = vmatprep.subr.mxu0 %v2545
        %2720 = vmatpush1.msra.mxu0 %v2544
        %2721 = vmatprep.subr.mxu0 %v2549
        %2722 = vmatpush1.msra.mxu0 %v2548
        %2723 = vmatprep.subr.mxu0 %v2553
        %2724 = vmatpush1.msra.mxu0 %v2552
        %2725 = vmatprep.subr.mxu0 %v2557
        %2726 = vmatpush1.msra.mxu0 %v2556
        %2727 = vmatprep.subr.mxu0 %v2561
        %2728 = vmatpush1.msra.mxu0 %v2560
        %2729 = vmatprep.subr.mxu0 %v2565
        %2730 = vmatpush1.msra.mxu0 %v2564
        %2731 = vmatprep.subr.mxu0 %v2569
        %2732 = vmatpush1.msra.mxu0 %v2568
        %2733 = vmatprep.subr.mxu0 %v2573
        %2734 = vmatpush1.msra.mxu0 %v2572
        %2735 = vmatprep.subr.mxu0 %v2577
        %2736 = vmatpush1.msra.mxu0 %v2576
        %2737 = vmatprep.subr.mxu0 %v2581
        %2738 = vmatpush1.msra.mxu0 %v2580
        %2739 = vmatprep.subr.mxu0 %v2585
        %2740 = vmatpush1.msra.mxu0 %v2584
        %2741 = vmatprep.subr.mxu0 %v2589
        %2742 = vmatpush1.msra.mxu0 %v2588
        %2743 = vmatprep.subr.mxu0 %v2593
        %2744 = vmatpush1.msra.mxu0 %v2592
        %2745 = vmatprep.subr.mxu0 %v2597
        %2746 = vmatpush1.msra.mxu0 %v2596
        %2747 = vmatprep.subr.mxu0 %v2601
        %2748 = vmatpush1.msra.mxu0 %v2600
        %2749 = vmatprep.subr.mxu0 %v2605
        %2750 = vmatpush1.msra.mxu0 %v2604
        %2751 = vmatprep.subr.mxu0 %v2609
        %2752 = vmatpush1.msra.mxu0 %v2608
        %2753 = vmatprep.mubr.f32.mxu0 %v2347
        %2754 = vmatmul.mubr.f32.gmra.mrb[0].mxu0 %v2345
        %v2755 = vpop.f32.mrb[0].mxu0
        %v2756 = vadd.f32 %v2679, %v2755
        %v2757 = vpop.f32.mrb[0].mxu0
        %v2758 = vadd.f32 %v2681, %v2757
        %2759 = vmatprep.mubr.f32.mxu0 %v2353
        %2760 = vmatmul.mubr.f32.gmra.mrb[0].mxu0 %v2351
        %v2761 = vpop.f32.mrb[0].mxu0
        %v2762 = vadd.f32 %v2685, %v2761
        %v2763 = vpop.f32.mrb[0].mxu0
        %v2764 = vadd.f32 %v2687, %v2763
        %2765 = vdwg.mxu0
        %2766 = vmatprep.subr.mxu0 %v2359
        %2767 = vmatpush1.msra.mxu0 %v2358
        %2768 = vmatprep.subr.mxu0 %v2363
        %2769 = vmatpush1.msra.mxu0 %v2362
        %2770 = vmatprep.subr.mxu0 %v2367
        %2771 = vmatpush1.msra.mxu0 %v2366
        %2772 = vmatprep.subr.mxu0 %v2371
        %2773 = vmatpush1.msra.mxu0 %v2370
        %2774 = vmatprep.subr.mxu0 %v2375
        %2775 = vmatpush1.msra.mxu0 %v2374
        %2776 = vmatprep.subr.mxu0 %v2379
        %2777 = vmatpush1.msra.mxu0 %v2378
        %2778 = vmatprep.subr.mxu0 %v2383
        %2779 = vmatpush1.msra.mxu0 %v2382
        %2780 = vmatprep.subr.mxu0 %v2387
        %2781 = vmatpush1.msra.mxu0 %v2386
        %2782 = vmatprep.subr.mxu0 %v2391
        %2783 = vmatpush1.msra.mxu0 %v2390
        %2784 = vmatprep.subr.mxu0 %v2395
        %2785 = vmatpush1.msra.mxu0 %v2394
        %2786 = vmatprep.subr.mxu0 %v2399
        %2787 = vmatpush1.msra.mxu0 %v2398
        %2788 = vmatprep.subr.mxu0 %v2403
        %2789 = vmatpush1.msra.mxu0 %v2402
        %2790 = vmatprep.subr.mxu0 %v2407
        %2791 = vmatpush1.msra.mxu0 %v2406
        %2792 = vmatprep.subr.mxu0 %v2411
        %2793 = vmatpush1.msra.mxu0 %v2410
        %2794 = vmatprep.subr.mxu0 %v2415
        %2795 = vmatpush1.msra.mxu0 %v2414
        %2796 = vmatprep.subr.mxu0 %v2419
        %2797 = vmatpush1.msra.mxu0 %v2418
        %2798 = vmatprep.subr.mxu0 %v2423
        %2799 = vmatpush1.msra.mxu0 %v2422
        %2800 = vmatprep.subr.mxu0 %v2427
        %2801 = vmatpush1.msra.mxu0 %v2426
        %2802 = vmatprep.subr.mxu0 %v2431
        %2803 = vmatpush1.msra.mxu0 %v2430
        %2804 = vmatprep.subr.mxu0 %v2435
        %2805 = vmatpush1.msra.mxu0 %v2434
        %2806 = vmatprep.subr.mxu0 %v2439
        %2807 = vmatpush1.msra.mxu0 %v2438
        %2808 = vmatprep.subr.mxu0 %v2443
        %2809 = vmatpush1.msra.mxu0 %v2442
        %2810 = vmatprep.subr.mxu0 %v2447
        %2811 = vmatpush1.msra.mxu0 %v2446
        %2812 = vmatprep.subr.mxu0 %v2451
        %2813 = vmatpush1.msra.mxu0 %v2450
        %2814 = vmatprep.subr.mxu0 %v2455
        %2815 = vmatpush1.msra.mxu0 %v2454
        %2816 = vmatprep.subr.mxu0 %v2459
        %2817 = vmatpush1.msra.mxu0 %v2458
        %2818 = vmatprep.subr.mxu0 %v2463
        %2819 = vmatpush1.msra.mxu0 %v2462
        %2820 = vmatprep.subr.mxu0 %v2467
        %2821 = vmatpush1.msra.mxu0 %v2466
        %2822 = vmatprep.subr.mxu0 %v2471
        %2823 = vmatpush1.msra.mxu0 %v2470
        %2824 = vmatprep.subr.mxu0 %v2475
        %2825 = vmatpush1.msra.mxu0 %v2474
        %2826 = vmatprep.subr.mxu0 %v2479
        %2827 = vmatpush1.msra.mxu0 %v2478
        %2828 = vmatprep.subr.mxu0 %v2483
        %2829 = vmatpush1.msra.mxu0 %v2482
        %2830 = vmatprep.mubr.f32.mxu0 %v2270
        %2831 = vmatmul.mubr.f32.gmra.mrb[0].mxu0 %v2268
        %v2832 = vpop.f32.mrb[0].mxu0
        %v2833 = vadd.f32 0.0, %v2832
        %v2834 = vpop.f32.mrb[0].mxu0
        %v2835 = vadd.f32 0.0, %v2834
        %2836 = vmatprep.mubr.f32.mxu0 %v2276
        %2837 = vmatmul.mubr.f32.gmra.mrb[0].mxu0 %v2274
        %v2838 = vpop.f32.mrb[0].mxu0
        %v2839 = vadd.f32 0.0, %v2838
        %v2840 = vpop.f32.mrb[0].mxu0
        %v2841 = vadd.f32 0.0, %v2840
        %2842 = vdwg.mxu0
        %2843 = vmatprep.subr.mxu0 %v2487
        %2844 = vmatpush1.msra.mxu0 %v2486
        %2845 = vmatprep.subr.mxu0 %v2491
        %2846 = vmatpush1.msra.mxu0 %v2490
        %2847 = vmatprep.subr.mxu0 %v2495
        %2848 = vmatpush1.msra.mxu0 %v2494
        %2849 = vmatprep.subr.mxu0 %v2499
        %2850 = vmatpush1.msra.mxu0 %v2498
        %2851 = vmatprep.subr.mxu0 %v2503
        %2852 = vmatpush1.msra.mxu0 %v2502
        %2853 = vmatprep.subr.mxu0 %v2507
        %2854 = vmatpush1.msra.mxu0 %v2506
        %2855 = vmatprep.subr.mxu0 %v2511
        %2856 = vmatpush1.msra.mxu0 %v2510
        %2857 = vmatprep.subr.mxu0 %v2515
        %2858 = vmatpush1.msra.mxu0 %v2514
        %2859 = vmatprep.subr.mxu0 %v2519
        %2860 = vmatpush1.msra.mxu0 %v2518
        %2861 = vmatprep.subr.mxu0 %v2523
        %2862 = vmatpush1.msra.mxu0 %v2522
        %2863 = vmatprep.subr.mxu0 %v2527
        %2864 = vmatpush1.msra.mxu0 %v2526
        %2865 = vmatprep.subr.mxu0 %v2531
        %2866 = vmatpush1.msra.mxu0 %v2530
        %2867 = vmatprep.subr.mxu0 %v2535
        %2868 = vmatpush1.msra.mxu0 %v2534
        %2869 = vmatprep.subr.mxu0 %v2539
        %2870 = vmatpush1.msra.mxu0 %v2538
        %2871 = vmatprep.subr.mxu0 %v2543
        %2872 = vmatpush1.msra.mxu0 %v2542
        %2873 = vmatprep.subr.mxu0 %v2547
        %2874 = vmatpush1.msra.mxu0 %v2546
        %2875 = vmatprep.subr.mxu0 %v2551
        %2876 = vmatpush1.msra.mxu0 %v2550
        %2877 = vmatprep.subr.mxu0 %v2555
        %2878 = vmatpush1.msra.mxu0 %v2554
        %2879 = vmatprep.subr.mxu0 %v2559
        %2880 = vmatpush1.msra.mxu0 %v2558
        %2881 = vmatprep.subr.mxu0 %v2563
        %2882 = vmatpush1.msra.mxu0 %v2562
        %2883 = vmatprep.subr.mxu0 %v2567
        %2884 = vmatpush1.msra.mxu0 %v2566
        %2885 = vmatprep.subr.mxu0 %v2571
        %2886 = vmatpush1.msra.mxu0 %v2570
        %2887 = vmatprep.subr.mxu0 %v2575
        %2888 = vmatpush1.msra.mxu0 %v2574
        %2889 = vmatprep.subr.mxu0 %v2579
        %2890 = vmatpush1.msra.mxu0 %v2578
        %2891 = vmatprep.subr.mxu0 %v2583
        %2892 = vmatpush1.msra.mxu0 %v2582
        %2893 = vmatprep.subr.mxu0 %v2587
        %2894 = vmatpush1.msra.mxu0 %v2586
        %2895 = vmatprep.subr.mxu0 %v2591
        %2896 = vmatpush1.msra.mxu0 %v2590
        %2897 = vmatprep.subr.mxu0 %v2595
        %2898 = vmatpush1.msra.mxu0 %v2594
        %2899 = vmatprep.subr.mxu0 %v2599
        %2900 = vmatpush1.msra.mxu0 %v2598
        %2901 = vmatprep.subr.mxu0 %v2603
        %2902 = vmatpush1.msra.mxu0 %v2602
        %2903 = vmatprep.subr.mxu0 %v2607
        %2904 = vmatpush1.msra.mxu0 %v2606
        %2905 = vmatprep.subr.mxu0 %v2611
        %2906 = vmatpush1.msra.mxu0 %v2610
        %2907 = vmatprep.mubr.f32.mxu0 %v2347
        %2908 = vmatmul.mubr.f32.gmra.mrb[0].mxu0 %v2345
        %v2909 = vpop.f32.mrb[0].mxu0
        %v2910 = vadd.f32 %v2833, %v2909
        %v2911 = vpop.f32.mrb[0].mxu0
        %v2912 = vadd.f32 %v2835, %v2911
        %2913 = vmatprep.mubr.f32.mxu0 %v2353
        %2914 = vmatmul.mubr.f32.gmra.mrb[0].mxu0 %v2351
        %v2915 = vpop.f32.mrb[0].mxu0
        %v2916 = vadd.f32 %v2839, %v2915
        %v2917 = vpop.f32.mrb[0].mxu0
        %v2918 = vadd.f32 %v2841, %v2917
        %2919 = vdwg.mxu0
        %2920 = vmatprep.subr.mxu0 %v1937
        %2921 = vmatpush1.msra.mxu0 %v1936
        %2922 = vmatprep.subr.mxu0 %v1941
        %2923 = vmatpush1.msra.mxu0 %v1940
        %2924 = vmatprep.subr.mxu0 %v1945
        %2925 = vmatpush1.msra.mxu0 %v1944
        %2926 = vmatprep.subr.mxu0 %v1949
        %2927 = vmatpush1.msra.mxu0 %v1948
        %2928 = vmatprep.subr.mxu0 %v1953
        %2929 = vmatpush1.msra.mxu0 %v1952
        %2930 = vmatprep.subr.mxu0 %v1957
        %2931 = vmatpush1.msra.mxu0 %v1956
        %2932 = vmatprep.subr.mxu0 %v1961
        %2933 = vmatpush1.msra.mxu0 %v1960
        %2934 = vmatprep.subr.mxu0 %v1965
        %2935 = vmatpush1.msra.mxu0 %v1964
        %2936 = vmatprep.subr.mxu0 %v1969
        %2937 = vmatpush1.msra.mxu0 %v1968
        %2938 = vmatprep.subr.mxu0 %v1973
        %2939 = vmatpush1.msra.mxu0 %v1972
        %2940 = vmatprep.subr.mxu0 %v1977
        %2941 = vmatpush1.msra.mxu0 %v1976
        %2942 = vmatprep.subr.mxu0 %v1981
        %2943 = vmatpush1.msra.mxu0 %v1980
        %2944 = vmatprep.subr.mxu0 %v1985
        %2945 = vmatpush1.msra.mxu0 %v1984
        %2946 = vmatprep.subr.mxu0 %v1989
        %2947 = vmatpush1.msra.mxu0 %v1988
        %2948 = vmatprep.subr.mxu0 %v1993
        %2949 = vmatpush1.msra.mxu0 %v1992
        %2950 = vmatprep.subr.mxu0 %v1997
        %2951 = vmatpush1.msra.mxu0 %v1996
        %2952 = vmatprep.subr.mxu0 %v2001
        %2953 = vmatpush1.msra.mxu0 %v2000
        %2954 = vmatprep.subr.mxu0 %v2005
        %2955 = vmatpush1.msra.mxu0 %v2004
        %2956 = vmatprep.subr.mxu0 %v2009
        %2957 = vmatpush1.msra.mxu0 %v2008
        %2958 = vmatprep.subr.mxu0 %v2013
        %2959 = vmatpush1.msra.mxu0 %v2012
        %2960 = vmatprep.subr.mxu0 %v2017
        %2961 = vmatpush1.msra.mxu0 %v2016
        %2962 = vmatprep.subr.mxu0 %v2021
        %2963 = vmatpush1.msra.mxu0 %v2020
        %2964 = vmatprep.subr.mxu0 %v2025
        %2965 = vmatpush1.msra.mxu0 %v2024
        %2966 = vmatprep.subr.mxu0 %v2029
        %2967 = vmatpush1.msra.mxu0 %v2028
        %2968 = vmatprep.subr.mxu0 %v2033
        %2969 = vmatpush1.msra.mxu0 %v2032
        %2970 = vmatprep.subr.mxu0 %v2037
        %2971 = vmatpush1.msra.mxu0 %v2036
        %2972 = vmatprep.subr.mxu0 %v2041
        %2973 = vmatpush1.msra.mxu0 %v2040
        %2974 = vmatprep.subr.mxu0 %v2045
        %2975 = vmatpush1.msra.mxu0 %v2044
        %2976 = vmatprep.subr.mxu0 %v2049
        %2977 = vmatpush1.msra.mxu0 %v2048
        %2978 = vmatprep.subr.mxu0 %v2053
        %2979 = vmatpush1.msra.mxu0 %v2052
        %2980 = vmatprep.subr.mxu0 %v2057
        %2981 = vmatpush1.msra.mxu0 %v2056
        %2982 = vmatprep.subr.mxu0 %v2061
        %2983 = vmatpush1.msra.mxu0 %v2060
        %2984 = vmatprep.mubr.f32.mxu0 %v1851
        %2985 = vmatmul.mubr.f32.gmra.mrb[0].mxu0 %v1849
        %v2986 = vpop.f32.mrb[0].mxu0
        %v2987 = vadd.f32 %v2756, %v2986
        %v2988 = vpop.f32.mrb[0].mxu0
        %v2989 = vadd.f32 %v2758, %v2988
        %2990 = vmatprep.mubr.f32.mxu0 %v1857
        %2991 = vmatmul.mubr.f32.gmra.mrb[0].mxu0 %v1855
        %v2992 = vpop.f32.mrb[0].mxu0
        %v2993 = vadd.f32 %v2762, %v2992
        %v2994 = vpop.f32.mrb[0].mxu0
        %v2995 = vadd.f32 %v2764, %v2994
        %2996 = vdwg.mxu0
        %2997 = vmatprep.subr.mxu0 %v2065
        %2998 = vmatpush1.msra.mxu0 %v2064
        %2999 = vmatprep.subr.mxu0 %v2069
        %3000 = vmatpush1.msra.mxu0 %v2068
        %3001 = vmatprep.subr.mxu0 %v2073
        %3002 = vmatpush1.msra.mxu0 %v2072
        %3003 = vmatprep.subr.mxu0 %v2077
        %3004 = vmatpush1.msra.mxu0 %v2076
        %3005 = vmatprep.subr.mxu0 %v2081
        %3006 = vmatpush1.msra.mxu0 %v2080
        %3007 = vmatprep.subr.mxu0 %v2085
        %3008 = vmatpush1.msra.mxu0 %v2084
        %3009 = vmatprep.subr.mxu0 %v2089
        %3010 = vmatpush1.msra.mxu0 %v2088
        %3011 = vmatprep.subr.mxu0 %v2093
        %3012 = vmatpush1.msra.mxu0 %v2092
        %3013 = vmatprep.subr.mxu0 %v2097
        %3014 = vmatpush1.msra.mxu0 %v2096
        %3015 = vmatprep.subr.mxu0 %v2101
        %3016 = vmatpush1.msra.mxu0 %v2100
        %3017 = vmatprep.subr.mxu0 %v2105
        %3018 = vmatpush1.msra.mxu0 %v2104
        %3019 = vmatprep.subr.mxu0 %v2109
        %3020 = vmatpush1.msra.mxu0 %v2108
        %3021 = vmatprep.subr.mxu0 %v2113
        %3022 = vmatpush1.msra.mxu0 %v2112
        %3023 = vmatprep.subr.mxu0 %v2117
        %3024 = vmatpush1.msra.mxu0 %v2116
        %3025 = vmatprep.subr.mxu0 %v2121
        %3026 = vmatpush1.msra.mxu0 %v2120
        %3027 = vmatprep.subr.mxu0 %v2125
        %3028 = vmatpush1.msra.mxu0 %v2124
        %3029 = vmatprep.subr.mxu0 %v2129
        %3030 = vmatpush1.msra.mxu0 %v2128
        %3031 = vmatprep.subr.mxu0 %v2133
        %3032 = vmatpush1.msra.mxu0 %v2132
        %3033 = vmatprep.subr.mxu0 %v2137
        %3034 = vmatpush1.msra.mxu0 %v2136
        %3035 = vmatprep.subr.mxu0 %v2141
        %3036 = vmatpush1.msra.mxu0 %v2140
        %3037 = vmatprep.subr.mxu0 %v2145
        %3038 = vmatpush1.msra.mxu0 %v2144
        %3039 = vmatprep.subr.mxu0 %v2149
        %3040 = vmatpush1.msra.mxu0 %v2148
        %3041 = vmatprep.subr.mxu0 %v2153
        %3042 = vmatpush1.msra.mxu0 %v2152
        %3043 = vmatprep.subr.mxu0 %v2157
        %3044 = vmatpush1.msra.mxu0 %v2156
        %3045 = vmatprep.subr.mxu0 %v2161
        %3046 = vmatpush1.msra.mxu0 %v2160
        %3047 = vmatprep.subr.mxu0 %v2165
        %3048 = vmatpush1.msra.mxu0 %v2164
        %3049 = vmatprep.subr.mxu0 %v2169
        %3050 = vmatpush1.msra.mxu0 %v2168
        %3051 = vmatprep.subr.mxu0 %v2173
        %3052 = vmatpush1.msra.mxu0 %v2172
        %3053 = vmatprep.subr.mxu0 %v2177
        %3054 = vmatpush1.msra.mxu0 %v2176
        %3055 = vmatprep.subr.mxu0 %v2181
        %3056 = vmatpush1.msra.mxu0 %v2180
        %3057 = vmatprep.subr.mxu0 %v2185
        %3058 = vmatpush1.msra.mxu0 %v2184
        %3059 = vmatprep.subr.mxu0 %v2189
        %3060 = vmatpush1.msra.mxu0 %v2188
        %3061 = vmatprep.mubr.f32.mxu0 %v1928
        %3062 = vmatmul.mubr.f32.gmra.mrb[0].mxu0 %v1926
        %v3063 = vpop.f32.mrb[0].mxu0
        %v3064 = vadd.f32 %v2987, %v3063
        %v3065 = vpop.f32.mrb[0].mxu0
        %v3066 = vadd.f32 %v2989, %v3065
        %3067 = vmatprep.mubr.f32.mxu0 %v1934
        %3068 = vmatmul.mubr.f32.gmra.mrb[0].mxu0 %v1932
        %v3069 = vpop.f32.mrb[0].mxu0
        %v3070 = vadd.f32 %v2993, %v3069
        %v3071 = vpop.f32.mrb[0].mxu0
        %v3072 = vadd.f32 %v2995, %v3071
        %3073 = vdwg.mxu0
        %3074 = vmatprep.subr.mxu0 %v1939
        %3075 = vmatpush1.msra.mxu0 %v1938
        %3076 = vmatprep.subr.mxu0 %v1943
        %3077 = vmatpush1.msra.mxu0 %v1942
        %3078 = vmatprep.subr.mxu0 %v1947
        %3079 = vmatpush1.msra.mxu0 %v1946
        %3080 = vmatprep.subr.mxu0 %v1951
        %3081 = vmatpush1.msra.mxu0 %v1950
        %3082 = vmatprep.subr.mxu0 %v1955
        %3083 = vmatpush1.msra.mxu0 %v1954
        %3084 = vmatprep.subr.mxu0 %v1959
        %3085 = vmatpush1.msra.mxu0 %v1958
        %3086 = vmatprep.subr.mxu0 %v1963
        %3087 = vmatpush1.msra.mxu0 %v1962
        %3088 = vmatprep.subr.mxu0 %v1967
        %3089 = vmatpush1.msra.mxu0 %v1966
        %3090 = vmatprep.subr.mxu0 %v1971
        %3091 = vmatpush1.msra.mxu0 %v1970
        %3092 = vmatprep.subr.mxu0 %v1975
        %3093 = vmatpush1.msra.mxu0 %v1974
        %3094 = vmatprep.subr.mxu0 %v1979
        %3095 = vmatpush1.msra.mxu0 %v1978
        %3096 = vmatprep.subr.mxu0 %v1983
        %3097 = vmatpush1.msra.mxu0 %v1982
        %3098 = vmatprep.subr.mxu0 %v1987
        %3099 = vmatpush1.msra.mxu0 %v1986
        %3100 = vmatprep.subr.mxu0 %v1991
        %3101 = vmatpush1.msra.mxu0 %v1990
        %3102 = vmatprep.subr.mxu0 %v1995
        %3103 = vmatpush1.msra.mxu0 %v1994
        %3104 = vmatprep.subr.mxu0 %v1999
        %3105 = vmatpush1.msra.mxu0 %v1998
        %3106 = vmatprep.subr.mxu0 %v2003
        %3107 = vmatpush1.msra.mxu0 %v2002
        %3108 = vmatprep.subr.mxu0 %v2007
        %3109 = vmatpush1.msra.mxu0 %v2006
        %3110 = vmatprep.subr.mxu0 %v2011
        %3111 = vmatpush1.msra.mxu0 %v2010
        %3112 = vmatprep.subr.mxu0 %v2015
        %3113 = vmatpush1.msra.mxu0 %v2014
        %3114 = vmatprep.subr.mxu0 %v2019
        %3115 = vmatpush1.msra.mxu0 %v2018
        %3116 = vmatprep.subr.mxu0 %v2023
        %3117 = vmatpush1.msra.mxu0 %v2022
        %3118 = vmatprep.subr.mxu0 %v2027
        %3119 = vmatpush1.msra.mxu0 %v2026
        %3120 = vmatprep.subr.mxu0 %v2031
        %3121 = vmatpush1.msra.mxu0 %v2030
        %3122 = vmatprep.subr.mxu0 %v2035
        %3123 = vmatpush1.msra.mxu0 %v2034
        %3124 = vmatprep.subr.mxu0 %v2039
        %3125 = vmatpush1.msra.mxu0 %v2038
        %3126 = vmatprep.subr.mxu0 %v2043
        %3127 = vmatpush1.msra.mxu0 %v2042
        %3128 = vmatprep.subr.mxu0 %v2047
        %3129 = vmatpush1.msra.mxu0 %v2046
        %3130 = vmatprep.subr.mxu0 %v2051
        %3131 = vmatpush1.msra.mxu0 %v2050
        %3132 = vmatprep.subr.mxu0 %v2055
        %3133 = vmatpush1.msra.mxu0 %v2054
        %3134 = vmatprep.subr.mxu0 %v2059
        %3135 = vmatpush1.msra.mxu0 %v2058
        %3136 = vmatprep.subr.mxu0 %v2063
        %3137 = vmatpush1.msra.mxu0 %v2062
        %3138 = vmatprep.mubr.f32.mxu0 %v1851
        %3139 = vmatmul.mubr.f32.gmra.mrb[0].mxu0 %v1849
        %v3140 = vpop.f32.mrb[0].mxu0
        %v3141 = vadd.f32 %v2910, %v3140
        %v3142 = vpop.f32.mrb[0].mxu0
        %v3143 = vadd.f32 %v2912, %v3142
        %3144 = vmatprep.mubr.f32.mxu0 %v1857
        %3145 = vmatmul.mubr.f32.gmra.mrb[0].mxu0 %v1855
        %v3146 = vpop.f32.mrb[0].mxu0
        %v3147 = vadd.f32 %v2916, %v3146
        %v3148 = vpop.f32.mrb[0].mxu0
        %v3149 = vadd.f32 %v2918, %v3148
        %3150 = vdwg.mxu0
        %3151 = vmatprep.subr.mxu0 %v2067
        %3152 = vmatpush1.msra.mxu0 %v2066
        %3153 = vmatprep.subr.mxu0 %v2071
        %3154 = vmatpush1.msra.mxu0 %v2070
        %3155 = vmatprep.subr.mxu0 %v2075
        %3156 = vmatpush1.msra.mxu0 %v2074
        %3157 = vmatprep.subr.mxu0 %v2079
        %3158 = vmatpush1.msra.mxu0 %v2078
        %3159 = vmatprep.subr.mxu0 %v2083
        %3160 = vmatpush1.msra.mxu0 %v2082
        %3161 = vmatprep.subr.mxu0 %v2087
        %3162 = vmatpush1.msra.mxu0 %v2086
        %3163 = vmatprep.subr.mxu0 %v2091
        %3164 = vmatpush1.msra.mxu0 %v2090
        %3165 = vmatprep.subr.mxu0 %v2095
        %3166 = vmatpush1.msra.mxu0 %v2094
        %3167 = vmatprep.subr.mxu0 %v2099
        %3168 = vmatpush1.msra.mxu0 %v2098
        %3169 = vmatprep.subr.mxu0 %v2103
        %3170 = vmatpush1.msra.mxu0 %v2102
        %3171 = vmatprep.subr.mxu0 %v2107
        %3172 = vmatpush1.msra.mxu0 %v2106
        %3173 = vmatprep.subr.mxu0 %v2111
        %3174 = vmatpush1.msra.mxu0 %v2110
        %3175 = vmatprep.subr.mxu0 %v2115
        %3176 = vmatpush1.msra.mxu0 %v2114
        %3177 = vmatprep.subr.mxu0 %v2119
        %3178 = vmatpush1.msra.mxu0 %v2118
        %3179 = vmatprep.subr.mxu0 %v2123
        %3180 = vmatpush1.msra.mxu0 %v2122
        %3181 = vmatprep.subr.mxu0 %v2127
        %3182 = vmatpush1.msra.mxu0 %v2126
        %3183 = vmatprep.subr.mxu0 %v2131
        %3184 = vmatpush1.msra.mxu0 %v2130
        %3185 = vmatprep.subr.mxu0 %v2135
        %3186 = vmatpush1.msra.mxu0 %v2134
        %3187 = vmatprep.subr.mxu0 %v2139
        %3188 = vmatpush1.msra.mxu0 %v2138
        %3189 = vmatprep.subr.mxu0 %v2143
        %3190 = vmatpush1.msra.mxu0 %v2142
        %3191 = vmatprep.subr.mxu0 %v2147
        %3192 = vmatpush1.msra.mxu0 %v2146
        %3193 = vmatprep.subr.mxu0 %v2151
        %3194 = vmatpush1.msra.mxu0 %v2150
        %3195 = vmatprep.subr.mxu0 %v2155
        %3196 = vmatpush1.msra.mxu0 %v2154
        %3197 = vmatprep.subr.mxu0 %v2159
        %3198 = vmatpush1.msra.mxu0 %v2158
        %3199 = vmatprep.subr.mxu0 %v2163
        %3200 = vmatpush1.msra.mxu0 %v2162
        %3201 = vmatprep.subr.mxu0 %v2167
        %3202 = vmatpush1.msra.mxu0 %v2166
        %3203 = vmatprep.subr.mxu0 %v2171
        %3204 = vmatpush1.msra.mxu0 %v2170
        %3205 = vmatprep.subr.mxu0 %v2175
        %3206 = vmatpush1.msra.mxu0 %v2174
        %3207 = vmatprep.subr.mxu0 %v2179
        %3208 = vmatpush1.msra.mxu0 %v2178
        %3209 = vmatprep.subr.mxu0 %v2183
        %3210 = vmatpush1.msra.mxu0 %v2182
        %3211 = vmatprep.subr.mxu0 %v2187
        %3212 = vmatpush1.msra.mxu0 %v2186
        %3213 = vmatprep.subr.mxu0 %v2191
        %3214 = vmatpush1.msra.mxu0 %v2190
        %3215 = vmatprep.mubr.f32.mxu0 %v1928
        %3216 = vmatmul.mubr.f32.gmra.mrb[0].mxu0 %v1926
        %v3217 = vpop.f32.mrb[0].mxu0
        %v3218 = vadd.f32 %v3141, %v3217
        %v3219 = vpop.f32.mrb[0].mxu0
        %v3220 = vadd.f32 %v3143, %v3219
        %3221 = vmatprep.mubr.f32.mxu0 %v1934
        %3222 = vmatmul.mubr.f32.gmra.mrb[0].mxu0 %v1932
        %v3223 = vpop.f32.mrb[0].mxu0
        %v3224 = vadd.f32 %v3147, %v3223
        %v3225 = vpop.f32.mrb[0].mxu0
        %v3226 = vadd.f32 %v3149, %v3225
        %3227 = vdwg.mxu0
        %s3228 = scalar_lea.vmem [#allocation10], 32
        %v3229 = vld [vmem:[%s3228] sm:$0xff]
        %v3230 = vld [vmem:[%s3228 + $0x8] sm:$0xff]
        %v3232 = vsel %vm896, %v3229, 0
        %v3235 = vsel %vm896, %v3230, 0
        %3237 = vmatprep.subr.mxu0 %v1767
        %3238 = vmatpush1.msra.mxu0 %v1766
        %3239 = vmatprep.subr.mxu0 %v1771
        %3240 = vmatpush1.msra.mxu0 %v1770
        %3241 = vmatprep.subr.mxu0 0.0
        %3242 = vmatpush1.msra.mxu0 0.0
        %3243 = vmatprep.subr.mxu0 0.0
        %3244 = vmatpush1.msra.mxu0 0.0
        %3245 = vmatprep.subr.mxu0 0.0
        %3246 = vmatpush1.msra.mxu0 0.0
        %3247 = vmatprep.subr.mxu0 0.0
        %3248 = vmatpush1.msra.mxu0 0.0
        %3249 = vmatprep.subr.mxu0 0.0
        %3250 = vmatpush1.msra.mxu0 0.0
        %3251 = vmatprep.subr.mxu0 0.0
        %3252 = vmatpush1.msra.mxu0 0.0
        %3253 = vmatprep.subr.mxu0 0.0
        %3254 = vmatpush1.msra.mxu0 0.0
        %3255 = vmatprep.subr.mxu0 0.0
        %3256 = vmatpush1.msra.mxu0 0.0
        %3257 = vmatprep.subr.mxu0 0.0
        %3258 = vmatpush1.msra.mxu0 0.0
        %3259 = vmatprep.subr.mxu0 0.0
        %3260 = vmatpush1.msra.mxu0 0.0
        %3261 = vmatprep.subr.mxu0 0.0
        %3262 = vmatpush1.msra.mxu0 0.0
        %3263 = vmatprep.subr.mxu0 0.0
        %3264 = vmatpush1.msra.mxu0 0.0
        %3265 = vmatprep.subr.mxu0 0.0
        %3266 = vmatpush1.msra.mxu0 0.0
        %3267 = vmatprep.subr.mxu0 0.0
        %3268 = vmatpush1.msra.mxu0 0.0
        %3269 = vmatprep.subr.mxu0 0.0
        %3270 = vmatpush1.msra.mxu0 0.0
        %3271 = vmatprep.subr.mxu0 0.0
        %3272 = vmatpush1.msra.mxu0 0.0
        %3273 = vmatprep.subr.mxu0 0.0
        %3274 = vmatpush1.msra.mxu0 0.0
        %3275 = vmatprep.subr.mxu0 0.0
        %3276 = vmatpush1.msra.mxu0 0.0
        %3277 = vmatprep.subr.mxu0 0.0
        %3278 = vmatpush1.msra.mxu0 0.0
        %3279 = vmatprep.subr.mxu0 0.0
        %3280 = vmatpush1.msra.mxu0 0.0
        %3281 = vmatprep.subr.mxu0 0.0
        %3282 = vmatpush1.msra.mxu0 0.0
        %3283 = vmatprep.subr.mxu0 0.0
        %3284 = vmatpush1.msra.mxu0 0.0
        %3285 = vmatprep.subr.mxu0 0.0
        %3286 = vmatpush1.msra.mxu0 0.0
        %3287 = vmatprep.subr.mxu0 0.0
        %3288 = vmatpush1.msra.mxu0 0.0
        %3289 = vmatprep.subr.mxu0 0.0
        %3290 = vmatpush1.msra.mxu0 0.0
        %3291 = vmatprep.subr.mxu0 0.0
        %3292 = vmatpush1.msra.mxu0 0.0
        %3293 = vmatprep.subr.mxu0 0.0
        %3294 = vmatpush1.msra.mxu0 0.0
        %3295 = vmatprep.subr.mxu0 0.0
        %3296 = vmatpush1.msra.mxu0 0.0
        %3297 = vmatprep.subr.mxu0 0.0
        %3298 = vmatpush1.msra.mxu0 0.0
        %3299 = vmatprep.subr.mxu0 0.0
        %3300 = vmatpush1.msra.mxu0 0.0
        %3301 = vmatprep.mubr.f32.mxu0 0.0
        %3302 = vmatmul.mubr.f32.gmra.mrb[0].mxu0 %v3232
        %v3303 = vpop.f32.mrb[0].mxu0
        %v3304 = vadd.f32 0.0, %v3303
        %v3305 = vpop.f32.mrb[0].mxu0
        %v3306 = vadd.f32 0.0, %v3305
        %3307 = vmatprep.mubr.f32.mxu0 0.0
        %3308 = vmatmul.mubr.f32.gmra.mrb[0].mxu0 %v3235
        %v3309 = vpop.f32.mrb[0].mxu0
        %v3310 = vadd.f32 0.0, %v3309
        %v3311 = vpop.f32.mrb[0].mxu0
        %v3312 = vadd.f32 0.0, %v3311
        %3313 = vdwg.mxu0
        %3314 = vmatprep.subr.mxu0 %v1769
        %3315 = vmatpush1.msra.mxu0 %v1768
        %3316 = vmatprep.subr.mxu0 %v1773
        %3317 = vmatpush1.msra.mxu0 %v1772
        %3318 = vmatprep.subr.mxu0 0.0
        %3319 = vmatpush1.msra.mxu0 0.0
        %3320 = vmatprep.subr.mxu0 0.0
        %3321 = vmatpush1.msra.mxu0 0.0
        %3322 = vmatprep.subr.mxu0 0.0
        %3323 = vmatpush1.msra.mxu0 0.0
        %3324 = vmatprep.subr.mxu0 0.0
        %3325 = vmatpush1.msra.mxu0 0.0
        %3326 = vmatprep.subr.mxu0 0.0
        %3327 = vmatpush1.msra.mxu0 0.0
        %3328 = vmatprep.subr.mxu0 0.0
        %3329 = vmatpush1.msra.mxu0 0.0
        %3330 = vmatprep.subr.mxu0 0.0
        %3331 = vmatpush1.msra.mxu0 0.0
        %3332 = vmatprep.subr.mxu0 0.0
        %3333 = vmatpush1.msra.mxu0 0.0
        %3334 = vmatprep.subr.mxu0 0.0
        %3335 = vmatpush1.msra.mxu0 0.0
        %3336 = vmatprep.subr.mxu0 0.0
        %3337 = vmatpush1.msra.mxu0 0.0
        %3338 = vmatprep.subr.mxu0 0.0
        %3339 = vmatpush1.msra.mxu0 0.0
        %3340 = vmatprep.subr.mxu0 0.0
        %3341 = vmatpush1.msra.mxu0 0.0
        %3342 = vmatprep.subr.mxu0 0.0
        %3343 = vmatpush1.msra.mxu0 0.0
        %3344 = vmatprep.subr.mxu0 0.0
        %3345 = vmatpush1.msra.mxu0 0.0
        %3346 = vmatprep.subr.mxu0 0.0
        %3347 = vmatpush1.msra.mxu0 0.0
        %3348 = vmatprep.subr.mxu0 0.0
        %3349 = vmatpush1.msra.mxu0 0.0
        %3350 = vmatprep.subr.mxu0 0.0
        %3351 = vmatpush1.msra.mxu0 0.0
        %3352 = vmatprep.subr.mxu0 0.0
        %3353 = vmatpush1.msra.mxu0 0.0
        %3354 = vmatprep.subr.mxu0 0.0
        %3355 = vmatpush1.msra.mxu0 0.0
        %3356 = vmatprep.subr.mxu0 0.0
        %3357 = vmatpush1.msra.mxu0 0.0
        %3358 = vmatprep.subr.mxu0 0.0
        %3359 = vmatpush1.msra.mxu0 0.0
        %3360 = vmatprep.subr.mxu0 0.0
        %3361 = vmatpush1.msra.mxu0 0.0
        %3362 = vmatprep.subr.mxu0 0.0
        %3363 = vmatpush1.msra.mxu0 0.0
        %3364 = vmatprep.subr.mxu0 0.0
        %3365 = vmatpush1.msra.mxu0 0.0
        %3366 = vmatprep.subr.mxu0 0.0
        %3367 = vmatpush1.msra.mxu0 0.0
        %3368 = vmatprep.subr.mxu0 0.0
        %3369 = vmatpush1.msra.mxu0 0.0
        %3370 = vmatprep.subr.mxu0 0.0
        %3371 = vmatpush1.msra.mxu0 0.0
        %3372 = vmatprep.subr.mxu0 0.0
        %3373 = vmatpush1.msra.mxu0 0.0
        %3374 = vmatprep.subr.mxu0 0.0
        %3375 = vmatpush1.msra.mxu0 0.0
        %3376 = vmatprep.subr.mxu0 0.0
        %3377 = vmatpush1.msra.mxu0 0.0
        %3378 = vmatprep.mubr.f32.mxu0 0.0
        %3379 = vmatmul.mubr.f32.gmra.mrb[0].mxu0 %v3232
        %v3380 = vpop.f32.mrb[0].mxu0
        %v3381 = vadd.f32 0.0, %v3380
        %v3382 = vpop.f32.mrb[0].mxu0
        %v3383 = vadd.f32 0.0, %v3382
        %3384 = vmatprep.mubr.f32.mxu0 0.0
        %3385 = vmatmul.mubr.f32.gmra.mrb[0].mxu0 %v3235
        %v3386 = vpop.f32.mrb[0].mxu0
        %v3387 = vadd.f32 0.0, %v3386
        %v3388 = vpop.f32.mrb[0].mxu0
        %v3389 = vadd.f32 0.0, %v3388
        %3390 = vdwg.mxu0
        %s3391 = scalar_lea.vmem [#allocation11], 4096
        %v3392 = vld [vmem:[%s3391] sm:$0xff]
        %v3393 = vld [vmem:[%s3391 + $0x8] sm:$0xff]
        %v3394 = vld [vmem:[%s3391 + $0x10] sm:$0xff]
        %v3395 = vld [vmem:[%s3391 + $0x18] sm:$0xff]
        %v3396 = vld [vmem:[%s3391 + $0x20] sm:$0xff]
        %v3397 = vld [vmem:[%s3391 + $0x28] sm:$0xff]
        %v3398 = vld [vmem:[%s3391 + $0x30] sm:$0xff]
        %v3399 = vld [vmem:[%s3391 + $0x38] sm:$0xff]
        %v3400 = vld [vmem:[%s3391 + $0x40] sm:$0xff]
        %v3401 = vld [vmem:[%s3391 + $0x48] sm:$0xff]
        %v3402 = vld [vmem:[%s3391 + $0x50] sm:$0xff]
        %v3403 = vld [vmem:[%s3391 + $0x58] sm:$0xff]
        %v3404 = vld [vmem:[%s3391 + $0x60] sm:$0xff]
        %v3405 = vld [vmem:[%s3391 + $0x68] sm:$0xff]
        %v3406 = vld [vmem:[%s3391 + $0x70] sm:$0xff]
        %v3407 = vld [vmem:[%s3391 + $0x78] sm:$0xff]
        %v3408 = vld [vmem:[%s3391 + $0x80] sm:$0xff]
        %v3409 = vld [vmem:[%s3391 + $0x88] sm:$0xff]
        %v3410 = vld [vmem:[%s3391 + $0x90] sm:$0xff]
        %v3411 = vld [vmem:[%s3391 + $0x98] sm:$0xff]
        %v3412 = vld [vmem:[%s3391 + $0xa0] sm:$0xff]
        %v3413 = vld [vmem:[%s3391 + $0xa8] sm:$0xff]
        %v3414 = vld [vmem:[%s3391 + $0xb0] sm:$0xff]
        %v3415 = vld [vmem:[%s3391 + $0xb8] sm:$0xff]
        %v3416 = vld [vmem:[%s3391 + $0xc0] sm:$0xff]
        %v3417 = vld [vmem:[%s3391 + $0xc8] sm:$0xff]
        %v3418 = vld [vmem:[%s3391 + $0xd0] sm:$0xff]
        %v3419 = vld [vmem:[%s3391 + $0xd8] sm:$0xff]
        %v3420 = vld [vmem:[%s3391 + $0xe0] sm:$0xff]
        %v3421 = vld [vmem:[%s3391 + $0xe8] sm:$0xff]
        %v3422 = vld [vmem:[%s3391 + $0xf0] sm:$0xff]
        %v3423 = vld [vmem:[%s3391 + $0xf8] sm:$0xff]
        %v3424 = vld [vmem:[%s3391 + $0x100] sm:$0xff]
        %v3425 = vld [vmem:[%s3391 + $0x108] sm:$0xff]
        %v3426 = vld [vmem:[%s3391 + $0x110] sm:$0xff]
        %v3427 = vld [vmem:[%s3391 + $0x118] sm:$0xff]
        %v3428 = vld [vmem:[%s3391 + $0x120] sm:$0xff]
        %v3429 = vld [vmem:[%s3391 + $0x128] sm:$0xff]
        %v3430 = vld [vmem:[%s3391 + $0x130] sm:$0xff]
        %v3431 = vld [vmem:[%s3391 + $0x138] sm:$0xff]
        %v3432 = vld [vmem:[%s3391 + $0x140] sm:$0xff]
        %v3433 = vld [vmem:[%s3391 + $0x148] sm:$0xff]
        %v3434 = vld [vmem:[%s3391 + $0x150] sm:$0xff]
        %v3435 = vld [vmem:[%s3391 + $0x158] sm:$0xff]
        %v3436 = vld [vmem:[%s3391 + $0x160] sm:$0xff]
        %v3437 = vld [vmem:[%s3391 + $0x168] sm:$0xff]
        %v3438 = vld [vmem:[%s3391 + $0x170] sm:$0xff]
        %v3439 = vld [vmem:[%s3391 + $0x178] sm:$0xff]
        %v3440 = vld [vmem:[%s3391 + $0x180] sm:$0xff]
        %v3441 = vld [vmem:[%s3391 + $0x188] sm:$0xff]
        %v3442 = vld [vmem:[%s3391 + $0x190] sm:$0xff]
        %v3443 = vld [vmem:[%s3391 + $0x198] sm:$0xff]
        %v3444 = vld [vmem:[%s3391 + $0x1a0] sm:$0xff]
        %v3445 = vld [vmem:[%s3391 + $0x1a8] sm:$0xff]
        %v3446 = vld [vmem:[%s3391 + $0x1b0] sm:$0xff]
        %v3447 = vld [vmem:[%s3391 + $0x1b8] sm:$0xff]
        %v3448 = vld [vmem:[%s3391 + $0x1c0] sm:$0xff]
        %v3449 = vld [vmem:[%s3391 + $0x1c8] sm:$0xff]
        %v3450 = vld [vmem:[%s3391 + $0x1d0] sm:$0xff]
        %v3451 = vld [vmem:[%s3391 + $0x1d8] sm:$0xff]
        %v3452 = vld [vmem:[%s3391 + $0x1e0] sm:$0xff]
        %v3453 = vld [vmem:[%s3391 + $0x1e8] sm:$0xff]
        %v3454 = vld [vmem:[%s3391 + $0x1f0] sm:$0xff]
        %v3455 = vld [vmem:[%s3391 + $0x1f8] sm:$0xff]
        %v3456 = vld [vmem:[%s3391 + $0x200] sm:$0xff]
        %v3457 = vld [vmem:[%s3391 + $0x208] sm:$0xff]
        %v3458 = vld [vmem:[%s3391 + $0x210] sm:$0xff]
        %v3459 = vld [vmem:[%s3391 + $0x218] sm:$0xff]
        %v3460 = vld [vmem:[%s3391 + $0x220] sm:$0xff]
        %v3461 = vld [vmem:[%s3391 + $0x228] sm:$0xff]
        %v3462 = vld [vmem:[%s3391 + $0x230] sm:$0xff]
        %v3463 = vld [vmem:[%s3391 + $0x238] sm:$0xff]
        %v3464 = vld [vmem:[%s3391 + $0x240] sm:$0xff]
        %v3465 = vld [vmem:[%s3391 + $0x248] sm:$0xff]
        %v3466 = vld [vmem:[%s3391 + $0x250] sm:$0xff]
        %v3467 = vld [vmem:[%s3391 + $0x258] sm:$0xff]
        %v3468 = vld [vmem:[%s3391 + $0x260] sm:$0xff]
        %v3469 = vld [vmem:[%s3391 + $0x268] sm:$0xff]
        %v3470 = vld [vmem:[%s3391 + $0x270] sm:$0xff]
        %v3471 = vld [vmem:[%s3391 + $0x278] sm:$0xff]
        %v3472 = vld [vmem:[%s3391 + $0x280] sm:$0xff]
        %v3473 = vld [vmem:[%s3391 + $0x288] sm:$0xff]
        %v3474 = vld [vmem:[%s3391 + $0x290] sm:$0xff]
        %v3475 = vld [vmem:[%s3391 + $0x298] sm:$0xff]
        %v3476 = vld [vmem:[%s3391 + $0x2a0] sm:$0xff]
        %v3477 = vld [vmem:[%s3391 + $0x2a8] sm:$0xff]
        %v3478 = vld [vmem:[%s3391 + $0x2b0] sm:$0xff]
        %v3479 = vld [vmem:[%s3391 + $0x2b8] sm:$0xff]
        %v3480 = vld [vmem:[%s3391 + $0x2c0] sm:$0xff]
        %v3481 = vld [vmem:[%s3391 + $0x2c8] sm:$0xff]
        %v3482 = vld [vmem:[%s3391 + $0x2d0] sm:$0xff]
        %v3483 = vld [vmem:[%s3391 + $0x2d8] sm:$0xff]
        %v3484 = vld [vmem:[%s3391 + $0x2e0] sm:$0xff]
        %v3485 = vld [vmem:[%s3391 + $0x2e8] sm:$0xff]
        %v3486 = vld [vmem:[%s3391 + $0x2f0] sm:$0xff]
        %v3487 = vld [vmem:[%s3391 + $0x2f8] sm:$0xff]
        %v3488 = vld [vmem:[%s3391 + $0x300] sm:$0xff]
        %v3489 = vld [vmem:[%s3391 + $0x308] sm:$0xff]
        %v3490 = vld [vmem:[%s3391 + $0x310] sm:$0xff]
        %v3491 = vld [vmem:[%s3391 + $0x318] sm:$0xff]
        %v3492 = vld [vmem:[%s3391 + $0x320] sm:$0xff]
        %v3493 = vld [vmem:[%s3391 + $0x328] sm:$0xff]
        %v3494 = vld [vmem:[%s3391 + $0x330] sm:$0xff]
        %v3495 = vld [vmem:[%s3391 + $0x338] sm:$0xff]
        %v3496 = vld [vmem:[%s3391 + $0x340] sm:$0xff]
        %v3497 = vld [vmem:[%s3391 + $0x348] sm:$0xff]
        %v3498 = vld [vmem:[%s3391 + $0x350] sm:$0xff]
        %v3499 = vld [vmem:[%s3391 + $0x358] sm:$0xff]
        %v3500 = vld [vmem:[%s3391 + $0x360] sm:$0xff]
        %v3501 = vld [vmem:[%s3391 + $0x368] sm:$0xff]
        %v3502 = vld [vmem:[%s3391 + $0x370] sm:$0xff]
        %v3503 = vld [vmem:[%s3391 + $0x378] sm:$0xff]
        %v3504 = vld [vmem:[%s3391 + $0x380] sm:$0xff]
        %v3505 = vld [vmem:[%s3391 + $0x388] sm:$0xff]
        %v3506 = vld [vmem:[%s3391 + $0x390] sm:$0xff]
        %v3507 = vld [vmem:[%s3391 + $0x398] sm:$0xff]
        %v3508 = vld [vmem:[%s3391 + $0x3a0] sm:$0xff]
        %v3509 = vld [vmem:[%s3391 + $0x3a8] sm:$0xff]
        %v3510 = vld [vmem:[%s3391 + $0x3b0] sm:$0xff]
        %v3511 = vld [vmem:[%s3391 + $0x3b8] sm:$0xff]
        %v3512 = vld [vmem:[%s3391 + $0x3c0] sm:$0xff]
        %v3513 = vld [vmem:[%s3391 + $0x3c8] sm:$0xff]
        %v3514 = vld [vmem:[%s3391 + $0x3d0] sm:$0xff]
        %v3515 = vld [vmem:[%s3391 + $0x3d8] sm:$0xff]
        %v3516 = vld [vmem:[%s3391 + $0x3e0] sm:$0xff]
        %v3517 = vld [vmem:[%s3391 + $0x3e8] sm:$0xff]
        %v3518 = vld [vmem:[%s3391 + $0x3f0] sm:$0xff]
        %v3519 = vld [vmem:[%s3391 + $0x3f8] sm:$0xff]
        %v3520 = vld [vmem:[%s3391 + $0x400] sm:$0xff]
        %v3521 = vld [vmem:[%s3391 + $0x408] sm:$0xff]
        %v3522 = vld [vmem:[%s3391 + $0x410] sm:$0xff]
        %v3523 = vld [vmem:[%s3391 + $0x418] sm:$0xff]
        %v3524 = vld [vmem:[%s3391 + $0x420] sm:$0xff]
        %v3525 = vld [vmem:[%s3391 + $0x428] sm:$0xff]
        %v3526 = vld [vmem:[%s3391 + $0x430] sm:$0xff]
        %v3527 = vld [vmem:[%s3391 + $0x438] sm:$0xff]
        %v3528 = vld [vmem:[%s3391 + $0x440] sm:$0xff]
        %v3529 = vld [vmem:[%s3391 + $0x448] sm:$0xff]
        %v3530 = vld [vmem:[%s3391 + $0x450] sm:$0xff]
        %v3531 = vld [vmem:[%s3391 + $0x458] sm:$0xff]
        %v3532 = vld [vmem:[%s3391 + $0x460] sm:$0xff]
        %v3533 = vld [vmem:[%s3391 + $0x468] sm:$0xff]
        %v3534 = vld [vmem:[%s3391 + $0x470] sm:$0xff]
        %v3535 = vld [vmem:[%s3391 + $0x478] sm:$0xff]
        %v3536 = vld [vmem:[%s3391 + $0x480] sm:$0xff]
        %v3537 = vld [vmem:[%s3391 + $0x488] sm:$0xff]
        %v3538 = vld [vmem:[%s3391 + $0x490] sm:$0xff]
        %v3539 = vld [vmem:[%s3391 + $0x498] sm:$0xff]
        %v3540 = vld [vmem:[%s3391 + $0x4a0] sm:$0xff]
        %v3541 = vld [vmem:[%s3391 + $0x4a8] sm:$0xff]
        %v3542 = vld [vmem:[%s3391 + $0x4b0] sm:$0xff]
        %v3543 = vld [vmem:[%s3391 + $0x4b8] sm:$0xff]
        %v3544 = vld [vmem:[%s3391 + $0x4c0] sm:$0xff]
        %v3545 = vld [vmem:[%s3391 + $0x4c8] sm:$0xff]
        %v3546 = vld [vmem:[%s3391 + $0x4d0] sm:$0xff]
        %v3547 = vld [vmem:[%s3391 + $0x4d8] sm:$0xff]
        %v3548 = vld [vmem:[%s3391 + $0x4e0] sm:$0xff]
        %v3549 = vld [vmem:[%s3391 + $0x4e8] sm:$0xff]
        %v3550 = vld [vmem:[%s3391 + $0x4f0] sm:$0xff]
        %v3551 = vld [vmem:[%s3391 + $0x4f8] sm:$0xff]
        %v3552 = vld [vmem:[%s3391 + $0x500] sm:$0xff]
        %v3553 = vld [vmem:[%s3391 + $0x508] sm:$0xff]
        %v3554 = vld [vmem:[%s3391 + $0x510] sm:$0xff]
        %v3555 = vld [vmem:[%s3391 + $0x518] sm:$0xff]
        %v3556 = vld [vmem:[%s3391 + $0x520] sm:$0xff]
        %v3557 = vld [vmem:[%s3391 + $0x528] sm:$0xff]
        %v3558 = vld [vmem:[%s3391 + $0x530] sm:$0xff]
        %v3559 = vld [vmem:[%s3391 + $0x538] sm:$0xff]
        %v3560 = vld [vmem:[%s3391 + $0x540] sm:$0xff]
        %v3561 = vld [vmem:[%s3391 + $0x548] sm:$0xff]
        %v3562 = vld [vmem:[%s3391 + $0x550] sm:$0xff]
        %v3563 = vld [vmem:[%s3391 + $0x558] sm:$0xff]
        %v3564 = vld [vmem:[%s3391 + $0x560] sm:$0xff]
        %v3565 = vld [vmem:[%s3391 + $0x568] sm:$0xff]
        %v3566 = vld [vmem:[%s3391 + $0x570] sm:$0xff]
        %v3567 = vld [vmem:[%s3391 + $0x578] sm:$0xff]
        %v3568 = vld [vmem:[%s3391 + $0x580] sm:$0xff]
        %v3569 = vld [vmem:[%s3391 + $0x588] sm:$0xff]
        %v3570 = vld [vmem:[%s3391 + $0x590] sm:$0xff]
        %v3571 = vld [vmem:[%s3391 + $0x598] sm:$0xff]
        %v3572 = vld [vmem:[%s3391 + $0x5a0] sm:$0xff]
        %v3573 = vld [vmem:[%s3391 + $0x5a8] sm:$0xff]
        %v3574 = vld [vmem:[%s3391 + $0x5b0] sm:$0xff]
        %v3575 = vld [vmem:[%s3391 + $0x5b8] sm:$0xff]
        %v3576 = vld [vmem:[%s3391 + $0x5c0] sm:$0xff]
        %v3577 = vld [vmem:[%s3391 + $0x5c8] sm:$0xff]
        %v3578 = vld [vmem:[%s3391 + $0x5d0] sm:$0xff]
        %v3579 = vld [vmem:[%s3391 + $0x5d8] sm:$0xff]
        %v3580 = vld [vmem:[%s3391 + $0x5e0] sm:$0xff]
        %v3581 = vld [vmem:[%s3391 + $0x5e8] sm:$0xff]
        %v3582 = vld [vmem:[%s3391 + $0x5f0] sm:$0xff]
        %v3583 = vld [vmem:[%s3391 + $0x5f8] sm:$0xff]
        %v3584 = vld [vmem:[%s3391 + $0x600] sm:$0xff]
        %v3585 = vld [vmem:[%s3391 + $0x608] sm:$0xff]
        %v3586 = vld [vmem:[%s3391 + $0x610] sm:$0xff]
        %v3587 = vld [vmem:[%s3391 + $0x618] sm:$0xff]
        %v3588 = vld [vmem:[%s3391 + $0x620] sm:$0xff]
        %v3589 = vld [vmem:[%s3391 + $0x628] sm:$0xff]
        %v3590 = vld [vmem:[%s3391 + $0x630] sm:$0xff]
        %v3591 = vld [vmem:[%s3391 + $0x638] sm:$0xff]
        %v3592 = vld [vmem:[%s3391 + $0x640] sm:$0xff]
        %v3593 = vld [vmem:[%s3391 + $0x648] sm:$0xff]
        %v3594 = vld [vmem:[%s3391 + $0x650] sm:$0xff]
        %v3595 = vld [vmem:[%s3391 + $0x658] sm:$0xff]
        %v3596 = vld [vmem:[%s3391 + $0x660] sm:$0xff]
        %v3597 = vld [vmem:[%s3391 + $0x668] sm:$0xff]
        %v3598 = vld [vmem:[%s3391 + $0x670] sm:$0xff]
        %v3599 = vld [vmem:[%s3391 + $0x678] sm:$0xff]
        %v3600 = vld [vmem:[%s3391 + $0x680] sm:$0xff]
        %v3601 = vld [vmem:[%s3391 + $0x688] sm:$0xff]
        %v3602 = vld [vmem:[%s3391 + $0x690] sm:$0xff]
        %v3603 = vld [vmem:[%s3391 + $0x698] sm:$0xff]
        %v3604 = vld [vmem:[%s3391 + $0x6a0] sm:$0xff]
        %v3605 = vld [vmem:[%s3391 + $0x6a8] sm:$0xff]
        %v3606 = vld [vmem:[%s3391 + $0x6b0] sm:$0xff]
        %v3607 = vld [vmem:[%s3391 + $0x6b8] sm:$0xff]
        %v3608 = vld [vmem:[%s3391 + $0x6c0] sm:$0xff]
        %v3609 = vld [vmem:[%s3391 + $0x6c8] sm:$0xff]
        %v3610 = vld [vmem:[%s3391 + $0x6d0] sm:$0xff]
        %v3611 = vld [vmem:[%s3391 + $0x6d8] sm:$0xff]
        %v3612 = vld [vmem:[%s3391 + $0x6e0] sm:$0xff]
        %v3613 = vld [vmem:[%s3391 + $0x6e8] sm:$0xff]
        %v3614 = vld [vmem:[%s3391 + $0x6f0] sm:$0xff]
        %v3615 = vld [vmem:[%s3391 + $0x6f8] sm:$0xff]
        %v3616 = vld [vmem:[%s3391 + $0x700] sm:$0xff]
        %v3617 = vld [vmem:[%s3391 + $0x708] sm:$0xff]
        %v3618 = vld [vmem:[%s3391 + $0x710] sm:$0xff]
        %v3619 = vld [vmem:[%s3391 + $0x718] sm:$0xff]
        %v3620 = vld [vmem:[%s3391 + $0x720] sm:$0xff]
        %v3621 = vld [vmem:[%s3391 + $0x728] sm:$0xff]
        %v3622 = vld [vmem:[%s3391 + $0x730] sm:$0xff]
        %v3623 = vld [vmem:[%s3391 + $0x738] sm:$0xff]
        %v3624 = vld [vmem:[%s3391 + $0x740] sm:$0xff]
        %v3625 = vld [vmem:[%s3391 + $0x748] sm:$0xff]
        %v3626 = vld [vmem:[%s3391 + $0x750] sm:$0xff]
        %v3627 = vld [vmem:[%s3391 + $0x758] sm:$0xff]
        %v3628 = vld [vmem:[%s3391 + $0x760] sm:$0xff]
        %v3629 = vld [vmem:[%s3391 + $0x768] sm:$0xff]
        %v3630 = vld [vmem:[%s3391 + $0x770] sm:$0xff]
        %v3631 = vld [vmem:[%s3391 + $0x778] sm:$0xff]
        %v3632 = vld [vmem:[%s3391 + $0x780] sm:$0xff]
        %v3633 = vld [vmem:[%s3391 + $0x788] sm:$0xff]
        %v3634 = vld [vmem:[%s3391 + $0x790] sm:$0xff]
        %v3635 = vld [vmem:[%s3391 + $0x798] sm:$0xff]
        %v3636 = vld [vmem:[%s3391 + $0x7a0] sm:$0xff]
        %v3637 = vld [vmem:[%s3391 + $0x7a8] sm:$0xff]
        %v3638 = vld [vmem:[%s3391 + $0x7b0] sm:$0xff]
        %v3639 = vld [vmem:[%s3391 + $0x7b8] sm:$0xff]
        %v3640 = vld [vmem:[%s3391 + $0x7c0] sm:$0xff]
        %v3641 = vld [vmem:[%s3391 + $0x7c8] sm:$0xff]
        %v3642 = vld [vmem:[%s3391 + $0x7d0] sm:$0xff]
        %v3643 = vld [vmem:[%s3391 + $0x7d8] sm:$0xff]
        %v3644 = vld [vmem:[%s3391 + $0x7e0] sm:$0xff]
        %v3645 = vld [vmem:[%s3391 + $0x7e8] sm:$0xff]
        %v3646 = vld [vmem:[%s3391 + $0x7f0] sm:$0xff]
        %v3647 = vld [vmem:[%s3391 + $0x7f8] sm:$0xff]
        %3648 = vmatprep.subr.mxu0 %v3393
        %3649 = vmatpush1.msra.mxu0 %v3392
        %3650 = vmatprep.subr.mxu0 %v3397
        %3651 = vmatpush1.msra.mxu0 %v3396
        %3652 = vmatprep.subr.mxu0 %v3401
        %3653 = vmatpush1.msra.mxu0 %v3400
        %3654 = vmatprep.subr.mxu0 %v3405
        %3655 = vmatpush1.msra.mxu0 %v3404
        %3656 = vmatprep.subr.mxu0 %v3409
        %3657 = vmatpush1.msra.mxu0 %v3408
        %3658 = vmatprep.subr.mxu0 %v3413
        %3659 = vmatpush1.msra.mxu0 %v3412
        %3660 = vmatprep.subr.mxu0 %v3417
        %3661 = vmatpush1.msra.mxu0 %v3416
        %3662 = vmatprep.subr.mxu0 %v3421
        %3663 = vmatpush1.msra.mxu0 %v3420
        %3664 = vmatprep.subr.mxu0 %v3425
        %3665 = vmatpush1.msra.mxu0 %v3424
        %3666 = vmatprep.subr.mxu0 %v3429
        %3667 = vmatpush1.msra.mxu0 %v3428
        %3668 = vmatprep.subr.mxu0 %v3433
        %3669 = vmatpush1.msra.mxu0 %v3432
        %3670 = vmatprep.subr.mxu0 %v3437
        %3671 = vmatpush1.msra.mxu0 %v3436
        %3672 = vmatprep.subr.mxu0 %v3441
        %3673 = vmatpush1.msra.mxu0 %v3440
        %3674 = vmatprep.subr.mxu0 %v3445
        %3675 = vmatpush1.msra.mxu0 %v3444
        %3676 = vmatprep.subr.mxu0 %v3449
        %3677 = vmatpush1.msra.mxu0 %v3448
        %3678 = vmatprep.subr.mxu0 %v3453
        %3679 = vmatpush1.msra.mxu0 %v3452
        %3680 = vmatprep.subr.mxu0 %v3457
        %3681 = vmatpush1.msra.mxu0 %v3456
        %3682 = vmatprep.subr.mxu0 %v3461
        %3683 = vmatpush1.msra.mxu0 %v3460
        %3684 = vmatprep.subr.mxu0 %v3465
        %3685 = vmatpush1.msra.mxu0 %v3464
        %3686 = vmatprep.subr.mxu0 %v3469
        %3687 = vmatpush1.msra.mxu0 %v3468
        %3688 = vmatprep.subr.mxu0 %v3473
        %3689 = vmatpush1.msra.mxu0 %v3472
        %3690 = vmatprep.subr.mxu0 %v3477
        %3691 = vmatpush1.msra.mxu0 %v3476
        %3692 = vmatprep.subr.mxu0 %v3481
        %3693 = vmatpush1.msra.mxu0 %v3480
        %3694 = vmatprep.subr.mxu0 %v3485
        %3695 = vmatpush1.msra.mxu0 %v3484
        %3696 = vmatprep.subr.mxu0 %v3489
        %3697 = vmatpush1.msra.mxu0 %v3488
        %3698 = vmatprep.subr.mxu0 %v3493
        %3699 = vmatpush1.msra.mxu0 %v3492
        %3700 = vmatprep.subr.mxu0 %v3497
        %3701 = vmatpush1.msra.mxu0 %v3496
        %3702 = vmatprep.subr.mxu0 %v3501
        %3703 = vmatpush1.msra.mxu0 %v3500
        %3704 = vmatprep.subr.mxu0 %v3505
        %3705 = vmatpush1.msra.mxu0 %v3504
        %3706 = vmatprep.subr.mxu0 %v3509
        %3707 = vmatpush1.msra.mxu0 %v3508
        %3708 = vmatprep.subr.mxu0 %v3513
        %3709 = vmatpush1.msra.mxu0 %v3512
        %3710 = vmatprep.subr.mxu0 %v3517
        %3711 = vmatpush1.msra.mxu0 %v3516
        %3712 = vmatprep.mubr.f32.mxu0 %v3306
        %3713 = vmatmul.mubr.f32.gmra.mrb[0].mxu0 %v3304
        %v3714 = vpop.f32.mrb[0].mxu0
        %v3715 = vadd.f32 0.0, %v3714
        %v3716 = vpop.f32.mrb[0].mxu0
        %v3717 = vadd.f32 0.0, %v3716
        %3718 = vmatprep.mubr.f32.mxu0 %v3312
        %3719 = vmatmul.mubr.f32.gmra.mrb[0].mxu0 %v3310
        %v3720 = vpop.f32.mrb[0].mxu0
        %v3721 = vadd.f32 0.0, %v3720
        %v3722 = vpop.f32.mrb[0].mxu0
        %v3723 = vadd.f32 0.0, %v3722
        %3724 = vdwg.mxu0
        %3725 = vmatprep.subr.mxu0 %v3521
        %3726 = vmatpush1.msra.mxu0 %v3520
        %3727 = vmatprep.subr.mxu0 %v3525
        %3728 = vmatpush1.msra.mxu0 %v3524
        %3729 = vmatprep.subr.mxu0 %v3529
        %3730 = vmatpush1.msra.mxu0 %v3528
        %3731 = vmatprep.subr.mxu0 %v3533
        %3732 = vmatpush1.msra.mxu0 %v3532
        %3733 = vmatprep.subr.mxu0 %v3537
        %3734 = vmatpush1.msra.mxu0 %v3536
        %3735 = vmatprep.subr.mxu0 %v3541
        %3736 = vmatpush1.msra.mxu0 %v3540
        %3737 = vmatprep.subr.mxu0 %v3545
        %3738 = vmatpush1.msra.mxu0 %v3544
        %3739 = vmatprep.subr.mxu0 %v3549
        %3740 = vmatpush1.msra.mxu0 %v3548
        %3741 = vmatprep.subr.mxu0 %v3553
        %3742 = vmatpush1.msra.mxu0 %v3552
        %3743 = vmatprep.subr.mxu0 %v3557
        %3744 = vmatpush1.msra.mxu0 %v3556
        %3745 = vmatprep.subr.mxu0 %v3561
        %3746 = vmatpush1.msra.mxu0 %v3560
        %3747 = vmatprep.subr.mxu0 %v3565
        %3748 = vmatpush1.msra.mxu0 %v3564
        %3749 = vmatprep.subr.mxu0 %v3569
        %3750 = vmatpush1.msra.mxu0 %v3568
        %3751 = vmatprep.subr.mxu0 %v3573
        %3752 = vmatpush1.msra.mxu0 %v3572
        %3753 = vmatprep.subr.mxu0 %v3577
        %3754 = vmatpush1.msra.mxu0 %v3576
        %3755 = vmatprep.subr.mxu0 %v3581
        %3756 = vmatpush1.msra.mxu0 %v3580
        %3757 = vmatprep.subr.mxu0 %v3585
        %3758 = vmatpush1.msra.mxu0 %v3584
        %3759 = vmatprep.subr.mxu0 %v3589
        %3760 = vmatpush1.msra.mxu0 %v3588
        %3761 = vmatprep.subr.mxu0 %v3593
        %3762 = vmatpush1.msra.mxu0 %v3592
        %3763 = vmatprep.subr.mxu0 %v3597
        %3764 = vmatpush1.msra.mxu0 %v3596
        %3765 = vmatprep.subr.mxu0 %v3601
        %3766 = vmatpush1.msra.mxu0 %v3600
        %3767 = vmatprep.subr.mxu0 %v3605
        %3768 = vmatpush1.msra.mxu0 %v3604
        %3769 = vmatprep.subr.mxu0 %v3609
        %3770 = vmatpush1.msra.mxu0 %v3608
        %3771 = vmatprep.subr.mxu0 %v3613
        %3772 = vmatpush1.msra.mxu0 %v3612
        %3773 = vmatprep.subr.mxu0 %v3617
        %3774 = vmatpush1.msra.mxu0 %v3616
        %3775 = vmatprep.subr.mxu0 %v3621
        %3776 = vmatpush1.msra.mxu0 %v3620
        %3777 = vmatprep.subr.mxu0 %v3625
        %3778 = vmatpush1.msra.mxu0 %v3624
        %3779 = vmatprep.subr.mxu0 %v3629
        %3780 = vmatpush1.msra.mxu0 %v3628
        %3781 = vmatprep.subr.mxu0 %v3633
        %3782 = vmatpush1.msra.mxu0 %v3632
        %3783 = vmatprep.subr.mxu0 %v3637
        %3784 = vmatpush1.msra.mxu0 %v3636
        %3785 = vmatprep.subr.mxu0 %v3641
        %3786 = vmatpush1.msra.mxu0 %v3640
        %3787 = vmatprep.subr.mxu0 %v3645
        %3788 = vmatpush1.msra.mxu0 %v3644
        %3789 = vmatprep.mubr.f32.mxu0 %v3383
        %3790 = vmatmul.mubr.f32.gmra.mrb[0].mxu0 %v3381
        %v3791 = vpop.f32.mrb[0].mxu0
        %v3792 = vadd.f32 %v3715, %v3791
        %v3793 = vpop.f32.mrb[0].mxu0
        %v3794 = vadd.f32 %v3717, %v3793
        %3795 = vmatprep.mubr.f32.mxu0 %v3389
        %3796 = vmatmul.mubr.f32.gmra.mrb[0].mxu0 %v3387
        %v3797 = vpop.f32.mrb[0].mxu0
        %v3798 = vadd.f32 %v3721, %v3797
        %v3799 = vpop.f32.mrb[0].mxu0
        %v3800 = vadd.f32 %v3723, %v3799
        %3801 = vdwg.mxu0
        %3802 = vmatprep.subr.mxu0 %v3395
        %3803 = vmatpush1.msra.mxu0 %v3394
        %3804 = vmatprep.subr.mxu0 %v3399
        %3805 = vmatpush1.msra.mxu0 %v3398
        %3806 = vmatprep.subr.mxu0 %v3403
        %3807 = vmatpush1.msra.mxu0 %v3402
        %3808 = vmatprep.subr.mxu0 %v3407
        %3809 = vmatpush1.msra.mxu0 %v3406
        %3810 = vmatprep.subr.mxu0 %v3411
        %3811 = vmatpush1.msra.mxu0 %v3410
        %3812 = vmatprep.subr.mxu0 %v3415
        %3813 = vmatpush1.msra.mxu0 %v3414
        %3814 = vmatprep.subr.mxu0 %v3419
        %3815 = vmatpush1.msra.mxu0 %v3418
        %3816 = vmatprep.subr.mxu0 %v3423
        %3817 = vmatpush1.msra.mxu0 %v3422
        %3818 = vmatprep.subr.mxu0 %v3427
        %3819 = vmatpush1.msra.mxu0 %v3426
        %3820 = vmatprep.subr.mxu0 %v3431
        %3821 = vmatpush1.msra.mxu0 %v3430
        %3822 = vmatprep.subr.mxu0 %v3435
        %3823 = vmatpush1.msra.mxu0 %v3434
        %3824 = vmatprep.subr.mxu0 %v3439
        %3825 = vmatpush1.msra.mxu0 %v3438
        %3826 = vmatprep.subr.mxu0 %v3443
        %3827 = vmatpush1.msra.mxu0 %v3442
        %3828 = vmatprep.subr.mxu0 %v3447
        %3829 = vmatpush1.msra.mxu0 %v3446
        %3830 = vmatprep.subr.mxu0 %v3451
        %3831 = vmatpush1.msra.mxu0 %v3450
        %3832 = vmatprep.subr.mxu0 %v3455
        %3833 = vmatpush1.msra.mxu0 %v3454
        %3834 = vmatprep.subr.mxu0 %v3459
        %3835 = vmatpush1.msra.mxu0 %v3458
        %3836 = vmatprep.subr.mxu0 %v3463
        %3837 = vmatpush1.msra.mxu0 %v3462
        %3838 = vmatprep.subr.mxu0 %v3467
        %3839 = vmatpush1.msra.mxu0 %v3466
        %3840 = vmatprep.subr.mxu0 %v3471
        %3841 = vmatpush1.msra.mxu0 %v3470
        %3842 = vmatprep.subr.mxu0 %v3475
        %3843 = vmatpush1.msra.mxu0 %v3474
        %3844 = vmatprep.subr.mxu0 %v3479
        %3845 = vmatpush1.msra.mxu0 %v3478
        %3846 = vmatprep.subr.mxu0 %v3483
        %3847 = vmatpush1.msra.mxu0 %v3482
        %3848 = vmatprep.subr.mxu0 %v3487
        %3849 = vmatpush1.msra.mxu0 %v3486
        %3850 = vmatprep.subr.mxu0 %v3491
        %3851 = vmatpush1.msra.mxu0 %v3490
        %3852 = vmatprep.subr.mxu0 %v3495
        %3853 = vmatpush1.msra.mxu0 %v3494
        %3854 = vmatprep.subr.mxu0 %v3499
        %3855 = vmatpush1.msra.mxu0 %v3498
        %3856 = vmatprep.subr.mxu0 %v3503
        %3857 = vmatpush1.msra.mxu0 %v3502
        %3858 = vmatprep.subr.mxu0 %v3507
        %3859 = vmatpush1.msra.mxu0 %v3506
        %3860 = vmatprep.subr.mxu0 %v3511
        %3861 = vmatpush1.msra.mxu0 %v3510
        %3862 = vmatprep.subr.mxu0 %v3515
        %3863 = vmatpush1.msra.mxu0 %v3514
        %3864 = vmatprep.subr.mxu0 %v3519
        %3865 = vmatpush1.msra.mxu0 %v3518
        %3866 = vmatprep.mubr.f32.mxu0 %v3306
        %3867 = vmatmul.mubr.f32.gmra.mrb[0].mxu0 %v3304
        %v3868 = vpop.f32.mrb[0].mxu0
        %v3869 = vadd.f32 0.0, %v3868
        %v3870 = vpop.f32.mrb[0].mxu0
        %v3871 = vadd.f32 0.0, %v3870
        %3872 = vmatprep.mubr.f32.mxu0 %v3312
        %3873 = vmatmul.mubr.f32.gmra.mrb[0].mxu0 %v3310
        %v3874 = vpop.f32.mrb[0].mxu0
        %v3875 = vadd.f32 0.0, %v3874
        %v3876 = vpop.f32.mrb[0].mxu0
        %v3877 = vadd.f32 0.0, %v3876
        %3878 = vdwg.mxu0
        %3879 = vmatprep.subr.mxu0 %v3523
        %3880 = vmatpush1.msra.mxu0 %v3522
        %3881 = vmatprep.subr.mxu0 %v3527
        %3882 = vmatpush1.msra.mxu0 %v3526
        %3883 = vmatprep.subr.mxu0 %v3531
        %3884 = vmatpush1.msra.mxu0 %v3530
        %3885 = vmatprep.subr.mxu0 %v3535
        %3886 = vmatpush1.msra.mxu0 %v3534
        %3887 = vmatprep.subr.mxu0 %v3539
        %3888 = vmatpush1.msra.mxu0 %v3538
        %3889 = vmatprep.subr.mxu0 %v3543
        %3890 = vmatpush1.msra.mxu0 %v3542
        %3891 = vmatprep.subr.mxu0 %v3547
        %3892 = vmatpush1.msra.mxu0 %v3546
        %3893 = vmatprep.subr.mxu0 %v3551
        %3894 = vmatpush1.msra.mxu0 %v3550
        %3895 = vmatprep.subr.mxu0 %v3555
        %3896 = vmatpush1.msra.mxu0 %v3554
        %3897 = vmatprep.subr.mxu0 %v3559
        %3898 = vmatpush1.msra.mxu0 %v3558
        %3899 = vmatprep.subr.mxu0 %v3563
        %3900 = vmatpush1.msra.mxu0 %v3562
        %3901 = vmatprep.subr.mxu0 %v3567
        %3902 = vmatpush1.msra.mxu0 %v3566
        %3903 = vmatprep.subr.mxu0 %v3571
        %3904 = vmatpush1.msra.mxu0 %v3570
        %3905 = vmatprep.subr.mxu0 %v3575
        %3906 = vmatpush1.msra.mxu0 %v3574
        %3907 = vmatprep.subr.mxu0 %v3579
        %3908 = vmatpush1.msra.mxu0 %v3578
        %3909 = vmatprep.subr.mxu0 %v3583
        %3910 = vmatpush1.msra.mxu0 %v3582
        %3911 = vmatprep.subr.mxu0 %v3587
        %3912 = vmatpush1.msra.mxu0 %v3586
        %3913 = vmatprep.subr.mxu0 %v3591
        %3914 = vmatpush1.msra.mxu0 %v3590
        %3915 = vmatprep.subr.mxu0 %v3595
        %3916 = vmatpush1.msra.mxu0 %v3594
        %3917 = vmatprep.subr.mxu0 %v3599
        %3918 = vmatpush1.msra.mxu0 %v3598
        %3919 = vmatprep.subr.mxu0 %v3603
        %3920 = vmatpush1.msra.mxu0 %v3602
        %3921 = vmatprep.subr.mxu0 %v3607
        %3922 = vmatpush1.msra.mxu0 %v3606
        %3923 = vmatprep.subr.mxu0 %v3611
        %3924 = vmatpush1.msra.mxu0 %v3610
        %3925 = vmatprep.subr.mxu0 %v3615
        %3926 = vmatpush1.msra.mxu0 %v3614
        %3927 = vmatprep.subr.mxu0 %v3619
        %3928 = vmatpush1.msra.mxu0 %v3618
        %3929 = vmatprep.subr.mxu0 %v3623
        %3930 = vmatpush1.msra.mxu0 %v3622
        %3931 = vmatprep.subr.mxu0 %v3627
        %3932 = vmatpush1.msra.mxu0 %v3626
        %3933 = vmatprep.subr.mxu0 %v3631
        %3934 = vmatpush1.msra.mxu0 %v3630
        %3935 = vmatprep.subr.mxu0 %v3635
        %3936 = vmatpush1.msra.mxu0 %v3634
        %3937 = vmatprep.subr.mxu0 %v3639
        %3938 = vmatpush1.msra.mxu0 %v3638
        %3939 = vmatprep.subr.mxu0 %v3643
        %3940 = vmatpush1.msra.mxu0 %v3642
        %3941 = vmatprep.subr.mxu0 %v3647
        %3942 = vmatpush1.msra.mxu0 %v3646
        %3943 = vmatprep.mubr.f32.mxu0 %v3383
        %3944 = vmatmul.mubr.f32.gmra.mrb[0].mxu0 %v3381
        %v3945 = vpop.f32.mrb[0].mxu0
        %v3946 = vadd.f32 %v3869, %v3945
        %v3947 = vpop.f32.mrb[0].mxu0
        %v3948 = vadd.f32 %v3871, %v3947
        %3949 = vmatprep.mubr.f32.mxu0 %v3389
        %3950 = vmatmul.mubr.f32.gmra.mrb[0].mxu0 %v3387
        %v3951 = vpop.f32.mrb[0].mxu0
        %v3952 = vadd.f32 %v3875, %v3951
        %v3953 = vpop.f32.mrb[0].mxu0
        %v3954 = vadd.f32 %v3877, %v3953
        %3955 = vdwg.mxu0
        %v3956 = vadd.f32 %v3064, %v3792
        %v3957 = vadd.f32 %v3066, %v3794
        %v3958 = vadd.f32 %v3218, %v3946
        %v3959 = vadd.f32 %v3220, %v3948
        %v3960 = vadd.f32 %v3070, %v3798
        %v3961 = vadd.f32 %v3072, %v3800
        %v3962 = vadd.f32 %v3224, %v3952
        %v3963 = vadd.f32 %v3226, %v3954
        %v3964 = vld [vmem:[#allocation13] sm:$0xff]
        %v3966 = vlaneseq
        %v3967 = vshrl.u32 %v3966, 7
        %v3968 = vsub.s32 0, %v3967
        %v3969 = vrot.slane %v3964, %v3968
        %v3970 = vlaneseq
        %v3971 = vshrl.u32 %v3970, 7
        %v3972 = vsub.s32 2, %v3971
        %v3973 = vrot.slane %v3964, %v3972
        %v3974 = vlaneseq
        %v3975 = vshrl.u32 %v3974, 7
        %v3976 = vsub.s32 4, %v3975
        %v3977 = vrot.slane %v3964, %v3976
        %v3978 = vlaneseq
        %v3979 = vshrl.u32 %v3978, 7
        %v3980 = vsub.s32 6, %v3979
        %v3981 = vrot.slane %v3964, %v3980
        %v3986 = vlaneseq
        %v3987 = vshrl.u32 %v3986, 7
        %v3988 = vsub.s32 0, %v3987
        %v3989 = vrot.slane %v3969, %v3988
        %v3990 = vlaneseq
        %v3991 = vshrl.u32 %v3990, 7
        %v3992 = vsub.s32 0, %v3991
        %v3993 = vrot.slane %v3973, %v3992
        %v3994 = vlaneseq
        %v3995 = vshrl.u32 %v3994, 7
        %v3996 = vsub.s32 0, %v3995
        %v3997 = vrot.slane %v3977, %v3996
        %v3998 = vlaneseq
        %v3999 = vshrl.u32 %v3998, 7
        %v4000 = vsub.s32 0, %v3999
        %v4001 = vrot.slane %v3981, %v4000
        %v4002 = vadd.f32 %v3956, %v3989
        %v4003 = vadd.f32 %v3957, %v3993
        %v4004 = vadd.f32 %v3958, %v3997
        %v4005 = vadd.f32 %v3959, %v4001
        %v4006 = vadd.f32 %v3960, %v3989
        %v4007 = vadd.f32 %v3961, %v3993
        %v4008 = vadd.f32 %v3962, %v3997
        %v4009 = vadd.f32 %v3963, %v4001
        %vm4010 = vcmp.ge.f32.partialorder %v4002, 0.0
        %vm4011 = vcmp.ge.f32.partialorder %v4003, 0.0
        %vm4012 = vcmp.ge.f32.partialorder %v4004, 0.0
        %vm4013 = vcmp.ge.f32.partialorder %v4005, 0.0
        %vm4014 = vcmp.ge.f32.partialorder %v4006, 0.0
        %vm4015 = vcmp.ge.f32.partialorder %v4007, 0.0
        %vm4016 = vcmp.ge.f32.partialorder %v4008, 0.0
        %vm4017 = vcmp.ge.f32.partialorder %v4009, 0.0
        %v4018 = vmul.f32 %v4002, 0.01
        %v4019 = vmul.f32 %v4003, 0.01
        %v4020 = vmul.f32 %v4004, 0.01
        %v4021 = vmul.f32 %v4005, 0.01
        %v4022 = vmul.f32 %v4006, 0.01
        %v4023 = vmul.f32 %v4007, 0.01
        %v4024 = vmul.f32 %v4008, 0.01
        %v4025 = vmul.f32 %v4009, 0.01
        %v4026 = vsel %vm4010, %v4002, %v4018
        %v4027 = vsel %vm4011, %v4003, %v4019
        %v4028 = vsel %vm4012, %v4004, %v4020
        %v4029 = vsel %vm4013, %v4005, %v4021
        %v4030 = vsel %vm4014, %v4006, %v4022
        %v4031 = vsel %vm4015, %v4007, %v4023
        %v4032 = vsel %vm4016, %v4008, %v4024
        %v4033 = vsel %vm4017, %v4009, %v4025
        %v4034 = vlaneseq
        %v4035 = vshrl.u32 %v4034, 7
        %v4036 = vsub.s32 1, %v4035
        %v4037 = vrot.slane %v3964, %v4036
        %v4038 = vlaneseq
        %v4039 = vshrl.u32 %v4038, 7
        %v4040 = vsub.s32 3, %v4039
        %v4041 = vrot.slane %v3964, %v4040
        %v4042 = vlaneseq
        %v4043 = vshrl.u32 %v4042, 7
        %v4044 = vsub.s32 5, %v4043
        %v4045 = vrot.slane %v3964, %v4044
        %v4046 = vlaneseq
        %v4047 = vshrl.u32 %v4046, 7
        %v4048 = vsub.s32 7, %v4047
        %v4049 = vrot.slane %v3964, %v4048
        %v4054 = vlaneseq
        %v4055 = vshrl.u32 %v4054, 7
        %v4056 = vsub.s32 1, %v4055
        %v4057 = vrot.slane %v4037, %v4056
        %v4058 = vlaneseq
        %v4059 = vshrl.u32 %v4058, 7
        %v4060 = vsub.s32 1, %v4059
        %v4061 = vrot.slane %v4041, %v4060
        %v4062 = vlaneseq
        %v4063 = vshrl.u32 %v4062, 7
        %v4064 = vsub.s32 1, %v4063
        %v4065 = vrot.slane %v4045, %v4064
        %v4066 = vlaneseq
        %v4067 = vshrl.u32 %v4066, 7
        %v4068 = vsub.s32 1, %v4067
        %v4069 = vrot.slane %v4049, %v4068
        %v4070 = vadd.f32 %v4026, %v4057
        %v4071 = vadd.f32 %v4027, %v4061
        %v4072 = vadd.f32 %v4028, %v4065
        %v4073 = vadd.f32 %v4029, %v4069
        %v4074 = vadd.f32 %v4030, %v4057
        %v4075 = vadd.f32 %v4031, %v4061
        %v4076 = vadd.f32 %v4032, %v4065
        %v4077 = vadd.f32 %v4033, %v4069
        %v4078 = vld [vmem:[#allocation14] sm:$0xff]
        %v4080 = vsel %vm896, %v4078, 0
        %4082 = vmatprep.subr.mxu0 %v4071
        %4083 = vmatpush1.msra.mxu0 %v4070
        %4084 = vmatprep.subr.mxu0 %v4075
        %4085 = vmatpush1.msra.mxu0 %v4074
        %4086 = vmatprep.subr.mxu0 0.0
        %4087 = vmatpush1.msra.mxu0 0.0
        %4088 = vmatprep.subr.mxu0 0.0
        %4089 = vmatpush1.msra.mxu0 0.0
        %4090 = vmatprep.subr.mxu0 0.0
        %4091 = vmatpush1.msra.mxu0 0.0
        %4092 = vmatprep.subr.mxu0 0.0
        %4093 = vmatpush1.msra.mxu0 0.0
        %4094 = vmatprep.subr.mxu0 0.0
        %4095 = vmatpush1.msra.mxu0 0.0
        %4096 = vmatprep.subr.mxu0 0.0
        %4097 = vmatpush1.msra.mxu0 0.0
        %4098 = vmatprep.subr.mxu0 0.0
        %4099 = vmatpush1.msra.mxu0 0.0
        %4100 = vmatprep.subr.mxu0 0.0
        %4101 = vmatpush1.msra.mxu0 0.0
        %4102 = vmatprep.subr.mxu0 0.0
        %4103 = vmatpush1.msra.mxu0 0.0
        %4104 = vmatprep.subr.mxu0 0.0
        %4105 = vmatpush1.msra.mxu0 0.0
        %4106 = vmatprep.subr.mxu0 0.0
        %4107 = vmatpush1.msra.mxu0 0.0
        %4108 = vmatprep.subr.mxu0 0.0
        %4109 = vmatpush1.msra.mxu0 0.0
        %4110 = vmatprep.subr.mxu0 0.0
        %4111 = vmatpush1.msra.mxu0 0.0
        %4112 = vmatprep.subr.mxu0 0.0
        %4113 = vmatpush1.msra.mxu0 0.0
        %4114 = vmatprep.subr.mxu0 0.0
        %4115 = vmatpush1.msra.mxu0 0.0
        %4116 = vmatprep.subr.mxu0 0.0
        %4117 = vmatpush1.msra.mxu0 0.0
        %4118 = vmatprep.subr.mxu0 0.0
        %4119 = vmatpush1.msra.mxu0 0.0
        %4120 = vmatprep.subr.mxu0 0.0
        %4121 = vmatpush1.msra.mxu0 0.0
        %4122 = vmatprep.subr.mxu0 0.0
        %4123 = vmatpush1.msra.mxu0 0.0
        %4124 = vmatprep.subr.mxu0 0.0
        %4125 = vmatpush1.msra.mxu0 0.0
        %4126 = vmatprep.subr.mxu0 0.0
        %4127 = vmatpush1.msra.mxu0 0.0
        %4128 = vmatprep.subr.mxu0 0.0
        %4129 = vmatpush1.msra.mxu0 0.0
        %4130 = vmatprep.subr.mxu0 0.0
        %4131 = vmatpush1.msra.mxu0 0.0
        %4132 = vmatprep.subr.mxu0 0.0
        %4133 = vmatpush1.msra.mxu0 0.0
        %4134 = vmatprep.subr.mxu0 0.0
        %4135 = vmatpush1.msra.mxu0 0.0
        %4136 = vmatprep.subr.mxu0 0.0
        %4137 = vmatpush1.msra.mxu0 0.0
        %4138 = vmatprep.subr.mxu0 0.0
        %4139 = vmatpush1.msra.mxu0 0.0
        %4140 = vmatprep.subr.mxu0 0.0
        %4141 = vmatpush1.msra.mxu0 0.0
        %4142 = vmatprep.subr.mxu0 0.0
        %4143 = vmatpush1.msra.mxu0 0.0
        %4144 = vmatprep.subr.mxu0 0.0
        %4145 = vmatpush1.msra.mxu0 0.0
        %4146 = vmatprep.mubr.f32.mxu0 0.0
        %4147 = vmatmul.mubr.f32.gmra.mrb[0].mxu0 %v4080
        %v4148 = vpop.f32.mrb[0].mxu0
        %v4149 = vadd.f32 0.0, %v4148
        %v4150 = vpop.f32.mrb[0].mxu0
        %v4151 = vadd.f32 0.0, %v4150
        %4152 = vdwg.mxu0
        %4153 = vmatprep.subr.mxu0 %v4073
        %4154 = vmatpush1.msra.mxu0 %v4072
        %4155 = vmatprep.subr.mxu0 %v4077
        %4156 = vmatpush1.msra.mxu0 %v4076
        %4157 = vmatprep.subr.mxu0 0.0
        %4158 = vmatpush1.msra.mxu0 0.0
        %4159 = vmatprep.subr.mxu0 0.0
        %4160 = vmatpush1.msra.mxu0 0.0
        %4161 = vmatprep.subr.mxu0 0.0
        %4162 = vmatpush1.msra.mxu0 0.0
        %4163 = vmatprep.subr.mxu0 0.0
        %4164 = vmatpush1.msra.mxu0 0.0
        %4165 = vmatprep.subr.mxu0 0.0
        %4166 = vmatpush1.msra.mxu0 0.0
        %4167 = vmatprep.subr.mxu0 0.0
        %4168 = vmatpush1.msra.mxu0 0.0
        %4169 = vmatprep.subr.mxu0 0.0
        %4170 = vmatpush1.msra.mxu0 0.0
        %4171 = vmatprep.subr.mxu0 0.0
        %4172 = vmatpush1.msra.mxu0 0.0
        %4173 = vmatprep.subr.mxu0 0.0
        %4174 = vmatpush1.msra.mxu0 0.0
        %4175 = vmatprep.subr.mxu0 0.0
        %4176 = vmatpush1.msra.mxu0 0.0
        %4177 = vmatprep.subr.mxu0 0.0
        %4178 = vmatpush1.msra.mxu0 0.0
        %4179 = vmatprep.subr.mxu0 0.0
        %4180 = vmatpush1.msra.mxu0 0.0
        %4181 = vmatprep.subr.mxu0 0.0
        %4182 = vmatpush1.msra.mxu0 0.0
        %4183 = vmatprep.subr.mxu0 0.0
        %4184 = vmatpush1.msra.mxu0 0.0
        %4185 = vmatprep.subr.mxu0 0.0
        %4186 = vmatpush1.msra.mxu0 0.0
        %4187 = vmatprep.subr.mxu0 0.0
        %4188 = vmatpush1.msra.mxu0 0.0
        %4189 = vmatprep.subr.mxu0 0.0
        %4190 = vmatpush1.msra.mxu0 0.0
        %4191 = vmatprep.subr.mxu0 0.0
        %4192 = vmatpush1.msra.mxu0 0.0
        %4193 = vmatprep.subr.mxu0 0.0
        %4194 = vmatpush1.msra.mxu0 0.0
        %4195 = vmatprep.subr.mxu0 0.0
        %4196 = vmatpush1.msra.mxu0 0.0
        %4197 = vmatprep.subr.mxu0 0.0
        %4198 = vmatpush1.msra.mxu0 0.0
        %4199 = vmatprep.subr.mxu0 0.0
        %4200 = vmatpush1.msra.mxu0 0.0
        %4201 = vmatprep.subr.mxu0 0.0
        %4202 = vmatpush1.msra.mxu0 0.0
        %4203 = vmatprep.subr.mxu0 0.0
        %4204 = vmatpush1.msra.mxu0 0.0
        %4205 = vmatprep.subr.mxu0 0.0
        %4206 = vmatpush1.msra.mxu0 0.0
        %4207 = vmatprep.subr.mxu0 0.0
        %4208 = vmatpush1.msra.mxu0 0.0
        %4209 = vmatprep.subr.mxu0 0.0
        %4210 = vmatpush1.msra.mxu0 0.0
        %4211 = vmatprep.subr.mxu0 0.0
        %4212 = vmatpush1.msra.mxu0 0.0
        %4213 = vmatprep.subr.mxu0 0.0
        %4214 = vmatpush1.msra.mxu0 0.0
        %4215 = vmatprep.subr.mxu0 0.0
        %4216 = vmatpush1.msra.mxu0 0.0
        %4217 = vmatprep.mubr.f32.mxu0 0.0
        %4218 = vmatmul.mubr.f32.gmra.mrb[0].mxu0 %v4080
        %v4219 = vpop.f32.mrb[0].mxu0
        %v4220 = vadd.f32 0.0, %v4219
        %v4221 = vpop.f32.mrb[0].mxu0
        %v4222 = vadd.f32 0.0, %v4221
        %4223 = vdwg.mxu0
        %v4224 = vld [vmem:[#allocation16] sm:$0xff]
        %v4225 = vld [vmem:[#allocation16 + $0x8] sm:$0xff]
        %v4226 = vld [vmem:[#allocation16 + $0x10] sm:$0xff]
        %v4227 = vld [vmem:[#allocation16 + $0x18] sm:$0xff]
        %v4228 = vld [vmem:[#allocation16 + $0x20] sm:$0xff]
        %v4229 = vld [vmem:[#allocation16 + $0x28] sm:$0xff]
        %v4230 = vld [vmem:[#allocation16 + $0x30] sm:$0xff]
        %v4231 = vld [vmem:[#allocation16 + $0x38] sm:$0xff]
        %v4232 = vld [vmem:[#allocation16 + $0x40] sm:$0xff]
        %v4233 = vld [vmem:[#allocation16 + $0x48] sm:$0xff]
        %v4234 = vld [vmem:[#allocation16 + $0x50] sm:$0xff]
        %v4235 = vld [vmem:[#allocation16 + $0x58] sm:$0xff]
        %v4236 = vld [vmem:[#allocation16 + $0x60] sm:$0xff]
        %v4237 = vld [vmem:[#allocation16 + $0x68] sm:$0xff]
        %v4238 = vld [vmem:[#allocation16 + $0x70] sm:$0xff]
        %v4239 = vld [vmem:[#allocation16 + $0x78] sm:$0xff]
        %v4240 = vld [vmem:[#allocation16 + $0x80] sm:$0xff]
        %v4241 = vld [vmem:[#allocation16 + $0x88] sm:$0xff]
        %v4242 = vld [vmem:[#allocation16 + $0x90] sm:$0xff]
        %v4243 = vld [vmem:[#allocation16 + $0x98] sm:$0xff]
        %v4244 = vld [vmem:[#allocation16 + $0xa0] sm:$0xff]
        %v4245 = vld [vmem:[#allocation16 + $0xa8] sm:$0xff]
        %v4246 = vld [vmem:[#allocation16 + $0xb0] sm:$0xff]
        %v4247 = vld [vmem:[#allocation16 + $0xb8] sm:$0xff]
        %v4248 = vld [vmem:[#allocation16 + $0xc0] sm:$0xff]
        %v4249 = vld [vmem:[#allocation16 + $0xc8] sm:$0xff]
        %v4250 = vld [vmem:[#allocation16 + $0xd0] sm:$0xff]
        %v4251 = vld [vmem:[#allocation16 + $0xd8] sm:$0xff]
        %v4252 = vld [vmem:[#allocation16 + $0xe0] sm:$0xff]
        %v4253 = vld [vmem:[#allocation16 + $0xe8] sm:$0xff]
        %v4254 = vld [vmem:[#allocation16 + $0xf0] sm:$0xff]
        %v4255 = vld [vmem:[#allocation16 + $0xf8] sm:$0xff]
        %v4256 = vld [vmem:[#allocation16 + $0x100] sm:$0xff]
        %v4257 = vld [vmem:[#allocation16 + $0x108] sm:$0xff]
        %v4258 = vld [vmem:[#allocation16 + $0x110] sm:$0xff]
        %v4259 = vld [vmem:[#allocation16 + $0x118] sm:$0xff]
        %v4260 = vld [vmem:[#allocation16 + $0x120] sm:$0xff]
        %v4261 = vld [vmem:[#allocation16 + $0x128] sm:$0xff]
        %v4262 = vld [vmem:[#allocation16 + $0x130] sm:$0xff]
        %v4263 = vld [vmem:[#allocation16 + $0x138] sm:$0xff]
        %v4264 = vld [vmem:[#allocation16 + $0x140] sm:$0xff]
        %v4265 = vld [vmem:[#allocation16 + $0x148] sm:$0xff]
        %v4266 = vld [vmem:[#allocation16 + $0x150] sm:$0xff]
        %v4267 = vld [vmem:[#allocation16 + $0x158] sm:$0xff]
        %v4268 = vld [vmem:[#allocation16 + $0x160] sm:$0xff]
        %v4269 = vld [vmem:[#allocation16 + $0x168] sm:$0xff]
        %v4270 = vld [vmem:[#allocation16 + $0x170] sm:$0xff]
        %v4271 = vld [vmem:[#allocation16 + $0x178] sm:$0xff]
        %v4272 = vld [vmem:[#allocation16 + $0x180] sm:$0xff]
        %v4273 = vld [vmem:[#allocation16 + $0x188] sm:$0xff]
        %v4274 = vld [vmem:[#allocation16 + $0x190] sm:$0xff]
        %v4275 = vld [vmem:[#allocation16 + $0x198] sm:$0xff]
        %v4276 = vld [vmem:[#allocation16 + $0x1a0] sm:$0xff]
        %v4277 = vld [vmem:[#allocation16 + $0x1a8] sm:$0xff]
        %v4278 = vld [vmem:[#allocation16 + $0x1b0] sm:$0xff]
        %v4279 = vld [vmem:[#allocation16 + $0x1b8] sm:$0xff]
        %v4280 = vld [vmem:[#allocation16 + $0x1c0] sm:$0xff]
        %v4281 = vld [vmem:[#allocation16 + $0x1c8] sm:$0xff]
        %v4282 = vld [vmem:[#allocation16 + $0x1d0] sm:$0xff]
        %v4283 = vld [vmem:[#allocation16 + $0x1d8] sm:$0xff]
        %v4284 = vld [vmem:[#allocation16 + $0x1e0] sm:$0xff]
        %v4285 = vld [vmem:[#allocation16 + $0x1e8] sm:$0xff]
        %v4286 = vld [vmem:[#allocation16 + $0x1f0] sm:$0xff]
        %v4287 = vld [vmem:[#allocation16 + $0x1f8] sm:$0xff]
        %v4288 = vld [vmem:[#allocation16 + $0x200] sm:$0xff]
        %v4289 = vld [vmem:[#allocation16 + $0x208] sm:$0xff]
        %v4290 = vld [vmem:[#allocation16 + $0x210] sm:$0xff]
        %v4291 = vld [vmem:[#allocation16 + $0x218] sm:$0xff]
        %v4292 = vld [vmem:[#allocation16 + $0x220] sm:$0xff]
        %v4293 = vld [vmem:[#allocation16 + $0x228] sm:$0xff]
        %v4294 = vld [vmem:[#allocation16 + $0x230] sm:$0xff]
        %v4295 = vld [vmem:[#allocation16 + $0x238] sm:$0xff]
        %v4296 = vld [vmem:[#allocation16 + $0x240] sm:$0xff]
        %v4297 = vld [vmem:[#allocation16 + $0x248] sm:$0xff]
        %v4298 = vld [vmem:[#allocation16 + $0x250] sm:$0xff]
        %v4299 = vld [vmem:[#allocation16 + $0x258] sm:$0xff]
        %v4300 = vld [vmem:[#allocation16 + $0x260] sm:$0xff]
        %v4301 = vld [vmem:[#allocation16 + $0x268] sm:$0xff]
        %v4302 = vld [vmem:[#allocation16 + $0x270] sm:$0xff]
        %v4303 = vld [vmem:[#allocation16 + $0x278] sm:$0xff]
        %v4304 = vld [vmem:[#allocation16 + $0x280] sm:$0xff]
        %v4305 = vld [vmem:[#allocation16 + $0x288] sm:$0xff]
        %v4306 = vld [vmem:[#allocation16 + $0x290] sm:$0xff]
        %v4307 = vld [vmem:[#allocation16 + $0x298] sm:$0xff]
        %v4308 = vld [vmem:[#allocation16 + $0x2a0] sm:$0xff]
        %v4309 = vld [vmem:[#allocation16 + $0x2a8] sm:$0xff]
        %v4310 = vld [vmem:[#allocation16 + $0x2b0] sm:$0xff]
        %v4311 = vld [vmem:[#allocation16 + $0x2b8] sm:$0xff]
        %v4312 = vld [vmem:[#allocation16 + $0x2c0] sm:$0xff]
        %v4313 = vld [vmem:[#allocation16 + $0x2c8] sm:$0xff]
        %v4314 = vld [vmem:[#allocation16 + $0x2d0] sm:$0xff]
        %v4315 = vld [vmem:[#allocation16 + $0x2d8] sm:$0xff]
        %v4316 = vld [vmem:[#allocation16 + $0x2e0] sm:$0xff]
        %v4317 = vld [vmem:[#allocation16 + $0x2e8] sm:$0xff]
        %v4318 = vld [vmem:[#allocation16 + $0x2f0] sm:$0xff]
        %v4319 = vld [vmem:[#allocation16 + $0x2f8] sm:$0xff]
        %v4320 = vld [vmem:[#allocation16 + $0x300] sm:$0xff]
        %v4321 = vld [vmem:[#allocation16 + $0x308] sm:$0xff]
        %v4322 = vld [vmem:[#allocation16 + $0x310] sm:$0xff]
        %v4323 = vld [vmem:[#allocation16 + $0x318] sm:$0xff]
        %v4324 = vld [vmem:[#allocation16 + $0x320] sm:$0xff]
        %v4325 = vld [vmem:[#allocation16 + $0x328] sm:$0xff]
        %v4326 = vld [vmem:[#allocation16 + $0x330] sm:$0xff]
        %v4327 = vld [vmem:[#allocation16 + $0x338] sm:$0xff]
        %v4328 = vld [vmem:[#allocation16 + $0x340] sm:$0xff]
        %v4329 = vld [vmem:[#allocation16 + $0x348] sm:$0xff]
        %v4330 = vld [vmem:[#allocation16 + $0x350] sm:$0xff]
        %v4331 = vld [vmem:[#allocation16 + $0x358] sm:$0xff]
        %v4332 = vld [vmem:[#allocation16 + $0x360] sm:$0xff]
        %v4333 = vld [vmem:[#allocation16 + $0x368] sm:$0xff]
        %v4334 = vld [vmem:[#allocation16 + $0x370] sm:$0xff]
        %v4335 = vld [vmem:[#allocation16 + $0x378] sm:$0xff]
        %v4336 = vld [vmem:[#allocation16 + $0x380] sm:$0xff]
        %v4337 = vld [vmem:[#allocation16 + $0x388] sm:$0xff]
        %v4338 = vld [vmem:[#allocation16 + $0x390] sm:$0xff]
        %v4339 = vld [vmem:[#allocation16 + $0x398] sm:$0xff]
        %v4340 = vld [vmem:[#allocation16 + $0x3a0] sm:$0xff]
        %v4341 = vld [vmem:[#allocation16 + $0x3a8] sm:$0xff]
        %v4342 = vld [vmem:[#allocation16 + $0x3b0] sm:$0xff]
        %v4343 = vld [vmem:[#allocation16 + $0x3b8] sm:$0xff]
        %v4344 = vld [vmem:[#allocation16 + $0x3c0] sm:$0xff]
        %v4345 = vld [vmem:[#allocation16 + $0x3c8] sm:$0xff]
        %v4346 = vld [vmem:[#allocation16 + $0x3d0] sm:$0xff]
        %v4347 = vld [vmem:[#allocation16 + $0x3d8] sm:$0xff]
        %v4348 = vld [vmem:[#allocation16 + $0x3e0] sm:$0xff]
        %v4349 = vld [vmem:[#allocation16 + $0x3e8] sm:$0xff]
        %v4350 = vld [vmem:[#allocation16 + $0x3f0] sm:$0xff]
        %v4351 = vld [vmem:[#allocation16 + $0x3f8] sm:$0xff]
        %s4352 = scalar_lea.vmem [#allocation14], 8
        %v4353 = vld [vmem:[%s4352] sm:$0xff]
        %v4355 = vsel %vm896, %v4353, 0
        %4357 = vmatprep.subr.mxu0 %v4071
        %4358 = vmatpush1.msra.mxu0 %v4070
        %4359 = vmatprep.subr.mxu0 %v4075
        %4360 = vmatpush1.msra.mxu0 %v4074
        %4361 = vmatprep.subr.mxu0 0.0
        %4362 = vmatpush1.msra.mxu0 0.0
        %4363 = vmatprep.subr.mxu0 0.0
        %4364 = vmatpush1.msra.mxu0 0.0
        %4365 = vmatprep.subr.mxu0 0.0
        %4366 = vmatpush1.msra.mxu0 0.0
        %4367 = vmatprep.subr.mxu0 0.0
        %4368 = vmatpush1.msra.mxu0 0.0
        %4369 = vmatprep.subr.mxu0 0.0
        %4370 = vmatpush1.msra.mxu0 0.0
        %4371 = vmatprep.subr.mxu0 0.0
        %4372 = vmatpush1.msra.mxu0 0.0
        %4373 = vmatprep.subr.mxu0 0.0
        %4374 = vmatpush1.msra.mxu0 0.0
        %4375 = vmatprep.subr.mxu0 0.0
        %4376 = vmatpush1.msra.mxu0 0.0
        %4377 = vmatprep.subr.mxu0 0.0
        %4378 = vmatpush1.msra.mxu0 0.0
        %4379 = vmatprep.subr.mxu0 0.0
        %4380 = vmatpush1.msra.mxu0 0.0
        %4381 = vmatprep.subr.mxu0 0.0
        %4382 = vmatpush1.msra.mxu0 0.0
        %4383 = vmatprep.subr.mxu0 0.0
        %4384 = vmatpush1.msra.mxu0 0.0
        %4385 = vmatprep.subr.mxu0 0.0
        %4386 = vmatpush1.msra.mxu0 0.0
        %4387 = vmatprep.subr.mxu0 0.0
        %4388 = vmatpush1.msra.mxu0 0.0
        %4389 = vmatprep.subr.mxu0 0.0
        %4390 = vmatpush1.msra.mxu0 0.0
        %4391 = vmatprep.subr.mxu0 0.0
        %4392 = vmatpush1.msra.mxu0 0.0
        %4393 = vmatprep.subr.mxu0 0.0
        %4394 = vmatpush1.msra.mxu0 0.0
        %4395 = vmatprep.subr.mxu0 0.0
        %4396 = vmatpush1.msra.mxu0 0.0
        %4397 = vmatprep.subr.mxu0 0.0
        %4398 = vmatpush1.msra.mxu0 0.0
        %4399 = vmatprep.subr.mxu0 0.0
        %4400 = vmatpush1.msra.mxu0 0.0
        %4401 = vmatprep.subr.mxu0 0.0
        %4402 = vmatpush1.msra.mxu0 0.0
        %4403 = vmatprep.subr.mxu0 0.0
        %4404 = vmatpush1.msra.mxu0 0.0
        %4405 = vmatprep.subr.mxu0 0.0
        %4406 = vmatpush1.msra.mxu0 0.0
        %4407 = vmatprep.subr.mxu0 0.0
        %4408 = vmatpush1.msra.mxu0 0.0
        %4409 = vmatprep.subr.mxu0 0.0
        %4410 = vmatpush1.msra.mxu0 0.0
        %4411 = vmatprep.subr.mxu0 0.0
        %4412 = vmatpush1.msra.mxu0 0.0
        %4413 = vmatprep.subr.mxu0 0.0
        %4414 = vmatpush1.msra.mxu0 0.0
        %4415 = vmatprep.subr.mxu0 0.0
        %4416 = vmatpush1.msra.mxu0 0.0
        %4417 = vmatprep.subr.mxu0 0.0
        %4418 = vmatpush1.msra.mxu0 0.0
        %4419 = vmatprep.subr.mxu0 0.0
        %4420 = vmatpush1.msra.mxu0 0.0
        %4421 = vmatprep.mubr.f32.mxu0 0.0
        %4422 = vmatmul.mubr.f32.gmra.mrb[0].mxu0 %v4355
        %v4423 = vpop.f32.mrb[0].mxu0
        %v4424 = vadd.f32 0.0, %v4423
        %v4425 = vpop.f32.mrb[0].mxu0
        %v4426 = vadd.f32 0.0, %v4425
        %4427 = vdwg.mxu0
        %4428 = vmatprep.subr.mxu0 %v4073
        %4429 = vmatpush1.msra.mxu0 %v4072
        %4430 = vmatprep.subr.mxu0 %v4077
        %4431 = vmatpush1.msra.mxu0 %v4076
        %4432 = vmatprep.subr.mxu0 0.0
        %4433 = vmatpush1.msra.mxu0 0.0
        %4434 = vmatprep.subr.mxu0 0.0
        %4435 = vmatpush1.msra.mxu0 0.0
        %4436 = vmatprep.subr.mxu0 0.0
        %4437 = vmatpush1.msra.mxu0 0.0
        %4438 = vmatprep.subr.mxu0 0.0
        %4439 = vmatpush1.msra.mxu0 0.0
        %4440 = vmatprep.subr.mxu0 0.0
        %4441 = vmatpush1.msra.mxu0 0.0
        %4442 = vmatprep.subr.mxu0 0.0
        %4443 = vmatpush1.msra.mxu0 0.0
        %4444 = vmatprep.subr.mxu0 0.0
        %4445 = vmatpush1.msra.mxu0 0.0
        %4446 = vmatprep.subr.mxu0 0.0
        %4447 = vmatpush1.msra.mxu0 0.0
        %4448 = vmatprep.subr.mxu0 0.0
        %4449 = vmatpush1.msra.mxu0 0.0
        %4450 = vmatprep.subr.mxu0 0.0
        %4451 = vmatpush1.msra.mxu0 0.0
        %4452 = vmatprep.subr.mxu0 0.0
        %4453 = vmatpush1.msra.mxu0 0.0
        %4454 = vmatprep.subr.mxu0 0.0
        %4455 = vmatpush1.msra.mxu0 0.0
        %4456 = vmatprep.subr.mxu0 0.0
        %4457 = vmatpush1.msra.mxu0 0.0
        %4458 = vmatprep.subr.mxu0 0.0
        %4459 = vmatpush1.msra.mxu0 0.0
        %4460 = vmatprep.subr.mxu0 0.0
        %4461 = vmatpush1.msra.mxu0 0.0
        %4462 = vmatprep.subr.mxu0 0.0
        %4463 = vmatpush1.msra.mxu0 0.0
        %4464 = vmatprep.subr.mxu0 0.0
        %4465 = vmatpush1.msra.mxu0 0.0
        %4466 = vmatprep.subr.mxu0 0.0
        %4467 = vmatpush1.msra.mxu0 0.0
        %4468 = vmatprep.subr.mxu0 0.0
        %4469 = vmatpush1.msra.mxu0 0.0
        %4470 = vmatprep.subr.mxu0 0.0
        %4471 = vmatpush1.msra.mxu0 0.0
        %4472 = vmatprep.subr.mxu0 0.0
        %4473 = vmatpush1.msra.mxu0 0.0
        %4474 = vmatprep.subr.mxu0 0.0
        %4475 = vmatpush1.msra.mxu0 0.0
        %4476 = vmatprep.subr.mxu0 0.0
        %4477 = vmatpush1.msra.mxu0 0.0
        %4478 = vmatprep.subr.mxu0 0.0
        %4479 = vmatpush1.msra.mxu0 0.0
        %4480 = vmatprep.subr.mxu0 0.0
        %4481 = vmatpush1.msra.mxu0 0.0
        %4482 = vmatprep.subr.mxu0 0.0
        %4483 = vmatpush1.msra.mxu0 0.0
        %4484 = vmatprep.subr.mxu0 0.0
        %4485 = vmatpush1.msra.mxu0 0.0
        %4486 = vmatprep.subr.mxu0 0.0
        %4487 = vmatpush1.msra.mxu0 0.0
        %4488 = vmatprep.subr.mxu0 0.0
        %4489 = vmatpush1.msra.mxu0 0.0
        %4490 = vmatprep.subr.mxu0 0.0
        %4491 = vmatpush1.msra.mxu0 0.0
        %4492 = vmatprep.mubr.f32.mxu0 0.0
        %4493 = vmatmul.mubr.f32.gmra.mrb[0].mxu0 %v4355
        %v4494 = vpop.f32.mrb[0].mxu0
        %v4495 = vadd.f32 0.0, %v4494
        %v4496 = vpop.f32.mrb[0].mxu0
        %v4497 = vadd.f32 0.0, %v4496
        %4498 = vdwg.mxu0
        %s4499 = scalar_lea.vmem [#allocation16], 1024
        %v4500 = vld [vmem:[%s4499] sm:$0xff]
        %v4501 = vld [vmem:[%s4499 + $0x8] sm:$0xff]
        %v4502 = vld [vmem:[%s4499 + $0x10] sm:$0xff]
        %v4503 = vld [vmem:[%s4499 + $0x18] sm:$0xff]
        %v4504 = vld [vmem:[%s4499 + $0x20] sm:$0xff]
        %v4505 = vld [vmem:[%s4499 + $0x28] sm:$0xff]
        %v4506 = vld [vmem:[%s4499 + $0x30] sm:$0xff]
        %v4507 = vld [vmem:[%s4499 + $0x38] sm:$0xff]
        %v4508 = vld [vmem:[%s4499 + $0x40] sm:$0xff]
        %v4509 = vld [vmem:[%s4499 + $0x48] sm:$0xff]
        %v4510 = vld [vmem:[%s4499 + $0x50] sm:$0xff]
        %v4511 = vld [vmem:[%s4499 + $0x58] sm:$0xff]
        %v4512 = vld [vmem:[%s4499 + $0x60] sm:$0xff]
        %v4513 = vld [vmem:[%s4499 + $0x68] sm:$0xff]
        %v4514 = vld [vmem:[%s4499 + $0x70] sm:$0xff]
        %v4515 = vld [vmem:[%s4499 + $0x78] sm:$0xff]
        %v4516 = vld [vmem:[%s4499 + $0x80] sm:$0xff]
        %v4517 = vld [vmem:[%s4499 + $0x88] sm:$0xff]
        %v4518 = vld [vmem:[%s4499 + $0x90] sm:$0xff]
        %v4519 = vld [vmem:[%s4499 + $0x98] sm:$0xff]
        %v4520 = vld [vmem:[%s4499 + $0xa0] sm:$0xff]
        %v4521 = vld [vmem:[%s4499 + $0xa8] sm:$0xff]
        %v4522 = vld [vmem:[%s4499 + $0xb0] sm:$0xff]
        %v4523 = vld [vmem:[%s4499 + $0xb8] sm:$0xff]
        %v4524 = vld [vmem:[%s4499 + $0xc0] sm:$0xff]
        %v4525 = vld [vmem:[%s4499 + $0xc8] sm:$0xff]
        %v4526 = vld [vmem:[%s4499 + $0xd0] sm:$0xff]
        %v4527 = vld [vmem:[%s4499 + $0xd8] sm:$0xff]
        %v4528 = vld [vmem:[%s4499 + $0xe0] sm:$0xff]
        %v4529 = vld [vmem:[%s4499 + $0xe8] sm:$0xff]
        %v4530 = vld [vmem:[%s4499 + $0xf0] sm:$0xff]
        %v4531 = vld [vmem:[%s4499 + $0xf8] sm:$0xff]
        %v4532 = vld [vmem:[%s4499 + $0x100] sm:$0xff]
        %v4533 = vld [vmem:[%s4499 + $0x108] sm:$0xff]
        %v4534 = vld [vmem:[%s4499 + $0x110] sm:$0xff]
        %v4535 = vld [vmem:[%s4499 + $0x118] sm:$0xff]
        %v4536 = vld [vmem:[%s4499 + $0x120] sm:$0xff]
        %v4537 = vld [vmem:[%s4499 + $0x128] sm:$0xff]
        %v4538 = vld [vmem:[%s4499 + $0x130] sm:$0xff]
        %v4539 = vld [vmem:[%s4499 + $0x138] sm:$0xff]
        %v4540 = vld [vmem:[%s4499 + $0x140] sm:$0xff]
        %v4541 = vld [vmem:[%s4499 + $0x148] sm:$0xff]
        %v4542 = vld [vmem:[%s4499 + $0x150] sm:$0xff]
        %v4543 = vld [vmem:[%s4499 + $0x158] sm:$0xff]
        %v4544 = vld [vmem:[%s4499 + $0x160] sm:$0xff]
        %v4545 = vld [vmem:[%s4499 + $0x168] sm:$0xff]
        %v4546 = vld [vmem:[%s4499 + $0x170] sm:$0xff]
        %v4547 = vld [vmem:[%s4499 + $0x178] sm:$0xff]
        %v4548 = vld [vmem:[%s4499 + $0x180] sm:$0xff]
        %v4549 = vld [vmem:[%s4499 + $0x188] sm:$0xff]
        %v4550 = vld [vmem:[%s4499 + $0x190] sm:$0xff]
        %v4551 = vld [vmem:[%s4499 + $0x198] sm:$0xff]
        %v4552 = vld [vmem:[%s4499 + $0x1a0] sm:$0xff]
        %v4553 = vld [vmem:[%s4499 + $0x1a8] sm:$0xff]
        %v4554 = vld [vmem:[%s4499 + $0x1b0] sm:$0xff]
        %v4555 = vld [vmem:[%s4499 + $0x1b8] sm:$0xff]
        %v4556 = vld [vmem:[%s4499 + $0x1c0] sm:$0xff]
        %v4557 = vld [vmem:[%s4499 + $0x1c8] sm:$0xff]
        %v4558 = vld [vmem:[%s4499 + $0x1d0] sm:$0xff]
        %v4559 = vld [vmem:[%s4499 + $0x1d8] sm:$0xff]
        %v4560 = vld [vmem:[%s4499 + $0x1e0] sm:$0xff]
        %v4561 = vld [vmem:[%s4499 + $0x1e8] sm:$0xff]
        %v4562 = vld [vmem:[%s4499 + $0x1f0] sm:$0xff]
        %v4563 = vld [vmem:[%s4499 + $0x1f8] sm:$0xff]
        %v4564 = vld [vmem:[%s4499 + $0x200] sm:$0xff]
        %v4565 = vld [vmem:[%s4499 + $0x208] sm:$0xff]
        %v4566 = vld [vmem:[%s4499 + $0x210] sm:$0xff]
        %v4567 = vld [vmem:[%s4499 + $0x218] sm:$0xff]
        %v4568 = vld [vmem:[%s4499 + $0x220] sm:$0xff]
        %v4569 = vld [vmem:[%s4499 + $0x228] sm:$0xff]
        %v4570 = vld [vmem:[%s4499 + $0x230] sm:$0xff]
        %v4571 = vld [vmem:[%s4499 + $0x238] sm:$0xff]
        %v4572 = vld [vmem:[%s4499 + $0x240] sm:$0xff]
        %v4573 = vld [vmem:[%s4499 + $0x248] sm:$0xff]
        %v4574 = vld [vmem:[%s4499 + $0x250] sm:$0xff]
        %v4575 = vld [vmem:[%s4499 + $0x258] sm:$0xff]
        %v4576 = vld [vmem:[%s4499 + $0x260] sm:$0xff]
        %v4577 = vld [vmem:[%s4499 + $0x268] sm:$0xff]
        %v4578 = vld [vmem:[%s4499 + $0x270] sm:$0xff]
        %v4579 = vld [vmem:[%s4499 + $0x278] sm:$0xff]
        %v4580 = vld [vmem:[%s4499 + $0x280] sm:$0xff]
        %v4581 = vld [vmem:[%s4499 + $0x288] sm:$0xff]
        %v4582 = vld [vmem:[%s4499 + $0x290] sm:$0xff]
        %v4583 = vld [vmem:[%s4499 + $0x298] sm:$0xff]
        %v4584 = vld [vmem:[%s4499 + $0x2a0] sm:$0xff]
        %v4585 = vld [vmem:[%s4499 + $0x2a8] sm:$0xff]
        %v4586 = vld [vmem:[%s4499 + $0x2b0] sm:$0xff]
        %v4587 = vld [vmem:[%s4499 + $0x2b8] sm:$0xff]
        %v4588 = vld [vmem:[%s4499 + $0x2c0] sm:$0xff]
        %v4589 = vld [vmem:[%s4499 + $0x2c8] sm:$0xff]
        %v4590 = vld [vmem:[%s4499 + $0x2d0] sm:$0xff]
        %v4591 = vld [vmem:[%s4499 + $0x2d8] sm:$0xff]
        %v4592 = vld [vmem:[%s4499 + $0x2e0] sm:$0xff]
        %v4593 = vld [vmem:[%s4499 + $0x2e8] sm:$0xff]
        %v4594 = vld [vmem:[%s4499 + $0x2f0] sm:$0xff]
        %v4595 = vld [vmem:[%s4499 + $0x2f8] sm:$0xff]
        %v4596 = vld [vmem:[%s4499 + $0x300] sm:$0xff]
        %v4597 = vld [vmem:[%s4499 + $0x308] sm:$0xff]
        %v4598 = vld [vmem:[%s4499 + $0x310] sm:$0xff]
        %v4599 = vld [vmem:[%s4499 + $0x318] sm:$0xff]
        %v4600 = vld [vmem:[%s4499 + $0x320] sm:$0xff]
        %v4601 = vld [vmem:[%s4499 + $0x328] sm:$0xff]
        %v4602 = vld [vmem:[%s4499 + $0x330] sm:$0xff]
        %v4603 = vld [vmem:[%s4499 + $0x338] sm:$0xff]
        %v4604 = vld [vmem:[%s4499 + $0x340] sm:$0xff]
        %v4605 = vld [vmem:[%s4499 + $0x348] sm:$0xff]
        %v4606 = vld [vmem:[%s4499 + $0x350] sm:$0xff]
        %v4607 = vld [vmem:[%s4499 + $0x358] sm:$0xff]
        %v4608 = vld [vmem:[%s4499 + $0x360] sm:$0xff]
        %v4609 = vld [vmem:[%s4499 + $0x368] sm:$0xff]
        %v4610 = vld [vmem:[%s4499 + $0x370] sm:$0xff]
        %v4611 = vld [vmem:[%s4499 + $0x378] sm:$0xff]
        %v4612 = vld [vmem:[%s4499 + $0x380] sm:$0xff]
        %v4613 = vld [vmem:[%s4499 + $0x388] sm:$0xff]
        %v4614 = vld [vmem:[%s4499 + $0x390] sm:$0xff]
        %v4615 = vld [vmem:[%s4499 + $0x398] sm:$0xff]
        %v4616 = vld [vmem:[%s4499 + $0x3a0] sm:$0xff]
        %v4617 = vld [vmem:[%s4499 + $0x3a8] sm:$0xff]
        %v4618 = vld [vmem:[%s4499 + $0x3b0] sm:$0xff]
        %v4619 = vld [vmem:[%s4499 + $0x3b8] sm:$0xff]
        %v4620 = vld [vmem:[%s4499 + $0x3c0] sm:$0xff]
        %v4621 = vld [vmem:[%s4499 + $0x3c8] sm:$0xff]
        %v4622 = vld [vmem:[%s4499 + $0x3d0] sm:$0xff]
        %v4623 = vld [vmem:[%s4499 + $0x3d8] sm:$0xff]
        %v4624 = vld [vmem:[%s4499 + $0x3e0] sm:$0xff]
        %v4625 = vld [vmem:[%s4499 + $0x3e8] sm:$0xff]
        %v4626 = vld [vmem:[%s4499 + $0x3f0] sm:$0xff]
        %v4627 = vld [vmem:[%s4499 + $0x3f8] sm:$0xff]
        %4628 = vmatprep.subr.mxu0 %v4501
        %4629 = vmatpush1.msra.mxu0 %v4500
        %4630 = vmatprep.subr.mxu0 %v4503
        %4631 = vmatpush1.msra.mxu0 %v4502
        %4632 = vmatprep.subr.mxu0 %v4505
        %4633 = vmatpush1.msra.mxu0 %v4504
        %4634 = vmatprep.subr.mxu0 %v4507
        %4635 = vmatpush1.msra.mxu0 %v4506
        %4636 = vmatprep.subr.mxu0 %v4509
        %4637 = vmatpush1.msra.mxu0 %v4508
        %4638 = vmatprep.subr.mxu0 %v4511
        %4639 = vmatpush1.msra.mxu0 %v4510
        %4640 = vmatprep.subr.mxu0 %v4513
        %4641 = vmatpush1.msra.mxu0 %v4512
        %4642 = vmatprep.subr.mxu0 %v4515
        %4643 = vmatpush1.msra.mxu0 %v4514
        %4644 = vmatprep.subr.mxu0 %v4517
        %4645 = vmatpush1.msra.mxu0 %v4516
        %4646 = vmatprep.subr.mxu0 %v4519
        %4647 = vmatpush1.msra.mxu0 %v4518
        %4648 = vmatprep.subr.mxu0 %v4521
        %4649 = vmatpush1.msra.mxu0 %v4520
        %4650 = vmatprep.subr.mxu0 %v4523
        %4651 = vmatpush1.msra.mxu0 %v4522
        %4652 = vmatprep.subr.mxu0 %v4525
        %4653 = vmatpush1.msra.mxu0 %v4524
        %4654 = vmatprep.subr.mxu0 %v4527
        %4655 = vmatpush1.msra.mxu0 %v4526
        %4656 = vmatprep.subr.mxu0 %v4529
        %4657 = vmatpush1.msra.mxu0 %v4528
        %4658 = vmatprep.subr.mxu0 %v4531
        %4659 = vmatpush1.msra.mxu0 %v4530
        %4660 = vmatprep.subr.mxu0 %v4533
        %4661 = vmatpush1.msra.mxu0 %v4532
        %4662 = vmatprep.subr.mxu0 %v4535
        %4663 = vmatpush1.msra.mxu0 %v4534
        %4664 = vmatprep.subr.mxu0 %v4537
        %4665 = vmatpush1.msra.mxu0 %v4536
        %4666 = vmatprep.subr.mxu0 %v4539
        %4667 = vmatpush1.msra.mxu0 %v4538
        %4668 = vmatprep.subr.mxu0 %v4541
        %4669 = vmatpush1.msra.mxu0 %v4540
        %4670 = vmatprep.subr.mxu0 %v4543
        %4671 = vmatpush1.msra.mxu0 %v4542
        %4672 = vmatprep.subr.mxu0 %v4545
        %4673 = vmatpush1.msra.mxu0 %v4544
        %4674 = vmatprep.subr.mxu0 %v4547
        %4675 = vmatpush1.msra.mxu0 %v4546
        %4676 = vmatprep.subr.mxu0 %v4549
        %4677 = vmatpush1.msra.mxu0 %v4548
        %4678 = vmatprep.subr.mxu0 %v4551
        %4679 = vmatpush1.msra.mxu0 %v4550
        %4680 = vmatprep.subr.mxu0 %v4553
        %4681 = vmatpush1.msra.mxu0 %v4552
        %4682 = vmatprep.subr.mxu0 %v4555
        %4683 = vmatpush1.msra.mxu0 %v4554
        %4684 = vmatprep.subr.mxu0 %v4557
        %4685 = vmatpush1.msra.mxu0 %v4556
        %4686 = vmatprep.subr.mxu0 %v4559
        %4687 = vmatpush1.msra.mxu0 %v4558
        %4688 = vmatprep.subr.mxu0 %v4561
        %4689 = vmatpush1.msra.mxu0 %v4560
        %4690 = vmatprep.subr.mxu0 %v4563
        %4691 = vmatpush1.msra.mxu0 %v4562
        %4692 = vmatprep.mubr.f32.mxu0 %v4426
        %4693 = vmatmul.mubr.f32.gmra.mrb[0].mxu0 %v4424
        %v4694 = vpop.f32.mrb[0].mxu0
        %v4695 = vadd.f32 0.0, %v4694
        %v4696 = vpop.f32.mrb[0].mxu0
        %v4697 = vadd.f32 0.0, %v4696
        %4698 = vdwg.mxu0
        %4699 = vmatprep.subr.mxu0 %v4565
        %4700 = vmatpush1.msra.mxu0 %v4564
        %4701 = vmatprep.subr.mxu0 %v4567
        %4702 = vmatpush1.msra.mxu0 %v4566
        %4703 = vmatprep.subr.mxu0 %v4569
        %4704 = vmatpush1.msra.mxu0 %v4568
        %4705 = vmatprep.subr.mxu0 %v4571
        %4706 = vmatpush1.msra.mxu0 %v4570
        %4707 = vmatprep.subr.mxu0 %v4573
        %4708 = vmatpush1.msra.mxu0 %v4572
        %4709 = vmatprep.subr.mxu0 %v4575
        %4710 = vmatpush1.msra.mxu0 %v4574
        %4711 = vmatprep.subr.mxu0 %v4577
        %4712 = vmatpush1.msra.mxu0 %v4576
        %4713 = vmatprep.subr.mxu0 %v4579
        %4714 = vmatpush1.msra.mxu0 %v4578
        %4715 = vmatprep.subr.mxu0 %v4581
        %4716 = vmatpush1.msra.mxu0 %v4580
        %4717 = vmatprep.subr.mxu0 %v4583
        %4718 = vmatpush1.msra.mxu0 %v4582
        %4719 = vmatprep.subr.mxu0 %v4585
        %4720 = vmatpush1.msra.mxu0 %v4584
        %4721 = vmatprep.subr.mxu0 %v4587
        %4722 = vmatpush1.msra.mxu0 %v4586
        %4723 = vmatprep.subr.mxu0 %v4589
        %4724 = vmatpush1.msra.mxu0 %v4588
        %4725 = vmatprep.subr.mxu0 %v4591
        %4726 = vmatpush1.msra.mxu0 %v4590
        %4727 = vmatprep.subr.mxu0 %v4593
        %4728 = vmatpush1.msra.mxu0 %v4592
        %4729 = vmatprep.subr.mxu0 %v4595
        %4730 = vmatpush1.msra.mxu0 %v4594
        %4731 = vmatprep.subr.mxu0 %v4597
        %4732 = vmatpush1.msra.mxu0 %v4596
        %4733 = vmatprep.subr.mxu0 %v4599
        %4734 = vmatpush1.msra.mxu0 %v4598
        %4735 = vmatprep.subr.mxu0 %v4601
        %4736 = vmatpush1.msra.mxu0 %v4600
        %4737 = vmatprep.subr.mxu0 %v4603
        %4738 = vmatpush1.msra.mxu0 %v4602
        %4739 = vmatprep.subr.mxu0 %v4605
        %4740 = vmatpush1.msra.mxu0 %v4604
        %4741 = vmatprep.subr.mxu0 %v4607
        %4742 = vmatpush1.msra.mxu0 %v4606
        %4743 = vmatprep.subr.mxu0 %v4609
        %4744 = vmatpush1.msra.mxu0 %v4608
        %4745 = vmatprep.subr.mxu0 %v4611
        %4746 = vmatpush1.msra.mxu0 %v4610
        %4747 = vmatprep.subr.mxu0 %v4613
        %4748 = vmatpush1.msra.mxu0 %v4612
        %4749 = vmatprep.subr.mxu0 %v4615
        %4750 = vmatpush1.msra.mxu0 %v4614
        %4751 = vmatprep.subr.mxu0 %v4617
        %4752 = vmatpush1.msra.mxu0 %v4616
        %4753 = vmatprep.subr.mxu0 %v4619
        %4754 = vmatpush1.msra.mxu0 %v4618
        %4755 = vmatprep.subr.mxu0 %v4621
        %4756 = vmatpush1.msra.mxu0 %v4620
        %4757 = vmatprep.subr.mxu0 %v4623
        %4758 = vmatpush1.msra.mxu0 %v4622
        %4759 = vmatprep.subr.mxu0 %v4625
        %4760 = vmatpush1.msra.mxu0 %v4624
        %4761 = vmatprep.subr.mxu0 %v4627
        %4762 = vmatpush1.msra.mxu0 %v4626
        %4763 = vmatprep.mubr.f32.mxu0 %v4497
        %4764 = vmatmul.mubr.f32.gmra.mrb[0].mxu0 %v4495
        %v4765 = vpop.f32.mrb[0].mxu0
        %v4766 = vadd.f32 %v4695, %v4765
        %v4767 = vpop.f32.mrb[0].mxu0
        %v4768 = vadd.f32 %v4697, %v4767
        %4769 = vdwg.mxu0
        %4770 = vmatprep.subr.mxu0 %v4225
        %4771 = vmatpush1.msra.mxu0 %v4224
        %4772 = vmatprep.subr.mxu0 %v4227
        %4773 = vmatpush1.msra.mxu0 %v4226
        %4774 = vmatprep.subr.mxu0 %v4229
        %4775 = vmatpush1.msra.mxu0 %v4228
        %4776 = vmatprep.subr.mxu0 %v4231
        %4777 = vmatpush1.msra.mxu0 %v4230
        %4778 = vmatprep.subr.mxu0 %v4233
        %4779 = vmatpush1.msra.mxu0 %v4232
        %4780 = vmatprep.subr.mxu0 %v4235
        %4781 = vmatpush1.msra.mxu0 %v4234
        %4782 = vmatprep.subr.mxu0 %v4237
        %4783 = vmatpush1.msra.mxu0 %v4236
        %4784 = vmatprep.subr.mxu0 %v4239
        %4785 = vmatpush1.msra.mxu0 %v4238
        %4786 = vmatprep.subr.mxu0 %v4241
        %4787 = vmatpush1.msra.mxu0 %v4240
        %4788 = vmatprep.subr.mxu0 %v4243
        %4789 = vmatpush1.msra.mxu0 %v4242
        %4790 = vmatprep.subr.mxu0 %v4245
        %4791 = vmatpush1.msra.mxu0 %v4244
        %4792 = vmatprep.subr.mxu0 %v4247
        %4793 = vmatpush1.msra.mxu0 %v4246
        %4794 = vmatprep.subr.mxu0 %v4249
        %4795 = vmatpush1.msra.mxu0 %v4248
        %4796 = vmatprep.subr.mxu0 %v4251
        %4797 = vmatpush1.msra.mxu0 %v4250
        %4798 = vmatprep.subr.mxu0 %v4253
        %4799 = vmatpush1.msra.mxu0 %v4252
        %4800 = vmatprep.subr.mxu0 %v4255
        %4801 = vmatpush1.msra.mxu0 %v4254
        %4802 = vmatprep.subr.mxu0 %v4257
        %4803 = vmatpush1.msra.mxu0 %v4256
        %4804 = vmatprep.subr.mxu0 %v4259
        %4805 = vmatpush1.msra.mxu0 %v4258
        %4806 = vmatprep.subr.mxu0 %v4261
        %4807 = vmatpush1.msra.mxu0 %v4260
        %4808 = vmatprep.subr.mxu0 %v4263
        %4809 = vmatpush1.msra.mxu0 %v4262
        %4810 = vmatprep.subr.mxu0 %v4265
        %4811 = vmatpush1.msra.mxu0 %v4264
        %4812 = vmatprep.subr.mxu0 %v4267
        %4813 = vmatpush1.msra.mxu0 %v4266
        %4814 = vmatprep.subr.mxu0 %v4269
        %4815 = vmatpush1.msra.mxu0 %v4268
        %4816 = vmatprep.subr.mxu0 %v4271
        %4817 = vmatpush1.msra.mxu0 %v4270
        %4818 = vmatprep.subr.mxu0 %v4273
        %4819 = vmatpush1.msra.mxu0 %v4272
        %4820 = vmatprep.subr.mxu0 %v4275
        %4821 = vmatpush1.msra.mxu0 %v4274
        %4822 = vmatprep.subr.mxu0 %v4277
        %4823 = vmatpush1.msra.mxu0 %v4276
        %4824 = vmatprep.subr.mxu0 %v4279
        %4825 = vmatpush1.msra.mxu0 %v4278
        %4826 = vmatprep.subr.mxu0 %v4281
        %4827 = vmatpush1.msra.mxu0 %v4280
        %4828 = vmatprep.subr.mxu0 %v4283
        %4829 = vmatpush1.msra.mxu0 %v4282
        %4830 = vmatprep.subr.mxu0 %v4285
        %4831 = vmatpush1.msra.mxu0 %v4284
        %4832 = vmatprep.subr.mxu0 %v4287
        %4833 = vmatpush1.msra.mxu0 %v4286
        %4834 = vmatprep.mubr.f32.mxu0 %v4151
        %4835 = vmatmul.mubr.f32.gmra.mrb[0].mxu0 %v4149
        %v4836 = vpop.f32.mrb[0].mxu0
        %v4837 = vadd.f32 %v4766, %v4836
        %v4838 = vpop.f32.mrb[0].mxu0
        %v4839 = vadd.f32 %v4768, %v4838
        %4840 = vdwg.mxu0
        %4841 = vmatprep.subr.mxu0 %v4289
        %4842 = vmatpush1.msra.mxu0 %v4288
        %4843 = vmatprep.subr.mxu0 %v4291
        %4844 = vmatpush1.msra.mxu0 %v4290
        %4845 = vmatprep.subr.mxu0 %v4293
        %4846 = vmatpush1.msra.mxu0 %v4292
        %4847 = vmatprep.subr.mxu0 %v4295
        %4848 = vmatpush1.msra.mxu0 %v4294
        %4849 = vmatprep.subr.mxu0 %v4297
        %4850 = vmatpush1.msra.mxu0 %v4296
        %4851 = vmatprep.subr.mxu0 %v4299
        %4852 = vmatpush1.msra.mxu0 %v4298
        %4853 = vmatprep.subr.mxu0 %v4301
        %4854 = vmatpush1.msra.mxu0 %v4300
        %4855 = vmatprep.subr.mxu0 %v4303
        %4856 = vmatpush1.msra.mxu0 %v4302
        %4857 = vmatprep.subr.mxu0 %v4305
        %4858 = vmatpush1.msra.mxu0 %v4304
        %4859 = vmatprep.subr.mxu0 %v4307
        %4860 = vmatpush1.msra.mxu0 %v4306
        %4861 = vmatprep.subr.mxu0 %v4309
        %4862 = vmatpush1.msra.mxu0 %v4308
        %4863 = vmatprep.subr.mxu0 %v4311
        %4864 = vmatpush1.msra.mxu0 %v4310
        %4865 = vmatprep.subr.mxu0 %v4313
        %4866 = vmatpush1.msra.mxu0 %v4312
        %4867 = vmatprep.subr.mxu0 %v4315
        %4868 = vmatpush1.msra.mxu0 %v4314
        %4869 = vmatprep.subr.mxu0 %v4317
        %4870 = vmatpush1.msra.mxu0 %v4316
        %4871 = vmatprep.subr.mxu0 %v4319
        %4872 = vmatpush1.msra.mxu0 %v4318
        %4873 = vmatprep.subr.mxu0 %v4321
        %4874 = vmatpush1.msra.mxu0 %v4320
        %4875 = vmatprep.subr.mxu0 %v4323
        %4876 = vmatpush1.msra.mxu0 %v4322
        %4877 = vmatprep.subr.mxu0 %v4325
        %4878 = vmatpush1.msra.mxu0 %v4324
        %4879 = vmatprep.subr.mxu0 %v4327
        %4880 = vmatpush1.msra.mxu0 %v4326
        %4881 = vmatprep.subr.mxu0 %v4329
        %4882 = vmatpush1.msra.mxu0 %v4328
        %4883 = vmatprep.subr.mxu0 %v4331
        %4884 = vmatpush1.msra.mxu0 %v4330
        %4885 = vmatprep.subr.mxu0 %v4333
        %4886 = vmatpush1.msra.mxu0 %v4332
        %4887 = vmatprep.subr.mxu0 %v4335
        %4888 = vmatpush1.msra.mxu0 %v4334
        %4889 = vmatprep.subr.mxu0 %v4337
        %4890 = vmatpush1.msra.mxu0 %v4336
        %4891 = vmatprep.subr.mxu0 %v4339
        %4892 = vmatpush1.msra.mxu0 %v4338
        %4893 = vmatprep.subr.mxu0 %v4341
        %4894 = vmatpush1.msra.mxu0 %v4340
        %4895 = vmatprep.subr.mxu0 %v4343
        %4896 = vmatpush1.msra.mxu0 %v4342
        %4897 = vmatprep.subr.mxu0 %v4345
        %4898 = vmatpush1.msra.mxu0 %v4344
        %4899 = vmatprep.subr.mxu0 %v4347
        %4900 = vmatpush1.msra.mxu0 %v4346
        %4901 = vmatprep.subr.mxu0 %v4349
        %4902 = vmatpush1.msra.mxu0 %v4348
        %4903 = vmatprep.subr.mxu0 %v4351
        %4904 = vmatpush1.msra.mxu0 %v4350
        %4905 = vmatprep.mubr.f32.mxu0 %v4222
        %4906 = vmatmul.mubr.f32.gmra.mrb[0].mxu0 %v4220
        %v4907 = vpop.f32.mrb[0].mxu0
        %v4908 = vadd.f32 %v4837, %v4907
        %v4909 = vpop.f32.mrb[0].mxu0
        %v4910 = vadd.f32 %v4839, %v4909
        %4911 = vdwg.mxu0
        %s4912 = scalar_lea.vmem [#allocation14], 16
        %v4913 = vld [vmem:[%s4912] sm:$0xff]
        %v4915 = vsel %vm896, %v4913, 0
        %4917 = vmatprep.subr.mxu0 %v4071
        %4918 = vmatpush1.msra.mxu0 %v4070
        %4919 = vmatprep.subr.mxu0 %v4075
        %4920 = vmatpush1.msra.mxu0 %v4074
        %4921 = vmatprep.subr.mxu0 0.0
        %4922 = vmatpush1.msra.mxu0 0.0
        %4923 = vmatprep.subr.mxu0 0.0
        %4924 = vmatpush1.msra.mxu0 0.0
        %4925 = vmatprep.subr.mxu0 0.0
        %4926 = vmatpush1.msra.mxu0 0.0
        %4927 = vmatprep.subr.mxu0 0.0
        %4928 = vmatpush1.msra.mxu0 0.0
        %4929 = vmatprep.subr.mxu0 0.0
        %4930 = vmatpush1.msra.mxu0 0.0
        %4931 = vmatprep.subr.mxu0 0.0
        %4932 = vmatpush1.msra.mxu0 0.0
        %4933 = vmatprep.subr.mxu0 0.0
        %4934 = vmatpush1.msra.mxu0 0.0
        %4935 = vmatprep.subr.mxu0 0.0
        %4936 = vmatpush1.msra.mxu0 0.0
        %4937 = vmatprep.subr.mxu0 0.0
        %4938 = vmatpush1.msra.mxu0 0.0
        %4939 = vmatprep.subr.mxu0 0.0
        %4940 = vmatpush1.msra.mxu0 0.0
        %4941 = vmatprep.subr.mxu0 0.0
        %4942 = vmatpush1.msra.mxu0 0.0
        %4943 = vmatprep.subr.mxu0 0.0
        %4944 = vmatpush1.msra.mxu0 0.0
        %4945 = vmatprep.subr.mxu0 0.0
        %4946 = vmatpush1.msra.mxu0 0.0
        %4947 = vmatprep.subr.mxu0 0.0
        %4948 = vmatpush1.msra.mxu0 0.0
        %4949 = vmatprep.subr.mxu0 0.0
        %4950 = vmatpush1.msra.mxu0 0.0
        %4951 = vmatprep.subr.mxu0 0.0
        %4952 = vmatpush1.msra.mxu0 0.0
        %4953 = vmatprep.subr.mxu0 0.0
        %4954 = vmatpush1.msra.mxu0 0.0
        %4955 = vmatprep.subr.mxu0 0.0
        %4956 = vmatpush1.msra.mxu0 0.0
        %4957 = vmatprep.subr.mxu0 0.0
        %4958 = vmatpush1.msra.mxu0 0.0
        %4959 = vmatprep.subr.mxu0 0.0
        %4960 = vmatpush1.msra.mxu0 0.0
        %4961 = vmatprep.subr.mxu0 0.0
        %4962 = vmatpush1.msra.mxu0 0.0
        %4963 = vmatprep.subr.mxu0 0.0
        %4964 = vmatpush1.msra.mxu0 0.0
        %4965 = vmatprep.subr.mxu0 0.0
        %4966 = vmatpush1.msra.mxu0 0.0
        %4967 = vmatprep.subr.mxu0 0.0
        %4968 = vmatpush1.msra.mxu0 0.0
        %4969 = vmatprep.subr.mxu0 0.0
        %4970 = vmatpush1.msra.mxu0 0.0
        %4971 = vmatprep.subr.mxu0 0.0
        %4972 = vmatpush1.msra.mxu0 0.0
        %4973 = vmatprep.subr.mxu0 0.0
        %4974 = vmatpush1.msra.mxu0 0.0
        %4975 = vmatprep.subr.mxu0 0.0
        %4976 = vmatpush1.msra.mxu0 0.0
        %4977 = vmatprep.subr.mxu0 0.0
        %4978 = vmatpush1.msra.mxu0 0.0
        %4979 = vmatprep.subr.mxu0 0.0
        %4980 = vmatpush1.msra.mxu0 0.0
        %4981 = vmatprep.mubr.f32.mxu0 0.0
        %4982 = vmatmul.mubr.f32.gmra.mrb[0].mxu0 %v4915
        %v4983 = vpop.f32.mrb[0].mxu0
        %v4984 = vadd.f32 0.0, %v4983
        %v4985 = vpop.f32.mrb[0].mxu0
        %v4986 = vadd.f32 0.0, %v4985
        %4987 = vdwg.mxu0
        %4988 = vmatprep.subr.mxu0 %v4073
        %4989 = vmatpush1.msra.mxu0 %v4072
        %4990 = vmatprep.subr.mxu0 %v4077
        %4991 = vmatpush1.msra.mxu0 %v4076
        %4992 = vmatprep.subr.mxu0 0.0
        %4993 = vmatpush1.msra.mxu0 0.0
        %4994 = vmatprep.subr.mxu0 0.0
        %4995 = vmatpush1.msra.mxu0 0.0
        %4996 = vmatprep.subr.mxu0 0.0
        %4997 = vmatpush1.msra.mxu0 0.0
        %4998 = vmatprep.subr.mxu0 0.0
        %4999 = vmatpush1.msra.mxu0 0.0
        %5000 = vmatprep.subr.mxu0 0.0
        %5001 = vmatpush1.msra.mxu0 0.0
        %5002 = vmatprep.subr.mxu0 0.0
        %5003 = vmatpush1.msra.mxu0 0.0
        %5004 = vmatprep.subr.mxu0 0.0
        %5005 = vmatpush1.msra.mxu0 0.0
        %5006 = vmatprep.subr.mxu0 0.0
        %5007 = vmatpush1.msra.mxu0 0.0
        %5008 = vmatprep.subr.mxu0 0.0
        %5009 = vmatpush1.msra.mxu0 0.0
        %5010 = vmatprep.subr.mxu0 0.0
        %5011 = vmatpush1.msra.mxu0 0.0
        %5012 = vmatprep.subr.mxu0 0.0
        %5013 = vmatpush1.msra.mxu0 0.0
        %5014 = vmatprep.subr.mxu0 0.0
        %5015 = vmatpush1.msra.mxu0 0.0
        %5016 = vmatprep.subr.mxu0 0.0
        %5017 = vmatpush1.msra.mxu0 0.0
        %5018 = vmatprep.subr.mxu0 0.0
        %5019 = vmatpush1.msra.mxu0 0.0
        %5020 = vmatprep.subr.mxu0 0.0
        %5021 = vmatpush1.msra.mxu0 0.0
        %5022 = vmatprep.subr.mxu0 0.0
        %5023 = vmatpush1.msra.mxu0 0.0
        %5024 = vmatprep.subr.mxu0 0.0
        %5025 = vmatpush1.msra.mxu0 0.0
        %5026 = vmatprep.subr.mxu0 0.0
        %5027 = vmatpush1.msra.mxu0 0.0
        %5028 = vmatprep.subr.mxu0 0.0
        %5029 = vmatpush1.msra.mxu0 0.0
        %5030 = vmatprep.subr.mxu0 0.0
        %5031 = vmatpush1.msra.mxu0 0.0
        %5032 = vmatprep.subr.mxu0 0.0
        %5033 = vmatpush1.msra.mxu0 0.0
        %5034 = vmatprep.subr.mxu0 0.0
        %5035 = vmatpush1.msra.mxu0 0.0
        %5036 = vmatprep.subr.mxu0 0.0
        %5037 = vmatpush1.msra.mxu0 0.0
        %5038 = vmatprep.subr.mxu0 0.0
        %5039 = vmatpush1.msra.mxu0 0.0
        %5040 = vmatprep.subr.mxu0 0.0
        %5041 = vmatpush1.msra.mxu0 0.0
        %5042 = vmatprep.subr.mxu0 0.0
        %5043 = vmatpush1.msra.mxu0 0.0
        %5044 = vmatprep.subr.mxu0 0.0
        %5045 = vmatpush1.msra.mxu0 0.0
        %5046 = vmatprep.subr.mxu0 0.0
        %5047 = vmatpush1.msra.mxu0 0.0
        %5048 = vmatprep.subr.mxu0 0.0
        %5049 = vmatpush1.msra.mxu0 0.0
        %5050 = vmatprep.subr.mxu0 0.0
        %5051 = vmatpush1.msra.mxu0 0.0
        %5052 = vmatprep.mubr.f32.mxu0 0.0
        %5053 = vmatmul.mubr.f32.gmra.mrb[0].mxu0 %v4915
        %v5054 = vpop.f32.mrb[0].mxu0
        %v5055 = vadd.f32 0.0, %v5054
        %v5056 = vpop.f32.mrb[0].mxu0
        %v5057 = vadd.f32 0.0, %v5056
        %5058 = vdwg.mxu0
        %s5059 = scalar_lea.vmem [#allocation16], 2048
        %v5060 = vld [vmem:[%s5059] sm:$0xff]
        %v5061 = vld [vmem:[%s5059 + $0x8] sm:$0xff]
        %v5062 = vld [vmem:[%s5059 + $0x10] sm:$0xff]
        %v5063 = vld [vmem:[%s5059 + $0x18] sm:$0xff]
        %v5064 = vld [vmem:[%s5059 + $0x20] sm:$0xff]
        %v5065 = vld [vmem:[%s5059 + $0x28] sm:$0xff]
        %v5066 = vld [vmem:[%s5059 + $0x30] sm:$0xff]
        %v5067 = vld [vmem:[%s5059 + $0x38] sm:$0xff]
        %v5068 = vld [vmem:[%s5059 + $0x40] sm:$0xff]
        %v5069 = vld [vmem:[%s5059 + $0x48] sm:$0xff]
        %v5070 = vld [vmem:[%s5059 + $0x50] sm:$0xff]
        %v5071 = vld [vmem:[%s5059 + $0x58] sm:$0xff]
        %v5072 = vld [vmem:[%s5059 + $0x60] sm:$0xff]
        %v5073 = vld [vmem:[%s5059 + $0x68] sm:$0xff]
        %v5074 = vld [vmem:[%s5059 + $0x70] sm:$0xff]
        %v5075 = vld [vmem:[%s5059 + $0x78] sm:$0xff]
        %v5076 = vld [vmem:[%s5059 + $0x80] sm:$0xff]
        %v5077 = vld [vmem:[%s5059 + $0x88] sm:$0xff]
        %v5078 = vld [vmem:[%s5059 + $0x90] sm:$0xff]
        %v5079 = vld [vmem:[%s5059 + $0x98] sm:$0xff]
        %v5080 = vld [vmem:[%s5059 + $0xa0] sm:$0xff]
        %v5081 = vld [vmem:[%s5059 + $0xa8] sm:$0xff]
        %v5082 = vld [vmem:[%s5059 + $0xb0] sm:$0xff]
        %v5083 = vld [vmem:[%s5059 + $0xb8] sm:$0xff]
        %v5084 = vld [vmem:[%s5059 + $0xc0] sm:$0xff]
        %v5085 = vld [vmem:[%s5059 + $0xc8] sm:$0xff]
        %v5086 = vld [vmem:[%s5059 + $0xd0] sm:$0xff]
        %v5087 = vld [vmem:[%s5059 + $0xd8] sm:$0xff]
        %v5088 = vld [vmem:[%s5059 + $0xe0] sm:$0xff]
        %v5089 = vld [vmem:[%s5059 + $0xe8] sm:$0xff]
        %v5090 = vld [vmem:[%s5059 + $0xf0] sm:$0xff]
        %v5091 = vld [vmem:[%s5059 + $0xf8] sm:$0xff]
        %v5092 = vld [vmem:[%s5059 + $0x100] sm:$0xff]
        %v5093 = vld [vmem:[%s5059 + $0x108] sm:$0xff]
        %v5094 = vld [vmem:[%s5059 + $0x110] sm:$0xff]
        %v5095 = vld [vmem:[%s5059 + $0x118] sm:$0xff]
        %v5096 = vld [vmem:[%s5059 + $0x120] sm:$0xff]
        %v5097 = vld [vmem:[%s5059 + $0x128] sm:$0xff]
        %v5098 = vld [vmem:[%s5059 + $0x130] sm:$0xff]
        %v5099 = vld [vmem:[%s5059 + $0x138] sm:$0xff]
        %v5100 = vld [vmem:[%s5059 + $0x140] sm:$0xff]
        %v5101 = vld [vmem:[%s5059 + $0x148] sm:$0xff]
        %v5102 = vld [vmem:[%s5059 + $0x150] sm:$0xff]
        %v5103 = vld [vmem:[%s5059 + $0x158] sm:$0xff]
        %v5104 = vld [vmem:[%s5059 + $0x160] sm:$0xff]
        %v5105 = vld [vmem:[%s5059 + $0x168] sm:$0xff]
        %v5106 = vld [vmem:[%s5059 + $0x170] sm:$0xff]
        %v5107 = vld [vmem:[%s5059 + $0x178] sm:$0xff]
        %v5108 = vld [vmem:[%s5059 + $0x180] sm:$0xff]
        %v5109 = vld [vmem:[%s5059 + $0x188] sm:$0xff]
        %v5110 = vld [vmem:[%s5059 + $0x190] sm:$0xff]
        %v5111 = vld [vmem:[%s5059 + $0x198] sm:$0xff]
        %v5112 = vld [vmem:[%s5059 + $0x1a0] sm:$0xff]
        %v5113 = vld [vmem:[%s5059 + $0x1a8] sm:$0xff]
        %v5114 = vld [vmem:[%s5059 + $0x1b0] sm:$0xff]
        %v5115 = vld [vmem:[%s5059 + $0x1b8] sm:$0xff]
        %v5116 = vld [vmem:[%s5059 + $0x1c0] sm:$0xff]
        %v5117 = vld [vmem:[%s5059 + $0x1c8] sm:$0xff]
        %v5118 = vld [vmem:[%s5059 + $0x1d0] sm:$0xff]
        %v5119 = vld [vmem:[%s5059 + $0x1d8] sm:$0xff]
        %v5120 = vld [vmem:[%s5059 + $0x1e0] sm:$0xff]
        %v5121 = vld [vmem:[%s5059 + $0x1e8] sm:$0xff]
        %v5122 = vld [vmem:[%s5059 + $0x1f0] sm:$0xff]
        %v5123 = vld [vmem:[%s5059 + $0x1f8] sm:$0xff]
        %v5124 = vld [vmem:[%s5059 + $0x200] sm:$0xff]
        %v5125 = vld [vmem:[%s5059 + $0x208] sm:$0xff]
        %v5126 = vld [vmem:[%s5059 + $0x210] sm:$0xff]
        %v5127 = vld [vmem:[%s5059 + $0x218] sm:$0xff]
        %v5128 = vld [vmem:[%s5059 + $0x220] sm:$0xff]
        %v5129 = vld [vmem:[%s5059 + $0x228] sm:$0xff]
        %v5130 = vld [vmem:[%s5059 + $0x230] sm:$0xff]
        %v5131 = vld [vmem:[%s5059 + $0x238] sm:$0xff]
        %v5132 = vld [vmem:[%s5059 + $0x240] sm:$0xff]
        %v5133 = vld [vmem:[%s5059 + $0x248] sm:$0xff]
        %v5134 = vld [vmem:[%s5059 + $0x250] sm:$0xff]
        %v5135 = vld [vmem:[%s5059 + $0x258] sm:$0xff]
        %v5136 = vld [vmem:[%s5059 + $0x260] sm:$0xff]
        %v5137 = vld [vmem:[%s5059 + $0x268] sm:$0xff]
        %v5138 = vld [vmem:[%s5059 + $0x270] sm:$0xff]
        %v5139 = vld [vmem:[%s5059 + $0x278] sm:$0xff]
        %v5140 = vld [vmem:[%s5059 + $0x280] sm:$0xff]
        %v5141 = vld [vmem:[%s5059 + $0x288] sm:$0xff]
        %v5142 = vld [vmem:[%s5059 + $0x290] sm:$0xff]
        %v5143 = vld [vmem:[%s5059 + $0x298] sm:$0xff]
        %v5144 = vld [vmem:[%s5059 + $0x2a0] sm:$0xff]
        %v5145 = vld [vmem:[%s5059 + $0x2a8] sm:$0xff]
        %v5146 = vld [vmem:[%s5059 + $0x2b0] sm:$0xff]
        %v5147 = vld [vmem:[%s5059 + $0x2b8] sm:$0xff]
        %v5148 = vld [vmem:[%s5059 + $0x2c0] sm:$0xff]
        %v5149 = vld [vmem:[%s5059 + $0x2c8] sm:$0xff]
        %v5150 = vld [vmem:[%s5059 + $0x2d0] sm:$0xff]
        %v5151 = vld [vmem:[%s5059 + $0x2d8] sm:$0xff]
        %v5152 = vld [vmem:[%s5059 + $0x2e0] sm:$0xff]
        %v5153 = vld [vmem:[%s5059 + $0x2e8] sm:$0xff]
        %v5154 = vld [vmem:[%s5059 + $0x2f0] sm:$0xff]
        %v5155 = vld [vmem:[%s5059 + $0x2f8] sm:$0xff]
        %v5156 = vld [vmem:[%s5059 + $0x300] sm:$0xff]
        %v5157 = vld [vmem:[%s5059 + $0x308] sm:$0xff]
        %v5158 = vld [vmem:[%s5059 + $0x310] sm:$0xff]
        %v5159 = vld [vmem:[%s5059 + $0x318] sm:$0xff]
        %v5160 = vld [vmem:[%s5059 + $0x320] sm:$0xff]
        %v5161 = vld [vmem:[%s5059 + $0x328] sm:$0xff]
        %v5162 = vld [vmem:[%s5059 + $0x330] sm:$0xff]
        %v5163 = vld [vmem:[%s5059 + $0x338] sm:$0xff]
        %v5164 = vld [vmem:[%s5059 + $0x340] sm:$0xff]
        %v5165 = vld [vmem:[%s5059 + $0x348] sm:$0xff]
        %v5166 = vld [vmem:[%s5059 + $0x350] sm:$0xff]
        %v5167 = vld [vmem:[%s5059 + $0x358] sm:$0xff]
        %v5168 = vld [vmem:[%s5059 + $0x360] sm:$0xff]
        %v5169 = vld [vmem:[%s5059 + $0x368] sm:$0xff]
        %v5170 = vld [vmem:[%s5059 + $0x370] sm:$0xff]
        %v5171 = vld [vmem:[%s5059 + $0x378] sm:$0xff]
        %v5172 = vld [vmem:[%s5059 + $0x380] sm:$0xff]
        %v5173 = vld [vmem:[%s5059 + $0x388] sm:$0xff]
        %v5174 = vld [vmem:[%s5059 + $0x390] sm:$0xff]
        %v5175 = vld [vmem:[%s5059 + $0x398] sm:$0xff]
        %v5176 = vld [vmem:[%s5059 + $0x3a0] sm:$0xff]
        %v5177 = vld [vmem:[%s5059 + $0x3a8] sm:$0xff]
        %v5178 = vld [vmem:[%s5059 + $0x3b0] sm:$0xff]
        %v5179 = vld [vmem:[%s5059 + $0x3b8] sm:$0xff]
        %v5180 = vld [vmem:[%s5059 + $0x3c0] sm:$0xff]
        %v5181 = vld [vmem:[%s5059 + $0x3c8] sm:$0xff]
        %v5182 = vld [vmem:[%s5059 + $0x3d0] sm:$0xff]
        %v5183 = vld [vmem:[%s5059 + $0x3d8] sm:$0xff]
        %v5184 = vld [vmem:[%s5059 + $0x3e0] sm:$0xff]
        %v5185 = vld [vmem:[%s5059 + $0x3e8] sm:$0xff]
        %v5186 = vld [vmem:[%s5059 + $0x3f0] sm:$0xff]
        %v5187 = vld [vmem:[%s5059 + $0x3f8] sm:$0xff]
        %5188 = vmatprep.subr.mxu0 %v5061
        %5189 = vmatpush1.msra.mxu0 %v5060
        %5190 = vmatprep.subr.mxu0 %v5063
        %5191 = vmatpush1.msra.mxu0 %v5062
        %5192 = vmatprep.subr.mxu0 %v5065
        %5193 = vmatpush1.msra.mxu0 %v5064
        %5194 = vmatprep.subr.mxu0 %v5067
        %5195 = vmatpush1.msra.mxu0 %v5066
        %5196 = vmatprep.subr.mxu0 %v5069
        %5197 = vmatpush1.msra.mxu0 %v5068
        %5198 = vmatprep.subr.mxu0 %v5071
        %5199 = vmatpush1.msra.mxu0 %v5070
        %5200 = vmatprep.subr.mxu0 %v5073
        %5201 = vmatpush1.msra.mxu0 %v5072
        %5202 = vmatprep.subr.mxu0 %v5075
        %5203 = vmatpush1.msra.mxu0 %v5074
        %5204 = vmatprep.subr.mxu0 %v5077
        %5205 = vmatpush1.msra.mxu0 %v5076
        %5206 = vmatprep.subr.mxu0 %v5079
        %5207 = vmatpush1.msra.mxu0 %v5078
        %5208 = vmatprep.subr.mxu0 %v5081
        %5209 = vmatpush1.msra.mxu0 %v5080
        %5210 = vmatprep.subr.mxu0 %v5083
        %5211 = vmatpush1.msra.mxu0 %v5082
        %5212 = vmatprep.subr.mxu0 %v5085
        %5213 = vmatpush1.msra.mxu0 %v5084
        %5214 = vmatprep.subr.mxu0 %v5087
        %5215 = vmatpush1.msra.mxu0 %v5086
        %5216 = vmatprep.subr.mxu0 %v5089
        %5217 = vmatpush1.msra.mxu0 %v5088
        %5218 = vmatprep.subr.mxu0 %v5091
        %5219 = vmatpush1.msra.mxu0 %v5090
        %5220 = vmatprep.subr.mxu0 %v5093
        %5221 = vmatpush1.msra.mxu0 %v5092
        %5222 = vmatprep.subr.mxu0 %v5095
        %5223 = vmatpush1.msra.mxu0 %v5094
        %5224 = vmatprep.subr.mxu0 %v5097
        %5225 = vmatpush1.msra.mxu0 %v5096
        %5226 = vmatprep.subr.mxu0 %v5099
        %5227 = vmatpush1.msra.mxu0 %v5098
        %5228 = vmatprep.subr.mxu0 %v5101
        %5229 = vmatpush1.msra.mxu0 %v5100
        %5230 = vmatprep.subr.mxu0 %v5103
        %5231 = vmatpush1.msra.mxu0 %v5102
        %5232 = vmatprep.subr.mxu0 %v5105
        %5233 = vmatpush1.msra.mxu0 %v5104
        %5234 = vmatprep.subr.mxu0 %v5107
        %5235 = vmatpush1.msra.mxu0 %v5106
        %5236 = vmatprep.subr.mxu0 %v5109
        %5237 = vmatpush1.msra.mxu0 %v5108
        %5238 = vmatprep.subr.mxu0 %v5111
        %5239 = vmatpush1.msra.mxu0 %v5110
        %5240 = vmatprep.subr.mxu0 %v5113
        %5241 = vmatpush1.msra.mxu0 %v5112
        %5242 = vmatprep.subr.mxu0 %v5115
        %5243 = vmatpush1.msra.mxu0 %v5114
        %5244 = vmatprep.subr.mxu0 %v5117
        %5245 = vmatpush1.msra.mxu0 %v5116
        %5246 = vmatprep.subr.mxu0 %v5119
        %5247 = vmatpush1.msra.mxu0 %v5118
        %5248 = vmatprep.subr.mxu0 %v5121
        %5249 = vmatpush1.msra.mxu0 %v5120
        %5250 = vmatprep.subr.mxu0 %v5123
        %5251 = vmatpush1.msra.mxu0 %v5122
        %5252 = vmatprep.mubr.f32.mxu0 %v4986
        %5253 = vmatmul.mubr.f32.gmra.mrb[0].mxu0 %v4984
        %v5254 = vpop.f32.mrb[0].mxu0
        %v5255 = vadd.f32 0.0, %v5254
        %v5256 = vpop.f32.mrb[0].mxu0
        %v5257 = vadd.f32 0.0, %v5256
        %5258 = vdwg.mxu0
        %5259 = vmatprep.subr.mxu0 %v5125
        %5260 = vmatpush1.msra.mxu0 %v5124
        %5261 = vmatprep.subr.mxu0 %v5127
        %5262 = vmatpush1.msra.mxu0 %v5126
        %5263 = vmatprep.subr.mxu0 %v5129
        %5264 = vmatpush1.msra.mxu0 %v5128
        %5265 = vmatprep.subr.mxu0 %v5131
        %5266 = vmatpush1.msra.mxu0 %v5130
        %5267 = vmatprep.subr.mxu0 %v5133
        %5268 = vmatpush1.msra.mxu0 %v5132
        %5269 = vmatprep.subr.mxu0 %v5135
        %5270 = vmatpush1.msra.mxu0 %v5134
        %5271 = vmatprep.subr.mxu0 %v5137
        %5272 = vmatpush1.msra.mxu0 %v5136
        %5273 = vmatprep.subr.mxu0 %v5139
        %5274 = vmatpush1.msra.mxu0 %v5138
        %5275 = vmatprep.subr.mxu0 %v5141
        %5276 = vmatpush1.msra.mxu0 %v5140
        %5277 = vmatprep.subr.mxu0 %v5143
        %5278 = vmatpush1.msra.mxu0 %v5142
        %5279 = vmatprep.subr.mxu0 %v5145
        %5280 = vmatpush1.msra.mxu0 %v5144
        %5281 = vmatprep.subr.mxu0 %v5147
        %5282 = vmatpush1.msra.mxu0 %v5146
        %5283 = vmatprep.subr.mxu0 %v5149
        %5284 = vmatpush1.msra.mxu0 %v5148
        %5285 = vmatprep.subr.mxu0 %v5151
        %5286 = vmatpush1.msra.mxu0 %v5150
        %5287 = vmatprep.subr.mxu0 %v5153
        %5288 = vmatpush1.msra.mxu0 %v5152
        %5289 = vmatprep.subr.mxu0 %v5155
        %5290 = vmatpush1.msra.mxu0 %v5154
        %5291 = vmatprep.subr.mxu0 %v5157
        %5292 = vmatpush1.msra.mxu0 %v5156
        %5293 = vmatprep.subr.mxu0 %v5159
        %5294 = vmatpush1.msra.mxu0 %v5158
        %5295 = vmatprep.subr.mxu0 %v5161
        %5296 = vmatpush1.msra.mxu0 %v5160
        %5297 = vmatprep.subr.mxu0 %v5163
        %5298 = vmatpush1.msra.mxu0 %v5162
        %5299 = vmatprep.subr.mxu0 %v5165
        %5300 = vmatpush1.msra.mxu0 %v5164
        %5301 = vmatprep.subr.mxu0 %v5167
        %5302 = vmatpush1.msra.mxu0 %v5166
        %5303 = vmatprep.subr.mxu0 %v5169
        %5304 = vmatpush1.msra.mxu0 %v5168
        %5305 = vmatprep.subr.mxu0 %v5171
        %5306 = vmatpush1.msra.mxu0 %v5170
        %5307 = vmatprep.subr.mxu0 %v5173
        %5308 = vmatpush1.msra.mxu0 %v5172
        %5309 = vmatprep.subr.mxu0 %v5175
        %5310 = vmatpush1.msra.mxu0 %v5174
        %5311 = vmatprep.subr.mxu0 %v5177
        %5312 = vmatpush1.msra.mxu0 %v5176
        %5313 = vmatprep.subr.mxu0 %v5179
        %5314 = vmatpush1.msra.mxu0 %v5178
        %5315 = vmatprep.subr.mxu0 %v5181
        %5316 = vmatpush1.msra.mxu0 %v5180
        %5317 = vmatprep.subr.mxu0 %v5183
        %5318 = vmatpush1.msra.mxu0 %v5182
        %5319 = vmatprep.subr.mxu0 %v5185
        %5320 = vmatpush1.msra.mxu0 %v5184
        %5321 = vmatprep.subr.mxu0 %v5187
        %5322 = vmatpush1.msra.mxu0 %v5186
        %5323 = vmatprep.mubr.f32.mxu0 %v5057
        %5324 = vmatmul.mubr.f32.gmra.mrb[0].mxu0 %v5055
        %v5325 = vpop.f32.mrb[0].mxu0
        %v5326 = vadd.f32 %v5255, %v5325
        %v5327 = vpop.f32.mrb[0].mxu0
        %v5328 = vadd.f32 %v5257, %v5327
        %5329 = vdwg.mxu0
        %v5330 = vadd.f32 %v4908, %v5326
        %v5331 = vadd.f32 %v4910, %v5328
        %v5332 = vld [vmem:[#allocation17] sm:$0xf]
        %v5334 = vlaneseq
        %v5335 = vshrl.u32 %v5334, 7
        %v5336 = vsub.s32 0, %v5335
        %v5337 = vrot.slane %v5332, %v5336
        %v5338 = vlaneseq
        %v5339 = vshrl.u32 %v5338, 7
        %v5340 = vsub.s32 2, %v5339
        %v5341 = vrot.slane %v5332, %v5340
        %v5344 = vlaneseq
        %v5345 = vshrl.u32 %v5344, 7
        %v5346 = vsub.s32 0, %v5345
        %v5347 = vrot.slane %v5337, %v5346
        %v5348 = vlaneseq
        %v5349 = vshrl.u32 %v5348, 7
        %v5350 = vsub.s32 0, %v5349
        %v5351 = vrot.slane %v5341, %v5350
        %v5352 = vadd.f32 %v5330, %v5347
        %v5353 = vadd.f32 %v5331, %v5351
        %vm5354 = vcmp.ge.f32.partialorder %v5352, 0.0
        %vm5355 = vcmp.ge.f32.partialorder %v5353, 0.0
        %v5356 = vmul.f32 %v5352, 0.01
        %v5357 = vmul.f32 %v5353, 0.01
        %v5358 = vsel %vm5354, %v5352, %v5356
        %v5359 = vsel %vm5355, %v5353, %v5357
        %v5360 = vlaneseq
        %v5361 = vshrl.u32 %v5360, 7
        %v5362 = vsub.s32 1, %v5361
        %v5363 = vrot.slane %v5332, %v5362
        %v5364 = vlaneseq
        %v5365 = vshrl.u32 %v5364, 7
        %v5366 = vsub.s32 3, %v5365
        %v5367 = vrot.slane %v5332, %v5366
        %v5370 = vlaneseq
        %v5371 = vshrl.u32 %v5370, 7
        %v5372 = vsub.s32 1, %v5371
        %v5373 = vrot.slane %v5363, %v5372
        %v5374 = vlaneseq
        %v5375 = vshrl.u32 %v5374, 7
        %v5376 = vsub.s32 1, %v5375
        %v5377 = vrot.slane %v5367, %v5376
        %v5378 = vadd.f32 %v5358, %v5373
        %v5379 = vadd.f32 %v5359, %v5377
        %v5380 = vld [vmem:[#allocation19] sm:$0xf]
        %vm5381 = vcmask 64512
        %v5383 = vsel %vm5381, %v5380, 0
        %5385 = vmatprep.subr.mxu0 %v5379
        %5386 = vmatpush1.msra.mxu0 %v5378
        %5387 = vmatprep.subr.mxu0 0.0
        %5388 = vmatpush1.msra.mxu0 0.0
        %5389 = vmatprep.subr.mxu0 0.0
        %5390 = vmatpush1.msra.mxu0 0.0
        %5391 = vmatprep.subr.mxu0 0.0
        %5392 = vmatpush1.msra.mxu0 0.0
        %5393 = vmatprep.subr.mxu0 0.0
        %5394 = vmatpush1.msra.mxu0 0.0
        %5395 = vmatprep.subr.mxu0 0.0
        %5396 = vmatpush1.msra.mxu0 0.0
        %5397 = vmatprep.subr.mxu0 0.0
        %5398 = vmatpush1.msra.mxu0 0.0
        %5399 = vmatprep.subr.mxu0 0.0
        %5400 = vmatpush1.msra.mxu0 0.0
        %5401 = vmatprep.subr.mxu0 0.0
        %5402 = vmatpush1.msra.mxu0 0.0
        %5403 = vmatprep.subr.mxu0 0.0
        %5404 = vmatpush1.msra.mxu0 0.0
        %5405 = vmatprep.subr.mxu0 0.0
        %5406 = vmatpush1.msra.mxu0 0.0
        %5407 = vmatprep.subr.mxu0 0.0
        %5408 = vmatpush1.msra.mxu0 0.0
        %5409 = vmatprep.subr.mxu0 0.0
        %5410 = vmatpush1.msra.mxu0 0.0
        %5411 = vmatprep.subr.mxu0 0.0
        %5412 = vmatpush1.msra.mxu0 0.0
        %5413 = vmatprep.subr.mxu0 0.0
        %5414 = vmatpush1.msra.mxu0 0.0
        %5415 = vmatprep.subr.mxu0 0.0
        %5416 = vmatpush1.msra.mxu0 0.0
        %5417 = vmatprep.subr.mxu0 0.0
        %5418 = vmatpush1.msra.mxu0 0.0
        %5419 = vmatprep.subr.mxu0 0.0
        %5420 = vmatpush1.msra.mxu0 0.0
        %5421 = vmatprep.subr.mxu0 0.0
        %5422 = vmatpush1.msra.mxu0 0.0
        %5423 = vmatprep.subr.mxu0 0.0
        %5424 = vmatpush1.msra.mxu0 0.0
        %5425 = vmatprep.subr.mxu0 0.0
        %5426 = vmatpush1.msra.mxu0 0.0
        %5427 = vmatprep.subr.mxu0 0.0
        %5428 = vmatpush1.msra.mxu0 0.0
        %5429 = vmatprep.subr.mxu0 0.0
        %5430 = vmatpush1.msra.mxu0 0.0
        %5431 = vmatprep.subr.mxu0 0.0
        %5432 = vmatpush1.msra.mxu0 0.0
        %5433 = vmatprep.subr.mxu0 0.0
        %5434 = vmatpush1.msra.mxu0 0.0
        %5435 = vmatprep.subr.mxu0 0.0
        %5436 = vmatpush1.msra.mxu0 0.0
        %5437 = vmatprep.subr.mxu0 0.0
        %5438 = vmatpush1.msra.mxu0 0.0
        %5439 = vmatprep.subr.mxu0 0.0
        %5440 = vmatpush1.msra.mxu0 0.0
        %5441 = vmatprep.subr.mxu0 0.0
        %5442 = vmatpush1.msra.mxu0 0.0
        %5443 = vmatprep.subr.mxu0 0.0
        %5444 = vmatpush1.msra.mxu0 0.0
        %5445 = vmatprep.subr.mxu0 0.0
        %5446 = vmatpush1.msra.mxu0 0.0
        %5447 = vmatprep.subr.mxu0 0.0
        %5448 = vmatpush1.msra.mxu0 0.0
        %5449 = vmatprep.mubr.f32.mxu0 0.0
        %5450 = vmatmul.mubr.f32.gmra.mrb[0].mxu0 %v5383
        %v5451 = vpop.f32.mrb[0].mxu0
        %v5452 = vadd.f32 0.0, %v5451
        %v5453 = vpop.f32.mrb[0].mxu0
        %v5454 = vadd.f32 0.0, %v5453
        %5455 = vdwg.mxu0
        %v5456 = vld [vmem:[#allocation20] sm:$0xff]
        %v5457 = vld [vmem:[#allocation20 + $0x8] sm:$0xff]
        %v5458 = vld [vmem:[#allocation20 + $0x10] sm:$0xff]
        %v5459 = vld [vmem:[#allocation20 + $0x18] sm:$0xff]
        %v5460 = vld [vmem:[#allocation20 + $0x20] sm:$0xff]
        %v5461 = vld [vmem:[#allocation20 + $0x28] sm:$0xff]
        %v5462 = vld [vmem:[#allocation20 + $0x30] sm:$0xff]
        %v5463 = vld [vmem:[#allocation20 + $0x38] sm:$0xff]
        %v5464 = vld [vmem:[#allocation20 + $0x40] sm:$0xff]
        %v5465 = vld [vmem:[#allocation20 + $0x48] sm:$0xff]
        %v5466 = vld [vmem:[#allocation20 + $0x50] sm:$0xff]
        %v5467 = vld [vmem:[#allocation20 + $0x58] sm:$0xff]
        %v5468 = vld [vmem:[#allocation20 + $0x60] sm:$0xff]
        %v5469 = vld [vmem:[#allocation20 + $0x68] sm:$0xff]
        %v5470 = vld [vmem:[#allocation20 + $0x70] sm:$0xff]
        %v5471 = vld [vmem:[#allocation20 + $0x78] sm:$0xff]
        %v5472 = vld [vmem:[#allocation20 + $0x80] sm:$0xff]
        %v5473 = vld [vmem:[#allocation20 + $0x88] sm:$0xff]
        %v5474 = vld [vmem:[#allocation20 + $0x90] sm:$0xff]
        %v5475 = vld [vmem:[#allocation20 + $0x98] sm:$0xff]
        %v5476 = vld [vmem:[#allocation20 + $0xa0] sm:$0xff]
        %v5477 = vld [vmem:[#allocation20 + $0xa8] sm:$0xff]
        %v5478 = vld [vmem:[#allocation20 + $0xb0] sm:$0xff]
        %v5479 = vld [vmem:[#allocation20 + $0xb8] sm:$0xff]
        %v5480 = vld [vmem:[#allocation20 + $0xc0] sm:$0xff]
        %v5481 = vld [vmem:[#allocation20 + $0xc8] sm:$0xff]
        %v5482 = vld [vmem:[#allocation20 + $0xd0] sm:$0xff]
        %v5483 = vld [vmem:[#allocation20 + $0xd8] sm:$0xff]
        %v5484 = vld [vmem:[#allocation20 + $0xe0] sm:$0xff]
        %v5485 = vld [vmem:[#allocation20 + $0xe8] sm:$0xff]
        %v5486 = vld [vmem:[#allocation20 + $0xf0] sm:$0xff]
        %v5487 = vld [vmem:[#allocation20 + $0xf8] sm:$0xff]
        %s5488 = scalar_lea.vmem [#allocation19], 4
        %v5489 = vld [vmem:[%s5488] sm:$0xf]
        %v5491 = vsel %vm5381, %v5489, 0
        %5493 = vmatprep.subr.mxu0 %v5379
        %5494 = vmatpush1.msra.mxu0 %v5378
        %5495 = vmatprep.subr.mxu0 0.0
        %5496 = vmatpush1.msra.mxu0 0.0
        %5497 = vmatprep.subr.mxu0 0.0
        %5498 = vmatpush1.msra.mxu0 0.0
        %5499 = vmatprep.subr.mxu0 0.0
        %5500 = vmatpush1.msra.mxu0 0.0
        %5501 = vmatprep.subr.mxu0 0.0
        %5502 = vmatpush1.msra.mxu0 0.0
        %5503 = vmatprep.subr.mxu0 0.0
        %5504 = vmatpush1.msra.mxu0 0.0
        %5505 = vmatprep.subr.mxu0 0.0
        %5506 = vmatpush1.msra.mxu0 0.0
        %5507 = vmatprep.subr.mxu0 0.0
        %5508 = vmatpush1.msra.mxu0 0.0
        %5509 = vmatprep.subr.mxu0 0.0
        %5510 = vmatpush1.msra.mxu0 0.0
        %5511 = vmatprep.subr.mxu0 0.0
        %5512 = vmatpush1.msra.mxu0 0.0
        %5513 = vmatprep.subr.mxu0 0.0
        %5514 = vmatpush1.msra.mxu0 0.0
        %5515 = vmatprep.subr.mxu0 0.0
        %5516 = vmatpush1.msra.mxu0 0.0
        %5517 = vmatprep.subr.mxu0 0.0
        %5518 = vmatpush1.msra.mxu0 0.0
        %5519 = vmatprep.subr.mxu0 0.0
        %5520 = vmatpush1.msra.mxu0 0.0
        %5521 = vmatprep.subr.mxu0 0.0
        %5522 = vmatpush1.msra.mxu0 0.0
        %5523 = vmatprep.subr.mxu0 0.0
        %5524 = vmatpush1.msra.mxu0 0.0
        %5525 = vmatprep.subr.mxu0 0.0
        %5526 = vmatpush1.msra.mxu0 0.0
        %5527 = vmatprep.subr.mxu0 0.0
        %5528 = vmatpush1.msra.mxu0 0.0
        %5529 = vmatprep.subr.mxu0 0.0
        %5530 = vmatpush1.msra.mxu0 0.0
        %5531 = vmatprep.subr.mxu0 0.0
        %5532 = vmatpush1.msra.mxu0 0.0
        %5533 = vmatprep.subr.mxu0 0.0
        %5534 = vmatpush1.msra.mxu0 0.0
        %5535 = vmatprep.subr.mxu0 0.0
        %5536 = vmatpush1.msra.mxu0 0.0
        %5537 = vmatprep.subr.mxu0 0.0
        %5538 = vmatpush1.msra.mxu0 0.0
        %5539 = vmatprep.subr.mxu0 0.0
        %5540 = vmatpush1.msra.mxu0 0.0
        %5541 = vmatprep.subr.mxu0 0.0
        %5542 = vmatpush1.msra.mxu0 0.0
        %5543 = vmatprep.subr.mxu0 0.0
        %5544 = vmatpush1.msra.mxu0 0.0
        %5545 = vmatprep.subr.mxu0 0.0
        %5546 = vmatpush1.msra.mxu0 0.0
        %5547 = vmatprep.subr.mxu0 0.0
        %5548 = vmatpush1.msra.mxu0 0.0
        %5549 = vmatprep.subr.mxu0 0.0
        %5550 = vmatpush1.msra.mxu0 0.0
        %5551 = vmatprep.subr.mxu0 0.0
        %5552 = vmatpush1.msra.mxu0 0.0
        %5553 = vmatprep.subr.mxu0 0.0
        %5554 = vmatpush1.msra.mxu0 0.0
        %5555 = vmatprep.subr.mxu0 0.0
        %5556 = vmatpush1.msra.mxu0 0.0
        %5557 = vmatprep.mubr.f32.mxu0 0.0
        %5558 = vmatmul.mubr.f32.gmra.mrb[0].mxu0 %v5491
        %v5559 = vpop.f32.mrb[0].mxu0
        %v5560 = vadd.f32 0.0, %v5559
        %v5561 = vpop.f32.mrb[0].mxu0
        %v5562 = vadd.f32 0.0, %v5561
        %5563 = vdwg.mxu0
        %s5564 = scalar_lea.vmem [#allocation20], 256
        %v5565 = vld [vmem:[%s5564] sm:$0xff]
        %v5566 = vld [vmem:[%s5564 + $0x8] sm:$0xff]
        %v5567 = vld [vmem:[%s5564 + $0x10] sm:$0xff]
        %v5568 = vld [vmem:[%s5564 + $0x18] sm:$0xff]
        %v5569 = vld [vmem:[%s5564 + $0x20] sm:$0xff]
        %v5570 = vld [vmem:[%s5564 + $0x28] sm:$0xff]
        %v5571 = vld [vmem:[%s5564 + $0x30] sm:$0xff]
        %v5572 = vld [vmem:[%s5564 + $0x38] sm:$0xff]
        %v5573 = vld [vmem:[%s5564 + $0x40] sm:$0xff]
        %v5574 = vld [vmem:[%s5564 + $0x48] sm:$0xff]
        %v5575 = vld [vmem:[%s5564 + $0x50] sm:$0xff]
        %v5576 = vld [vmem:[%s5564 + $0x58] sm:$0xff]
        %v5577 = vld [vmem:[%s5564 + $0x60] sm:$0xff]
        %v5578 = vld [vmem:[%s5564 + $0x68] sm:$0xff]
        %v5579 = vld [vmem:[%s5564 + $0x70] sm:$0xff]
        %v5580 = vld [vmem:[%s5564 + $0x78] sm:$0xff]
        %v5581 = vld [vmem:[%s5564 + $0x80] sm:$0xff]
        %v5582 = vld [vmem:[%s5564 + $0x88] sm:$0xff]
        %v5583 = vld [vmem:[%s5564 + $0x90] sm:$0xff]
        %v5584 = vld [vmem:[%s5564 + $0x98] sm:$0xff]
        %v5585 = vld [vmem:[%s5564 + $0xa0] sm:$0xff]
        %v5586 = vld [vmem:[%s5564 + $0xa8] sm:$0xff]
        %v5587 = vld [vmem:[%s5564 + $0xb0] sm:$0xff]
        %v5588 = vld [vmem:[%s5564 + $0xb8] sm:$0xff]
        %v5589 = vld [vmem:[%s5564 + $0xc0] sm:$0xff]
        %v5590 = vld [vmem:[%s5564 + $0xc8] sm:$0xff]
        %v5591 = vld [vmem:[%s5564 + $0xd0] sm:$0xff]
        %v5592 = vld [vmem:[%s5564 + $0xd8] sm:$0xff]
        %v5593 = vld [vmem:[%s5564 + $0xe0] sm:$0xff]
        %v5594 = vld [vmem:[%s5564 + $0xe8] sm:$0xff]
        %v5595 = vld [vmem:[%s5564 + $0xf0] sm:$0xff]
        %v5596 = vld [vmem:[%s5564 + $0xf8] sm:$0xff]
        %5597 = vmatprep.subr.mxu0 0.0
        %5598 = vmatpush1.msra.mxu0 %v5565
        %5599 = vmatprep.subr.mxu0 0.0
        %5600 = vmatpush1.msra.mxu0 %v5566
        %5601 = vmatprep.subr.mxu0 0.0
        %5602 = vmatpush1.msra.mxu0 %v5567
        %5603 = vmatprep.subr.mxu0 0.0
        %5604 = vmatpush1.msra.mxu0 %v5568
        %5605 = vmatprep.subr.mxu0 0.0
        %5606 = vmatpush1.msra.mxu0 %v5569
        %5607 = vmatprep.subr.mxu0 0.0
        %5608 = vmatpush1.msra.mxu0 %v5570
        %5609 = vmatprep.subr.mxu0 0.0
        %5610 = vmatpush1.msra.mxu0 %v5571
        %5611 = vmatprep.subr.mxu0 0.0
        %5612 = vmatpush1.msra.mxu0 %v5572
        %5613 = vmatprep.subr.mxu0 0.0
        %5614 = vmatpush1.msra.mxu0 %v5573
        %5615 = vmatprep.subr.mxu0 0.0
        %5616 = vmatpush1.msra.mxu0 %v5574
        %5617 = vmatprep.subr.mxu0 0.0
        %5618 = vmatpush1.msra.mxu0 %v5575
        %5619 = vmatprep.subr.mxu0 0.0
        %5620 = vmatpush1.msra.mxu0 %v5576
        %5621 = vmatprep.subr.mxu0 0.0
        %5622 = vmatpush1.msra.mxu0 %v5577
        %5623 = vmatprep.subr.mxu0 0.0
        %5624 = vmatpush1.msra.mxu0 %v5578
        %5625 = vmatprep.subr.mxu0 0.0
        %5626 = vmatpush1.msra.mxu0 %v5579
        %5627 = vmatprep.subr.mxu0 0.0
        %5628 = vmatpush1.msra.mxu0 %v5580
        %5629 = vmatprep.subr.mxu0 0.0
        %5630 = vmatpush1.msra.mxu0 %v5581
        %5631 = vmatprep.subr.mxu0 0.0
        %5632 = vmatpush1.msra.mxu0 %v5582
        %5633 = vmatprep.subr.mxu0 0.0
        %5634 = vmatpush1.msra.mxu0 %v5583
        %5635 = vmatprep.subr.mxu0 0.0
        %5636 = vmatpush1.msra.mxu0 %v5584
        %5637 = vmatprep.subr.mxu0 0.0
        %5638 = vmatpush1.msra.mxu0 %v5585
        %5639 = vmatprep.subr.mxu0 0.0
        %5640 = vmatpush1.msra.mxu0 %v5586
        %5641 = vmatprep.subr.mxu0 0.0
        %5642 = vmatpush1.msra.mxu0 %v5587
        %5643 = vmatprep.subr.mxu0 0.0
        %5644 = vmatpush1.msra.mxu0 %v5588
        %5645 = vmatprep.subr.mxu0 0.0
        %5646 = vmatpush1.msra.mxu0 %v5589
        %5647 = vmatprep.subr.mxu0 0.0
        %5648 = vmatpush1.msra.mxu0 %v5590
        %5649 = vmatprep.subr.mxu0 0.0
        %5650 = vmatpush1.msra.mxu0 %v5591
        %5651 = vmatprep.subr.mxu0 0.0
        %5652 = vmatpush1.msra.mxu0 %v5592
        %5653 = vmatprep.subr.mxu0 0.0
        %5654 = vmatpush1.msra.mxu0 %v5593
        %5655 = vmatprep.subr.mxu0 0.0
        %5656 = vmatpush1.msra.mxu0 %v5594
        %5657 = vmatprep.subr.mxu0 0.0
        %5658 = vmatpush1.msra.mxu0 %v5595
        %5659 = vmatprep.subr.mxu0 0.0
        %5660 = vmatpush1.msra.mxu0 %v5596
        %5661 = vmatprep.mubr.f32.mxu0 %v5562
        %5662 = vmatmul.mubr.f32.gmra.mrb[0].mxu0 %v5560
        %v5663 = vpop.f32.mrb[0].mxu0
        %v5664 = vadd.f32 0.0, %v5663
        %v5665 = vpop.f32.mrb[0].mxu0
        %5666 = vdwg.mxu0
        %5667 = vmatprep.subr.mxu0 0.0
        %5668 = vmatpush1.msra.mxu0 %v5456
        %5669 = vmatprep.subr.mxu0 0.0
        %5670 = vmatpush1.msra.mxu0 %v5457
        %5671 = vmatprep.subr.mxu0 0.0
        %5672 = vmatpush1.msra.mxu0 %v5458
        %5673 = vmatprep.subr.mxu0 0.0
        %5674 = vmatpush1.msra.mxu0 %v5459
        %5675 = vmatprep.subr.mxu0 0.0
        %5676 = vmatpush1.msra.mxu0 %v5460
        %5677 = vmatprep.subr.mxu0 0.0
        %5678 = vmatpush1.msra.mxu0 %v5461
        %5679 = vmatprep.subr.mxu0 0.0
        %5680 = vmatpush1.msra.mxu0 %v5462
        %5681 = vmatprep.subr.mxu0 0.0
        %5682 = vmatpush1.msra.mxu0 %v5463
        %5683 = vmatprep.subr.mxu0 0.0
        %5684 = vmatpush1.msra.mxu0 %v5464
        %5685 = vmatprep.subr.mxu0 0.0
        %5686 = vmatpush1.msra.mxu0 %v5465
        %5687 = vmatprep.subr.mxu0 0.0
        %5688 = vmatpush1.msra.mxu0 %v5466
        %5689 = vmatprep.subr.mxu0 0.0
        %5690 = vmatpush1.msra.mxu0 %v5467
        %5691 = vmatprep.subr.mxu0 0.0
        %5692 = vmatpush1.msra.mxu0 %v5468
        %5693 = vmatprep.subr.mxu0 0.0
        %5694 = vmatpush1.msra.mxu0 %v5469
        %5695 = vmatprep.subr.mxu0 0.0
        %5696 = vmatpush1.msra.mxu0 %v5470
        %5697 = vmatprep.subr.mxu0 0.0
        %5698 = vmatpush1.msra.mxu0 %v5471
        %5699 = vmatprep.subr.mxu0 0.0
        %5700 = vmatpush1.msra.mxu0 %v5472
        %5701 = vmatprep.subr.mxu0 0.0
        %5702 = vmatpush1.msra.mxu0 %v5473
        %5703 = vmatprep.subr.mxu0 0.0
        %5704 = vmatpush1.msra.mxu0 %v5474
        %5705 = vmatprep.subr.mxu0 0.0
        %5706 = vmatpush1.msra.mxu0 %v5475
        %5707 = vmatprep.subr.mxu0 0.0
        %5708 = vmatpush1.msra.mxu0 %v5476
        %5709 = vmatprep.subr.mxu0 0.0
        %5710 = vmatpush1.msra.mxu0 %v5477
        %5711 = vmatprep.subr.mxu0 0.0
        %5712 = vmatpush1.msra.mxu0 %v5478
        %5713 = vmatprep.subr.mxu0 0.0
        %5714 = vmatpush1.msra.mxu0 %v5479
        %5715 = vmatprep.subr.mxu0 0.0
        %5716 = vmatpush1.msra.mxu0 %v5480
        %5717 = vmatprep.subr.mxu0 0.0
        %5718 = vmatpush1.msra.mxu0 %v5481
        %5719 = vmatprep.subr.mxu0 0.0
        %5720 = vmatpush1.msra.mxu0 %v5482
        %5721 = vmatprep.subr.mxu0 0.0
        %5722 = vmatpush1.msra.mxu0 %v5483
        %5723 = vmatprep.subr.mxu0 0.0
        %5724 = vmatpush1.msra.mxu0 %v5484
        %5725 = vmatprep.subr.mxu0 0.0
        %5726 = vmatpush1.msra.mxu0 %v5485
        %5727 = vmatprep.subr.mxu0 0.0
        %5728 = vmatpush1.msra.mxu0 %v5486
        %5729 = vmatprep.subr.mxu0 0.0
        %5730 = vmatpush1.msra.mxu0 %v5487
        %5731 = vmatprep.mubr.f32.mxu0 %v5454
        %5732 = vmatmul.mubr.f32.gmra.mrb[0].mxu0 %v5452
        %v5733 = vpop.f32.mrb[0].mxu0
        %v5734 = vadd.f32 %v5664, %v5733
        %v5735 = vpop.f32.mrb[0].mxu0
        %5736 = vdwg.mxu0
        %s5737 = scalar_lea.vmem [#allocation19], 8
        %v5738 = vld [vmem:[%s5737] sm:$0xf]
        %v5740 = vsel %vm5381, %v5738, 0
        %5742 = vmatprep.subr.mxu0 %v5379
        %5743 = vmatpush1.msra.mxu0 %v5378
        %5744 = vmatprep.subr.mxu0 0.0
        %5745 = vmatpush1.msra.mxu0 0.0
        %5746 = vmatprep.subr.mxu0 0.0
        %5747 = vmatpush1.msra.mxu0 0.0
        %5748 = vmatprep.subr.mxu0 0.0
        %5749 = vmatpush1.msra.mxu0 0.0
        %5750 = vmatprep.subr.mxu0 0.0
        %5751 = vmatpush1.msra.mxu0 0.0
        %5752 = vmatprep.subr.mxu0 0.0
        %5753 = vmatpush1.msra.mxu0 0.0
        %5754 = vmatprep.subr.mxu0 0.0
        %5755 = vmatpush1.msra.mxu0 0.0
        %5756 = vmatprep.subr.mxu0 0.0
        %5757 = vmatpush1.msra.mxu0 0.0
        %5758 = vmatprep.subr.mxu0 0.0
        %5759 = vmatpush1.msra.mxu0 0.0
        %5760 = vmatprep.subr.mxu0 0.0
        %5761 = vmatpush1.msra.mxu0 0.0
        %5762 = vmatprep.subr.mxu0 0.0
        %5763 = vmatpush1.msra.mxu0 0.0
        %5764 = vmatprep.subr.mxu0 0.0
        %5765 = vmatpush1.msra.mxu0 0.0
        %5766 = vmatprep.subr.mxu0 0.0
        %5767 = vmatpush1.msra.mxu0 0.0
        %5768 = vmatprep.subr.mxu0 0.0
        %5769 = vmatpush1.msra.mxu0 0.0
        %5770 = vmatprep.subr.mxu0 0.0
        %5771 = vmatpush1.msra.mxu0 0.0
        %5772 = vmatprep.subr.mxu0 0.0
        %5773 = vmatpush1.msra.mxu0 0.0
        %5774 = vmatprep.subr.mxu0 0.0
        %5775 = vmatpush1.msra.mxu0 0.0
        %5776 = vmatprep.subr.mxu0 0.0
        %5777 = vmatpush1.msra.mxu0 0.0
        %5778 = vmatprep.subr.mxu0 0.0
        %5779 = vmatpush1.msra.mxu0 0.0
        %5780 = vmatprep.subr.mxu0 0.0
        %5781 = vmatpush1.msra.mxu0 0.0
        %5782 = vmatprep.subr.mxu0 0.0
        %5783 = vmatpush1.msra.mxu0 0.0
        %5784 = vmatprep.subr.mxu0 0.0
        %5785 = vmatpush1.msra.mxu0 0.0
        %5786 = vmatprep.subr.mxu0 0.0
        %5787 = vmatpush1.msra.mxu0 0.0
        %5788 = vmatprep.subr.mxu0 0.0
        %5789 = vmatpush1.msra.mxu0 0.0
        %5790 = vmatprep.subr.mxu0 0.0
        %5791 = vmatpush1.msra.mxu0 0.0
        %5792 = vmatprep.subr.mxu0 0.0
        %5793 = vmatpush1.msra.mxu0 0.0
        %5794 = vmatprep.subr.mxu0 0.0
        %5795 = vmatpush1.msra.mxu0 0.0
        %5796 = vmatprep.subr.mxu0 0.0
        %5797 = vmatpush1.msra.mxu0 0.0
        %5798 = vmatprep.subr.mxu0 0.0
        %5799 = vmatpush1.msra.mxu0 0.0
        %5800 = vmatprep.subr.mxu0 0.0
        %5801 = vmatpush1.msra.mxu0 0.0
        %5802 = vmatprep.subr.mxu0 0.0
        %5803 = vmatpush1.msra.mxu0 0.0
        %5804 = vmatprep.subr.mxu0 0.0
        %5805 = vmatpush1.msra.mxu0 0.0
        %5806 = vmatprep.mubr.f32.mxu0 0.0
        %5807 = vmatmul.mubr.f32.gmra.mrb[0].mxu0 %v5740
        %v5808 = vpop.f32.mrb[0].mxu0
        %v5809 = vadd.f32 0.0, %v5808
        %v5810 = vpop.f32.mrb[0].mxu0
        %v5811 = vadd.f32 0.0, %v5810
        %5812 = vdwg.mxu0
        %s5813 = scalar_lea.vmem [#allocation20], 512
        %v5814 = vld [vmem:[%s5813] sm:$0xff]
        %v5815 = vld [vmem:[%s5813 + $0x8] sm:$0xff]
        %v5816 = vld [vmem:[%s5813 + $0x10] sm:$0xff]
        %v5817 = vld [vmem:[%s5813 + $0x18] sm:$0xff]
        %v5818 = vld [vmem:[%s5813 + $0x20] sm:$0xff]
        %v5819 = vld [vmem:[%s5813 + $0x28] sm:$0xff]
        %v5820 = vld [vmem:[%s5813 + $0x30] sm:$0xff]
        %v5821 = vld [vmem:[%s5813 + $0x38] sm:$0xff]
        %v5822 = vld [vmem:[%s5813 + $0x40] sm:$0xff]
        %v5823 = vld [vmem:[%s5813 + $0x48] sm:$0xff]
        %v5824 = vld [vmem:[%s5813 + $0x50] sm:$0xff]
        %v5825 = vld [vmem:[%s5813 + $0x58] sm:$0xff]
        %v5826 = vld [vmem:[%s5813 + $0x60] sm:$0xff]
        %v5827 = vld [vmem:[%s5813 + $0x68] sm:$0xff]
        %v5828 = vld [vmem:[%s5813 + $0x70] sm:$0xff]
        %v5829 = vld [vmem:[%s5813 + $0x78] sm:$0xff]
        %v5830 = vld [vmem:[%s5813 + $0x80] sm:$0xff]
        %v5831 = vld [vmem:[%s5813 + $0x88] sm:$0xff]
        %v5832 = vld [vmem:[%s5813 + $0x90] sm:$0xff]
        %v5833 = vld [vmem:[%s5813 + $0x98] sm:$0xff]
        %v5834 = vld [vmem:[%s5813 + $0xa0] sm:$0xff]
        %v5835 = vld [vmem:[%s5813 + $0xa8] sm:$0xff]
        %v5836 = vld [vmem:[%s5813 + $0xb0] sm:$0xff]
        %v5837 = vld [vmem:[%s5813 + $0xb8] sm:$0xff]
        %v5838 = vld [vmem:[%s5813 + $0xc0] sm:$0xff]
        %v5839 = vld [vmem:[%s5813 + $0xc8] sm:$0xff]
        %v5840 = vld [vmem:[%s5813 + $0xd0] sm:$0xff]
        %v5841 = vld [vmem:[%s5813 + $0xd8] sm:$0xff]
        %v5842 = vld [vmem:[%s5813 + $0xe0] sm:$0xff]
        %v5843 = vld [vmem:[%s5813 + $0xe8] sm:$0xff]
        %v5844 = vld [vmem:[%s5813 + $0xf0] sm:$0xff]
        %v5845 = vld [vmem:[%s5813 + $0xf8] sm:$0xff]
        %5846 = vmatprep.subr.mxu0 0.0
        %5847 = vmatpush1.msra.mxu0 %v5814
        %5848 = vmatprep.subr.mxu0 0.0
        %5849 = vmatpush1.msra.mxu0 %v5815
        %5850 = vmatprep.subr.mxu0 0.0
        %5851 = vmatpush1.msra.mxu0 %v5816
        %5852 = vmatprep.subr.mxu0 0.0
        %5853 = vmatpush1.msra.mxu0 %v5817
        %5854 = vmatprep.subr.mxu0 0.0
        %5855 = vmatpush1.msra.mxu0 %v5818
        %5856 = vmatprep.subr.mxu0 0.0
        %5857 = vmatpush1.msra.mxu0 %v5819
        %5858 = vmatprep.subr.mxu0 0.0
        %5859 = vmatpush1.msra.mxu0 %v5820
        %5860 = vmatprep.subr.mxu0 0.0
        %5861 = vmatpush1.msra.mxu0 %v5821
        %5862 = vmatprep.subr.mxu0 0.0
        %5863 = vmatpush1.msra.mxu0 %v5822
        %5864 = vmatprep.subr.mxu0 0.0
        %5865 = vmatpush1.msra.mxu0 %v5823
        %5866 = vmatprep.subr.mxu0 0.0
        %5867 = vmatpush1.msra.mxu0 %v5824
        %5868 = vmatprep.subr.mxu0 0.0
        %5869 = vmatpush1.msra.mxu0 %v5825
        %5870 = vmatprep.subr.mxu0 0.0
        %5871 = vmatpush1.msra.mxu0 %v5826
        %5872 = vmatprep.subr.mxu0 0.0
        %5873 = vmatpush1.msra.mxu0 %v5827
        %5874 = vmatprep.subr.mxu0 0.0
        %5875 = vmatpush1.msra.mxu0 %v5828
        %5876 = vmatprep.subr.mxu0 0.0
        %5877 = vmatpush1.msra.mxu0 %v5829
        %5878 = vmatprep.subr.mxu0 0.0
        %5879 = vmatpush1.msra.mxu0 %v5830
        %5880 = vmatprep.subr.mxu0 0.0
        %5881 = vmatpush1.msra.mxu0 %v5831
        %5882 = vmatprep.subr.mxu0 0.0
        %5883 = vmatpush1.msra.mxu0 %v5832
        %5884 = vmatprep.subr.mxu0 0.0
        %5885 = vmatpush1.msra.mxu0 %v5833
        %5886 = vmatprep.subr.mxu0 0.0
        %5887 = vmatpush1.msra.mxu0 %v5834
        %5888 = vmatprep.subr.mxu0 0.0
        %5889 = vmatpush1.msra.mxu0 %v5835
        %5890 = vmatprep.subr.mxu0 0.0
        %5891 = vmatpush1.msra.mxu0 %v5836
        %5892 = vmatprep.subr.mxu0 0.0
        %5893 = vmatpush1.msra.mxu0 %v5837
        %5894 = vmatprep.subr.mxu0 0.0
        %5895 = vmatpush1.msra.mxu0 %v5838
        %5896 = vmatprep.subr.mxu0 0.0
        %5897 = vmatpush1.msra.mxu0 %v5839
        %5898 = vmatprep.subr.mxu0 0.0
        %5899 = vmatpush1.msra.mxu0 %v5840
        %5900 = vmatprep.subr.mxu0 0.0
        %5901 = vmatpush1.msra.mxu0 %v5841
        %5902 = vmatprep.subr.mxu0 0.0
        %5903 = vmatpush1.msra.mxu0 %v5842
        %5904 = vmatprep.subr.mxu0 0.0
        %5905 = vmatpush1.msra.mxu0 %v5843
        %5906 = vmatprep.subr.mxu0 0.0
        %5907 = vmatpush1.msra.mxu0 %v5844
        %5908 = vmatprep.subr.mxu0 0.0
        %5909 = vmatpush1.msra.mxu0 %v5845
        %5910 = vmatprep.mubr.f32.mxu0 %v5811
        %5911 = vmatmul.mubr.f32.gmra.mrb[0].mxu0 %v5809
        %v5912 = vpop.f32.mrb[0].mxu0
        %v5913 = vadd.f32 0.0, %v5912
        %v5914 = vpop.f32.mrb[0].mxu0
        %5915 = vdwg.mxu0
        %v5916 = vadd.f32 %v5734, %v5913
        %v5917 = vld [vmem:[#allocation22] sm:$0x3]
        %v5918 = vlaneseq
        %v5919 = vshrl.u32 %v5918, 7
        %v5920 = vsub.s32 0, %v5919
        %v5921 = vrot.slane %v5917, %v5920
        %v5922 = vadd.f32 %v5916, %v5921
        %vm5923 = vcmp.ge.f32.partialorder %v5922, 0.0
        %v5924 = vmul.f32 %v5922, 0.01
        %v5925 = vsel %vm5923, %v5922, %v5924
        %v5926 = vlaneseq
        %v5927 = vshrl.u32 %v5926, 7
        %v5928 = vsub.s32 1, %v5927
        %v5929 = vrot.slane %v5917, %v5928
        %v5930 = vadd.f32 %v5925, %v5929
        %v5931 = vld [vmem:[#allocation23] sm:$0x3]
        %vm5932 = vcmask 31744
        %v5934 = vsel %vm5932, %v5931, 0
        %vm5936 = vcmask 1043456
        %v5938 = vsel %vm5936, %v5930, 0
        %5940 = vmatprep.subr.mxu0 0.0
        %5941 = vmatpush1.msra.mxu0 %v5938
        %5942 = vmatprep.subr.mxu0 0.0
        %5943 = vmatpush1.msra.mxu0 0.0
        %5944 = vmatprep.subr.mxu0 0.0
        %5945 = vmatpush1.msra.mxu0 0.0
        %5946 = vmatprep.subr.mxu0 0.0
        %5947 = vmatpush1.msra.mxu0 0.0
        %5948 = vmatprep.subr.mxu0 0.0
        %5949 = vmatpush1.msra.mxu0 0.0
        %5950 = vmatprep.subr.mxu0 0.0
        %5951 = vmatpush1.msra.mxu0 0.0
        %5952 = vmatprep.subr.mxu0 0.0
        %5953 = vmatpush1.msra.mxu0 0.0
        %5954 = vmatprep.subr.mxu0 0.0
        %5955 = vmatpush1.msra.mxu0 0.0
        %5956 = vmatprep.subr.mxu0 0.0
        %5957 = vmatpush1.msra.mxu0 0.0
        %5958 = vmatprep.subr.mxu0 0.0
        %5959 = vmatpush1.msra.mxu0 0.0
        %5960 = vmatprep.subr.mxu0 0.0
        %5961 = vmatpush1.msra.mxu0 0.0
        %5962 = vmatprep.subr.mxu0 0.0
        %5963 = vmatpush1.msra.mxu0 0.0
        %5964 = vmatprep.subr.mxu0 0.0
        %5965 = vmatpush1.msra.mxu0 0.0
        %5966 = vmatprep.subr.mxu0 0.0
        %5967 = vmatpush1.msra.mxu0 0.0
        %5968 = vmatprep.subr.mxu0 0.0
        %5969 = vmatpush1.msra.mxu0 0.0
        %5970 = vmatprep.subr.mxu0 0.0
        %5971 = vmatpush1.msra.mxu0 0.0
        %5972 = vmatprep.subr.mxu0 0.0
        %5973 = vmatpush1.msra.mxu0 0.0
        %5974 = vmatprep.subr.mxu0 0.0
        %5975 = vmatpush1.msra.mxu0 0.0
        %5976 = vmatprep.subr.mxu0 0.0
        %5977 = vmatpush1.msra.mxu0 0.0
        %5978 = vmatprep.subr.mxu0 0.0
        %5979 = vmatpush1.msra.mxu0 0.0
        %5980 = vmatprep.subr.mxu0 0.0
        %5981 = vmatpush1.msra.mxu0 0.0
        %5982 = vmatprep.subr.mxu0 0.0
        %5983 = vmatpush1.msra.mxu0 0.0
        %5984 = vmatprep.subr.mxu0 0.0
        %5985 = vmatpush1.msra.mxu0 0.0
        %5986 = vmatprep.subr.mxu0 0.0
        %5987 = vmatpush1.msra.mxu0 0.0
        %5988 = vmatprep.subr.mxu0 0.0
        %5989 = vmatpush1.msra.mxu0 0.0
        %5990 = vmatprep.subr.mxu0 0.0
        %5991 = vmatpush1.msra.mxu0 0.0
        %5992 = vmatprep.subr.mxu0 0.0
        %5993 = vmatpush1.msra.mxu0 0.0
        %5994 = vmatprep.subr.mxu0 0.0
        %5995 = vmatpush1.msra.mxu0 0.0
        %5996 = vmatprep.subr.mxu0 0.0
        %5997 = vmatpush1.msra.mxu0 0.0
        %5998 = vmatprep.subr.mxu0 0.0
        %5999 = vmatpush1.msra.mxu0 0.0
        %6000 = vmatprep.subr.mxu0 0.0
        %6001 = vmatpush1.msra.mxu0 0.0
        %6002 = vmatprep.subr.mxu0 0.0
        %6003 = vmatpush1.msra.mxu0 0.0
        %6004 = vmatprep.mubr.f32.mxu0 0.0
        %6005 = vmatmul.mubr.f32.gmra.mrb[0].mxu0 %v5934
        %v6006 = vpop.f32.mrb[0].mxu0
        %v6007 = vadd.f32 0.0, %v6006
        %v6008 = vpop.f32.mrb[0].mxu0
        %6009 = vdwg.mxu0
        %v6010 = vld [vmem:[%s14] sm:$0xff]
        %v6011 = vld [vmem:[%s14 + $0x8] sm:$0xff]
        %v6012 = vld [vmem:[%s14 + $0x10] sm:$0xff]
        %v6013 = vld [vmem:[%s14 + $0x18] sm:$0xff]
        %v6014 = vld [vmem:[%s14 + $0x20] sm:$0xff]
        %v6015 = vld [vmem:[%s14 + $0x28] sm:$0xff]
        %v6016 = vld [vmem:[%s14 + $0x30] sm:$0xff]
        %v6017 = vld [vmem:[%s14 + $0x38] sm:$0xff]
        %v6018 = vld [vmem:[%s14 + $0x40] sm:$0xff]
        %v6019 = vld [vmem:[%s14 + $0x48] sm:$0xff]
        %v6020 = vld [vmem:[%s14 + $0x50] sm:$0xff]
        %v6021 = vld [vmem:[%s14 + $0x58] sm:$0xff]
        %v6022 = vld [vmem:[%s14 + $0x60] sm:$0xff]
        %v6023 = vld [vmem:[%s14 + $0x68] sm:$0xff]
        %v6024 = vld [vmem:[%s14 + $0x70] sm:$0xff]
        %v6025 = vld [vmem:[%s14 + $0x78] sm:$0xff]
        %s6026 = scalar_lea.vmem [#allocation23], 2
        %v6027 = vld [vmem:[%s6026] sm:$0x3]
        %v6029 = vsel %vm5932, %v6027, 0
        %6031 = vmatprep.subr.mxu0 0.0
        %6032 = vmatpush1.msra.mxu0 %v5938
        %6033 = vmatprep.subr.mxu0 0.0
        %6034 = vmatpush1.msra.mxu0 0.0
        %6035 = vmatprep.subr.mxu0 0.0
        %6036 = vmatpush1.msra.mxu0 0.0
        %6037 = vmatprep.subr.mxu0 0.0
        %6038 = vmatpush1.msra.mxu0 0.0
        %6039 = vmatprep.subr.mxu0 0.0
        %6040 = vmatpush1.msra.mxu0 0.0
        %6041 = vmatprep.subr.mxu0 0.0
        %6042 = vmatpush1.msra.mxu0 0.0
        %6043 = vmatprep.subr.mxu0 0.0
        %6044 = vmatpush1.msra.mxu0 0.0
        %6045 = vmatprep.subr.mxu0 0.0
        %6046 = vmatpush1.msra.mxu0 0.0
        %6047 = vmatprep.subr.mxu0 0.0
        %6048 = vmatpush1.msra.mxu0 0.0
        %6049 = vmatprep.subr.mxu0 0.0
        %6050 = vmatpush1.msra.mxu0 0.0
        %6051 = vmatprep.subr.mxu0 0.0
        %6052 = vmatpush1.msra.mxu0 0.0
        %6053 = vmatprep.subr.mxu0 0.0
        %6054 = vmatpush1.msra.mxu0 0.0
        %6055 = vmatprep.subr.mxu0 0.0
        %6056 = vmatpush1.msra.mxu0 0.0
        %6057 = vmatprep.subr.mxu0 0.0
        %6058 = vmatpush1.msra.mxu0 0.0
        %6059 = vmatprep.subr.mxu0 0.0
        %6060 = vmatpush1.msra.mxu0 0.0
        %6061 = vmatprep.subr.mxu0 0.0
        %6062 = vmatpush1.msra.mxu0 0.0
        %6063 = vmatprep.subr.mxu0 0.0
        %6064 = vmatpush1.msra.mxu0 0.0
        %6065 = vmatprep.subr.mxu0 0.0
        %6066 = vmatpush1.msra.mxu0 0.0
        %6067 = vmatprep.subr.mxu0 0.0
        %6068 = vmatpush1.msra.mxu0 0.0
        %6069 = vmatprep.subr.mxu0 0.0
        %6070 = vmatpush1.msra.mxu0 0.0
        %6071 = vmatprep.subr.mxu0 0.0
        %6072 = vmatpush1.msra.mxu0 0.0
        %6073 = vmatprep.subr.mxu0 0.0
        %6074 = vmatpush1.msra.mxu0 0.0
        %6075 = vmatprep.subr.mxu0 0.0
        %6076 = vmatpush1.msra.mxu0 0.0
        %6077 = vmatprep.subr.mxu0 0.0
        %6078 = vmatpush1.msra.mxu0 0.0
        %6079 = vmatprep.subr.mxu0 0.0
        %6080 = vmatpush1.msra.mxu0 0.0
        %6081 = vmatprep.subr.mxu0 0.0
        %6082 = vmatpush1.msra.mxu0 0.0
        %6083 = vmatprep.subr.mxu0 0.0
        %6084 = vmatpush1.msra.mxu0 0.0
        %6085 = vmatprep.subr.mxu0 0.0
        %6086 = vmatpush1.msra.mxu0 0.0
        %6087 = vmatprep.subr.mxu0 0.0
        %6088 = vmatpush1.msra.mxu0 0.0
        %6089 = vmatprep.subr.mxu0 0.0
        %6090 = vmatpush1.msra.mxu0 0.0
        %6091 = vmatprep.subr.mxu0 0.0
        %6092 = vmatpush1.msra.mxu0 0.0
        %6093 = vmatprep.subr.mxu0 0.0
        %6094 = vmatpush1.msra.mxu0 0.0
        %6095 = vmatprep.mubr.f32.mxu0 0.0
        %6096 = vmatmul.mubr.f32.gmra.mrb[0].mxu0 %v6029
        %v6097 = vpop.f32.mrb[0].mxu0
        %v6098 = vadd.f32 0.0, %v6097
        %v6099 = vpop.f32.mrb[0].mxu0
        %6100 = vdwg.mxu0
        %s6101 = scalar_lea.vmem %s14, 128
        %v6102 = vld [vmem:[%s6101] sm:$0xff]
        %v6103 = vld [vmem:[%s6101 + $0x8] sm:$0xff]
        %v6104 = vld [vmem:[%s6101 + $0x10] sm:$0xff]
        %v6105 = vld [vmem:[%s6101 + $0x18] sm:$0xff]
        %v6106 = vld [vmem:[%s6101 + $0x20] sm:$0xff]
        %v6107 = vld [vmem:[%s6101 + $0x28] sm:$0xff]
        %v6108 = vld [vmem:[%s6101 + $0x30] sm:$0xff]
        %v6109 = vld [vmem:[%s6101 + $0x38] sm:$0xff]
        %v6110 = vld [vmem:[%s6101 + $0x40] sm:$0xff]
        %v6111 = vld [vmem:[%s6101 + $0x48] sm:$0xff]
        %v6112 = vld [vmem:[%s6101 + $0x50] sm:$0xff]
        %v6113 = vld [vmem:[%s6101 + $0x58] sm:$0xff]
        %v6114 = vld [vmem:[%s6101 + $0x60] sm:$0xff]
        %v6115 = vld [vmem:[%s6101 + $0x68] sm:$0xff]
        %v6116 = vld [vmem:[%s6101 + $0x70] sm:$0xff]
        %v6117 = vld [vmem:[%s6101 + $0x78] sm:$0xff]
        %6118 = vmatprep.subr.mxu0 0.0
        %6119 = vmatpush1.msra.mxu0 %v6102
        %6120 = vmatprep.subr.mxu0 0.0
        %6121 = vmatpush1.msra.mxu0 %v6103
        %6122 = vmatprep.subr.mxu0 0.0
        %6123 = vmatpush1.msra.mxu0 %v6104
        %6124 = vmatprep.subr.mxu0 0.0
        %6125 = vmatpush1.msra.mxu0 %v6105
        %6126 = vmatprep.subr.mxu0 0.0
        %6127 = vmatpush1.msra.mxu0 %v6106
        %6128 = vmatprep.subr.mxu0 0.0
        %6129 = vmatpush1.msra.mxu0 %v6107
        %6130 = vmatprep.subr.mxu0 0.0
        %6131 = vmatpush1.msra.mxu0 %v6108
        %6132 = vmatprep.subr.mxu0 0.0
        %6133 = vmatpush1.msra.mxu0 %v6109
        %6134 = vmatprep.subr.mxu0 0.0
        %6135 = vmatpush1.msra.mxu0 %v6110
        %6136 = vmatprep.subr.mxu0 0.0
        %6137 = vmatpush1.msra.mxu0 %v6111
        %6138 = vmatprep.subr.mxu0 0.0
        %6139 = vmatpush1.msra.mxu0 %v6112
        %6140 = vmatprep.subr.mxu0 0.0
        %6141 = vmatpush1.msra.mxu0 %v6113
        %6142 = vmatprep.subr.mxu0 0.0
        %6143 = vmatpush1.msra.mxu0 %v6114
        %6144 = vmatprep.subr.mxu0 0.0
        %6145 = vmatpush1.msra.mxu0 %v6115
        %6146 = vmatprep.subr.mxu0 0.0
        %6147 = vmatpush1.msra.mxu0 %v6116
        %6148 = vmatprep.subr.mxu0 0.0
        %6149 = vmatpush1.msra.mxu0 %v6117
        %6150 = vmatprep.subr.mxu0 0.0
        %6151 = vmatpush1.msra.mxu0 0.0
        %6152 = vmatprep.subr.mxu0 0.0
        %6153 = vmatpush1.msra.mxu0 0.0
        %6154 = vmatprep.subr.mxu0 0.0
        %6155 = vmatpush1.msra.mxu0 0.0
        %6156 = vmatprep.subr.mxu0 0.0
        %6157 = vmatpush1.msra.mxu0 0.0
        %6158 = vmatprep.subr.mxu0 0.0
        %6159 = vmatpush1.msra.mxu0 0.0
        %6160 = vmatprep.subr.mxu0 0.0
        %6161 = vmatpush1.msra.mxu0 0.0
        %6162 = vmatprep.subr.mxu0 0.0
        %6163 = vmatpush1.msra.mxu0 0.0
        %6164 = vmatprep.subr.mxu0 0.0
        %6165 = vmatpush1.msra.mxu0 0.0
        %6166 = vmatprep.subr.mxu0 0.0
        %6167 = vmatpush1.msra.mxu0 0.0
        %6168 = vmatprep.subr.mxu0 0.0
        %6169 = vmatpush1.msra.mxu0 0.0
        %6170 = vmatprep.subr.mxu0 0.0
        %6171 = vmatpush1.msra.mxu0 0.0
        %6172 = vmatprep.subr.mxu0 0.0
        %6173 = vmatpush1.msra.mxu0 0.0
        %6174 = vmatprep.subr.mxu0 0.0
        %6175 = vmatpush1.msra.mxu0 0.0
        %6176 = vmatprep.subr.mxu0 0.0
        %6177 = vmatpush1.msra.mxu0 0.0
        %6178 = vmatprep.subr.mxu0 0.0
        %6179 = vmatpush1.msra.mxu0 0.0
        %6180 = vmatprep.subr.mxu0 0.0
        %6181 = vmatpush1.msra.mxu0 0.0
        %6182 = vmatprep.mubr.f32.mxu0 0.0
        %6183 = vmatmul.mubr.f32.gmra.mrb[0].mxu0 %v6098
        %v6184 = vpop.f32.mrb[0].mxu0
        %v6185 = vadd.f32 0.0, %v6184
        %v6186 = vpop.f32.mrb[0].mxu0
        %6187 = vdwg.mxu0
        %6188 = vmatprep.subr.mxu0 0.0
        %6189 = vmatpush1.msra.mxu0 %v6010
        %6190 = vmatprep.subr.mxu0 0.0
        %6191 = vmatpush1.msra.mxu0 %v6011
        %6192 = vmatprep.subr.mxu0 0.0
        %6193 = vmatpush1.msra.mxu0 %v6012
        %6194 = vmatprep.subr.mxu0 0.0
        %6195 = vmatpush1.msra.mxu0 %v6013
        %6196 = vmatprep.subr.mxu0 0.0
        %6197 = vmatpush1.msra.mxu0 %v6014
        %6198 = vmatprep.subr.mxu0 0.0
        %6199 = vmatpush1.msra.mxu0 %v6015
        %6200 = vmatprep.subr.mxu0 0.0
        %6201 = vmatpush1.msra.mxu0 %v6016
        %6202 = vmatprep.subr.mxu0 0.0
        %6203 = vmatpush1.msra.mxu0 %v6017
        %6204 = vmatprep.subr.mxu0 0.0
        %6205 = vmatpush1.msra.mxu0 %v6018
        %6206 = vmatprep.subr.mxu0 0.0
        %6207 = vmatpush1.msra.mxu0 %v6019
        %6208 = vmatprep.subr.mxu0 0.0
        %6209 = vmatpush1.msra.mxu0 %v6020
        %6210 = vmatprep.subr.mxu0 0.0
        %6211 = vmatpush1.msra.mxu0 %v6021
        %6212 = vmatprep.subr.mxu0 0.0
        %6213 = vmatpush1.msra.mxu0 %v6022
        %6214 = vmatprep.subr.mxu0 0.0
        %6215 = vmatpush1.msra.mxu0 %v6023
        %6216 = vmatprep.subr.mxu0 0.0
        %6217 = vmatpush1.msra.mxu0 %v6024
        %6218 = vmatprep.subr.mxu0 0.0
        %6219 = vmatpush1.msra.mxu0 %v6025
        %6220 = vmatprep.subr.mxu0 0.0
        %6221 = vmatpush1.msra.mxu0 0.0
        %6222 = vmatprep.subr.mxu0 0.0
        %6223 = vmatpush1.msra.mxu0 0.0
        %6224 = vmatprep.subr.mxu0 0.0
        %6225 = vmatpush1.msra.mxu0 0.0
        %6226 = vmatprep.subr.mxu0 0.0
        %6227 = vmatpush1.msra.mxu0 0.0
        %6228 = vmatprep.subr.mxu0 0.0
        %6229 = vmatpush1.msra.mxu0 0.0
        %6230 = vmatprep.subr.mxu0 0.0
        %6231 = vmatpush1.msra.mxu0 0.0
        %6232 = vmatprep.subr.mxu0 0.0
        %6233 = vmatpush1.msra.mxu0 0.0
        %6234 = vmatprep.subr.mxu0 0.0
        %6235 = vmatpush1.msra.mxu0 0.0
        %6236 = vmatprep.subr.mxu0 0.0
        %6237 = vmatpush1.msra.mxu0 0.0
        %6238 = vmatprep.subr.mxu0 0.0
        %6239 = vmatpush1.msra.mxu0 0.0
        %6240 = vmatprep.subr.mxu0 0.0
        %6241 = vmatpush1.msra.mxu0 0.0
        %6242 = vmatprep.subr.mxu0 0.0
        %6243 = vmatpush1.msra.mxu0 0.0
        %6244 = vmatprep.subr.mxu0 0.0
        %6245 = vmatpush1.msra.mxu0 0.0
        %6246 = vmatprep.subr.mxu0 0.0
        %6247 = vmatpush1.msra.mxu0 0.0
        %6248 = vmatprep.subr.mxu0 0.0
        %6249 = vmatpush1.msra.mxu0 0.0
        %6250 = vmatprep.subr.mxu0 0.0
        %6251 = vmatpush1.msra.mxu0 0.0
        %6252 = vmatprep.mubr.f32.mxu0 0.0
        %6253 = vmatmul.mubr.f32.gmra.mrb[0].mxu0 %v6007
        %v6254 = vpop.f32.mrb[0].mxu0
        %v6255 = vadd.f32 %v6185, %v6254
        %v6256 = vpop.f32.mrb[0].mxu0
        %6257 = vdwg.mxu0
        %s6258 = scalar_lea.vmem [#allocation23], 4
        %v6259 = vld [vmem:[%s6258] sm:$0x3]
        %v6261 = vsel %vm5932, %v6259, 0
        %6263 = vmatprep.subr.mxu0 0.0
        %6264 = vmatpush1.msra.mxu0 %v5938
        %6265 = vmatprep.subr.mxu0 0.0
        %6266 = vmatpush1.msra.mxu0 0.0
        %6267 = vmatprep.subr.mxu0 0.0
        %6268 = vmatpush1.msra.mxu0 0.0
        %6269 = vmatprep.subr.mxu0 0.0
        %6270 = vmatpush1.msra.mxu0 0.0
        %6271 = vmatprep.subr.mxu0 0.0
        %6272 = vmatpush1.msra.mxu0 0.0
        %6273 = vmatprep.subr.mxu0 0.0
        %6274 = vmatpush1.msra.mxu0 0.0
        %6275 = vmatprep.subr.mxu0 0.0
        %6276 = vmatpush1.msra.mxu0 0.0
        %6277 = vmatprep.subr.mxu0 0.0
        %6278 = vmatpush1.msra.mxu0 0.0
        %6279 = vmatprep.subr.mxu0 0.0
        %6280 = vmatpush1.msra.mxu0 0.0
        %6281 = vmatprep.subr.mxu0 0.0
        %6282 = vmatpush1.msra.mxu0 0.0
        %6283 = vmatprep.subr.mxu0 0.0
        %6284 = vmatpush1.msra.mxu0 0.0
        %6285 = vmatprep.subr.mxu0 0.0
        %6286 = vmatpush1.msra.mxu0 0.0
        %6287 = vmatprep.subr.mxu0 0.0
        %6288 = vmatpush1.msra.mxu0 0.0
        %6289 = vmatprep.subr.mxu0 0.0
        %6290 = vmatpush1.msra.mxu0 0.0
        %6291 = vmatprep.subr.mxu0 0.0
        %6292 = vmatpush1.msra.mxu0 0.0
        %6293 = vmatprep.subr.mxu0 0.0
        %6294 = vmatpush1.msra.mxu0 0.0
        %6295 = vmatprep.subr.mxu0 0.0
        %6296 = vmatpush1.msra.mxu0 0.0
        %6297 = vmatprep.subr.mxu0 0.0
        %6298 = vmatpush1.msra.mxu0 0.0
        %6299 = vmatprep.subr.mxu0 0.0
        %6300 = vmatpush1.msra.mxu0 0.0
        %6301 = vmatprep.subr.mxu0 0.0
        %6302 = vmatpush1.msra.mxu0 0.0
        %6303 = vmatprep.subr.mxu0 0.0
        %6304 = vmatpush1.msra.mxu0 0.0
        %6305 = vmatprep.subr.mxu0 0.0
        %6306 = vmatpush1.msra.mxu0 0.0
        %6307 = vmatprep.subr.mxu0 0.0
        %6308 = vmatpush1.msra.mxu0 0.0
        %6309 = vmatprep.subr.mxu0 0.0
        %6310 = vmatpush1.msra.mxu0 0.0
        %6311 = vmatprep.subr.mxu0 0.0
        %6312 = vmatpush1.msra.mxu0 0.0
        %6313 = vmatprep.subr.mxu0 0.0
        %6314 = vmatpush1.msra.mxu0 0.0
        %6315 = vmatprep.subr.mxu0 0.0
        %6316 = vmatpush1.msra.mxu0 0.0
        %6317 = vmatprep.subr.mxu0 0.0
        %6318 = vmatpush1.msra.mxu0 0.0
        %6319 = vmatprep.subr.mxu0 0.0
        %6320 = vmatpush1.msra.mxu0 0.0
        %6321 = vmatprep.subr.mxu0 0.0
        %6322 = vmatpush1.msra.mxu0 0.0
        %6323 = vmatprep.subr.mxu0 0.0
        %6324 = vmatpush1.msra.mxu0 0.0
        %6325 = vmatprep.subr.mxu0 0.0
        %6326 = vmatpush1.msra.mxu0 0.0
        %6327 = vmatprep.mubr.f32.mxu0 0.0
        %6328 = vmatmul.mubr.f32.gmra.mrb[0].mxu0 %v6261
        %v6329 = vpop.f32.mrb[0].mxu0
        %v6330 = vadd.f32 0.0, %v6329
        %v6331 = vpop.f32.mrb[0].mxu0
        %6332 = vdwg.mxu0
        %s6333 = scalar_lea.vmem %s14, 256
        %v6334 = vld [vmem:[%s6333] sm:$0xff]
        %v6335 = vld [vmem:[%s6333 + $0x8] sm:$0xff]
        %v6336 = vld [vmem:[%s6333 + $0x10] sm:$0xff]
        %v6337 = vld [vmem:[%s6333 + $0x18] sm:$0xff]
        %v6338 = vld [vmem:[%s6333 + $0x20] sm:$0xff]
        %v6339 = vld [vmem:[%s6333 + $0x28] sm:$0xff]
        %v6340 = vld [vmem:[%s6333 + $0x30] sm:$0xff]
        %v6341 = vld [vmem:[%s6333 + $0x38] sm:$0xff]
        %v6342 = vld [vmem:[%s6333 + $0x40] sm:$0xff]
        %v6343 = vld [vmem:[%s6333 + $0x48] sm:$0xff]
        %v6344 = vld [vmem:[%s6333 + $0x50] sm:$0xff]
        %v6345 = vld [vmem:[%s6333 + $0x58] sm:$0xff]
        %v6346 = vld [vmem:[%s6333 + $0x60] sm:$0xff]
        %v6347 = vld [vmem:[%s6333 + $0x68] sm:$0xff]
        %v6348 = vld [vmem:[%s6333 + $0x70] sm:$0xff]
        %v6349 = vld [vmem:[%s6333 + $0x78] sm:$0xff]
        %6350 = vmatprep.subr.mxu0 0.0
        %6351 = vmatpush1.msra.mxu0 %v6334
        %6352 = vmatprep.subr.mxu0 0.0
        %6353 = vmatpush1.msra.mxu0 %v6335
        %6354 = vmatprep.subr.mxu0 0.0
        %6355 = vmatpush1.msra.mxu0 %v6336
        %6356 = vmatprep.subr.mxu0 0.0
        %6357 = vmatpush1.msra.mxu0 %v6337
        %6358 = vmatprep.subr.mxu0 0.0
        %6359 = vmatpush1.msra.mxu0 %v6338
        %6360 = vmatprep.subr.mxu0 0.0
        %6361 = vmatpush1.msra.mxu0 %v6339
        %6362 = vmatprep.subr.mxu0 0.0
        %6363 = vmatpush1.msra.mxu0 %v6340
        %6364 = vmatprep.subr.mxu0 0.0
        %6365 = vmatpush1.msra.mxu0 %v6341
        %6366 = vmatprep.subr.mxu0 0.0
        %6367 = vmatpush1.msra.mxu0 %v6342
        %6368 = vmatprep.subr.mxu0 0.0
        %6369 = vmatpush1.msra.mxu0 %v6343
        %6370 = vmatprep.subr.mxu0 0.0
        %6371 = vmatpush1.msra.mxu0 %v6344
        %6372 = vmatprep.subr.mxu0 0.0
        %6373 = vmatpush1.msra.mxu0 %v6345
        %6374 = vmatprep.subr.mxu0 0.0
        %6375 = vmatpush1.msra.mxu0 %v6346
        %6376 = vmatprep.subr.mxu0 0.0
        %6377 = vmatpush1.msra.mxu0 %v6347
        %6378 = vmatprep.subr.mxu0 0.0
        %6379 = vmatpush1.msra.mxu0 %v6348
        %6380 = vmatprep.subr.mxu0 0.0
        %6381 = vmatpush1.msra.mxu0 %v6349
        %6382 = vmatprep.subr.mxu0 0.0
        %6383 = vmatpush1.msra.mxu0 0.0
        %6384 = vmatprep.subr.mxu0 0.0
        %6385 = vmatpush1.msra.mxu0 0.0
        %6386 = vmatprep.subr.mxu0 0.0
        %6387 = vmatpush1.msra.mxu0 0.0
        %6388 = vmatprep.subr.mxu0 0.0
        %6389 = vmatpush1.msra.mxu0 0.0
        %6390 = vmatprep.subr.mxu0 0.0
        %6391 = vmatpush1.msra.mxu0 0.0
        %6392 = vmatprep.subr.mxu0 0.0
        %6393 = vmatpush1.msra.mxu0 0.0
        %6394 = vmatprep.subr.mxu0 0.0
        %6395 = vmatpush1.msra.mxu0 0.0
        %6396 = vmatprep.subr.mxu0 0.0
        %6397 = vmatpush1.msra.mxu0 0.0
        %6398 = vmatprep.subr.mxu0 0.0
        %6399 = vmatpush1.msra.mxu0 0.0
        %6400 = vmatprep.subr.mxu0 0.0
        %6401 = vmatpush1.msra.mxu0 0.0
        %6402 = vmatprep.subr.mxu0 0.0
        %6403 = vmatpush1.msra.mxu0 0.0
        %6404 = vmatprep.subr.mxu0 0.0
        %6405 = vmatpush1.msra.mxu0 0.0
        %6406 = vmatprep.subr.mxu0 0.0
        %6407 = vmatpush1.msra.mxu0 0.0
        %6408 = vmatprep.subr.mxu0 0.0
        %6409 = vmatpush1.msra.mxu0 0.0
        %6410 = vmatprep.subr.mxu0 0.0
        %6411 = vmatpush1.msra.mxu0 0.0
        %6412 = vmatprep.subr.mxu0 0.0
        %6413 = vmatpush1.msra.mxu0 0.0
        %6414 = vmatprep.mubr.f32.mxu0 0.0
        %6415 = vmatmul.mubr.f32.gmra.mrb[0].mxu0 %v6330
        %v6416 = vpop.f32.mrb[0].mxu0
        %v6417 = vadd.f32 0.0, %v6416
        %v6418 = vpop.f32.mrb[0].mxu0
        %6419 = vdwg.mxu0
        %v6420 = vadd.f32 %v6255, %v6417
        %v6421 = vld [vmem:[#allocation25] sm:$0x3]
        %v6422 = vlaneseq
        %v6423 = vshrl.u32 %v6422, 7
        %v6424 = vsub.s32 0, %v6423
        %v6425 = vrot.slane %v6421, %v6424
        %v6426 = vadd.f32 %v6420, %v6425
        %vm6427 = vcmp.ge.f32.partialorder %v6426, 0.0
        %v6428 = vmul.f32 %v6426, 0.01
        %v6429 = vsel %vm6427, %v6426, %v6428
        %v6430 = vlaneseq
        %v6431 = vshrl.u32 %v6430, 7
        %v6432 = vsub.s32 1, %v6431
        %v6433 = vrot.slane %v6421, %v6432
        %v6434 = vadd.f32 %v6429, %v6433
        %v6435 = vld [vmem:[%s16] sm:$0x1]
        %vm6436 = vcmask 15360
        %v6438 = vsel %vm6436, %v6435, 0
        %vm6440 = vcmask 1041408
        %v6442 = vsel %vm6440, %v6434, 0
        %6444 = vmatprep.subr.mxu0 0.0
        %6445 = vmatpush1.msra.mxu0 %v6442
        %6446 = vmatprep.subr.mxu0 0.0
        %6447 = vmatpush1.msra.mxu0 0.0
        %6448 = vmatprep.subr.mxu0 0.0
        %6449 = vmatpush1.msra.mxu0 0.0
        %6450 = vmatprep.subr.mxu0 0.0
        %6451 = vmatpush1.msra.mxu0 0.0
        %6452 = vmatprep.subr.mxu0 0.0
        %6453 = vmatpush1.msra.mxu0 0.0
        %6454 = vmatprep.subr.mxu0 0.0
        %6455 = vmatpush1.msra.mxu0 0.0
        %6456 = vmatprep.subr.mxu0 0.0
        %6457 = vmatpush1.msra.mxu0 0.0
        %6458 = vmatprep.subr.mxu0 0.0
        %6459 = vmatpush1.msra.mxu0 0.0
        %6460 = vmatprep.subr.mxu0 0.0
        %6461 = vmatpush1.msra.mxu0 0.0
        %6462 = vmatprep.subr.mxu0 0.0
        %6463 = vmatpush1.msra.mxu0 0.0
        %6464 = vmatprep.subr.mxu0 0.0
        %6465 = vmatpush1.msra.mxu0 0.0
        %6466 = vmatprep.subr.mxu0 0.0
        %6467 = vmatpush1.msra.mxu0 0.0
        %6468 = vmatprep.subr.mxu0 0.0
        %6469 = vmatpush1.msra.mxu0 0.0
        %6470 = vmatprep.subr.mxu0 0.0
        %6471 = vmatpush1.msra.mxu0 0.0
        %6472 = vmatprep.subr.mxu0 0.0
        %6473 = vmatpush1.msra.mxu0 0.0
        %6474 = vmatprep.subr.mxu0 0.0
        %6475 = vmatpush1.msra.mxu0 0.0
        %6476 = vmatprep.subr.mxu0 0.0
        %6477 = vmatpush1.msra.mxu0 0.0
        %6478 = vmatprep.subr.mxu0 0.0
        %6479 = vmatpush1.msra.mxu0 0.0
        %6480 = vmatprep.subr.mxu0 0.0
        %6481 = vmatpush1.msra.mxu0 0.0
        %6482 = vmatprep.subr.mxu0 0.0
        %6483 = vmatpush1.msra.mxu0 0.0
        %6484 = vmatprep.subr.mxu0 0.0
        %6485 = vmatpush1.msra.mxu0 0.0
        %6486 = vmatprep.subr.mxu0 0.0
        %6487 = vmatpush1.msra.mxu0 0.0
        %6488 = vmatprep.subr.mxu0 0.0
        %6489 = vmatpush1.msra.mxu0 0.0
        %6490 = vmatprep.subr.mxu0 0.0
        %6491 = vmatpush1.msra.mxu0 0.0
        %6492 = vmatprep.subr.mxu0 0.0
        %6493 = vmatpush1.msra.mxu0 0.0
        %6494 = vmatprep.subr.mxu0 0.0
        %6495 = vmatpush1.msra.mxu0 0.0
        %6496 = vmatprep.subr.mxu0 0.0
        %6497 = vmatpush1.msra.mxu0 0.0
        %6498 = vmatprep.subr.mxu0 0.0
        %6499 = vmatpush1.msra.mxu0 0.0
        %6500 = vmatprep.subr.mxu0 0.0
        %6501 = vmatpush1.msra.mxu0 0.0
        %6502 = vmatprep.subr.mxu0 0.0
        %6503 = vmatpush1.msra.mxu0 0.0
        %6504 = vmatprep.subr.mxu0 0.0
        %6505 = vmatpush1.msra.mxu0 0.0
        %6506 = vmatprep.subr.mxu0 0.0
        %6507 = vmatpush1.msra.mxu0 0.0
        %6508 = vmatprep.mubr.f32.mxu0 0.0
        %6509 = vmatmul.mubr.f32.gmra.mrb[0].mxu0 %v6438
        %v6510 = vpop.f32.mrb[0].mxu0
        %v6511 = vadd.f32 0.0, %v6510
        %v6512 = vpop.f32.mrb[0].mxu0
        %6513 = vdwg.mxu0
        %v6514 = vld [vmem:[%s17] sm:$0xff]
        %v6515 = vld [vmem:[%s17 + $0x8] sm:$0xff]
        %v6516 = vld [vmem:[%s17 + $0x10] sm:$0xff]
        %v6517 = vld [vmem:[%s17 + $0x18] sm:$0xff]
        %v6518 = vld [vmem:[%s17 + $0x20] sm:$0xff]
        %v6519 = vld [vmem:[%s17 + $0x28] sm:$0xff]
        %v6520 = vld [vmem:[%s17 + $0x30] sm:$0xff]
        %v6521 = vld [vmem:[%s17 + $0x38] sm:$0xff]
        %s6522 = scalar_lea.vmem %s16, 1
        %v6523 = vld [vmem:[%s6522] sm:$0x1]
        %v6525 = vsel %vm6436, %v6523, 0
        %6527 = vmatprep.subr.mxu0 0.0
        %6528 = vmatpush1.msra.mxu0 %v6442
        %6529 = vmatprep.subr.mxu0 0.0
        %6530 = vmatpush1.msra.mxu0 0.0
        %6531 = vmatprep.subr.mxu0 0.0
        %6532 = vmatpush1.msra.mxu0 0.0
        %6533 = vmatprep.subr.mxu0 0.0
        %6534 = vmatpush1.msra.mxu0 0.0
        %6535 = vmatprep.subr.mxu0 0.0
        %6536 = vmatpush1.msra.mxu0 0.0
        %6537 = vmatprep.subr.mxu0 0.0
        %6538 = vmatpush1.msra.mxu0 0.0
        %6539 = vmatprep.subr.mxu0 0.0
        %6540 = vmatpush1.msra.mxu0 0.0
        %6541 = vmatprep.subr.mxu0 0.0
        %6542 = vmatpush1.msra.mxu0 0.0
        %6543 = vmatprep.subr.mxu0 0.0
        %6544 = vmatpush1.msra.mxu0 0.0
        %6545 = vmatprep.subr.mxu0 0.0
        %6546 = vmatpush1.msra.mxu0 0.0
        %6547 = vmatprep.subr.mxu0 0.0
        %6548 = vmatpush1.msra.mxu0 0.0
        %6549 = vmatprep.subr.mxu0 0.0
        %6550 = vmatpush1.msra.mxu0 0.0
        %6551 = vmatprep.subr.mxu0 0.0
        %6552 = vmatpush1.msra.mxu0 0.0
        %6553 = vmatprep.subr.mxu0 0.0
        %6554 = vmatpush1.msra.mxu0 0.0
        %6555 = vmatprep.subr.mxu0 0.0
        %6556 = vmatpush1.msra.mxu0 0.0
        %6557 = vmatprep.subr.mxu0 0.0
        %6558 = vmatpush1.msra.mxu0 0.0
        %6559 = vmatprep.subr.mxu0 0.0
        %6560 = vmatpush1.msra.mxu0 0.0
        %6561 = vmatprep.subr.mxu0 0.0
        %6562 = vmatpush1.msra.mxu0 0.0
        %6563 = vmatprep.subr.mxu0 0.0
        %6564 = vmatpush1.msra.mxu0 0.0
        %6565 = vmatprep.subr.mxu0 0.0
        %6566 = vmatpush1.msra.mxu0 0.0
        %6567 = vmatprep.subr.mxu0 0.0
        %6568 = vmatpush1.msra.mxu0 0.0
        %6569 = vmatprep.subr.mxu0 0.0
        %6570 = vmatpush1.msra.mxu0 0.0
        %6571 = vmatprep.subr.mxu0 0.0
        %6572 = vmatpush1.msra.mxu0 0.0
        %6573 = vmatprep.subr.mxu0 0.0
        %6574 = vmatpush1.msra.mxu0 0.0
        %6575 = vmatprep.subr.mxu0 0.0
        %6576 = vmatpush1.msra.mxu0 0.0
        %6577 = vmatprep.subr.mxu0 0.0
        %6578 = vmatpush1.msra.mxu0 0.0
        %6579 = vmatprep.subr.mxu0 0.0
        %6580 = vmatpush1.msra.mxu0 0.0
        %6581 = vmatprep.subr.mxu0 0.0
        %6582 = vmatpush1.msra.mxu0 0.0
        %6583 = vmatprep.subr.mxu0 0.0
        %6584 = vmatpush1.msra.mxu0 0.0
        %6585 = vmatprep.subr.mxu0 0.0
        %6586 = vmatpush1.msra.mxu0 0.0
        %6587 = vmatprep.subr.mxu0 0.0
        %6588 = vmatpush1.msra.mxu0 0.0
        %6589 = vmatprep.subr.mxu0 0.0
        %6590 = vmatpush1.msra.mxu0 0.0
        %6591 = vmatprep.mubr.f32.mxu0 0.0
        %6592 = vmatmul.mubr.f32.gmra.mrb[0].mxu0 %v6525
        %v6593 = vpop.f32.mrb[0].mxu0
        %v6594 = vadd.f32 0.0, %v6593
        %v6595 = vpop.f32.mrb[0].mxu0
        %6596 = vdwg.mxu0
        %s6597 = scalar_lea.vmem %s17, 64
        %v6598 = vld [vmem:[%s6597] sm:$0xff]
        %v6599 = vld [vmem:[%s6597 + $0x8] sm:$0xff]
        %v6600 = vld [vmem:[%s6597 + $0x10] sm:$0xff]
        %v6601 = vld [vmem:[%s6597 + $0x18] sm:$0xff]
        %v6602 = vld [vmem:[%s6597 + $0x20] sm:$0xff]
        %v6603 = vld [vmem:[%s6597 + $0x28] sm:$0xff]
        %v6604 = vld [vmem:[%s6597 + $0x30] sm:$0xff]
        %v6605 = vld [vmem:[%s6597 + $0x38] sm:$0xff]
        %vm6606 = vcmask 523264
        %v6608 = vsel %vm6606, %v6594, 0
        %6610 = vmatprep.subr.mxu0 0.0
        %6611 = vmatpush1.msra.mxu0 %v6598
        %6612 = vmatprep.subr.mxu0 0.0
        %6613 = vmatpush1.msra.mxu0 %v6599
        %6614 = vmatprep.subr.mxu0 0.0
        %6615 = vmatpush1.msra.mxu0 %v6600
        %6616 = vmatprep.subr.mxu0 0.0
        %6617 = vmatpush1.msra.mxu0 %v6601
        %6618 = vmatprep.subr.mxu0 0.0
        %6619 = vmatpush1.msra.mxu0 %v6602
        %6620 = vmatprep.subr.mxu0 0.0
        %6621 = vmatpush1.msra.mxu0 %v6603
        %6622 = vmatprep.subr.mxu0 0.0
        %6623 = vmatpush1.msra.mxu0 %v6604
        %6624 = vmatprep.subr.mxu0 0.0
        %6625 = vmatpush1.msra.mxu0 %v6605
        %6626 = vmatprep.subr.mxu0 0.0
        %6627 = vmatpush1.msra.mxu0 0.0
        %6628 = vmatprep.subr.mxu0 0.0
        %6629 = vmatpush1.msra.mxu0 0.0
        %6630 = vmatprep.subr.mxu0 0.0
        %6631 = vmatpush1.msra.mxu0 0.0
        %6632 = vmatprep.subr.mxu0 0.0
        %6633 = vmatpush1.msra.mxu0 0.0
        %6634 = vmatprep.subr.mxu0 0.0
        %6635 = vmatpush1.msra.mxu0 0.0
        %6636 = vmatprep.subr.mxu0 0.0
        %6637 = vmatpush1.msra.mxu0 0.0
        %6638 = vmatprep.subr.mxu0 0.0
        %6639 = vmatpush1.msra.mxu0 0.0
        %6640 = vmatprep.subr.mxu0 0.0
        %6641 = vmatpush1.msra.mxu0 0.0
        %6642 = vmatprep.subr.mxu0 0.0
        %6643 = vmatpush1.msra.mxu0 0.0
        %6644 = vmatprep.subr.mxu0 0.0
        %6645 = vmatpush1.msra.mxu0 0.0
        %6646 = vmatprep.subr.mxu0 0.0
        %6647 = vmatpush1.msra.mxu0 0.0
        %6648 = vmatprep.subr.mxu0 0.0
        %6649 = vmatpush1.msra.mxu0 0.0
        %6650 = vmatprep.subr.mxu0 0.0
        %6651 = vmatpush1.msra.mxu0 0.0
        %6652 = vmatprep.subr.mxu0 0.0
        %6653 = vmatpush1.msra.mxu0 0.0
        %6654 = vmatprep.subr.mxu0 0.0
        %6655 = vmatpush1.msra.mxu0 0.0
        %6656 = vmatprep.subr.mxu0 0.0
        %6657 = vmatpush1.msra.mxu0 0.0
        %6658 = vmatprep.subr.mxu0 0.0
        %6659 = vmatpush1.msra.mxu0 0.0
        %6660 = vmatprep.subr.mxu0 0.0
        %6661 = vmatpush1.msra.mxu0 0.0
        %6662 = vmatprep.subr.mxu0 0.0
        %6663 = vmatpush1.msra.mxu0 0.0
        %6664 = vmatprep.subr.mxu0 0.0
        %6665 = vmatpush1.msra.mxu0 0.0
        %6666 = vmatprep.subr.mxu0 0.0
        %6667 = vmatpush1.msra.mxu0 0.0
        %6668 = vmatprep.subr.mxu0 0.0
        %6669 = vmatpush1.msra.mxu0 0.0
        %6670 = vmatprep.subr.mxu0 0.0
        %6671 = vmatpush1.msra.mxu0 0.0
        %6672 = vmatprep.subr.mxu0 0.0
        %6673 = vmatpush1.msra.mxu0 0.0
        %6674 = vmatprep.mubr.f32.mxu0 0.0
        %6675 = vmatmul.mubr.f32.gmra.mrb[0].mxu0 %v6608
        %v6676 = vpop.f32.mrb[0].mxu0
        %v6677 = vadd.f32 0.0, %v6676
        %v6678 = vpop.f32.mrb[0].mxu0
        %6679 = vdwg.mxu0
        %v6681 = vsel %vm6606, %v6511, 0
        %6683 = vmatprep.subr.mxu0 0.0
        %6684 = vmatpush1.msra.mxu0 %v6514
        %6685 = vmatprep.subr.mxu0 0.0
        %6686 = vmatpush1.msra.mxu0 %v6515
        %6687 = vmatprep.subr.mxu0 0.0
        %6688 = vmatpush1.msra.mxu0 %v6516
        %6689 = vmatprep.subr.mxu0 0.0
        %6690 = vmatpush1.msra.mxu0 %v6517
        %6691 = vmatprep.subr.mxu0 0.0
        %6692 = vmatpush1.msra.mxu0 %v6518
        %6693 = vmatprep.subr.mxu0 0.0
        %6694 = vmatpush1.msra.mxu0 %v6519
        %6695 = vmatprep.subr.mxu0 0.0
        %6696 = vmatpush1.msra.mxu0 %v6520
        %6697 = vmatprep.subr.mxu0 0.0
        %6698 = vmatpush1.msra.mxu0 %v6521
        %6699 = vmatprep.subr.mxu0 0.0
        %6700 = vmatpush1.msra.mxu0 0.0
        %6701 = vmatprep.subr.mxu0 0.0
        %6702 = vmatpush1.msra.mxu0 0.0
        %6703 = vmatprep.subr.mxu0 0.0
        %6704 = vmatpush1.msra.mxu0 0.0
        %6705 = vmatprep.subr.mxu0 0.0
        %6706 = vmatpush1.msra.mxu0 0.0
        %6707 = vmatprep.subr.mxu0 0.0
        %6708 = vmatpush1.msra.mxu0 0.0
        %6709 = vmatprep.subr.mxu0 0.0
        %6710 = vmatpush1.msra.mxu0 0.0
        %6711 = vmatprep.subr.mxu0 0.0
        %6712 = vmatpush1.msra.mxu0 0.0
        %6713 = vmatprep.subr.mxu0 0.0
        %6714 = vmatpush1.msra.mxu0 0.0
        %6715 = vmatprep.subr.mxu0 0.0
        %6716 = vmatpush1.msra.mxu0 0.0
        %6717 = vmatprep.subr.mxu0 0.0
        %6718 = vmatpush1.msra.mxu0 0.0
        %6719 = vmatprep.subr.mxu0 0.0
        %6720 = vmatpush1.msra.mxu0 0.0
        %6721 = vmatprep.subr.mxu0 0.0
        %6722 = vmatpush1.msra.mxu0 0.0
        %6723 = vmatprep.subr.mxu0 0.0
        %6724 = vmatpush1.msra.mxu0 0.0
        %6725 = vmatprep.subr.mxu0 0.0
        %6726 = vmatpush1.msra.mxu0 0.0
        %6727 = vmatprep.subr.mxu0 0.0
        %6728 = vmatpush1.msra.mxu0 0.0
        %6729 = vmatprep.subr.mxu0 0.0
        %6730 = vmatpush1.msra.mxu0 0.0
        %6731 = vmatprep.subr.mxu0 0.0
        %6732 = vmatpush1.msra.mxu0 0.0
        %6733 = vmatprep.subr.mxu0 0.0
        %6734 = vmatpush1.msra.mxu0 0.0
        %6735 = vmatprep.subr.mxu0 0.0
        %6736 = vmatpush1.msra.mxu0 0.0
        %6737 = vmatprep.subr.mxu0 0.0
        %6738 = vmatpush1.msra.mxu0 0.0
        %6739 = vmatprep.subr.mxu0 0.0
        %6740 = vmatpush1.msra.mxu0 0.0
        %6741 = vmatprep.subr.mxu0 0.0
        %6742 = vmatpush1.msra.mxu0 0.0
        %6743 = vmatprep.subr.mxu0 0.0
        %6744 = vmatpush1.msra.mxu0 0.0
        %6745 = vmatprep.subr.mxu0 0.0
        %6746 = vmatpush1.msra.mxu0 0.0
        %6747 = vmatprep.mubr.f32.mxu0 0.0
        %6748 = vmatmul.mubr.f32.gmra.mrb[0].mxu0 %v6681
        %v6749 = vpop.f32.mrb[0].mxu0
        %v6750 = vadd.f32 %v6677, %v6749
        %v6751 = vpop.f32.mrb[0].mxu0
        %6752 = vdwg.mxu0
        %s6753 = scalar_lea.vmem %s16, 2
        %v6754 = vld [vmem:[%s6753] sm:$0x1]
        %v6756 = vsel %vm6436, %v6754, 0
        %6758 = vmatprep.subr.mxu0 0.0
        %6759 = vmatpush1.msra.mxu0 %v6442
        %6760 = vmatprep.subr.mxu0 0.0
        %6761 = vmatpush1.msra.mxu0 0.0
        %6762 = vmatprep.subr.mxu0 0.0
        %6763 = vmatpush1.msra.mxu0 0.0
        %6764 = vmatprep.subr.mxu0 0.0
        %6765 = vmatpush1.msra.mxu0 0.0
        %6766 = vmatprep.subr.mxu0 0.0
        %6767 = vmatpush1.msra.mxu0 0.0
        %6768 = vmatprep.subr.mxu0 0.0
        %6769 = vmatpush1.msra.mxu0 0.0
        %6770 = vmatprep.subr.mxu0 0.0
        %6771 = vmatpush1.msra.mxu0 0.0
        %6772 = vmatprep.subr.mxu0 0.0
        %6773 = vmatpush1.msra.mxu0 0.0
        %6774 = vmatprep.subr.mxu0 0.0
        %6775 = vmatpush1.msra.mxu0 0.0
        %6776 = vmatprep.subr.mxu0 0.0
        %6777 = vmatpush1.msra.mxu0 0.0
        %6778 = vmatprep.subr.mxu0 0.0
        %6779 = vmatpush1.msra.mxu0 0.0
        %6780 = vmatprep.subr.mxu0 0.0
        %6781 = vmatpush1.msra.mxu0 0.0
        %6782 = vmatprep.subr.mxu0 0.0
        %6783 = vmatpush1.msra.mxu0 0.0
        %6784 = vmatprep.subr.mxu0 0.0
        %6785 = vmatpush1.msra.mxu0 0.0
        %6786 = vmatprep.subr.mxu0 0.0
        %6787 = vmatpush1.msra.mxu0 0.0
        %6788 = vmatprep.subr.mxu0 0.0
        %6789 = vmatpush1.msra.mxu0 0.0
        %6790 = vmatprep.subr.mxu0 0.0
        %6791 = vmatpush1.msra.mxu0 0.0
        %6792 = vmatprep.subr.mxu0 0.0
        %6793 = vmatpush1.msra.mxu0 0.0
        %6794 = vmatprep.subr.mxu0 0.0
        %6795 = vmatpush1.msra.mxu0 0.0
        %6796 = vmatprep.subr.mxu0 0.0
        %6797 = vmatpush1.msra.mxu0 0.0
        %6798 = vmatprep.subr.mxu0 0.0
        %6799 = vmatpush1.msra.mxu0 0.0
        %6800 = vmatprep.subr.mxu0 0.0
        %6801 = vmatpush1.msra.mxu0 0.0
        %6802 = vmatprep.subr.mxu0 0.0
        %6803 = vmatpush1.msra.mxu0 0.0
        %6804 = vmatprep.subr.mxu0 0.0
        %6805 = vmatpush1.msra.mxu0 0.0
        %6806 = vmatprep.subr.mxu0 0.0
        %6807 = vmatpush1.msra.mxu0 0.0
        %6808 = vmatprep.subr.mxu0 0.0
        %6809 = vmatpush1.msra.mxu0 0.0
        %6810 = vmatprep.subr.mxu0 0.0
        %6811 = vmatpush1.msra.mxu0 0.0
        %6812 = vmatprep.subr.mxu0 0.0
        %6813 = vmatpush1.msra.mxu0 0.0
        %6814 = vmatprep.subr.mxu0 0.0
        %6815 = vmatpush1.msra.mxu0 0.0
        %6816 = vmatprep.subr.mxu0 0.0
        %6817 = vmatpush1.msra.mxu0 0.0
        %6818 = vmatprep.subr.mxu0 0.0
        %6819 = vmatpush1.msra.mxu0 0.0
        %6820 = vmatprep.subr.mxu0 0.0
        %6821 = vmatpush1.msra.mxu0 0.0
        %6822 = vmatprep.mubr.f32.mxu0 0.0
        %6823 = vmatmul.mubr.f32.gmra.mrb[0].mxu0 %v6756
        %v6824 = vpop.f32.mrb[0].mxu0
        %v6825 = vadd.f32 0.0, %v6824
        %v6826 = vpop.f32.mrb[0].mxu0
        %6827 = vdwg.mxu0
        %s6828 = scalar_lea.vmem %s17, 128
        %v6829 = vld [vmem:[%s6828] sm:$0xff]
        %v6830 = vld [vmem:[%s6828 + $0x8] sm:$0xff]
        %v6831 = vld [vmem:[%s6828 + $0x10] sm:$0xff]
        %v6832 = vld [vmem:[%s6828 + $0x18] sm:$0xff]
        %v6833 = vld [vmem:[%s6828 + $0x20] sm:$0xff]
        %v6834 = vld [vmem:[%s6828 + $0x28] sm:$0xff]
        %v6835 = vld [vmem:[%s6828 + $0x30] sm:$0xff]
        %v6836 = vld [vmem:[%s6828 + $0x38] sm:$0xff]
        %v6838 = vsel %vm6606, %v6825, 0
        %6840 = vmatprep.subr.mxu0 0.0
        %6841 = vmatpush1.msra.mxu0 %v6829
        %6842 = vmatprep.subr.mxu0 0.0
        %6843 = vmatpush1.msra.mxu0 %v6830
        %6844 = vmatprep.subr.mxu0 0.0
        %6845 = vmatpush1.msra.mxu0 %v6831
        %6846 = vmatprep.subr.mxu0 0.0
        %6847 = vmatpush1.msra.mxu0 %v6832
        %6848 = vmatprep.subr.mxu0 0.0
        %6849 = vmatpush1.msra.mxu0 %v6833
        %6850 = vmatprep.subr.mxu0 0.0
        %6851 = vmatpush1.msra.mxu0 %v6834
        %6852 = vmatprep.subr.mxu0 0.0
        %6853 = vmatpush1.msra.mxu0 %v6835
        %6854 = vmatprep.subr.mxu0 0.0
        %6855 = vmatpush1.msra.mxu0 %v6836
        %6856 = vmatprep.subr.mxu0 0.0
        %6857 = vmatpush1.msra.mxu0 0.0
        %6858 = vmatprep.subr.mxu0 0.0
        %6859 = vmatpush1.msra.mxu0 0.0
        %6860 = vmatprep.subr.mxu0 0.0
        %6861 = vmatpush1.msra.mxu0 0.0
        %6862 = vmatprep.subr.mxu0 0.0
        %6863 = vmatpush1.msra.mxu0 0.0
        %6864 = vmatprep.subr.mxu0 0.0
        %6865 = vmatpush1.msra.mxu0 0.0
        %6866 = vmatprep.subr.mxu0 0.0
        %6867 = vmatpush1.msra.mxu0 0.0
        %6868 = vmatprep.subr.mxu0 0.0
        %6869 = vmatpush1.msra.mxu0 0.0
        %6870 = vmatprep.subr.mxu0 0.0
        %6871 = vmatpush1.msra.mxu0 0.0
        %6872 = vmatprep.subr.mxu0 0.0
        %6873 = vmatpush1.msra.mxu0 0.0
        %6874 = vmatprep.subr.mxu0 0.0
        %6875 = vmatpush1.msra.mxu0 0.0
        %6876 = vmatprep.subr.mxu0 0.0
        %6877 = vmatpush1.msra.mxu0 0.0
        %6878 = vmatprep.subr.mxu0 0.0
        %6879 = vmatpush1.msra.mxu0 0.0
        %6880 = vmatprep.subr.mxu0 0.0
        %6881 = vmatpush1.msra.mxu0 0.0
        %6882 = vmatprep.subr.mxu0 0.0
        %6883 = vmatpush1.msra.mxu0 0.0
        %6884 = vmatprep.subr.mxu0 0.0
        %6885 = vmatpush1.msra.mxu0 0.0
        %6886 = vmatprep.subr.mxu0 0.0
        %6887 = vmatpush1.msra.mxu0 0.0
        %6888 = vmatprep.subr.mxu0 0.0
        %6889 = vmatpush1.msra.mxu0 0.0
        %6890 = vmatprep.subr.mxu0 0.0
        %6891 = vmatpush1.msra.mxu0 0.0
        %6892 = vmatprep.subr.mxu0 0.0
        %6893 = vmatpush1.msra.mxu0 0.0
        %6894 = vmatprep.subr.mxu0 0.0
        %6895 = vmatpush1.msra.mxu0 0.0
        %6896 = vmatprep.subr.mxu0 0.0
        %6897 = vmatpush1.msra.mxu0 0.0
        %6898 = vmatprep.subr.mxu0 0.0
        %6899 = vmatpush1.msra.mxu0 0.0
        %6900 = vmatprep.subr.mxu0 0.0
        %6901 = vmatpush1.msra.mxu0 0.0
        %6902 = vmatprep.subr.mxu0 0.0
        %6903 = vmatpush1.msra.mxu0 0.0
        %6904 = vmatprep.mubr.f32.mxu0 0.0
        %6905 = vmatmul.mubr.f32.gmra.mrb[0].mxu0 %v6838
        %v6906 = vpop.f32.mrb[0].mxu0
        %v6907 = vadd.f32 0.0, %v6906
        %v6908 = vpop.f32.mrb[0].mxu0
        %6909 = vdwg.mxu0
        %v6910 = vadd.f32 %v6750, %v6907
        %v6911 = vld [vmem:[#allocation26] sm:$0x3]
        %v6912 = vadd.f32 %v6910, %v6911
        %vm6913 = vcmp.ge.f32.partialorder %v6912, 0.0
        %v6914 = vmul.f32 %v6912, 0.01
        %v6915 = vsel %vm6913, %v6912, %v6914
        %v6917 = vrot.slane %v6911, 1
        %v6919 = vadd.f32 %v6915, %v6917
        %v6920 = vadd.f32 %v6919, 0.0
        %v6921 = vld [vmem:[%s19] sm:$0xff]
        %v6922 = vld [vmem:[%s19 + $0x8] sm:$0xff]
        %v6923 = vld [vmem:[%s19 + $0x10] sm:$0xff]
        %v6924 = vld [vmem:[%s19 + $0x18] sm:$0xff]
        %v6925 = vld [vmem:[#allocation28] sm:$0x1]
        %vm6926 = vcmask 261120
        %v6928 = vsel %vm6926, %v6920, 0
        %6930 = vmatprep.subr.mxu0 0.0
        %6931 = vmatpush1.msra.mxu0 %v6921
        %6932 = vmatprep.subr.mxu0 0.0
        %6933 = vmatpush1.msra.mxu0 %v6922
        %6934 = vmatprep.subr.mxu0 0.0
        %6935 = vmatpush1.msra.mxu0 %v6923
        %6936 = vmatprep.subr.mxu0 0.0
        %6937 = vmatpush1.msra.mxu0 %v6924
        %6938 = vmatprep.subr.mxu0 0.0
        %6939 = vmatpush1.msra.mxu0 0.0
        %6940 = vmatprep.subr.mxu0 0.0
        %6941 = vmatpush1.msra.mxu0 0.0
        %6942 = vmatprep.subr.mxu0 0.0
        %6943 = vmatpush1.msra.mxu0 0.0
        %6944 = vmatprep.subr.mxu0 0.0
        %6945 = vmatpush1.msra.mxu0 0.0
        %6946 = vmatprep.subr.mxu0 0.0
        %6947 = vmatpush1.msra.mxu0 0.0
        %6948 = vmatprep.subr.mxu0 0.0
        %6949 = vmatpush1.msra.mxu0 0.0
        %6950 = vmatprep.subr.mxu0 0.0
        %6951 = vmatpush1.msra.mxu0 0.0
        %6952 = vmatprep.subr.mxu0 0.0
        %6953 = vmatpush1.msra.mxu0 0.0
        %6954 = vmatprep.subr.mxu0 0.0
        %6955 = vmatpush1.msra.mxu0 0.0
        %6956 = vmatprep.subr.mxu0 0.0
        %6957 = vmatpush1.msra.mxu0 0.0
        %6958 = vmatprep.subr.mxu0 0.0
        %6959 = vmatpush1.msra.mxu0 0.0
        %6960 = vmatprep.subr.mxu0 0.0
        %6961 = vmatpush1.msra.mxu0 0.0
        %6962 = vmatprep.subr.mxu0 0.0
        %6963 = vmatpush1.msra.mxu0 0.0
        %6964 = vmatprep.subr.mxu0 0.0
        %6965 = vmatpush1.msra.mxu0 0.0
        %6966 = vmatprep.subr.mxu0 0.0
        %6967 = vmatpush1.msra.mxu0 0.0
        %6968 = vmatprep.subr.mxu0 0.0
        %6969 = vmatpush1.msra.mxu0 0.0
        %6970 = vmatprep.subr.mxu0 0.0
        %6971 = vmatpush1.msra.mxu0 0.0
        %6972 = vmatprep.subr.mxu0 0.0
        %6973 = vmatpush1.msra.mxu0 0.0
        %6974 = vmatprep.subr.mxu0 0.0
        %6975 = vmatpush1.msra.mxu0 0.0
        %6976 = vmatprep.subr.mxu0 0.0
        %6977 = vmatpush1.msra.mxu0 0.0
        %6978 = vmatprep.subr.mxu0 0.0
        %6979 = vmatpush1.msra.mxu0 0.0
        %6980 = vmatprep.subr.mxu0 0.0
        %6981 = vmatpush1.msra.mxu0 0.0
        %6982 = vmatprep.subr.mxu0 0.0
        %6983 = vmatpush1.msra.mxu0 0.0
        %6984 = vmatprep.subr.mxu0 0.0
        %6985 = vmatpush1.msra.mxu0 0.0
        %6986 = vmatprep.subr.mxu0 0.0
        %6987 = vmatpush1.msra.mxu0 0.0
        %6988 = vmatprep.subr.mxu0 0.0
        %6989 = vmatpush1.msra.mxu0 0.0
        %6990 = vmatprep.subr.mxu0 0.0
        %6991 = vmatpush1.msra.mxu0 0.0
        %6992 = vmatprep.subr.mxu0 0.0
        %6993 = vmatpush1.msra.mxu0 0.0
        %6994 = vmatprep.mubr.f32.mxu0 0.0
        %6995 = vmatmul.mubr.f32.gmra.mrb[0].mxu0 %v6928
        %v6996 = vpop.f32.mrb[0].mxu0
        %v6997 = vadd.f32 %v6925, %v6996
        %v6998 = vpop.f32.mrb[0].mxu0
        %6999 = vdwg.mxu0
        %vm7000 = vcmask 24576
        %v7001 = vsel %vm7000, %v6997, -inf
        %7002 = vmax.xlane.f32.xlu0 %v7001
        %v7003 = vpop.xlane.xlu0 %7002
        %v7004 = vsub.f32 %v6997, %v7003
        %v7005 = vmul.f32 %v7004, 1.442695
        %v7006 = vpow.pop %v7005
        %v7007 = vsel %vm7000, %v7006, 0.0
        %7008 = vadd.xlane.f32.xlu0 %v7007
        %v7009 = vpop.xlane.xlu0 %7008
        %v7010 = vrcp.pop %v7009
        %v7011 = vmul.f32 %v7006, %v7010
        %7012 = vst.msk [vmem:[%s891] sm:$0x1] %vm7000, %v7011
        %s7013 = sand.u32 %s500, 1
        %s7014 = scalar_lea.sflag [#allocation4], %s7013
        %s7015 = sand.u32 %s500, 1
        %s7016 = scalar_lea.vmem [#allocation29], %s7015
        // Predicated region
        $region173: #{tpu_custom_call.1} parent=103 // pred_check
          %p7017 = pneg %p510
        $region174: #{tpu_custom_call.1} parent=103 // pred_check_branch
          %7019 = sbr.rel (%p7017) target = $region176
        $region175: #{tpu_custom_call.1} parent=103 // pred_region
          %s7021 = ssub.s32 16, 16
          %7022 = vsyncadd %s7014, %s7021
          %s7023 = smul.addr %s46, 16
          %s7024 = scalar_lea.hbm %s21, %s7023
          %s7026 = sshll.u32 %s7016, 4
          %s7027 = int_to_ptr.vmem [resolvable:$true] %s7026
          %7029 = dma.vmem_to_hbm [thread:$0]  %s7027, 16, %s7024, %s7014
        $region176: #{tpu_custom_call.1} parent=103 // pred_fallthru
          _
      $region104: #{tpu_custom_call.1} parent=5 // pred_fallthru
        _
      %p7030 = scmp.le.s32.totalorder 2, %s41
      // Predicated region
      $region177: #{tpu_custom_call.1} parent=5 // pred_check
        %p7031 = pneg %p7030
      $region178: #{tpu_custom_call.1} parent=5 // pred_check_branch
        %7033 = sbr.rel (%p7031) target = $region180
      $region179: #{tpu_custom_call.1} parent=5 // pred_region
        %s7034 = ssub.s32 %s41, 2
        // Predicated region
        $region181: #{tpu_custom_call.1} parent=179 // pred_check
          %p7035 = pneg %p516
        $region182: #{tpu_custom_call.1} parent=179 // pred_check_branch
          %7037 = sbr.rel (%p7035) target = $region184
        $region183: #{tpu_custom_call.1} parent=179 // pred_region
          %s7038 = sand.u32 %s501, 1
          %s7039 = scalar_lea.sflag [#allocation4], %s7038
          %s7040 = sand.u32 %s501, 1
          %s7041 = scalar_lea.vmem [#allocation29], %s7040
          %7042 = dma.done %s7039, 16
        $region184: #{tpu_custom_call.1} parent=179 // pred_fallthru
          _
      $region180: #{tpu_custom_call.1} parent=5 // pred_fallthru
        _
    $region6: #{tpu_custom_call.1} parent=1 // loop_footer
      %s45 = sadd.s32 1, %s41
    $region7: #{tpu_custom_call.1} parent=1 // loop_footer_branch
      %40 = sbr.rel target = $region3
    $region8: #{tpu_custom_call.1} parent=1 // loop_exit
      _
    %7043 = vsyncpa [#allocation3], 1
    %s7044 = scalar_lea.sflag [#allocation3], 1
    %7045 = vsyncpa %s7044, 1
    %7046 = vsyncpa [#allocation6], 1
    %7047 = vsyncpa [#allocation9], 1
    %7048 = vsyncpa [#allocation12], 1
    %7049 = vsyncpa [#allocation15], 1
    %7050 = vsyncpa [#allocation18], 1
    %7051 = vsyncpa [#allocation21], 1
    %7052 = vsyncpa [#allocation24], 1
    %7053 = vsyncpa [#allocation27], 1
    %7054 = vsyncpa [#allocation4], 1
    %s7055 = scalar_lea.sflag [#allocation4], 1
    %7056 = vsyncpa %s7055, 1

</llo_original>
